<compile_context>
chip_gen: v6e
topology: v6e:2x2x1
jax: 0.10.0
libtpu: 0.0.40
codegen_flags: <defaults>
</compile_context>

<pallas_src>
import jax
import jax.numpy as jnp
from jax import lax
from jax.experimental import pallas as pl
from jax.experimental.pallas import tpu as pltpu

IN_C = 3
OUT_C = 16
K = 3


def _conv_min_tanh_kernel(x_ref, w_ref, b_ref, o_ref):
    # x_ref: (BB, Cin, H, W)   VMEM  raw input images for this grid step
    # w_ref: (Cout, Cin*K*K)   SMEM  flattened filters (row order c*K*K + ky*K + kx)
    # b_ref: (Cout,)           SMEM  bias
    # o_ref: (BB, 1, OH, OW)   VMEM  NCHW output block (exact final layout)
    _, cin, hh, ww = x_ref.shape
    cout, ckk = w_ref.shape
    oh, ow = hh - K + 1, ww - K + 1

    # In-kernel im2col: the 27 shifted conv taps, each (BB, OH, OW), built once
    # from static window slices of the raw input block and reused for all
    # output channels.  No HBM-side patch materialization.
    taps = []
    for c in range(cin):
        for ky in range(K):
            for kx in range(K):
                taps.append(
                    x_ref[:, c, ky:ky + oh, kx:kx + ow].astype(jnp.float32))

    # Per-output-channel MAC (scalar weight from SMEM x vector tap) with a
    # running channel-min; compute is tiny so VPU MACs are immaterial and avoid
    # any relayout that an MXU (ckk, N) patch slab would require.
    m = None
    for co in range(cout):
        acc = taps[0] * w_ref[co, 0]
        for r in range(1, ckk):
            acc = acc + taps[r] * w_ref[co, r]
        acc = acc + b_ref[co]
        m = acc if m is None else jnp.minimum(m, acc)

    y = jnp.tanh(jnp.tanh(m))                     # EUP tanh x2 on reduced slab
    o_ref[:, 0, :, :] = y.astype(o_ref.dtype)


def conv_min_tanh(x, w, b, *, max_bb=64):
    B, Cin, H, W = x.shape
    Cout = w.shape[0]
    OH, OW = H - K + 1, W - K + 1

    # Only wrapper-side work: a free contiguous reshape of the filters + casts.
    w2d = w.reshape(Cout, Cin * K * K).astype(jnp.float32)
    b1d = b.astype(jnp.float32)

    # Batch tiling: largest divisor of B not exceeding max_bb images per step.
    # Small B (the common case here) -> a single grid step on every generation;
    # large B -> bounded per-step block (VMEM-safe on v7x) with a "parallel"
    # axis so 2-TC chips can shard the steps.
    BB = 1
    for d in range(1, min(B, max_bb) + 1):
        if B % d == 0:
            BB = d
    G = B // BB

    return pl.pallas_call(
        _conv_min_tanh_kernel,
        out_shape=jax.ShapeDtypeStruct((B, 1, OH, OW), x.dtype),
        grid=(G,),
        in_specs=[
            pl.BlockSpec((BB, Cin, H, W), lambda g: (g, 0, 0, 0)),
            pl.BlockSpec(memory_space=pltpu.MemorySpace.SMEM),   # filters
            pl.BlockSpec(memory_space=pltpu.MemorySpace.SMEM),   # bias
        ],
        out_specs=pl.BlockSpec((BB, 1, OH, OW), lambda g: (g, 0, 0, 0)),
        compiler_params=pltpu.CompilerParams(
            dimension_semantics=("parallel",)),
    )(x, w2d, b1d)


def reference(x, w, b):
    y = lax.conv_general_dilated(
        x, w, window_strides=(1, 1), padding="VALID",
        dimension_numbers=("NCHW", "OIHW", "NCHW"))
    y = y + b[None, :, None, None]
    y = jnp.min(y, axis=1, keepdims=True)
    return jnp.tanh(jnp.tanh(y))


if __name__ == "__main__":
    key = jax.random.PRNGKey(0)
    kx, kw, kb = jax.random.split(key, 3)

    B, H, W = 2, 16, 16
    x = jax.random.normal(kx, (B, IN_C, H, W), dtype=jnp.float32)

    # PyTorch Conv2d default init: uniform(-1/sqrt(fan_in), 1/sqrt(fan_in))
    fan_in = IN_C * K * K
    bound = 1.0 / jnp.sqrt(fan_in)
    w = jax.random.uniform(kw, (OUT_C, IN_C, K, K), jnp.float32, -bound, bound)
    b = jax.random.uniform(kb, (OUT_C,), jnp.float32, -bound, bound)

    out = conv_min_tanh(x, w, b)
    out = jax.block_until_ready(out)

    ref = reference(x, w, b)
    assert out.shape == (B, 1, H - K + 1, W - K + 1), out.shape
    assert jnp.allclose(out, ref, atol=1e-4, rtol=1e-4), \
        float(jnp.max(jnp.abs(out - ref)))

    print("KERNEL_OK")
</pallas_src>

<mosaic_0001>
module attributes {stable_mosaic.version = 11 : i64} {
  func.func @_conv_min_tanh_kernel(%arg0: i32, %arg1: memref<2x3x16x16xf32, #tpu.memory_space<vmem>>, %arg2: memref<16x27xf32, #tpu.memory_space<smem>>, %arg3: memref<16xf32, #tpu.memory_space<smem>>, %arg4: memref<2x1x14x14xf32, #tpu.memory_space<vmem>>) attributes {dimension_semantics = [#tpu.dimension_semantics<parallel>], iteration_bounds = array<i64: 1>, scalar_prefetch = 0 : i64, scratch_operands = 0 : i64, tpu.core_type = #tpu.core_type<tc>, window_params = [{transform_indices = @transform_0, window_bounds = array<i64: 2, 3, 16, 16>}, {transform_indices = @transform_1, window_bounds = array<i64: 16, 27>}, {transform_indices = @transform_2, window_bounds = array<i64: 16>}, {transform_indices = @transform_3, window_bounds = array<i64: 2, 1, 14, 14>}]} {
    %c0 = arith.constant 0 : index
    %c0_0 = arith.constant 0 : index
    %c0_1 = arith.constant 0 : index
    %c0_2 = arith.constant 0 : index
    %0 = vector.load %arg1[%c0, %c0_0, %c0_1, %c0_2] : memref<2x3x16x16xf32, #tpu.memory_space<vmem>>, vector<2x1x14x14xf32>
    %1 = vector.shape_cast %0 : vector<2x1x14x14xf32> to vector<2x14x14xf32>
    %c0_3 = arith.constant 0 : index
    %c0_4 = arith.constant 0 : index
    %c0_5 = arith.constant 0 : index
    %c1 = arith.constant 1 : index
    %2 = vector.load %arg1[%c0_3, %c0_4, %c0_5, %c1] : memref<2x3x16x16xf32, #tpu.memory_space<vmem>>, vector<2x1x14x14xf32>
    %3 = vector.shape_cast %2 : vector<2x1x14x14xf32> to vector<2x14x14xf32>
    %c0_6 = arith.constant 0 : index
    %c0_7 = arith.constant 0 : index
    %c0_8 = arith.constant 0 : index
    %c2 = arith.constant 2 : index
    %4 = vector.load %arg1[%c0_6, %c0_7, %c0_8, %c2] : memref<2x3x16x16xf32, #tpu.memory_space<vmem>>, vector<2x1x14x14xf32>
    %5 = vector.shape_cast %4 : vector<2x1x14x14xf32> to vector<2x14x14xf32>
    %c0_9 = arith.constant 0 : index
    %c0_10 = arith.constant 0 : index
    %c1_11 = arith.constant 1 : index
    %c0_12 = arith.constant 0 : index
    %6 = vector.load %arg1[%c0_9, %c0_10, %c1_11, %c0_12] : memref<2x3x16x16xf32, #tpu.memory_space<vmem>>, vector<2x1x14x14xf32>
    %7 = vector.shape_cast %6 : vector<2x1x14x14xf32> to vector<2x14x14xf32>
    %c0_13 = arith.constant 0 : index
    %c0_14 = arith.constant 0 : index
    %c1_15 = arith.constant 1 : index
    %c1_16 = arith.constant 1 : index
    %8 = vector.load %arg1[%c0_13, %c0_14, %c1_15, %c1_16] : memref<2x3x16x16xf32, #tpu.memory_space<vmem>>, vector<2x1x14x14xf32>
    %9 = vector.shape_cast %8 : vector<2x1x14x14xf32> to vector<2x14x14xf32>
    %c0_17 = arith.constant 0 : index
    %c0_18 = arith.constant 0 : index
    %c1_19 = arith.constant 1 : index
    %c2_20 = arith.constant 2 : index
    %10 = vector.load %arg1[%c0_17, %c0_18, %c1_19, %c2_20] : memref<2x3x16x16xf32, #tpu.memory_space<vmem>>, vector<2x1x14x14xf32>
    %11 = vector.shape_cast %10 : vector<2x1x14x14xf32> to vector<2x14x14xf32>
    %c0_21 = arith.constant 0 : index
    %c0_22 = arith.constant 0 : index
    %c2_23 = arith.constant 2 : index
    %c0_24 = arith.constant 0 : index
    %12 = vector.load %arg1[%c0_21, %c0_22, %c2_23, %c0_24] : memref<2x3x16x16xf32, #tpu.memory_space<vmem>>, vector<2x1x14x14xf32>
    %13 = vector.shape_cast %12 : vector<2x1x14x14xf32> to vector<2x14x14xf32>
    %c0_25 = arith.constant 0 : index
    %c0_26 = arith.constant 0 : index
    %c2_27 = arith.constant 2 : index
    %c1_28 = arith.constant 1 : index
    %14 = vector.load %arg1[%c0_25, %c0_26, %c2_27, %c1_28] : memref<2x3x16x16xf32, #tpu.memory_space<vmem>>, vector<2x1x14x14xf32>
    %15 = vector.shape_cast %14 : vector<2x1x14x14xf32> to vector<2x14x14xf32>
    %c0_29 = arith.constant 0 : index
    %c0_30 = arith.constant 0 : index
    %c2_31 = arith.constant 2 : index
    %c2_32 = arith.constant 2 : index
    %16 = vector.load %arg1[%c0_29, %c0_30, %c2_31, %c2_32] : memref<2x3x16x16xf32, #tpu.memory_space<vmem>>, vector<2x1x14x14xf32>
    %17 = vector.shape_cast %16 : vector<2x1x14x14xf32> to vector<2x14x14xf32>
    %c0_33 = arith.constant 0 : index
    %c1_34 = arith.constant 1 : index
    %c0_35 = arith.constant 0 : index
    %c0_36 = arith.constant 0 : index
    %18 = vector.load %arg1[%c0_33, %c1_34, %c0_35, %c0_36] : memref<2x3x16x16xf32, #tpu.memory_space<vmem>>, vector<2x1x14x14xf32>
    %19 = vector.shape_cast %18 : vector<2x1x14x14xf32> to vector<2x14x14xf32>
    %c0_37 = arith.constant 0 : index
    %c1_38 = arith.constant 1 : index
    %c0_39 = arith.constant 0 : index
    %c1_40 = arith.constant 1 : index
    %20 = vector.load %arg1[%c0_37, %c1_38, %c0_39, %c1_40] : memref<2x3x16x16xf32, #tpu.memory_space<vmem>>, vector<2x1x14x14xf32>
    %21 = vector.shape_cast %20 : vector<2x1x14x14xf32> to vector<2x14x14xf32>
    %c0_41 = arith.constant 0 : index
    %c1_42 = arith.constant 1 : index
    %c0_43 = arith.constant 0 : index
    %c2_44 = arith.constant 2 : index
    %22 = vector.load %arg1[%c0_41, %c1_42, %c0_43, %c2_44] : memref<2x3x16x16xf32, #tpu.memory_space<vmem>>, vector<2x1x14x14xf32>
    %23 = vector.shape_cast %22 : vector<2x1x14x14xf32> to vector<2x14x14xf32>
    %c0_45 = arith.constant 0 : index
    %c1_46 = arith.constant 1 : index
    %c1_47 = arith.constant 1 : index
    %c0_48 = arith.constant 0 : index
    %24 = vector.load %arg1[%c0_45, %c1_46, %c1_47, %c0_48] : memref<2x3x16x16xf32, #tpu.memory_space<vmem>>, vector<2x1x14x14xf32>
    %25 = vector.shape_cast %24 : vector<2x1x14x14xf32> to vector<2x14x14xf32>
    %c0_49 = arith.constant 0 : index
    %c1_50 = arith.constant 1 : index
    %c1_51 = arith.constant 1 : index
    %c1_52 = arith.constant 1 : index
    %26 = vector.load %arg1[%c0_49, %c1_50, %c1_51, %c1_52] : memref<2x3x16x16xf32, #tpu.memory_space<vmem>>, vector<2x1x14x14xf32>
    %27 = vector.shape_cast %26 : vector<2x1x14x14xf32> to vector<2x14x14xf32>
    %c0_53 = arith.constant 0 : index
    %c1_54 = arith.constant 1 : index
    %c1_55 = arith.constant 1 : index
    %c2_56 = arith.constant 2 : index
    %28 = vector.load %arg1[%c0_53, %c1_54, %c1_55, %c2_56] : memref<2x3x16x16xf32, #tpu.memory_space<vmem>>, vector<2x1x14x14xf32>
    %29 = vector.shape_cast %28 : vector<2x1x14x14xf32> to vector<2x14x14xf32>
    %c0_57 = arith.constant 0 : index
    %c1_58 = arith.constant 1 : index
    %c2_59 = arith.constant 2 : index
    %c0_60 = arith.constant 0 : index
    %30 = vector.load %arg1[%c0_57, %c1_58, %c2_59, %c0_60] : memref<2x3x16x16xf32, #tpu.memory_space<vmem>>, vector<2x1x14x14xf32>
    %31 = vector.shape_cast %30 : vector<2x1x14x14xf32> to vector<2x14x14xf32>
    %c0_61 = arith.constant 0 : index
    %c1_62 = arith.constant 1 : index
    %c2_63 = arith.constant 2 : index
    %c1_64 = arith.constant 1 : index
    %32 = vector.load %arg1[%c0_61, %c1_62, %c2_63, %c1_64] : memref<2x3x16x16xf32, #tpu.memory_space<vmem>>, vector<2x1x14x14xf32>
    %33 = vector.shape_cast %32 : vector<2x1x14x14xf32> to vector<2x14x14xf32>
    %c0_65 = arith.constant 0 : index
    %c1_66 = arith.constant 1 : index
    %c2_67 = arith.constant 2 : index
    %c2_68 = arith.constant 2 : index
    %34 = vector.load %arg1[%c0_65, %c1_66, %c2_67, %c2_68] : memref<2x3x16x16xf32, #tpu.memory_space<vmem>>, vector<2x1x14x14xf32>
    %35 = vector.shape_cast %34 : vector<2x1x14x14xf32> to vector<2x14x14xf32>
    %c0_69 = arith.constant 0 : index
    %c2_70 = arith.constant 2 : index
    %c0_71 = arith.constant 0 : index
    %c0_72 = arith.constant 0 : index
    %36 = vector.load %arg1[%c0_69, %c2_70, %c0_71, %c0_72] : memref<2x3x16x16xf32, #tpu.memory_space<vmem>>, vector<2x1x14x14xf32>
    %37 = vector.shape_cast %36 : vector<2x1x14x14xf32> to vector<2x14x14xf32>
    %c0_73 = arith.constant 0 : index
    %c2_74 = arith.constant 2 : index
    %c0_75 = arith.constant 0 : index
    %c1_76 = arith.constant 1 : index
    %38 = vector.load %arg1[%c0_73, %c2_74, %c0_75, %c1_76] : memref<2x3x16x16xf32, #tpu.memory_space<vmem>>, vector<2x1x14x14xf32>
    %39 = vector.shape_cast %38 : vector<2x1x14x14xf32> to vector<2x14x14xf32>
    %c0_77 = arith.constant 0 : index
    %c2_78 = arith.constant 2 : index
    %c0_79 = arith.constant 0 : index
    %c2_80 = arith.constant 2 : index
    %40 = vector.load %arg1[%c0_77, %c2_78, %c0_79, %c2_80] : memref<2x3x16x16xf32, #tpu.memory_space<vmem>>, vector<2x1x14x14xf32>
    %41 = vector.shape_cast %40 : vector<2x1x14x14xf32> to vector<2x14x14xf32>
    %c0_81 = arith.constant 0 : index
    %c2_82 = arith.constant 2 : index
    %c1_83 = arith.constant 1 : index
    %c0_84 = arith.constant 0 : index
    %42 = vector.load %arg1[%c0_81, %c2_82, %c1_83, %c0_84] : memref<2x3x16x16xf32, #tpu.memory_space<vmem>>, vector<2x1x14x14xf32>
    %43 = vector.shape_cast %42 : vector<2x1x14x14xf32> to vector<2x14x14xf32>
    %c0_85 = arith.constant 0 : index
    %c2_86 = arith.constant 2 : index
    %c1_87 = arith.constant 1 : index
    %c1_88 = arith.constant 1 : index
    %44 = vector.load %arg1[%c0_85, %c2_86, %c1_87, %c1_88] : memref<2x3x16x16xf32, #tpu.memory_space<vmem>>, vector<2x1x14x14xf32>
    %45 = vector.shape_cast %44 : vector<2x1x14x14xf32> to vector<2x14x14xf32>
    %c0_89 = arith.constant 0 : index
    %c2_90 = arith.constant 2 : index
    %c1_91 = arith.constant 1 : index
    %c2_92 = arith.constant 2 : index
    %46 = vector.load %arg1[%c0_89, %c2_90, %c1_91, %c2_92] : memref<2x3x16x16xf32, #tpu.memory_space<vmem>>, vector<2x1x14x14xf32>
    %47 = vector.shape_cast %46 : vector<2x1x14x14xf32> to vector<2x14x14xf32>
    %c0_93 = arith.constant 0 : index
    %c2_94 = arith.constant 2 : index
    %c2_95 = arith.constant 2 : index
    %c0_96 = arith.constant 0 : index
    %48 = vector.load %arg1[%c0_93, %c2_94, %c2_95, %c0_96] : memref<2x3x16x16xf32, #tpu.memory_space<vmem>>, vector<2x1x14x14xf32>
    %49 = vector.shape_cast %48 : vector<2x1x14x14xf32> to vector<2x14x14xf32>
    %c0_97 = arith.constant 0 : index
    %c2_98 = arith.constant 2 : index
    %c2_99 = arith.constant 2 : index
    %c1_100 = arith.constant 1 : index
    %50 = vector.load %arg1[%c0_97, %c2_98, %c2_99, %c1_100] : memref<2x3x16x16xf32, #tpu.memory_space<vmem>>, vector<2x1x14x14xf32>
    %51 = vector.shape_cast %50 : vector<2x1x14x14xf32> to vector<2x14x14xf32>
    %c0_101 = arith.constant 0 : index
    %c2_102 = arith.constant 2 : index
    %c2_103 = arith.constant 2 : index
    %c2_104 = arith.constant 2 : index
    %52 = vector.load %arg1[%c0_101, %c2_102, %c2_103, %c2_104] : memref<2x3x16x16xf32, #tpu.memory_space<vmem>>, vector<2x1x14x14xf32>
    %53 = vector.shape_cast %52 : vector<2x1x14x14xf32> to vector<2x14x14xf32>
    %c0_105 = arith.constant 0 : index
    %c0_106 = arith.constant 0 : index
    %54 = memref.load %arg2[%c0_105, %c0_106] : memref<16x27xf32, #tpu.memory_space<smem>>
    %55 = vector.broadcast %54 : f32 to vector<2x14x14xf32>
    %56 = arith.mulf %1, %55 : vector<2x14x14xf32>
    %c0_107 = arith.constant 0 : index
    %c1_108 = arith.constant 1 : index
    %57 = memref.load %arg2[%c0_107, %c1_108] : memref<16x27xf32, #tpu.memory_space<smem>>
    %58 = vector.broadcast %57 : f32 to vector<2x14x14xf32>
    %59 = arith.mulf %3, %58 : vector<2x14x14xf32>
    %60 = arith.addf %56, %59 : vector<2x14x14xf32>
    %c0_109 = arith.constant 0 : index
    %c2_110 = arith.constant 2 : index
    %61 = memref.load %arg2[%c0_109, %c2_110] : memref<16x27xf32, #tpu.memory_space<smem>>
    %62 = vector.broadcast %61 : f32 to vector<2x14x14xf32>
    %63 = arith.mulf %5, %62 : vector<2x14x14xf32>
    %64 = arith.addf %60, %63 : vector<2x14x14xf32>
    %c0_111 = arith.constant 0 : index
    %c3 = arith.constant 3 : index
    %65 = memref.load %arg2[%c0_111, %c3] : memref<16x27xf32, #tpu.memory_space<smem>>
    %66 = vector.broadcast %65 : f32 to vector<2x14x14xf32>
    %67 = arith.mulf %7, %66 : vector<2x14x14xf32>
    %68 = arith.addf %64, %67 : vector<2x14x14xf32>
    %c0_112 = arith.constant 0 : index
    %c4 = arith.constant 4 : index
    %69 = memref.load %arg2[%c0_112, %c4] : memref<16x27xf32, #tpu.memory_space<smem>>
    %70 = vector.broadcast %69 : f32 to vector<2x14x14xf32>
    %71 = arith.mulf %9, %70 : vector<2x14x14xf32>
    %72 = arith.addf %68, %71 : vector<2x14x14xf32>
    %c0_113 = arith.constant 0 : index
    %c5 = arith.constant 5 : index
    %73 = memref.load %arg2[%c0_113, %c5] : memref<16x27xf32, #tpu.memory_space<smem>>
    %74 = vector.broadcast %73 : f32 to vector<2x14x14xf32>
    %75 = arith.mulf %11, %74 : vector<2x14x14xf32>
    %76 = arith.addf %72, %75 : vector<2x14x14xf32>
    %c0_114 = arith.constant 0 : index
    %c6 = arith.constant 6 : index
    %77 = memref.load %arg2[%c0_114, %c6] : memref<16x27xf32, #tpu.memory_space<smem>>
    %78 = vector.broadcast %77 : f32 to vector<2x14x14xf32>
    %79 = arith.mulf %13, %78 : vector<2x14x14xf32>
    %80 = arith.addf %76, %79 : vector<2x14x14xf32>
    %c0_115 = arith.constant 0 : index
    %c7 = arith.constant 7 : index
    %81 = memref.load %arg2[%c0_115, %c7] : memref<16x27xf32, #tpu.memory_space<smem>>
    %82 = vector.broadcast %81 : f32 to vector<2x14x14xf32>
    %83 = arith.mulf %15, %82 : vector<2x14x14xf32>
    %84 = arith.addf %80, %83 : vector<2x14x14xf32>
    %c0_116 = arith.constant 0 : index
    %c8 = arith.constant 8 : index
    %85 = memref.load %arg2[%c0_116, %c8] : memref<16x27xf32, #tpu.memory_space<smem>>
    %86 = vector.broadcast %85 : f32 to vector<2x14x14xf32>
    %87 = arith.mulf %17, %86 : vector<2x14x14xf32>
    %88 = arith.addf %84, %87 : vector<2x14x14xf32>
    %c0_117 = arith.constant 0 : index
    %c9 = arith.constant 9 : index
    %89 = memref.load %arg2[%c0_117, %c9] : memref<16x27xf32, #tpu.memory_space<smem>>
    %90 = vector.broadcast %89 : f32 to vector<2x14x14xf32>
    %91 = arith.mulf %19, %90 : vector<2x14x14xf32>
    %92 = arith.addf %88, %91 : vector<2x14x14xf32>
    %c0_118 = arith.constant 0 : index
    %c10 = arith.constant 10 : index
    %93 = memref.load %arg2[%c0_118, %c10] : memref<16x27xf32, #tpu.memory_space<smem>>
    %94 = vector.broadcast %93 : f32 to vector<2x14x14xf32>
    %95 = arith.mulf %21, %94 : vector<2x14x14xf32>
    %96 = arith.addf %92, %95 : vector<2x14x14xf32>
    %c0_119 = arith.constant 0 : index
    %c11 = arith.constant 11 : index
    %97 = memref.load %arg2[%c0_119, %c11] : memref<16x27xf32, #tpu.memory_space<smem>>
    %98 = vector.broadcast %97 : f32 to vector<2x14x14xf32>
    %99 = arith.mulf %23, %98 : vector<2x14x14xf32>
    %100 = arith.addf %96, %99 : vector<2x14x14xf32>
    %c0_120 = arith.constant 0 : index
    %c12 = arith.constant 12 : index
    %101 = memref.load %arg2[%c0_120, %c12] : memref<16x27xf32, #tpu.memory_space<smem>>
    %102 = vector.broadcast %101 : f32 to vector<2x14x14xf32>
    %103 = arith.mulf %25, %102 : vector<2x14x14xf32>
    %104 = arith.addf %100, %103 : vector<2x14x14xf32>
    %c0_121 = arith.constant 0 : index
    %c13 = arith.constant 13 : index
    %105 = memref.load %arg2[%c0_121, %c13] : memref<16x27xf32, #tpu.memory_space<smem>>
    %106 = vector.broadcast %105 : f32 to vector<2x14x14xf32>
    %107 = arith.mulf %27, %106 : vector<2x14x14xf32>
    %108 = arith.addf %104, %107 : vector<2x14x14xf32>
    %c0_122 = arith.constant 0 : index
    %c14 = arith.constant 14 : index
    %109 = memref.load %arg2[%c0_122, %c14] : memref<16x27xf32, #tpu.memory_space<smem>>
    %110 = vector.broadcast %109 : f32 to vector<2x14x14xf32>
    %111 = arith.mulf %29, %110 : vector<2x14x14xf32>
    %112 = arith.addf %108, %111 : vector<2x14x14xf32>
    %c0_123 = arith.constant 0 : index
    %c15 = arith.constant 15 : index
    %113 = memref.load %arg2[%c0_123, %c15] : memref<16x27xf32, #tpu.memory_space<smem>>
    %114 = vector.broadcast %113 : f32 to vector<2x14x14xf32>
    %115 = arith.mulf %31, %114 : vector<2x14x14xf32>
    %116 = arith.addf %112, %115 : vector<2x14x14xf32>
    %c0_124 = arith.constant 0 : index
    %c16 = arith.constant 16 : index
    %117 = memref.load %arg2[%c0_124, %c16] : memref<16x27xf32, #tpu.memory_space<smem>>
    %118 = vector.broadcast %117 : f32 to vector<2x14x14xf32>
    %119 = arith.mulf %33, %118 : vector<2x14x14xf32>
    %120 = arith.addf %116, %119 : vector<2x14x14xf32>
    %c0_125 = arith.constant 0 : index
    %c17 = arith.constant 17 : index
    %121 = memref.load %arg2[%c0_125, %c17] : memref<16x27xf32, #tpu.memory_space<smem>>
    %122 = vector.broadcast %121 : f32 to vector<2x14x14xf32>
    %123 = arith.mulf %35, %122 : vector<2x14x14xf32>
    %124 = arith.addf %120, %123 : vector<2x14x14xf32>
    %c0_126 = arith.constant 0 : index
    %c18 = arith.constant 18 : index
    %125 = memref.load %arg2[%c0_126, %c18] : memref<16x27xf32, #tpu.memory_space<smem>>
    %126 = vector.broadcast %125 : f32 to vector<2x14x14xf32>
    %127 = arith.mulf %37, %126 : vector<2x14x14xf32>
    %128 = arith.addf %124, %127 : vector<2x14x14xf32>
    %c0_127 = arith.constant 0 : index
    %c19 = arith.constant 19 : index
    %129 = memref.load %arg2[%c0_127, %c19] : memref<16x27xf32, #tpu.memory_space<smem>>
    %130 = vector.broadcast %129 : f32 to vector<2x14x14xf32>
    %131 = arith.mulf %39, %130 : vector<2x14x14xf32>
    %132 = arith.addf %128, %131 : vector<2x14x14xf32>
    %c0_128 = arith.constant 0 : index
    %c20 = arith.constant 20 : index
    %133 = memref.load %arg2[%c0_128, %c20] : memref<16x27xf32, #tpu.memory_space<smem>>
    %134 = vector.broadcast %133 : f32 to vector<2x14x14xf32>
    %135 = arith.mulf %41, %134 : vector<2x14x14xf32>
    %136 = arith.addf %132, %135 : vector<2x14x14xf32>
    %c0_129 = arith.constant 0 : index
    %c21 = arith.constant 21 : index
    %137 = memref.load %arg2[%c0_129, %c21] : memref<16x27xf32, #tpu.memory_space<smem>>
    %138 = vector.broadcast %137 : f32 to vector<2x14x14xf32>
    %139 = arith.mulf %43, %138 : vector<2x14x14xf32>
    %140 = arith.addf %136, %139 : vector<2x14x14xf32>
    %c0_130 = arith.constant 0 : index
    %c22 = arith.constant 22 : index
    %141 = memref.load %arg2[%c0_130, %c22] : memref<16x27xf32, #tpu.memory_space<smem>>
    %142 = vector.broadcast %141 : f32 to vector<2x14x14xf32>
    %143 = arith.mulf %45, %142 : vector<2x14x14xf32>
    %144 = arith.addf %140, %143 : vector<2x14x14xf32>
    %c0_131 = arith.constant 0 : index
    %c23 = arith.constant 23 : index
    %145 = memref.load %arg2[%c0_131, %c23] : memref<16x27xf32, #tpu.memory_space<smem>>
    %146 = vector.broadcast %145 : f32 to vector<2x14x14xf32>
    %147 = arith.mulf %47, %146 : vector<2x14x14xf32>
    %148 = arith.addf %144, %147 : vector<2x14x14xf32>
    %c0_132 = arith.constant 0 : index
    %c24 = arith.constant 24 : index
    %149 = memref.load %arg2[%c0_132, %c24] : memref<16x27xf32, #tpu.memory_space<smem>>
    %150 = vector.broadcast %149 : f32 to vector<2x14x14xf32>
    %151 = arith.mulf %49, %150 : vector<2x14x14xf32>
    %152 = arith.addf %148, %151 : vector<2x14x14xf32>
    %c0_133 = arith.constant 0 : index
    %c25 = arith.constant 25 : index
    %153 = memref.load %arg2[%c0_133, %c25] : memref<16x27xf32, #tpu.memory_space<smem>>
    %154 = vector.broadcast %153 : f32 to vector<2x14x14xf32>
    %155 = arith.mulf %51, %154 : vector<2x14x14xf32>
    %156 = arith.addf %152, %155 : vector<2x14x14xf32>
    %c0_134 = arith.constant 0 : index
    %c26 = arith.constant 26 : index
    %157 = memref.load %arg2[%c0_134, %c26] : memref<16x27xf32, #tpu.memory_space<smem>>
    %158 = vector.broadcast %157 : f32 to vector<2x14x14xf32>
    %159 = arith.mulf %53, %158 : vector<2x14x14xf32>
    %160 = arith.addf %156, %159 : vector<2x14x14xf32>
    %c0_135 = arith.constant 0 : index
    %161 = memref.load %arg3[%c0_135] : memref<16xf32, #tpu.memory_space<smem>>
    %162 = vector.broadcast %161 : f32 to vector<2x14x14xf32>
    %163 = arith.addf %160, %162 : vector<2x14x14xf32>
    %c1_136 = arith.constant 1 : index
    %c0_137 = arith.constant 0 : index
    %164 = memref.load %arg2[%c1_136, %c0_137] : memref<16x27xf32, #tpu.memory_space<smem>>
    %165 = vector.broadcast %164 : f32 to vector<2x14x14xf32>
    %166 = arith.mulf %1, %165 : vector<2x14x14xf32>
    %c1_138 = arith.constant 1 : index
    %c1_139 = arith.constant 1 : index
    %167 = memref.load %arg2[%c1_138, %c1_139] : memref<16x27xf32, #tpu.memory_space<smem>>
    %168 = vector.broadcast %167 : f32 to vector<2x14x14xf32>
    %169 = arith.mulf %3, %168 : vector<2x14x14xf32>
    %170 = arith.addf %166, %169 : vector<2x14x14xf32>
    %c1_140 = arith.constant 1 : index
    %c2_141 = arith.constant 2 : index
    %171 = memref.load %arg2[%c1_140, %c2_141] : memref<16x27xf32, #tpu.memory_space<smem>>
    %172 = vector.broadcast %171 : f32 to vector<2x14x14xf32>
    %173 = arith.mulf %5, %172 : vector<2x14x14xf32>
    %174 = arith.addf %170, %173 : vector<2x14x14xf32>
    %c1_142 = arith.constant 1 : index
    %c3_143 = arith.constant 3 : index
    %175 = memref.load %arg2[%c1_142, %c3_143] : memref<16x27xf32, #tpu.memory_space<smem>>
    %176 = vector.broadcast %175 : f32 to vector<2x14x14xf32>
    %177 = arith.mulf %7, %176 : vector<2x14x14xf32>
    %178 = arith.addf %174, %177 : vector<2x14x14xf32>
    %c1_144 = arith.constant 1 : index
    %c4_145 = arith.constant 4 : index
    %179 = memref.load %arg2[%c1_144, %c4_145] : memref<16x27xf32, #tpu.memory_space<smem>>
    %180 = vector.broadcast %179 : f32 to vector<2x14x14xf32>
    %181 = arith.mulf %9, %180 : vector<2x14x14xf32>
    %182 = arith.addf %178, %181 : vector<2x14x14xf32>
    %c1_146 = arith.constant 1 : index
    %c5_147 = arith.constant 5 : index
    %183 = memref.load %arg2[%c1_146, %c5_147] : memref<16x27xf32, #tpu.memory_space<smem>>
    %184 = vector.broadcast %183 : f32 to vector<2x14x14xf32>
    %185 = arith.mulf %11, %184 : vector<2x14x14xf32>
    %186 = arith.addf %182, %185 : vector<2x14x14xf32>
    %c1_148 = arith.constant 1 : index
    %c6_149 = arith.constant 6 : index
    %187 = memref.load %arg2[%c1_148, %c6_149] : memref<16x27xf32, #tpu.memory_space<smem>>
    %188 = vector.broadcast %187 : f32 to vector<2x14x14xf32>
    %189 = arith.mulf %13, %188 : vector<2x14x14xf32>
    %190 = arith.addf %186, %189 : vector<2x14x14xf32>
    %c1_150 = arith.constant 1 : index
    %c7_151 = arith.constant 7 : index
    %191 = memref.load %arg2[%c1_150, %c7_151] : memref<16x27xf32, #tpu.memory_space<smem>>
    %192 = vector.broadcast %191 : f32 to vector<2x14x14xf32>
    %193 = arith.mulf %15, %192 : vector<2x14x14xf32>
    %194 = arith.addf %190, %193 : vector<2x14x14xf32>
    %c1_152 = arith.constant 1 : index
    %c8_153 = arith.constant 8 : index
    %195 = memref.load %arg2[%c1_152, %c8_153] : memref<16x27xf32, #tpu.memory_space<smem>>
    %196 = vector.broadcast %195 : f32 to vector<2x14x14xf32>
    %197 = arith.mulf %17, %196 : vector<2x14x14xf32>
    %198 = arith.addf %194, %197 : vector<2x14x14xf32>
    %c1_154 = arith.constant 1 : index
    %c9_155 = arith.constant 9 : index
    %199 = memref.load %arg2[%c1_154, %c9_155] : memref<16x27xf32, #tpu.memory_space<smem>>
    %200 = vector.broadcast %199 : f32 to vector<2x14x14xf32>
    %201 = arith.mulf %19, %200 : vector<2x14x14xf32>
    %202 = arith.addf %198, %201 : vector<2x14x14xf32>
    %c1_156 = arith.constant 1 : index
    %c10_157 = arith.constant 10 : index
    %203 = memref.load %arg2[%c1_156, %c10_157] : memref<16x27xf32, #tpu.memory_space<smem>>
    %204 = vector.broadcast %203 : f32 to vector<2x14x14xf32>
    %205 = arith.mulf %21, %204 : vector<2x14x14xf32>
    %206 = arith.addf %202, %205 : vector<2x14x14xf32>
    %c1_158 = arith.constant 1 : index
    %c11_159 = arith.constant 11 : index
    %207 = memref.load %arg2[%c1_158, %c11_159] : memref<16x27xf32, #tpu.memory_space<smem>>
    %208 = vector.broadcast %207 : f32 to vector<2x14x14xf32>
    %209 = arith.mulf %23, %208 : vector<2x14x14xf32>
    %210 = arith.addf %206, %209 : vector<2x14x14xf32>
    %c1_160 = arith.constant 1 : index
    %c12_161 = arith.constant 12 : index
    %211 = memref.load %arg2[%c1_160, %c12_161] : memref<16x27xf32, #tpu.memory_space<smem>>
    %212 = vector.broadcast %211 : f32 to vector<2x14x14xf32>
    %213 = arith.mulf %25, %212 : vector<2x14x14xf32>
    %214 = arith.addf %210, %213 : vector<2x14x14xf32>
    %c1_162 = arith.constant 1 : index
    %c13_163 = arith.constant 13 : index
    %215 = memref.load %arg2[%c1_162, %c13_163] : memref<16x27xf32, #tpu.memory_space<smem>>
    %216 = vector.broadcast %215 : f32 to vector<2x14x14xf32>
    %217 = arith.mulf %27, %216 : vector<2x14x14xf32>
    %218 = arith.addf %214, %217 : vector<2x14x14xf32>
    %c1_164 = arith.constant 1 : index
    %c14_165 = arith.constant 14 : index
    %219 = memref.load %arg2[%c1_164, %c14_165] : memref<16x27xf32, #tpu.memory_space<smem>>
    %220 = vector.broadcast %219 : f32 to vector<2x14x14xf32>
    %221 = arith.mulf %29, %220 : vector<2x14x14xf32>
    %222 = arith.addf %218, %221 : vector<2x14x14xf32>
    %c1_166 = arith.constant 1 : index
    %c15_167 = arith.constant 15 : index
    %223 = memref.load %arg2[%c1_166, %c15_167] : memref<16x27xf32, #tpu.memory_space<smem>>
    %224 = vector.broadcast %223 : f32 to vector<2x14x14xf32>
    %225 = arith.mulf %31, %224 : vector<2x14x14xf32>
    %226 = arith.addf %222, %225 : vector<2x14x14xf32>
    %c1_168 = arith.constant 1 : index
    %c16_169 = arith.constant 16 : index
    %227 = memref.load %arg2[%c1_168, %c16_169] : memref<16x27xf32, #tpu.memory_space<smem>>
    %228 = vector.broadcast %227 : f32 to vector<2x14x14xf32>
    %229 = arith.mulf %33, %228 : vector<2x14x14xf32>
    %230 = arith.addf %226, %229 : vector<2x14x14xf32>
    %c1_170 = arith.constant 1 : index
    %c17_171 = arith.constant 17 : index
    %231 = memref.load %arg2[%c1_170, %c17_171] : memref<16x27xf32, #tpu.memory_space<smem>>
    %232 = vector.broadcast %231 : f32 to vector<2x14x14xf32>
    %233 = arith.mulf %35, %232 : vector<2x14x14xf32>
    %234 = arith.addf %230, %233 : vector<2x14x14xf32>
    %c1_172 = arith.constant 1 : index
    %c18_173 = arith.constant 18 : index
    %235 = memref.load %arg2[%c1_172, %c18_173] : memref<16x27xf32, #tpu.memory_space<smem>>
    %236 = vector.broadcast %235 : f32 to vector<2x14x14xf32>
    %237 = arith.mulf %37, %236 : vector<2x14x14xf32>
    %238 = arith.addf %234, %237 : vector<2x14x14xf32>
    %c1_174 = arith.constant 1 : index
    %c19_175 = arith.constant 19 : index
    %239 = memref.load %arg2[%c1_174, %c19_175] : memref<16x27xf32, #tpu.memory_space<smem>>
    %240 = vector.broadcast %239 : f32 to vector<2x14x14xf32>
    %241 = arith.mulf %39, %240 : vector<2x14x14xf32>
    %242 = arith.addf %238, %241 : vector<2x14x14xf32>
    %c1_176 = arith.constant 1 : index
    %c20_177 = arith.constant 20 : index
    %243 = memref.load %arg2[%c1_176, %c20_177] : memref<16x27xf32, #tpu.memory_space<smem>>
    %244 = vector.broadcast %243 : f32 to vector<2x14x14xf32>
    %245 = arith.mulf %41, %244 : vector<2x14x14xf32>
    %246 = arith.addf %242, %245 : vector<2x14x14xf32>
    %c1_178 = arith.constant 1 : index
    %c21_179 = arith.constant 21 : index
    %247 = memref.load %arg2[%c1_178, %c21_179] : memref<16x27xf32, #tpu.memory_space<smem>>
    %248 = vector.broadcast %247 : f32 to vector<2x14x14xf32>
    %249 = arith.mulf %43, %248 : vector<2x14x14xf32>
    %250 = arith.addf %246, %249 : vector<2x14x14xf32>
    %c1_180 = arith.constant 1 : index
    %c22_181 = arith.constant 22 : index
    %251 = memref.load %arg2[%c1_180, %c22_181] : memref<16x27xf32, #tpu.memory_space<smem>>
    %252 = vector.broadcast %251 : f32 to vector<2x14x14xf32>
    %253 = arith.mulf %45, %252 : vector<2x14x14xf32>
    %254 = arith.addf %250, %253 : vector<2x14x14xf32>
    %c1_182 = arith.constant 1 : index
    %c23_183 = arith.constant 23 : index
    %255 = memref.load %arg2[%c1_182, %c23_183] : memref<16x27xf32, #tpu.memory_space<smem>>
    %256 = vector.broadcast %255 : f32 to vector<2x14x14xf32>
    %257 = arith.mulf %47, %256 : vector<2x14x14xf32>
    %258 = arith.addf %254, %257 : vector<2x14x14xf32>
    %c1_184 = arith.constant 1 : index
    %c24_185 = arith.constant 24 : index
    %259 = memref.load %arg2[%c1_184, %c24_185] : memref<16x27xf32, #tpu.memory_space<smem>>
    %260 = vector.broadcast %259 : f32 to vector<2x14x14xf32>
    %261 = arith.mulf %49, %260 : vector<2x14x14xf32>
    %262 = arith.addf %258, %261 : vector<2x14x14xf32>
    %c1_186 = arith.constant 1 : index
    %c25_187 = arith.constant 25 : index
    %263 = memref.load %arg2[%c1_186, %c25_187] : memref<16x27xf32, #tpu.memory_space<smem>>
    %264 = vector.broadcast %263 : f32 to vector<2x14x14xf32>
    %265 = arith.mulf %51, %264 : vector<2x14x14xf32>
    %266 = arith.addf %262, %265 : vector<2x14x14xf32>
    %c1_188 = arith.constant 1 : index
    %c26_189 = arith.constant 26 : index
    %267 = memref.load %arg2[%c1_188, %c26_189] : memref<16x27xf32, #tpu.memory_space<smem>>
    %268 = vector.broadcast %267 : f32 to vector<2x14x14xf32>
    %269 = arith.mulf %53, %268 : vector<2x14x14xf32>
    %270 = arith.addf %266, %269 : vector<2x14x14xf32>
    %c1_190 = arith.constant 1 : index
    %271 = memref.load %arg3[%c1_190] : memref<16xf32, #tpu.memory_space<smem>>
    %272 = vector.broadcast %271 : f32 to vector<2x14x14xf32>
    %273 = arith.addf %270, %272 : vector<2x14x14xf32>
    %274 = arith.minimumf %163, %273 : vector<2x14x14xf32>
    %c2_191 = arith.constant 2 : index
    %c0_192 = arith.constant 0 : index
    %275 = memref.load %arg2[%c2_191, %c0_192] : memref<16x27xf32, #tpu.memory_space<smem>>
    %276 = vector.broadcast %275 : f32 to vector<2x14x14xf32>
    %277 = arith.mulf %1, %276 : vector<2x14x14xf32>
    %c2_193 = arith.constant 2 : index
    %c1_194 = arith.constant 1 : index
    %278 = memref.load %arg2[%c2_193, %c1_194] : memref<16x27xf32, #tpu.memory_space<smem>>
    %279 = vector.broadcast %278 : f32 to vector<2x14x14xf32>
    %280 = arith.mulf %3, %279 : vector<2x14x14xf32>
    %281 = arith.addf %277, %280 : vector<2x14x14xf32>
    %c2_195 = arith.constant 2 : index
    %c2_196 = arith.constant 2 : index
    %282 = memref.load %arg2[%c2_195, %c2_196] : memref<16x27xf32, #tpu.memory_space<smem>>
    %283 = vector.broadcast %282 : f32 to vector<2x14x14xf32>
    %284 = arith.mulf %5, %283 : vector<2x14x14xf32>
    %285 = arith.addf %281, %284 : vector<2x14x14xf32>
    %c2_197 = arith.constant 2 : index
    %c3_198 = arith.constant 3 : index
    %286 = memref.load %arg2[%c2_197, %c3_198] : memref<16x27xf32, #tpu.memory_space<smem>>
    %287 = vector.broadcast %286 : f32 to vector<2x14x14xf32>
    %288 = arith.mulf %7, %287 : vector<2x14x14xf32>
    %289 = arith.addf %285, %288 : vector<2x14x14xf32>
    %c2_199 = arith.constant 2 : index
    %c4_200 = arith.constant 4 : index
    %290 = memref.load %arg2[%c2_199, %c4_200] : memref<16x27xf32, #tpu.memory_space<smem>>
    %291 = vector.broadcast %290 : f32 to vector<2x14x14xf32>
    %292 = arith.mulf %9, %291 : vector<2x14x14xf32>
    %293 = arith.addf %289, %292 : vector<2x14x14xf32>
    %c2_201 = arith.constant 2 : index
    %c5_202 = arith.constant 5 : index
    %294 = memref.load %arg2[%c2_201, %c5_202] : memref<16x27xf32, #tpu.memory_space<smem>>
    %295 = vector.broadcast %294 : f32 to vector<2x14x14xf32>
    %296 = arith.mulf %11, %295 : vector<2x14x14xf32>
    %297 = arith.addf %293, %296 : vector<2x14x14xf32>
    %c2_203 = arith.constant 2 : index
    %c6_204 = arith.constant 6 : index
    %298 = memref.load %arg2[%c2_203, %c6_204] : memref<16x27xf32, #tpu.memory_space<smem>>
    %299 = vector.broadcast %298 : f32 to vector<2x14x14xf32>
    %300 = arith.mulf %13, %299 : vector<2x14x14xf32>
    %301 = arith.addf %297, %300 : vector<2x14x14xf32>
    %c2_205 = arith.constant 2 : index
    %c7_206 = arith.constant 7 : index
    %302 = memref.load %arg2[%c2_205, %c7_206] : memref<16x27xf32, #tpu.memory_space<smem>>
    %303 = vector.broadcast %302 : f32 to vector<2x14x14xf32>
    %304 = arith.mulf %15, %303 : vector<2x14x14xf32>
    %305 = arith.addf %301, %304 : vector<2x14x14xf32>
    %c2_207 = arith.constant 2 : index
    %c8_208 = arith.constant 8 : index
    %306 = memref.load %arg2[%c2_207, %c8_208] : memref<16x27xf32, #tpu.memory_space<smem>>
    %307 = vector.broadcast %306 : f32 to vector<2x14x14xf32>
    %308 = arith.mulf %17, %307 : vector<2x14x14xf32>
    %309 = arith.addf %305, %308 : vector<2x14x14xf32>
    %c2_209 = arith.constant 2 : index
    %c9_210 = arith.constant 9 : index
    %310 = memref.load %arg2[%c2_209, %c9_210] : memref<16x27xf32, #tpu.memory_space<smem>>
    %311 = vector.broadcast %310 : f32 to vector<2x14x14xf32>
    %312 = arith.mulf %19, %311 : vector<2x14x14xf32>
    %313 = arith.addf %309, %312 : vector<2x14x14xf32>
    %c2_211 = arith.constant 2 : index
    %c10_212 = arith.constant 10 : index
    %314 = memref.load %arg2[%c2_211, %c10_212] : memref<16x27xf32, #tpu.memory_space<smem>>
    %315 = vector.broadcast %314 : f32 to vector<2x14x14xf32>
    %316 = arith.mulf %21, %315 : vector<2x14x14xf32>
    %317 = arith.addf %313, %316 : vector<2x14x14xf32>
    %c2_213 = arith.constant 2 : index
    %c11_214 = arith.constant 11 : index
    %318 = memref.load %arg2[%c2_213, %c11_214] : memref<16x27xf32, #tpu.memory_space<smem>>
    %319 = vector.broadcast %318 : f32 to vector<2x14x14xf32>
    %320 = arith.mulf %23, %319 : vector<2x14x14xf32>
    %321 = arith.addf %317, %320 : vector<2x14x14xf32>
    %c2_215 = arith.constant 2 : index
    %c12_216 = arith.constant 12 : index
    %322 = memref.load %arg2[%c2_215, %c12_216] : memref<16x27xf32, #tpu.memory_space<smem>>
    %323 = vector.broadcast %322 : f32 to vector<2x14x14xf32>
    %324 = arith.mulf %25, %323 : vector<2x14x14xf32>
    %325 = arith.addf %321, %324 : vector<2x14x14xf32>
    %c2_217 = arith.constant 2 : index
    %c13_218 = arith.constant 13 : index
    %326 = memref.load %arg2[%c2_217, %c13_218] : memref<16x27xf32, #tpu.memory_space<smem>>
    %327 = vector.broadcast %326 : f32 to vector<2x14x14xf32>
    %328 = arith.mulf %27, %327 : vector<2x14x14xf32>
    %329 = arith.addf %325, %328 : vector<2x14x14xf32>
    %c2_219 = arith.constant 2 : index
    %c14_220 = arith.constant 14 : index
    %330 = memref.load %arg2[%c2_219, %c14_220] : memref<16x27xf32, #tpu.memory_space<smem>>
    %331 = vector.broadcast %330 : f32 to vector<2x14x14xf32>
    %332 = arith.mulf %29, %331 : vector<2x14x14xf32>
    %333 = arith.addf %329, %332 : vector<2x14x14xf32>
    %c2_221 = arith.constant 2 : index
    %c15_222 = arith.constant 15 : index
    %334 = memref.load %arg2[%c2_221, %c15_222] : memref<16x27xf32, #tpu.memory_space<smem>>
    %335 = vector.broadcast %334 : f32 to vector<2x14x14xf32>
    %336 = arith.mulf %31, %335 : vector<2x14x14xf32>
    %337 = arith.addf %333, %336 : vector<2x14x14xf32>
    %c2_223 = arith.constant 2 : index
    %c16_224 = arith.constant 16 : index
    %338 = memref.load %arg2[%c2_223, %c16_224] : memref<16x27xf32, #tpu.memory_space<smem>>
    %339 = vector.broadcast %338 : f32 to vector<2x14x14xf32>
    %340 = arith.mulf %33, %339 : vector<2x14x14xf32>
    %341 = arith.addf %337, %340 : vector<2x14x14xf32>
    %c2_225 = arith.constant 2 : index
    %c17_226 = arith.constant 17 : index
    %342 = memref.load %arg2[%c2_225, %c17_226] : memref<16x27xf32, #tpu.memory_space<smem>>
    %343 = vector.broadcast %342 : f32 to vector<2x14x14xf32>
    %344 = arith.mulf %35, %343 : vector<2x14x14xf32>
    %345 = arith.addf %341, %344 : vector<2x14x14xf32>
    %c2_227 = arith.constant 2 : index
    %c18_228 = arith.constant 18 : index
    %346 = memref.load %arg2[%c2_227, %c18_228] : memref<16x27xf32, #tpu.memory_space<smem>>
    %347 = vector.broadcast %346 : f32 to vector<2x14x14xf32>
    %348 = arith.mulf %37, %347 : vector<2x14x14xf32>
    %349 = arith.addf %345, %348 : vector<2x14x14xf32>
    %c2_229 = arith.constant 2 : index
    %c19_230 = arith.constant 19 : index
    %350 = memref.load %arg2[%c2_229, %c19_230] : memref<16x27xf32, #tpu.memory_space<smem>>
    %351 = vector.broadcast %350 : f32 to vector<2x14x14xf32>
    %352 = arith.mulf %39, %351 : vector<2x14x14xf32>
    %353 = arith.addf %349, %352 : vector<2x14x14xf32>
    %c2_231 = arith.constant 2 : index
    %c20_232 = arith.constant 20 : index
    %354 = memref.load %arg2[%c2_231, %c20_232] : memref<16x27xf32, #tpu.memory_space<smem>>
    %355 = vector.broadcast %354 : f32 to vector<2x14x14xf32>
    %356 = arith.mulf %41, %355 : vector<2x14x14xf32>
    %357 = arith.addf %353, %356 : vector<2x14x14xf32>
    %c2_233 = arith.constant 2 : index
    %c21_234 = arith.constant 21 : index
    %358 = memref.load %arg2[%c2_233, %c21_234] : memref<16x27xf32, #tpu.memory_space<smem>>
    %359 = vector.broadcast %358 : f32 to vector<2x14x14xf32>
    %360 = arith.mulf %43, %359 : vector<2x14x14xf32>
    %361 = arith.addf %357, %360 : vector<2x14x14xf32>
    %c2_235 = arith.constant 2 : index
    %c22_236 = arith.constant 22 : index
    %362 = memref.load %arg2[%c2_235, %c22_236] : memref<16x27xf32, #tpu.memory_space<smem>>
    %363 = vector.broadcast %362 : f32 to vector<2x14x14xf32>
    %364 = arith.mulf %45, %363 : vector<2x14x14xf32>
    %365 = arith.addf %361, %364 : vector<2x14x14xf32>
    %c2_237 = arith.constant 2 : index
    %c23_238 = arith.constant 23 : index
    %366 = memref.load %arg2[%c2_237, %c23_238] : memref<16x27xf32, #tpu.memory_space<smem>>
    %367 = vector.broadcast %366 : f32 to vector<2x14x14xf32>
    %368 = arith.mulf %47, %367 : vector<2x14x14xf32>
    %369 = arith.addf %365, %368 : vector<2x14x14xf32>
    %c2_239 = arith.constant 2 : index
    %c24_240 = arith.constant 24 : index
    %370 = memref.load %arg2[%c2_239, %c24_240] : memref<16x27xf32, #tpu.memory_space<smem>>
    %371 = vector.broadcast %370 : f32 to vector<2x14x14xf32>
    %372 = arith.mulf %49, %371 : vector<2x14x14xf32>
    %373 = arith.addf %369, %372 : vector<2x14x14xf32>
    %c2_241 = arith.constant 2 : index
    %c25_242 = arith.constant 25 : index
    %374 = memref.load %arg2[%c2_241, %c25_242] : memref<16x27xf32, #tpu.memory_space<smem>>
    %375 = vector.broadcast %374 : f32 to vector<2x14x14xf32>
    %376 = arith.mulf %51, %375 : vector<2x14x14xf32>
    %377 = arith.addf %373, %376 : vector<2x14x14xf32>
    %c2_243 = arith.constant 2 : index
    %c26_244 = arith.constant 26 : index
    %378 = memref.load %arg2[%c2_243, %c26_244] : memref<16x27xf32, #tpu.memory_space<smem>>
    %379 = vector.broadcast %378 : f32 to vector<2x14x14xf32>
    %380 = arith.mulf %53, %379 : vector<2x14x14xf32>
    %381 = arith.addf %377, %380 : vector<2x14x14xf32>
    %c2_245 = arith.constant 2 : index
    %382 = memref.load %arg3[%c2_245] : memref<16xf32, #tpu.memory_space<smem>>
    %383 = vector.broadcast %382 : f32 to vector<2x14x14xf32>
    %384 = arith.addf %381, %383 : vector<2x14x14xf32>
    %385 = arith.minimumf %274, %384 : vector<2x14x14xf32>
    %c3_246 = arith.constant 3 : index
    %c0_247 = arith.constant 0 : index
    %386 = memref.load %arg2[%c3_246, %c0_247] : memref<16x27xf32, #tpu.memory_space<smem>>
    %387 = vector.broadcast %386 : f32 to vector<2x14x14xf32>
    %388 = arith.mulf %1, %387 : vector<2x14x14xf32>
    %c3_248 = arith.constant 3 : index
    %c1_249 = arith.constant 1 : index
    %389 = memref.load %arg2[%c3_248, %c1_249] : memref<16x27xf32, #tpu.memory_space<smem>>
    %390 = vector.broadcast %389 : f32 to vector<2x14x14xf32>
    %391 = arith.mulf %3, %390 : vector<2x14x14xf32>
    %392 = arith.addf %388, %391 : vector<2x14x14xf32>
    %c3_250 = arith.constant 3 : index
    %c2_251 = arith.constant 2 : index
    %393 = memref.load %arg2[%c3_250, %c2_251] : memref<16x27xf32, #tpu.memory_space<smem>>
    %394 = vector.broadcast %393 : f32 to vector<2x14x14xf32>
    %395 = arith.mulf %5, %394 : vector<2x14x14xf32>
    %396 = arith.addf %392, %395 : vector<2x14x14xf32>
    %c3_252 = arith.constant 3 : index
    %c3_253 = arith.constant 3 : index
    %397 = memref.load %arg2[%c3_252, %c3_253] : memref<16x27xf32, #tpu.memory_space<smem>>
    %398 = vector.broadcast %397 : f32 to vector<2x14x14xf32>
    %399 = arith.mulf %7, %398 : vector<2x14x14xf32>
    %400 = arith.addf %396, %399 : vector<2x14x14xf32>
    %c3_254 = arith.constant 3 : index
    %c4_255 = arith.constant 4 : index
    %401 = memref.load %arg2[%c3_254, %c4_255] : memref<16x27xf32, #tpu.memory_space<smem>>
    %402 = vector.broadcast %401 : f32 to vector<2x14x14xf32>
    %403 = arith.mulf %9, %402 : vector<2x14x14xf32>
    %404 = arith.addf %400, %403 : vector<2x14x14xf32>
    %c3_256 = arith.constant 3 : index
    %c5_257 = arith.constant 5 : index
    %405 = memref.load %arg2[%c3_256, %c5_257] : memref<16x27xf32, #tpu.memory_space<smem>>
    %406 = vector.broadcast %405 : f32 to vector<2x14x14xf32>
    %407 = arith.mulf %11, %406 : vector<2x14x14xf32>
    %408 = arith.addf %404, %407 : vector<2x14x14xf32>
    %c3_258 = arith.constant 3 : index
    %c6_259 = arith.constant 6 : index
    %409 = memref.load %arg2[%c3_258, %c6_259] : memref<16x27xf32, #tpu.memory_space<smem>>
    %410 = vector.broadcast %409 : f32 to vector<2x14x14xf32>
    %411 = arith.mulf %13, %410 : vector<2x14x14xf32>
    %412 = arith.addf %408, %411 : vector<2x14x14xf32>
    %c3_260 = arith.constant 3 : index
    %c7_261 = arith.constant 7 : index
    %413 = memref.load %arg2[%c3_260, %c7_261] : memref<16x27xf32, #tpu.memory_space<smem>>
    %414 = vector.broadcast %413 : f32 to vector<2x14x14xf32>
    %415 = arith.mulf %15, %414 : vector<2x14x14xf32>
    %416 = arith.addf %412, %415 : vector<2x14x14xf32>
    %c3_262 = arith.constant 3 : index
    %c8_263 = arith.constant 8 : index
    %417 = memref.load %arg2[%c3_262, %c8_263] : memref<16x27xf32, #tpu.memory_space<smem>>
    %418 = vector.broadcast %417 : f32 to vector<2x14x14xf32>
    %419 = arith.mulf %17, %418 : vector<2x14x14xf32>
    %420 = arith.addf %416, %419 : vector<2x14x14xf32>
    %c3_264 = arith.constant 3 : index
    %c9_265 = arith.constant 9 : index
    %421 = memref.load %arg2[%c3_264, %c9_265] : memref<16x27xf32, #tpu.memory_space<smem>>
    %422 = vector.broadcast %421 : f32 to vector<2x14x14xf32>
    %423 = arith.mulf %19, %422 : vector<2x14x14xf32>
    %424 = arith.addf %420, %423 : vector<2x14x14xf32>
    %c3_266 = arith.constant 3 : index
    %c10_267 = arith.constant 10 : index
    %425 = memref.load %arg2[%c3_266, %c10_267] : memref<16x27xf32, #tpu.memory_space<smem>>
    %426 = vector.broadcast %425 : f32 to vector<2x14x14xf32>
    %427 = arith.mulf %21, %426 : vector<2x14x14xf32>
    %428 = arith.addf %424, %427 : vector<2x14x14xf32>
    %c3_268 = arith.constant 3 : index
    %c11_269 = arith.constant 11 : index
    %429 = memref.load %arg2[%c3_268, %c11_269] : memref<16x27xf32, #tpu.memory_space<smem>>
    %430 = vector.broadcast %429 : f32 to vector<2x14x14xf32>
    %431 = arith.mulf %23, %430 : vector<2x14x14xf32>
    %432 = arith.addf %428, %431 : vector<2x14x14xf32>
    %c3_270 = arith.constant 3 : index
    %c12_271 = arith.constant 12 : index
    %433 = memref.load %arg2[%c3_270, %c12_271] : memref<16x27xf32, #tpu.memory_space<smem>>
    %434 = vector.broadcast %433 : f32 to vector<2x14x14xf32>
    %435 = arith.mulf %25, %434 : vector<2x14x14xf32>
    %436 = arith.addf %432, %435 : vector<2x14x14xf32>
    %c3_272 = arith.constant 3 : index
    %c13_273 = arith.constant 13 : index
    %437 = memref.load %arg2[%c3_272, %c13_273] : memref<16x27xf32, #tpu.memory_space<smem>>
    %438 = vector.broadcast %437 : f32 to vector<2x14x14xf32>
    %439 = arith.mulf %27, %438 : vector<2x14x14xf32>
    %440 = arith.addf %436, %439 : vector<2x14x14xf32>
    %c3_274 = arith.constant 3 : index
    %c14_275 = arith.constant 14 : index
    %441 = memref.load %arg2[%c3_274, %c14_275] : memref<16x27xf32, #tpu.memory_space<smem>>
    %442 = vector.broadcast %441 : f32 to vector<2x14x14xf32>
    %443 = arith.mulf %29, %442 : vector<2x14x14xf32>
    %444 = arith.addf %440, %443 : vector<2x14x14xf32>
    %c3_276 = arith.constant 3 : index
    %c15_277 = arith.constant 15 : index
    %445 = memref.load %arg2[%c3_276, %c15_277] : memref<16x27xf32, #tpu.memory_space<smem>>
    %446 = vector.broadcast %445 : f32 to vector<2x14x14xf32>
    %447 = arith.mulf %31, %446 : vector<2x14x14xf32>
    %448 = arith.addf %444, %447 : vector<2x14x14xf32>
    %c3_278 = arith.constant 3 : index
    %c16_279 = arith.constant 16 : index
    %449 = memref.load %arg2[%c3_278, %c16_279] : memref<16x27xf32, #tpu.memory_space<smem>>
    %450 = vector.broadcast %449 : f32 to vector<2x14x14xf32>
    %451 = arith.mulf %33, %450 : vector<2x14x14xf32>
    %452 = arith.addf %448, %451 : vector<2x14x14xf32>
    %c3_280 = arith.constant 3 : index
    %c17_281 = arith.constant 17 : index
    %453 = memref.load %arg2[%c3_280, %c17_281] : memref<16x27xf32, #tpu.memory_space<smem>>
    %454 = vector.broadcast %453 : f32 to vector<2x14x14xf32>
    %455 = arith.mulf %35, %454 : vector<2x14x14xf32>
    %456 = arith.addf %452, %455 : vector<2x14x14xf32>
    %c3_282 = arith.constant 3 : index
    %c18_283 = arith.constant 18 : index
    %457 = memref.load %arg2[%c3_282, %c18_283] : memref<16x27xf32, #tpu.memory_space<smem>>
    %458 = vector.broadcast %457 : f32 to vector<2x14x14xf32>
    %459 = arith.mulf %37, %458 : vector<2x14x14xf32>
    %460 = arith.addf %456, %459 : vector<2x14x14xf32>
    %c3_284 = arith.constant 3 : index
    %c19_285 = arith.constant 19 : index
    %461 = memref.load %arg2[%c3_284, %c19_285] : memref<16x27xf32, #tpu.memory_space<smem>>
    %462 = vector.broadcast %461 : f32 to vector<2x14x14xf32>
    %463 = arith.mulf %39, %462 : vector<2x14x14xf32>
    %464 = arith.addf %460, %463 : vector<2x14x14xf32>
    %c3_286 = arith.constant 3 : index
    %c20_287 = arith.constant 20 : index
    %465 = memref.load %arg2[%c3_286, %c20_287] : memref<16x27xf32, #tpu.memory_space<smem>>
    %466 = vector.broadcast %465 : f32 to vector<2x14x14xf32>
    %467 = arith.mulf %41, %466 : vector<2x14x14xf32>
    %468 = arith.addf %464, %467 : vector<2x14x14xf32>
    %c3_288 = arith.constant 3 : index
    %c21_289 = arith.constant 21 : index
    %469 = memref.load %arg2[%c3_288, %c21_289] : memref<16x27xf32, #tpu.memory_space<smem>>
    %470 = vector.broadcast %469 : f32 to vector<2x14x14xf32>
    %471 = arith.mulf %43, %470 : vector<2x14x14xf32>
    %472 = arith.addf %468, %471 : vector<2x14x14xf32>
    %c3_290 = arith.constant 3 : index
    %c22_291 = arith.constant 22 : index
    %473 = memref.load %arg2[%c3_290, %c22_291] : memref<16x27xf32, #tpu.memory_space<smem>>
    %474 = vector.broadcast %473 : f32 to vector<2x14x14xf32>
    %475 = arith.mulf %45, %474 : vector<2x14x14xf32>
    %476 = arith.addf %472, %475 : vector<2x14x14xf32>
    %c3_292 = arith.constant 3 : index
    %c23_293 = arith.constant 23 : index
    %477 = memref.load %arg2[%c3_292, %c23_293] : memref<16x27xf32, #tpu.memory_space<smem>>
    %478 = vector.broadcast %477 : f32 to vector<2x14x14xf32>
    %479 = arith.mulf %47, %478 : vector<2x14x14xf32>
    %480 = arith.addf %476, %479 : vector<2x14x14xf32>
    %c3_294 = arith.constant 3 : index
    %c24_295 = arith.constant 24 : index
    %481 = memref.load %arg2[%c3_294, %c24_295] : memref<16x27xf32, #tpu.memory_space<smem>>
    %482 = vector.broadcast %481 : f32 to vector<2x14x14xf32>
    %483 = arith.mulf %49, %482 : vector<2x14x14xf32>
    %484 = arith.addf %480, %483 : vector<2x14x14xf32>
    %c3_296 = arith.constant 3 : index
    %c25_297 = arith.constant 25 : index
    %485 = memref.load %arg2[%c3_296, %c25_297] : memref<16x27xf32, #tpu.memory_space<smem>>
    %486 = vector.broadcast %485 : f32 to vector<2x14x14xf32>
    %487 = arith.mulf %51, %486 : vector<2x14x14xf32>
    %488 = arith.addf %484, %487 : vector<2x14x14xf32>
    %c3_298 = arith.constant 3 : index
    %c26_299 = arith.constant 26 : index
    %489 = memref.load %arg2[%c3_298, %c26_299] : memref<16x27xf32, #tpu.memory_space<smem>>
    %490 = vector.broadcast %489 : f32 to vector<2x14x14xf32>
    %491 = arith.mulf %53, %490 : vector<2x14x14xf32>
    %492 = arith.addf %488, %491 : vector<2x14x14xf32>
    %c3_300 = arith.constant 3 : index
    %493 = memref.load %arg3[%c3_300] : memref<16xf32, #tpu.memory_space<smem>>
    %494 = vector.broadcast %493 : f32 to vector<2x14x14xf32>
    %495 = arith.addf %492, %494 : vector<2x14x14xf32>
    %496 = arith.minimumf %385, %495 : vector<2x14x14xf32>
    %c4_301 = arith.constant 4 : index
    %c0_302 = arith.constant 0 : index
    %497 = memref.load %arg2[%c4_301, %c0_302] : memref<16x27xf32, #tpu.memory_space<smem>>
    %498 = vector.broadcast %497 : f32 to vector<2x14x14xf32>
    %499 = arith.mulf %1, %498 : vector<2x14x14xf32>
    %c4_303 = arith.constant 4 : index
    %c1_304 = arith.constant 1 : index
    %500 = memref.load %arg2[%c4_303, %c1_304] : memref<16x27xf32, #tpu.memory_space<smem>>
    %501 = vector.broadcast %500 : f32 to vector<2x14x14xf32>
    %502 = arith.mulf %3, %501 : vector<2x14x14xf32>
    %503 = arith.addf %499, %502 : vector<2x14x14xf32>
    %c4_305 = arith.constant 4 : index
    %c2_306 = arith.constant 2 : index
    %504 = memref.load %arg2[%c4_305, %c2_306] : memref<16x27xf32, #tpu.memory_space<smem>>
    %505 = vector.broadcast %504 : f32 to vector<2x14x14xf32>
    %506 = arith.mulf %5, %505 : vector<2x14x14xf32>
    %507 = arith.addf %503, %506 : vector<2x14x14xf32>
    %c4_307 = arith.constant 4 : index
    %c3_308 = arith.constant 3 : index
    %508 = memref.load %arg2[%c4_307, %c3_308] : memref<16x27xf32, #tpu.memory_space<smem>>
    %509 = vector.broadcast %508 : f32 to vector<2x14x14xf32>
    %510 = arith.mulf %7, %509 : vector<2x14x14xf32>
    %511 = arith.addf %507, %510 : vector<2x14x14xf32>
    %c4_309 = arith.constant 4 : index
    %c4_310 = arith.constant 4 : index
    %512 = memref.load %arg2[%c4_309, %c4_310] : memref<16x27xf32, #tpu.memory_space<smem>>
    %513 = vector.broadcast %512 : f32 to vector<2x14x14xf32>
    %514 = arith.mulf %9, %513 : vector<2x14x14xf32>
    %515 = arith.addf %511, %514 : vector<2x14x14xf32>
    %c4_311 = arith.constant 4 : index
    %c5_312 = arith.constant 5 : index
    %516 = memref.load %arg2[%c4_311, %c5_312] : memref<16x27xf32, #tpu.memory_space<smem>>
    %517 = vector.broadcast %516 : f32 to vector<2x14x14xf32>
    %518 = arith.mulf %11, %517 : vector<2x14x14xf32>
    %519 = arith.addf %515, %518 : vector<2x14x14xf32>
    %c4_313 = arith.constant 4 : index
    %c6_314 = arith.constant 6 : index
    %520 = memref.load %arg2[%c4_313, %c6_314] : memref<16x27xf32, #tpu.memory_space<smem>>
    %521 = vector.broadcast %520 : f32 to vector<2x14x14xf32>
    %522 = arith.mulf %13, %521 : vector<2x14x14xf32>
    %523 = arith.addf %519, %522 : vector<2x14x14xf32>
    %c4_315 = arith.constant 4 : index
    %c7_316 = arith.constant 7 : index
    %524 = memref.load %arg2[%c4_315, %c7_316] : memref<16x27xf32, #tpu.memory_space<smem>>
    %525 = vector.broadcast %524 : f32 to vector<2x14x14xf32>
    %526 = arith.mulf %15, %525 : vector<2x14x14xf32>
    %527 = arith.addf %523, %526 : vector<2x14x14xf32>
    %c4_317 = arith.constant 4 : index
    %c8_318 = arith.constant 8 : index
    %528 = memref.load %arg2[%c4_317, %c8_318] : memref<16x27xf32, #tpu.memory_space<smem>>
    %529 = vector.broadcast %528 : f32 to vector<2x14x14xf32>
    %530 = arith.mulf %17, %529 : vector<2x14x14xf32>
    %531 = arith.addf %527, %530 : vector<2x14x14xf32>
    %c4_319 = arith.constant 4 : index
    %c9_320 = arith.constant 9 : index
    %532 = memref.load %arg2[%c4_319, %c9_320] : memref<16x27xf32, #tpu.memory_space<smem>>
    %533 = vector.broadcast %532 : f32 to vector<2x14x14xf32>
    %534 = arith.mulf %19, %533 : vector<2x14x14xf32>
    %535 = arith.addf %531, %534 : vector<2x14x14xf32>
    %c4_321 = arith.constant 4 : index
    %c10_322 = arith.constant 10 : index
    %536 = memref.load %arg2[%c4_321, %c10_322] : memref<16x27xf32, #tpu.memory_space<smem>>
    %537 = vector.broadcast %536 : f32 to vector<2x14x14xf32>
    %538 = arith.mulf %21, %537 : vector<2x14x14xf32>
    %539 = arith.addf %535, %538 : vector<2x14x14xf32>
    %c4_323 = arith.constant 4 : index
    %c11_324 = arith.constant 11 : index
    %540 = memref.load %arg2[%c4_323, %c11_324] : memref<16x27xf32, #tpu.memory_space<smem>>
    %541 = vector.broadcast %540 : f32 to vector<2x14x14xf32>
    %542 = arith.mulf %23, %541 : vector<2x14x14xf32>
    %543 = arith.addf %539, %542 : vector<2x14x14xf32>
    %c4_325 = arith.constant 4 : index
    %c12_326 = arith.constant 12 : index
    %544 = memref.load %arg2[%c4_325, %c12_326] : memref<16x27xf32, #tpu.memory_space<smem>>
    %545 = vector.broadcast %544 : f32 to vector<2x14x14xf32>
    %546 = arith.mulf %25, %545 : vector<2x14x14xf32>
    %547 = arith.addf %543, %546 : vector<2x14x14xf32>
    %c4_327 = arith.constant 4 : index
    %c13_328 = arith.constant 13 : index
    %548 = memref.load %arg2[%c4_327, %c13_328] : memref<16x27xf32, #tpu.memory_space<smem>>
    %549 = vector.broadcast %548 : f32 to vector<2x14x14xf32>
    %550 = arith.mulf %27, %549 : vector<2x14x14xf32>
    %551 = arith.addf %547, %550 : vector<2x14x14xf32>
    %c4_329 = arith.constant 4 : index
    %c14_330 = arith.constant 14 : index
    %552 = memref.load %arg2[%c4_329, %c14_330] : memref<16x27xf32, #tpu.memory_space<smem>>
    %553 = vector.broadcast %552 : f32 to vector<2x14x14xf32>
    %554 = arith.mulf %29, %553 : vector<2x14x14xf32>
    %555 = arith.addf %551, %554 : vector<2x14x14xf32>
    %c4_331 = arith.constant 4 : index
    %c15_332 = arith.constant 15 : index
    %556 = memref.load %arg2[%c4_331, %c15_332] : memref<16x27xf32, #tpu.memory_space<smem>>
    %557 = vector.broadcast %556 : f32 to vector<2x14x14xf32>
    %558 = arith.mulf %31, %557 : vector<2x14x14xf32>
    %559 = arith.addf %555, %558 : vector<2x14x14xf32>
    %c4_333 = arith.constant 4 : index
    %c16_334 = arith.constant 16 : index
    %560 = memref.load %arg2[%c4_333, %c16_334] : memref<16x27xf32, #tpu.memory_space<smem>>
    %561 = vector.broadcast %560 : f32 to vector<2x14x14xf32>
    %562 = arith.mulf %33, %561 : vector<2x14x14xf32>
    %563 = arith.addf %559, %562 : vector<2x14x14xf32>
    %c4_335 = arith.constant 4 : index
    %c17_336 = arith.constant 17 : index
    %564 = memref.load %arg2[%c4_335, %c17_336] : memref<16x27xf32, #tpu.memory_space<smem>>
    %565 = vector.broadcast %564 : f32 to vector<2x14x14xf32>
    %566 = arith.mulf %35, %565 : vector<2x14x14xf32>
    %567 = arith.addf %563, %566 : vector<2x14x14xf32>
    %c4_337 = arith.constant 4 : index
    %c18_338 = arith.constant 18 : index
    %568 = memref.load %arg2[%c4_337, %c18_338] : memref<16x27xf32, #tpu.memory_space<smem>>
    %569 = vector.broadcast %568 : f32 to vector<2x14x14xf32>
    %570 = arith.mulf %37, %569 : vector<2x14x14xf32>
    %571 = arith.addf %567, %570 : vector<2x14x14xf32>
    %c4_339 = arith.constant 4 : index
    %c19_340 = arith.constant 19 : index
    %572 = memref.load %arg2[%c4_339, %c19_340] : memref<16x27xf32, #tpu.memory_space<smem>>
    %573 = vector.broadcast %572 : f32 to vector<2x14x14xf32>
    %574 = arith.mulf %39, %573 : vector<2x14x14xf32>
    %575 = arith.addf %571, %574 : vector<2x14x14xf32>
    %c4_341 = arith.constant 4 : index
    %c20_342 = arith.constant 20 : index
    %576 = memref.load %arg2[%c4_341, %c20_342] : memref<16x27xf32, #tpu.memory_space<smem>>
    %577 = vector.broadcast %576 : f32 to vector<2x14x14xf32>
    %578 = arith.mulf %41, %577 : vector<2x14x14xf32>
    %579 = arith.addf %575, %578 : vector<2x14x14xf32>
    %c4_343 = arith.constant 4 : index
    %c21_344 = arith.constant 21 : index
    %580 = memref.load %arg2[%c4_343, %c21_344] : memref<16x27xf32, #tpu.memory_space<smem>>
    %581 = vector.broadcast %580 : f32 to vector<2x14x14xf32>
    %582 = arith.mulf %43, %581 : vector<2x14x14xf32>
    %583 = arith.addf %579, %582 : vector<2x14x14xf32>
    %c4_345 = arith.constant 4 : index
    %c22_346 = arith.constant 22 : index
    %584 = memref.load %arg2[%c4_345, %c22_346] : memref<16x27xf32, #tpu.memory_space<smem>>
    %585 = vector.broadcast %584 : f32 to vector<2x14x14xf32>
    %586 = arith.mulf %45, %585 : vector<2x14x14xf32>
    %587 = arith.addf %583, %586 : vector<2x14x14xf32>
    %c4_347 = arith.constant 4 : index
    %c23_348 = arith.constant 23 : index
    %588 = memref.load %arg2[%c4_347, %c23_348] : memref<16x27xf32, #tpu.memory_space<smem>>
    %589 = vector.broadcast %588 : f32 to vector<2x14x14xf32>
    %590 = arith.mulf %47, %589 : vector<2x14x14xf32>
    %591 = arith.addf %587, %590 : vector<2x14x14xf32>
    %c4_349 = arith.constant 4 : index
    %c24_350 = arith.constant 24 : index
    %592 = memref.load %arg2[%c4_349, %c24_350] : memref<16x27xf32, #tpu.memory_space<smem>>
    %593 = vector.broadcast %592 : f32 to vector<2x14x14xf32>
    %594 = arith.mulf %49, %593 : vector<2x14x14xf32>
    %595 = arith.addf %591, %594 : vector<2x14x14xf32>
    %c4_351 = arith.constant 4 : index
    %c25_352 = arith.constant 25 : index
    %596 = memref.load %arg2[%c4_351, %c25_352] : memref<16x27xf32, #tpu.memory_space<smem>>
    %597 = vector.broadcast %596 : f32 to vector<2x14x14xf32>
    %598 = arith.mulf %51, %597 : vector<2x14x14xf32>
    %599 = arith.addf %595, %598 : vector<2x14x14xf32>
    %c4_353 = arith.constant 4 : index
    %c26_354 = arith.constant 26 : index
    %600 = memref.load %arg2[%c4_353, %c26_354] : memref<16x27xf32, #tpu.memory_space<smem>>
    %601 = vector.broadcast %600 : f32 to vector<2x14x14xf32>
    %602 = arith.mulf %53, %601 : vector<2x14x14xf32>
    %603 = arith.addf %599, %602 : vector<2x14x14xf32>
    %c4_355 = arith.constant 4 : index
    %604 = memref.load %arg3[%c4_355] : memref<16xf32, #tpu.memory_space<smem>>
    %605 = vector.broadcast %604 : f32 to vector<2x14x14xf32>
    %606 = arith.addf %603, %605 : vector<2x14x14xf32>
    %607 = arith.minimumf %496, %606 : vector<2x14x14xf32>
    %c5_356 = arith.constant 5 : index
    %c0_357 = arith.constant 0 : index
    %608 = memref.load %arg2[%c5_356, %c0_357] : memref<16x27xf32, #tpu.memory_space<smem>>
    %609 = vector.broadcast %608 : f32 to vector<2x14x14xf32>
    %610 = arith.mulf %1, %609 : vector<2x14x14xf32>
    %c5_358 = arith.constant 5 : index
    %c1_359 = arith.constant 1 : index
    %611 = memref.load %arg2[%c5_358, %c1_359] : memref<16x27xf32, #tpu.memory_space<smem>>
    %612 = vector.broadcast %611 : f32 to vector<2x14x14xf32>
    %613 = arith.mulf %3, %612 : vector<2x14x14xf32>
    %614 = arith.addf %610, %613 : vector<2x14x14xf32>
    %c5_360 = arith.constant 5 : index
    %c2_361 = arith.constant 2 : index
    %615 = memref.load %arg2[%c5_360, %c2_361] : memref<16x27xf32, #tpu.memory_space<smem>>
    %616 = vector.broadcast %615 : f32 to vector<2x14x14xf32>
    %617 = arith.mulf %5, %616 : vector<2x14x14xf32>
    %618 = arith.addf %614, %617 : vector<2x14x14xf32>
    %c5_362 = arith.constant 5 : index
    %c3_363 = arith.constant 3 : index
    %619 = memref.load %arg2[%c5_362, %c3_363] : memref<16x27xf32, #tpu.memory_space<smem>>
    %620 = vector.broadcast %619 : f32 to vector<2x14x14xf32>
    %621 = arith.mulf %7, %620 : vector<2x14x14xf32>
    %622 = arith.addf %618, %621 : vector<2x14x14xf32>
    %c5_364 = arith.constant 5 : index
    %c4_365 = arith.constant 4 : index
    %623 = memref.load %arg2[%c5_364, %c4_365] : memref<16x27xf32, #tpu.memory_space<smem>>
    %624 = vector.broadcast %623 : f32 to vector<2x14x14xf32>
    %625 = arith.mulf %9, %624 : vector<2x14x14xf32>
    %626 = arith.addf %622, %625 : vector<2x14x14xf32>
    %c5_366 = arith.constant 5 : index
    %c5_367 = arith.constant 5 : index
    %627 = memref.load %arg2[%c5_366, %c5_367] : memref<16x27xf32, #tpu.memory_space<smem>>
    %628 = vector.broadcast %627 : f32 to vector<2x14x14xf32>
    %629 = arith.mulf %11, %628 : vector<2x14x14xf32>
    %630 = arith.addf %626, %629 : vector<2x14x14xf32>
    %c5_368 = arith.constant 5 : index
    %c6_369 = arith.constant 6 : index
    %631 = memref.load %arg2[%c5_368, %c6_369] : memref<16x27xf32, #tpu.memory_space<smem>>
    %632 = vector.broadcast %631 : f32 to vector<2x14x14xf32>
    %633 = arith.mulf %13, %632 : vector<2x14x14xf32>
    %634 = arith.addf %630, %633 : vector<2x14x14xf32>
    %c5_370 = arith.constant 5 : index
    %c7_371 = arith.constant 7 : index
    %635 = memref.load %arg2[%c5_370, %c7_371] : memref<16x27xf32, #tpu.memory_space<smem>>
    %636 = vector.broadcast %635 : f32 to vector<2x14x14xf32>
    %637 = arith.mulf %15, %636 : vector<2x14x14xf32>
    %638 = arith.addf %634, %637 : vector<2x14x14xf32>
    %c5_372 = arith.constant 5 : index
    %c8_373 = arith.constant 8 : index
    %639 = memref.load %arg2[%c5_372, %c8_373] : memref<16x27xf32, #tpu.memory_space<smem>>
    %640 = vector.broadcast %639 : f32 to vector<2x14x14xf32>
    %641 = arith.mulf %17, %640 : vector<2x14x14xf32>
    %642 = arith.addf %638, %641 : vector<2x14x14xf32>
    %c5_374 = arith.constant 5 : index
    %c9_375 = arith.constant 9 : index
    %643 = memref.load %arg2[%c5_374, %c9_375] : memref<16x27xf32, #tpu.memory_space<smem>>
    %644 = vector.broadcast %643 : f32 to vector<2x14x14xf32>
    %645 = arith.mulf %19, %644 : vector<2x14x14xf32>
    %646 = arith.addf %642, %645 : vector<2x14x14xf32>
    %c5_376 = arith.constant 5 : index
    %c10_377 = arith.constant 10 : index
    %647 = memref.load %arg2[%c5_376, %c10_377] : memref<16x27xf32, #tpu.memory_space<smem>>
    %648 = vector.broadcast %647 : f32 to vector<2x14x14xf32>
    %649 = arith.mulf %21, %648 : vector<2x14x14xf32>
    %650 = arith.addf %646, %649 : vector<2x14x14xf32>
    %c5_378 = arith.constant 5 : index
    %c11_379 = arith.constant 11 : index
    %651 = memref.load %arg2[%c5_378, %c11_379] : memref<16x27xf32, #tpu.memory_space<smem>>
    %652 = vector.broadcast %651 : f32 to vector<2x14x14xf32>
    %653 = arith.mulf %23, %652 : vector<2x14x14xf32>
    %654 = arith.addf %650, %653 : vector<2x14x14xf32>
    %c5_380 = arith.constant 5 : index
    %c12_381 = arith.constant 12 : index
    %655 = memref.load %arg2[%c5_380, %c12_381] : memref<16x27xf32, #tpu.memory_space<smem>>
    %656 = vector.broadcast %655 : f32 to vector<2x14x14xf32>
    %657 = arith.mulf %25, %656 : vector<2x14x14xf32>
    %658 = arith.addf %654, %657 : vector<2x14x14xf32>
    %c5_382 = arith.constant 5 : index
    %c13_383 = arith.constant 13 : index
    %659 = memref.load %arg2[%c5_382, %c13_383] : memref<16x27xf32, #tpu.memory_space<smem>>
    %660 = vector.broadcast %659 : f32 to vector<2x14x14xf32>
    %661 = arith.mulf %27, %660 : vector<2x14x14xf32>
    %662 = arith.addf %658, %661 : vector<2x14x14xf32>
    %c5_384 = arith.constant 5 : index
    %c14_385 = arith.constant 14 : index
    %663 = memref.load %arg2[%c5_384, %c14_385] : memref<16x27xf32, #tpu.memory_space<smem>>
    %664 = vector.broadcast %663 : f32 to vector<2x14x14xf32>
    %665 = arith.mulf %29, %664 : vector<2x14x14xf32>
    %666 = arith.addf %662, %665 : vector<2x14x14xf32>
    %c5_386 = arith.constant 5 : index
    %c15_387 = arith.constant 15 : index
    %667 = memref.load %arg2[%c5_386, %c15_387] : memref<16x27xf32, #tpu.memory_space<smem>>
    %668 = vector.broadcast %667 : f32 to vector<2x14x14xf32>
    %669 = arith.mulf %31, %668 : vector<2x14x14xf32>
    %670 = arith.addf %666, %669 : vector<2x14x14xf32>
    %c5_388 = arith.constant 5 : index
    %c16_389 = arith.constant 16 : index
    %671 = memref.load %arg2[%c5_388, %c16_389] : memref<16x27xf32, #tpu.memory_space<smem>>
    %672 = vector.broadcast %671 : f32 to vector<2x14x14xf32>
    %673 = arith.mulf %33, %672 : vector<2x14x14xf32>
    %674 = arith.addf %670, %673 : vector<2x14x14xf32>
    %c5_390 = arith.constant 5 : index
    %c17_391 = arith.constant 17 : index
    %675 = memref.load %arg2[%c5_390, %c17_391] : memref<16x27xf32, #tpu.memory_space<smem>>
    %676 = vector.broadcast %675 : f32 to vector<2x14x14xf32>
    %677 = arith.mulf %35, %676 : vector<2x14x14xf32>
    %678 = arith.addf %674, %677 : vector<2x14x14xf32>
    %c5_392 = arith.constant 5 : index
    %c18_393 = arith.constant 18 : index
    %679 = memref.load %arg2[%c5_392, %c18_393] : memref<16x27xf32, #tpu.memory_space<smem>>
    %680 = vector.broadcast %679 : f32 to vector<2x14x14xf32>
    %681 = arith.mulf %37, %680 : vector<2x14x14xf32>
    %682 = arith.addf %678, %681 : vector<2x14x14xf32>
    %c5_394 = arith.constant 5 : index
    %c19_395 = arith.constant 19 : index
    %683 = memref.load %arg2[%c5_394, %c19_395] : memref<16x27xf32, #tpu.memory_space<smem>>
    %684 = vector.broadcast %683 : f32 to vector<2x14x14xf32>
    %685 = arith.mulf %39, %684 : vector<2x14x14xf32>
    %686 = arith.addf %682, %685 : vector<2x14x14xf32>
    %c5_396 = arith.constant 5 : index
    %c20_397 = arith.constant 20 : index
    %687 = memref.load %arg2[%c5_396, %c20_397] : memref<16x27xf32, #tpu.memory_space<smem>>
    %688 = vector.broadcast %687 : f32 to vector<2x14x14xf32>
    %689 = arith.mulf %41, %688 : vector<2x14x14xf32>
    %690 = arith.addf %686, %689 : vector<2x14x14xf32>
    %c5_398 = arith.constant 5 : index
    %c21_399 = arith.constant 21 : index
    %691 = memref.load %arg2[%c5_398, %c21_399] : memref<16x27xf32, #tpu.memory_space<smem>>
    %692 = vector.broadcast %691 : f32 to vector<2x14x14xf32>
    %693 = arith.mulf %43, %692 : vector<2x14x14xf32>
    %694 = arith.addf %690, %693 : vector<2x14x14xf32>
    %c5_400 = arith.constant 5 : index
    %c22_401 = arith.constant 22 : index
    %695 = memref.load %arg2[%c5_400, %c22_401] : memref<16x27xf32, #tpu.memory_space<smem>>
    %696 = vector.broadcast %695 : f32 to vector<2x14x14xf32>
    %697 = arith.mulf %45, %696 : vector<2x14x14xf32>
    %698 = arith.addf %694, %697 : vector<2x14x14xf32>
    %c5_402 = arith.constant 5 : index
    %c23_403 = arith.constant 23 : index
    %699 = memref.load %arg2[%c5_402, %c23_403] : memref<16x27xf32, #tpu.memory_space<smem>>
    %700 = vector.broadcast %699 : f32 to vector<2x14x14xf32>
    %701 = arith.mulf %47, %700 : vector<2x14x14xf32>
    %702 = arith.addf %698, %701 : vector<2x14x14xf32>
    %c5_404 = arith.constant 5 : index
    %c24_405 = arith.constant 24 : index
    %703 = memref.load %arg2[%c5_404, %c24_405] : memref<16x27xf32, #tpu.memory_space<smem>>
    %704 = vector.broadcast %703 : f32 to vector<2x14x14xf32>
    %705 = arith.mulf %49, %704 : vector<2x14x14xf32>
    %706 = arith.addf %702, %705 : vector<2x14x14xf32>
    %c5_406 = arith.constant 5 : index
    %c25_407 = arith.constant 25 : index
    %707 = memref.load %arg2[%c5_406, %c25_407] : memref<16x27xf32, #tpu.memory_space<smem>>
    %708 = vector.broadcast %707 : f32 to vector<2x14x14xf32>
    %709 = arith.mulf %51, %708 : vector<2x14x14xf32>
    %710 = arith.addf %706, %709 : vector<2x14x14xf32>
    %c5_408 = arith.constant 5 : index
    %c26_409 = arith.constant 26 : index
    %711 = memref.load %arg2[%c5_408, %c26_409] : memref<16x27xf32, #tpu.memory_space<smem>>
    %712 = vector.broadcast %711 : f32 to vector<2x14x14xf32>
    %713 = arith.mulf %53, %712 : vector<2x14x14xf32>
    %714 = arith.addf %710, %713 : vector<2x14x14xf32>
    %c5_410 = arith.constant 5 : index
    %715 = memref.load %arg3[%c5_410] : memref<16xf32, #tpu.memory_space<smem>>
    %716 = vector.broadcast %715 : f32 to vector<2x14x14xf32>
    %717 = arith.addf %714, %716 : vector<2x14x14xf32>
    %718 = arith.minimumf %607, %717 : vector<2x14x14xf32>
    %c6_411 = arith.constant 6 : index
    %c0_412 = arith.constant 0 : index
    %719 = memref.load %arg2[%c6_411, %c0_412] : memref<16x27xf32, #tpu.memory_space<smem>>
    %720 = vector.broadcast %719 : f32 to vector<2x14x14xf32>
    %721 = arith.mulf %1, %720 : vector<2x14x14xf32>
    %c6_413 = arith.constant 6 : index
    %c1_414 = arith.constant 1 : index
    %722 = memref.load %arg2[%c6_413, %c1_414] : memref<16x27xf32, #tpu.memory_space<smem>>
    %723 = vector.broadcast %722 : f32 to vector<2x14x14xf32>
    %724 = arith.mulf %3, %723 : vector<2x14x14xf32>
    %725 = arith.addf %721, %724 : vector<2x14x14xf32>
    %c6_415 = arith.constant 6 : index
    %c2_416 = arith.constant 2 : index
    %726 = memref.load %arg2[%c6_415, %c2_416] : memref<16x27xf32, #tpu.memory_space<smem>>
    %727 = vector.broadcast %726 : f32 to vector<2x14x14xf32>
    %728 = arith.mulf %5, %727 : vector<2x14x14xf32>
    %729 = arith.addf %725, %728 : vector<2x14x14xf32>
    %c6_417 = arith.constant 6 : index
    %c3_418 = arith.constant 3 : index
    %730 = memref.load %arg2[%c6_417, %c3_418] : memref<16x27xf32, #tpu.memory_space<smem>>
    %731 = vector.broadcast %730 : f32 to vector<2x14x14xf32>
    %732 = arith.mulf %7, %731 : vector<2x14x14xf32>
    %733 = arith.addf %729, %732 : vector<2x14x14xf32>
    %c6_419 = arith.constant 6 : index
    %c4_420 = arith.constant 4 : index
    %734 = memref.load %arg2[%c6_419, %c4_420] : memref<16x27xf32, #tpu.memory_space<smem>>
    %735 = vector.broadcast %734 : f32 to vector<2x14x14xf32>
    %736 = arith.mulf %9, %735 : vector<2x14x14xf32>
    %737 = arith.addf %733, %736 : vector<2x14x14xf32>
    %c6_421 = arith.constant 6 : index
    %c5_422 = arith.constant 5 : index
    %738 = memref.load %arg2[%c6_421, %c5_422] : memref<16x27xf32, #tpu.memory_space<smem>>
    %739 = vector.broadcast %738 : f32 to vector<2x14x14xf32>
    %740 = arith.mulf %11, %739 : vector<2x14x14xf32>
    %741 = arith.addf %737, %740 : vector<2x14x14xf32>
    %c6_423 = arith.constant 6 : index
    %c6_424 = arith.constant 6 : index
    %742 = memref.load %arg2[%c6_423, %c6_424] : memref<16x27xf32, #tpu.memory_space<smem>>
    %743 = vector.broadcast %742 : f32 to vector<2x14x14xf32>
    %744 = arith.mulf %13, %743 : vector<2x14x14xf32>
    %745 = arith.addf %741, %744 : vector<2x14x14xf32>
    %c6_425 = arith.constant 6 : index
    %c7_426 = arith.constant 7 : index
    %746 = memref.load %arg2[%c6_425, %c7_426] : memref<16x27xf32, #tpu.memory_space<smem>>
    %747 = vector.broadcast %746 : f32 to vector<2x14x14xf32>
    %748 = arith.mulf %15, %747 : vector<2x14x14xf32>
    %749 = arith.addf %745, %748 : vector<2x14x14xf32>
    %c6_427 = arith.constant 6 : index
    %c8_428 = arith.constant 8 : index
    %750 = memref.load %arg2[%c6_427, %c8_428] : memref<16x27xf32, #tpu.memory_space<smem>>
    %751 = vector.broadcast %750 : f32 to vector<2x14x14xf32>
    %752 = arith.mulf %17, %751 : vector<2x14x14xf32>
    %753 = arith.addf %749, %752 : vector<2x14x14xf32>
    %c6_429 = arith.constant 6 : index
    %c9_430 = arith.constant 9 : index
    %754 = memref.load %arg2[%c6_429, %c9_430] : memref<16x27xf32, #tpu.memory_space<smem>>
    %755 = vector.broadcast %754 : f32 to vector<2x14x14xf32>
    %756 = arith.mulf %19, %755 : vector<2x14x14xf32>
    %757 = arith.addf %753, %756 : vector<2x14x14xf32>
    %c6_431 = arith.constant 6 : index
    %c10_432 = arith.constant 10 : index
    %758 = memref.load %arg2[%c6_431, %c10_432] : memref<16x27xf32, #tpu.memory_space<smem>>
    %759 = vector.broadcast %758 : f32 to vector<2x14x14xf32>
    %760 = arith.mulf %21, %759 : vector<2x14x14xf32>
    %761 = arith.addf %757, %760 : vector<2x14x14xf32>
    %c6_433 = arith.constant 6 : index
    %c11_434 = arith.constant 11 : index
    %762 = memref.load %arg2[%c6_433, %c11_434] : memref<16x27xf32, #tpu.memory_space<smem>>
    %763 = vector.broadcast %762 : f32 to vector<2x14x14xf32>
    %764 = arith.mulf %23, %763 : vector<2x14x14xf32>
    %765 = arith.addf %761, %764 : vector<2x14x14xf32>
    %c6_435 = arith.constant 6 : index
    %c12_436 = arith.constant 12 : index
    %766 = memref.load %arg2[%c6_435, %c12_436] : memref<16x27xf32, #tpu.memory_space<smem>>
    %767 = vector.broadcast %766 : f32 to vector<2x14x14xf32>
    %768 = arith.mulf %25, %767 : vector<2x14x14xf32>
    %769 = arith.addf %765, %768 : vector<2x14x14xf32>
    %c6_437 = arith.constant 6 : index
    %c13_438 = arith.constant 13 : index
    %770 = memref.load %arg2[%c6_437, %c13_438] : memref<16x27xf32, #tpu.memory_space<smem>>
    %771 = vector.broadcast %770 : f32 to vector<2x14x14xf32>
    %772 = arith.mulf %27, %771 : vector<2x14x14xf32>
    %773 = arith.addf %769, %772 : vector<2x14x14xf32>
    %c6_439 = arith.constant 6 : index
    %c14_440 = arith.constant 14 : index
    %774 = memref.load %arg2[%c6_439, %c14_440] : memref<16x27xf32, #tpu.memory_space<smem>>
    %775 = vector.broadcast %774 : f32 to vector<2x14x14xf32>
    %776 = arith.mulf %29, %775 : vector<2x14x14xf32>
    %777 = arith.addf %773, %776 : vector<2x14x14xf32>
    %c6_441 = arith.constant 6 : index
    %c15_442 = arith.constant 15 : index
    %778 = memref.load %arg2[%c6_441, %c15_442] : memref<16x27xf32, #tpu.memory_space<smem>>
    %779 = vector.broadcast %778 : f32 to vector<2x14x14xf32>
    %780 = arith.mulf %31, %779 : vector<2x14x14xf32>
    %781 = arith.addf %777, %780 : vector<2x14x14xf32>
    %c6_443 = arith.constant 6 : index
    %c16_444 = arith.constant 16 : index
    %782 = memref.load %arg2[%c6_443, %c16_444] : memref<16x27xf32, #tpu.memory_space<smem>>
    %783 = vector.broadcast %782 : f32 to vector<2x14x14xf32>
    %784 = arith.mulf %33, %783 : vector<2x14x14xf32>
    %785 = arith.addf %781, %784 : vector<2x14x14xf32>
    %c6_445 = arith.constant 6 : index
    %c17_446 = arith.constant 17 : index
    %786 = memref.load %arg2[%c6_445, %c17_446] : memref<16x27xf32, #tpu.memory_space<smem>>
    %787 = vector.broadcast %786 : f32 to vector<2x14x14xf32>
    %788 = arith.mulf %35, %787 : vector<2x14x14xf32>
    %789 = arith.addf %785, %788 : vector<2x14x14xf32>
    %c6_447 = arith.constant 6 : index
    %c18_448 = arith.constant 18 : index
    %790 = memref.load %arg2[%c6_447, %c18_448] : memref<16x27xf32, #tpu.memory_space<smem>>
    %791 = vector.broadcast %790 : f32 to vector<2x14x14xf32>
    %792 = arith.mulf %37, %791 : vector<2x14x14xf32>
    %793 = arith.addf %789, %792 : vector<2x14x14xf32>
    %c6_449 = arith.constant 6 : index
    %c19_450 = arith.constant 19 : index
    %794 = memref.load %arg2[%c6_449, %c19_450] : memref<16x27xf32, #tpu.memory_space<smem>>
    %795 = vector.broadcast %794 : f32 to vector<2x14x14xf32>
    %796 = arith.mulf %39, %795 : vector<2x14x14xf32>
    %797 = arith.addf %793, %796 : vector<2x14x14xf32>
    %c6_451 = arith.constant 6 : index
    %c20_452 = arith.constant 20 : index
    %798 = memref.load %arg2[%c6_451, %c20_452] : memref<16x27xf32, #tpu.memory_space<smem>>
    %799 = vector.broadcast %798 : f32 to vector<2x14x14xf32>
    %800 = arith.mulf %41, %799 : vector<2x14x14xf32>
    %801 = arith.addf %797, %800 : vector<2x14x14xf32>
    %c6_453 = arith.constant 6 : index
    %c21_454 = arith.constant 21 : index
    %802 = memref.load %arg2[%c6_453, %c21_454] : memref<16x27xf32, #tpu.memory_space<smem>>
    %803 = vector.broadcast %802 : f32 to vector<2x14x14xf32>
    %804 = arith.mulf %43, %803 : vector<2x14x14xf32>
    %805 = arith.addf %801, %804 : vector<2x14x14xf32>
    %c6_455 = arith.constant 6 : index
    %c22_456 = arith.constant 22 : index
    %806 = memref.load %arg2[%c6_455, %c22_456] : memref<16x27xf32, #tpu.memory_space<smem>>
    %807 = vector.broadcast %806 : f32 to vector<2x14x14xf32>
    %808 = arith.mulf %45, %807 : vector<2x14x14xf32>
    %809 = arith.addf %805, %808 : vector<2x14x14xf32>
    %c6_457 = arith.constant 6 : index
    %c23_458 = arith.constant 23 : index
    %810 = memref.load %arg2[%c6_457, %c23_458] : memref<16x27xf32, #tpu.memory_space<smem>>
    %811 = vector.broadcast %810 : f32 to vector<2x14x14xf32>
    %812 = arith.mulf %47, %811 : vector<2x14x14xf32>
    %813 = arith.addf %809, %812 : vector<2x14x14xf32>
    %c6_459 = arith.constant 6 : index
    %c24_460 = arith.constant 24 : index
    %814 = memref.load %arg2[%c6_459, %c24_460] : memref<16x27xf32, #tpu.memory_space<smem>>
    %815 = vector.broadcast %814 : f32 to vector<2x14x14xf32>
    %816 = arith.mulf %49, %815 : vector<2x14x14xf32>
    %817 = arith.addf %813, %816 : vector<2x14x14xf32>
    %c6_461 = arith.constant 6 : index
    %c25_462 = arith.constant 25 : index
    %818 = memref.load %arg2[%c6_461, %c25_462] : memref<16x27xf32, #tpu.memory_space<smem>>
    %819 = vector.broadcast %818 : f32 to vector<2x14x14xf32>
    %820 = arith.mulf %51, %819 : vector<2x14x14xf32>
    %821 = arith.addf %817, %820 : vector<2x14x14xf32>
    %c6_463 = arith.constant 6 : index
    %c26_464 = arith.constant 26 : index
    %822 = memref.load %arg2[%c6_463, %c26_464] : memref<16x27xf32, #tpu.memory_space<smem>>
    %823 = vector.broadcast %822 : f32 to vector<2x14x14xf32>
    %824 = arith.mulf %53, %823 : vector<2x14x14xf32>
    %825 = arith.addf %821, %824 : vector<2x14x14xf32>
    %c6_465 = arith.constant 6 : index
    %826 = memref.load %arg3[%c6_465] : memref<16xf32, #tpu.memory_space<smem>>
    %827 = vector.broadcast %826 : f32 to vector<2x14x14xf32>
    %828 = arith.addf %825, %827 : vector<2x14x14xf32>
    %829 = arith.minimumf %718, %828 : vector<2x14x14xf32>
    %c7_466 = arith.constant 7 : index
    %c0_467 = arith.constant 0 : index
    %830 = memref.load %arg2[%c7_466, %c0_467] : memref<16x27xf32, #tpu.memory_space<smem>>
    %831 = vector.broadcast %830 : f32 to vector<2x14x14xf32>
    %832 = arith.mulf %1, %831 : vector<2x14x14xf32>
    %c7_468 = arith.constant 7 : index
    %c1_469 = arith.constant 1 : index
    %833 = memref.load %arg2[%c7_468, %c1_469] : memref<16x27xf32, #tpu.memory_space<smem>>
    %834 = vector.broadcast %833 : f32 to vector<2x14x14xf32>
    %835 = arith.mulf %3, %834 : vector<2x14x14xf32>
    %836 = arith.addf %832, %835 : vector<2x14x14xf32>
    %c7_470 = arith.constant 7 : index
    %c2_471 = arith.constant 2 : index
    %837 = memref.load %arg2[%c7_470, %c2_471] : memref<16x27xf32, #tpu.memory_space<smem>>
    %838 = vector.broadcast %837 : f32 to vector<2x14x14xf32>
    %839 = arith.mulf %5, %838 : vector<2x14x14xf32>
    %840 = arith.addf %836, %839 : vector<2x14x14xf32>
    %c7_472 = arith.constant 7 : index
    %c3_473 = arith.constant 3 : index
    %841 = memref.load %arg2[%c7_472, %c3_473] : memref<16x27xf32, #tpu.memory_space<smem>>
    %842 = vector.broadcast %841 : f32 to vector<2x14x14xf32>
    %843 = arith.mulf %7, %842 : vector<2x14x14xf32>
    %844 = arith.addf %840, %843 : vector<2x14x14xf32>
    %c7_474 = arith.constant 7 : index
    %c4_475 = arith.constant 4 : index
    %845 = memref.load %arg2[%c7_474, %c4_475] : memref<16x27xf32, #tpu.memory_space<smem>>
    %846 = vector.broadcast %845 : f32 to vector<2x14x14xf32>
    %847 = arith.mulf %9, %846 : vector<2x14x14xf32>
    %848 = arith.addf %844, %847 : vector<2x14x14xf32>
    %c7_476 = arith.constant 7 : index
    %c5_477 = arith.constant 5 : index
    %849 = memref.load %arg2[%c7_476, %c5_477] : memref<16x27xf32, #tpu.memory_space<smem>>
    %850 = vector.broadcast %849 : f32 to vector<2x14x14xf32>
    %851 = arith.mulf %11, %850 : vector<2x14x14xf32>
    %852 = arith.addf %848, %851 : vector<2x14x14xf32>
    %c7_478 = arith.constant 7 : index
    %c6_479 = arith.constant 6 : index
    %853 = memref.load %arg2[%c7_478, %c6_479] : memref<16x27xf32, #tpu.memory_space<smem>>
    %854 = vector.broadcast %853 : f32 to vector<2x14x14xf32>
    %855 = arith.mulf %13, %854 : vector<2x14x14xf32>
    %856 = arith.addf %852, %855 : vector<2x14x14xf32>
    %c7_480 = arith.constant 7 : index
    %c7_481 = arith.constant 7 : index
    %857 = memref.load %arg2[%c7_480, %c7_481] : memref<16x27xf32, #tpu.memory_space<smem>>
    %858 = vector.broadcast %857 : f32 to vector<2x14x14xf32>
    %859 = arith.mulf %15, %858 : vector<2x14x14xf32>
    %860 = arith.addf %856, %859 : vector<2x14x14xf32>
    %c7_482 = arith.constant 7 : index
    %c8_483 = arith.constant 8 : index
    %861 = memref.load %arg2[%c7_482, %c8_483] : memref<16x27xf32, #tpu.memory_space<smem>>
    %862 = vector.broadcast %861 : f32 to vector<2x14x14xf32>
    %863 = arith.mulf %17, %862 : vector<2x14x14xf32>
    %864 = arith.addf %860, %863 : vector<2x14x14xf32>
    %c7_484 = arith.constant 7 : index
    %c9_485 = arith.constant 9 : index
    %865 = memref.load %arg2[%c7_484, %c9_485] : memref<16x27xf32, #tpu.memory_space<smem>>
    %866 = vector.broadcast %865 : f32 to vector<2x14x14xf32>
    %867 = arith.mulf %19, %866 : vector<2x14x14xf32>
    %868 = arith.addf %864, %867 : vector<2x14x14xf32>
    %c7_486 = arith.constant 7 : index
    %c10_487 = arith.constant 10 : index
    %869 = memref.load %arg2[%c7_486, %c10_487] : memref<16x27xf32, #tpu.memory_space<smem>>
    %870 = vector.broadcast %869 : f32 to vector<2x14x14xf32>
    %871 = arith.mulf %21, %870 : vector<2x14x14xf32>
    %872 = arith.addf %868, %871 : vector<2x14x14xf32>
    %c7_488 = arith.constant 7 : index
    %c11_489 = arith.constant 11 : index
    %873 = memref.load %arg2[%c7_488, %c11_489] : memref<16x27xf32, #tpu.memory_space<smem>>
    %874 = vector.broadcast %873 : f32 to vector<2x14x14xf32>
    %875 = arith.mulf %23, %874 : vector<2x14x14xf32>
    %876 = arith.addf %872, %875 : vector<2x14x14xf32>
    %c7_490 = arith.constant 7 : index
    %c12_491 = arith.constant 12 : index
    %877 = memref.load %arg2[%c7_490, %c12_491] : memref<16x27xf32, #tpu.memory_space<smem>>
    %878 = vector.broadcast %877 : f32 to vector<2x14x14xf32>
    %879 = arith.mulf %25, %878 : vector<2x14x14xf32>
    %880 = arith.addf %876, %879 : vector<2x14x14xf32>
    %c7_492 = arith.constant 7 : index
    %c13_493 = arith.constant 13 : index
    %881 = memref.load %arg2[%c7_492, %c13_493] : memref<16x27xf32, #tpu.memory_space<smem>>
    %882 = vector.broadcast %881 : f32 to vector<2x14x14xf32>
    %883 = arith.mulf %27, %882 : vector<2x14x14xf32>
    %884 = arith.addf %880, %883 : vector<2x14x14xf32>
    %c7_494 = arith.constant 7 : index
    %c14_495 = arith.constant 14 : index
    %885 = memref.load %arg2[%c7_494, %c14_495] : memref<16x27xf32, #tpu.memory_space<smem>>
    %886 = vector.broadcast %885 : f32 to vector<2x14x14xf32>
    %887 = arith.mulf %29, %886 : vector<2x14x14xf32>
    %888 = arith.addf %884, %887 : vector<2x14x14xf32>
    %c7_496 = arith.constant 7 : index
    %c15_497 = arith.constant 15 : index
    %889 = memref.load %arg2[%c7_496, %c15_497] : memref<16x27xf32, #tpu.memory_space<smem>>
    %890 = vector.broadcast %889 : f32 to vector<2x14x14xf32>
    %891 = arith.mulf %31, %890 : vector<2x14x14xf32>
    %892 = arith.addf %888, %891 : vector<2x14x14xf32>
    %c7_498 = arith.constant 7 : index
    %c16_499 = arith.constant 16 : index
    %893 = memref.load %arg2[%c7_498, %c16_499] : memref<16x27xf32, #tpu.memory_space<smem>>
    %894 = vector.broadcast %893 : f32 to vector<2x14x14xf32>
    %895 = arith.mulf %33, %894 : vector<2x14x14xf32>
    %896 = arith.addf %892, %895 : vector<2x14x14xf32>
    %c7_500 = arith.constant 7 : index
    %c17_501 = arith.constant 17 : index
    %897 = memref.load %arg2[%c7_500, %c17_501] : memref<16x27xf32, #tpu.memory_space<smem>>
    %898 = vector.broadcast %897 : f32 to vector<2x14x14xf32>
    %899 = arith.mulf %35, %898 : vector<2x14x14xf32>
    %900 = arith.addf %896, %899 : vector<2x14x14xf32>
    %c7_502 = arith.constant 7 : index
    %c18_503 = arith.constant 18 : index
    %901 = memref.load %arg2[%c7_502, %c18_503] : memref<16x27xf32, #tpu.memory_space<smem>>
    %902 = vector.broadcast %901 : f32 to vector<2x14x14xf32>
    %903 = arith.mulf %37, %902 : vector<2x14x14xf32>
    %904 = arith.addf %900, %903 : vector<2x14x14xf32>
    %c7_504 = arith.constant 7 : index
    %c19_505 = arith.constant 19 : index
    %905 = memref.load %arg2[%c7_504, %c19_505] : memref<16x27xf32, #tpu.memory_space<smem>>
    %906 = vector.broadcast %905 : f32 to vector<2x14x14xf32>
    %907 = arith.mulf %39, %906 : vector<2x14x14xf32>
    %908 = arith.addf %904, %907 : vector<2x14x14xf32>
    %c7_506 = arith.constant 7 : index
    %c20_507 = arith.constant 20 : index
    %909 = memref.load %arg2[%c7_506, %c20_507] : memref<16x27xf32, #tpu.memory_space<smem>>
    %910 = vector.broadcast %909 : f32 to vector<2x14x14xf32>
    %911 = arith.mulf %41, %910 : vector<2x14x14xf32>
    %912 = arith.addf %908, %911 : vector<2x14x14xf32>
    %c7_508 = arith.constant 7 : index
    %c21_509 = arith.constant 21 : index
    %913 = memref.load %arg2[%c7_508, %c21_509] : memref<16x27xf32, #tpu.memory_space<smem>>
    %914 = vector.broadcast %913 : f32 to vector<2x14x14xf32>
    %915 = arith.mulf %43, %914 : vector<2x14x14xf32>
    %916 = arith.addf %912, %915 : vector<2x14x14xf32>
    %c7_510 = arith.constant 7 : index
    %c22_511 = arith.constant 22 : index
    %917 = memref.load %arg2[%c7_510, %c22_511] : memref<16x27xf32, #tpu.memory_space<smem>>
    %918 = vector.broadcast %917 : f32 to vector<2x14x14xf32>
    %919 = arith.mulf %45, %918 : vector<2x14x14xf32>
    %920 = arith.addf %916, %919 : vector<2x14x14xf32>
    %c7_512 = arith.constant 7 : index
    %c23_513 = arith.constant 23 : index
    %921 = memref.load %arg2[%c7_512, %c23_513] : memref<16x27xf32, #tpu.memory_space<smem>>
    %922 = vector.broadcast %921 : f32 to vector<2x14x14xf32>
    %923 = arith.mulf %47, %922 : vector<2x14x14xf32>
    %924 = arith.addf %920, %923 : vector<2x14x14xf32>
    %c7_514 = arith.constant 7 : index
    %c24_515 = arith.constant 24 : index
    %925 = memref.load %arg2[%c7_514, %c24_515] : memref<16x27xf32, #tpu.memory_space<smem>>
    %926 = vector.broadcast %925 : f32 to vector<2x14x14xf32>
    %927 = arith.mulf %49, %926 : vector<2x14x14xf32>
    %928 = arith.addf %924, %927 : vector<2x14x14xf32>
    %c7_516 = arith.constant 7 : index
    %c25_517 = arith.constant 25 : index
    %929 = memref.load %arg2[%c7_516, %c25_517] : memref<16x27xf32, #tpu.memory_space<smem>>
    %930 = vector.broadcast %929 : f32 to vector<2x14x14xf32>
    %931 = arith.mulf %51, %930 : vector<2x14x14xf32>
    %932 = arith.addf %928, %931 : vector<2x14x14xf32>
    %c7_518 = arith.constant 7 : index
    %c26_519 = arith.constant 26 : index
    %933 = memref.load %arg2[%c7_518, %c26_519] : memref<16x27xf32, #tpu.memory_space<smem>>
    %934 = vector.broadcast %933 : f32 to vector<2x14x14xf32>
    %935 = arith.mulf %53, %934 : vector<2x14x14xf32>
    %936 = arith.addf %932, %935 : vector<2x14x14xf32>
    %c7_520 = arith.constant 7 : index
    %937 = memref.load %arg3[%c7_520] : memref<16xf32, #tpu.memory_space<smem>>
    %938 = vector.broadcast %937 : f32 to vector<2x14x14xf32>
    %939 = arith.addf %936, %938 : vector<2x14x14xf32>
    %940 = arith.minimumf %829, %939 : vector<2x14x14xf32>
    %c8_521 = arith.constant 8 : index
    %c0_522 = arith.constant 0 : index
    %941 = memref.load %arg2[%c8_521, %c0_522] : memref<16x27xf32, #tpu.memory_space<smem>>
    %942 = vector.broadcast %941 : f32 to vector<2x14x14xf32>
    %943 = arith.mulf %1, %942 : vector<2x14x14xf32>
    %c8_523 = arith.constant 8 : index
    %c1_524 = arith.constant 1 : index
    %944 = memref.load %arg2[%c8_523, %c1_524] : memref<16x27xf32, #tpu.memory_space<smem>>
    %945 = vector.broadcast %944 : f32 to vector<2x14x14xf32>
    %946 = arith.mulf %3, %945 : vector<2x14x14xf32>
    %947 = arith.addf %943, %946 : vector<2x14x14xf32>
    %c8_525 = arith.constant 8 : index
    %c2_526 = arith.constant 2 : index
    %948 = memref.load %arg2[%c8_525, %c2_526] : memref<16x27xf32, #tpu.memory_space<smem>>
    %949 = vector.broadcast %948 : f32 to vector<2x14x14xf32>
    %950 = arith.mulf %5, %949 : vector<2x14x14xf32>
    %951 = arith.addf %947, %950 : vector<2x14x14xf32>
    %c8_527 = arith.constant 8 : index
    %c3_528 = arith.constant 3 : index
    %952 = memref.load %arg2[%c8_527, %c3_528] : memref<16x27xf32, #tpu.memory_space<smem>>
    %953 = vector.broadcast %952 : f32 to vector<2x14x14xf32>
    %954 = arith.mulf %7, %953 : vector<2x14x14xf32>
    %955 = arith.addf %951, %954 : vector<2x14x14xf32>
    %c8_529 = arith.constant 8 : index
    %c4_530 = arith.constant 4 : index
    %956 = memref.load %arg2[%c8_529, %c4_530] : memref<16x27xf32, #tpu.memory_space<smem>>
    %957 = vector.broadcast %956 : f32 to vector<2x14x14xf32>
    %958 = arith.mulf %9, %957 : vector<2x14x14xf32>
    %959 = arith.addf %955, %958 : vector<2x14x14xf32>
    %c8_531 = arith.constant 8 : index
    %c5_532 = arith.constant 5 : index
    %960 = memref.load %arg2[%c8_531, %c5_532] : memref<16x27xf32, #tpu.memory_space<smem>>
    %961 = vector.broadcast %960 : f32 to vector<2x14x14xf32>
    %962 = arith.mulf %11, %961 : vector<2x14x14xf32>
    %963 = arith.addf %959, %962 : vector<2x14x14xf32>
    %c8_533 = arith.constant 8 : index
    %c6_534 = arith.constant 6 : index
    %964 = memref.load %arg2[%c8_533, %c6_534] : memref<16x27xf32, #tpu.memory_space<smem>>
    %965 = vector.broadcast %964 : f32 to vector<2x14x14xf32>
    %966 = arith.mulf %13, %965 : vector<2x14x14xf32>
    %967 = arith.addf %963, %966 : vector<2x14x14xf32>
    %c8_535 = arith.constant 8 : index
    %c7_536 = arith.constant 7 : index
    %968 = memref.load %arg2[%c8_535, %c7_536] : memref<16x27xf32, #tpu.memory_space<smem>>
    %969 = vector.broadcast %968 : f32 to vector<2x14x14xf32>
    %970 = arith.mulf %15, %969 : vector<2x14x14xf32>
    %971 = arith.addf %967, %970 : vector<2x14x14xf32>
    %c8_537 = arith.constant 8 : index
    %c8_538 = arith.constant 8 : index
    %972 = memref.load %arg2[%c8_537, %c8_538] : memref<16x27xf32, #tpu.memory_space<smem>>
    %973 = vector.broadcast %972 : f32 to vector<2x14x14xf32>
    %974 = arith.mulf %17, %973 : vector<2x14x14xf32>
    %975 = arith.addf %971, %974 : vector<2x14x14xf32>
    %c8_539 = arith.constant 8 : index
    %c9_540 = arith.constant 9 : index
    %976 = memref.load %arg2[%c8_539, %c9_540] : memref<16x27xf32, #tpu.memory_space<smem>>
    %977 = vector.broadcast %976 : f32 to vector<2x14x14xf32>
    %978 = arith.mulf %19, %977 : vector<2x14x14xf32>
    %979 = arith.addf %975, %978 : vector<2x14x14xf32>
    %c8_541 = arith.constant 8 : index
    %c10_542 = arith.constant 10 : index
    %980 = memref.load %arg2[%c8_541, %c10_542] : memref<16x27xf32, #tpu.memory_space<smem>>
    %981 = vector.broadcast %980 : f32 to vector<2x14x14xf32>
    %982 = arith.mulf %21, %981 : vector<2x14x14xf32>
    %983 = arith.addf %979, %982 : vector<2x14x14xf32>
    %c8_543 = arith.constant 8 : index
    %c11_544 = arith.constant 11 : index
    %984 = memref.load %arg2[%c8_543, %c11_544] : memref<16x27xf32, #tpu.memory_space<smem>>
    %985 = vector.broadcast %984 : f32 to vector<2x14x14xf32>
    %986 = arith.mulf %23, %985 : vector<2x14x14xf32>
    %987 = arith.addf %983, %986 : vector<2x14x14xf32>
    %c8_545 = arith.constant 8 : index
    %c12_546 = arith.constant 12 : index
    %988 = memref.load %arg2[%c8_545, %c12_546] : memref<16x27xf32, #tpu.memory_space<smem>>
    %989 = vector.broadcast %988 : f32 to vector<2x14x14xf32>
    %990 = arith.mulf %25, %989 : vector<2x14x14xf32>
    %991 = arith.addf %987, %990 : vector<2x14x14xf32>
    %c8_547 = arith.constant 8 : index
    %c13_548 = arith.constant 13 : index
    %992 = memref.load %arg2[%c8_547, %c13_548] : memref<16x27xf32, #tpu.memory_space<smem>>
    %993 = vector.broadcast %992 : f32 to vector<2x14x14xf32>
    %994 = arith.mulf %27, %993 : vector<2x14x14xf32>
    %995 = arith.addf %991, %994 : vector<2x14x14xf32>
    %c8_549 = arith.constant 8 : index
    %c14_550 = arith.constant 14 : index
    %996 = memref.load %arg2[%c8_549, %c14_550] : memref<16x27xf32, #tpu.memory_space<smem>>
    %997 = vector.broadcast %996 : f32 to vector<2x14x14xf32>
    %998 = arith.mulf %29, %997 : vector<2x14x14xf32>
    %999 = arith.addf %995, %998 : vector<2x14x14xf32>
    %c8_551 = arith.constant 8 : index
    %c15_552 = arith.constant 15 : index
    %1000 = memref.load %arg2[%c8_551, %c15_552] : memref<16x27xf32, #tpu.memory_space<smem>>
    %1001 = vector.broadcast %1000 : f32 to vector<2x14x14xf32>
    %1002 = arith.mulf %31, %1001 : vector<2x14x14xf32>
    %1003 = arith.addf %999, %1002 : vector<2x14x14xf32>
    %c8_553 = arith.constant 8 : index
    %c16_554 = arith.constant 16 : index
    %1004 = memref.load %arg2[%c8_553, %c16_554] : memref<16x27xf32, #tpu.memory_space<smem>>
    %1005 = vector.broadcast %1004 : f32 to vector<2x14x14xf32>
    %1006 = arith.mulf %33, %1005 : vector<2x14x14xf32>
    %1007 = arith.addf %1003, %1006 : vector<2x14x14xf32>
    %c8_555 = arith.constant 8 : index
    %c17_556 = arith.constant 17 : index
    %1008 = memref.load %arg2[%c8_555, %c17_556] : memref<16x27xf32, #tpu.memory_space<smem>>
    %1009 = vector.broadcast %1008 : f32 to vector<2x14x14xf32>
    %1010 = arith.mulf %35, %1009 : vector<2x14x14xf32>
    %1011 = arith.addf %1007, %1010 : vector<2x14x14xf32>
    %c8_557 = arith.constant 8 : index
    %c18_558 = arith.constant 18 : index
    %1012 = memref.load %arg2[%c8_557, %c18_558] : memref<16x27xf32, #tpu.memory_space<smem>>
    %1013 = vector.broadcast %1012 : f32 to vector<2x14x14xf32>
    %1014 = arith.mulf %37, %1013 : vector<2x14x14xf32>
    %1015 = arith.addf %1011, %1014 : vector<2x14x14xf32>
    %c8_559 = arith.constant 8 : index
    %c19_560 = arith.constant 19 : index
    %1016 = memref.load %arg2[%c8_559, %c19_560] : memref<16x27xf32, #tpu.memory_space<smem>>
    %1017 = vector.broadcast %1016 : f32 to vector<2x14x14xf32>
    %1018 = arith.mulf %39, %1017 : vector<2x14x14xf32>
    %1019 = arith.addf %1015, %1018 : vector<2x14x14xf32>
    %c8_561 = arith.constant 8 : index
    %c20_562 = arith.constant 20 : index
    %1020 = memref.load %arg2[%c8_561, %c20_562] : memref<16x27xf32, #tpu.memory_space<smem>>
    %1021 = vector.broadcast %1020 : f32 to vector<2x14x14xf32>
    %1022 = arith.mulf %41, %1021 : vector<2x14x14xf32>
    %1023 = arith.addf %1019, %1022 : vector<2x14x14xf32>
    %c8_563 = arith.constant 8 : index
    %c21_564 = arith.constant 21 : index
    %1024 = memref.load %arg2[%c8_563, %c21_564] : memref<16x27xf32, #tpu.memory_space<smem>>
    %1025 = vector.broadcast %1024 : f32 to vector<2x14x14xf32>
    %1026 = arith.mulf %43, %1025 : vector<2x14x14xf32>
    %1027 = arith.addf %1023, %1026 : vector<2x14x14xf32>
    %c8_565 = arith.constant 8 : index
    %c22_566 = arith.constant 22 : index
    %1028 = memref.load %arg2[%c8_565, %c22_566] : memref<16x27xf32, #tpu.memory_space<smem>>
    %1029 = vector.broadcast %1028 : f32 to vector<2x14x14xf32>
    %1030 = arith.mulf %45, %1029 : vector<2x14x14xf32>
    %1031 = arith.addf %1027, %1030 : vector<2x14x14xf32>
    %c8_567 = arith.constant 8 : index
    %c23_568 = arith.constant 23 : index
    %1032 = memref.load %arg2[%c8_567, %c23_568] : memref<16x27xf32, #tpu.memory_space<smem>>
    %1033 = vector.broadcast %1032 : f32 to vector<2x14x14xf32>
    %1034 = arith.mulf %47, %1033 : vector<2x14x14xf32>
    %1035 = arith.addf %1031, %1034 : vector<2x14x14xf32>
    %c8_569 = arith.constant 8 : index
    %c24_570 = arith.constant 24 : index
    %1036 = memref.load %arg2[%c8_569, %c24_570] : memref<16x27xf32, #tpu.memory_space<smem>>
    %1037 = vector.broadcast %1036 : f32 to vector<2x14x14xf32>
    %1038 = arith.mulf %49, %1037 : vector<2x14x14xf32>
    %1039 = arith.addf %1035, %1038 : vector<2x14x14xf32>
    %c8_571 = arith.constant 8 : index
    %c25_572 = arith.constant 25 : index
    %1040 = memref.load %arg2[%c8_571, %c25_572] : memref<16x27xf32, #tpu.memory_space<smem>>
    %1041 = vector.broadcast %1040 : f32 to vector<2x14x14xf32>
    %1042 = arith.mulf %51, %1041 : vector<2x14x14xf32>
    %1043 = arith.addf %1039, %1042 : vector<2x14x14xf32>
    %c8_573 = arith.constant 8 : index
    %c26_574 = arith.constant 26 : index
    %1044 = memref.load %arg2[%c8_573, %c26_574] : memref<16x27xf32, #tpu.memory_space<smem>>
    %1045 = vector.broadcast %1044 : f32 to vector<2x14x14xf32>
    %1046 = arith.mulf %53, %1045 : vector<2x14x14xf32>
    %1047 = arith.addf %1043, %1046 : vector<2x14x14xf32>
    %c8_575 = arith.constant 8 : index
    %1048 = memref.load %arg3[%c8_575] : memref<16xf32, #tpu.memory_space<smem>>
    %1049 = vector.broadcast %1048 : f32 to vector<2x14x14xf32>
    %1050 = arith.addf %1047, %1049 : vector<2x14x14xf32>
    %1051 = arith.minimumf %940, %1050 : vector<2x14x14xf32>
    %c9_576 = arith.constant 9 : index
    %c0_577 = arith.constant 0 : index
    %1052 = memref.load %arg2[%c9_576, %c0_577] : memref<16x27xf32, #tpu.memory_space<smem>>
    %1053 = vector.broadcast %1052 : f32 to vector<2x14x14xf32>
    %1054 = arith.mulf %1, %1053 : vector<2x14x14xf32>
    %c9_578 = arith.constant 9 : index
    %c1_579 = arith.constant 1 : index
    %1055 = memref.load %arg2[%c9_578, %c1_579] : memref<16x27xf32, #tpu.memory_space<smem>>
    %1056 = vector.broadcast %1055 : f32 to vector<2x14x14xf32>
    %1057 = arith.mulf %3, %1056 : vector<2x14x14xf32>
    %1058 = arith.addf %1054, %1057 : vector<2x14x14xf32>
    %c9_580 = arith.constant 9 : index
    %c2_581 = arith.constant 2 : index
    %1059 = memref.load %arg2[%c9_580, %c2_581] : memref<16x27xf32, #tpu.memory_space<smem>>
    %1060 = vector.broadcast %1059 : f32 to vector<2x14x14xf32>
    %1061 = arith.mulf %5, %1060 : vector<2x14x14xf32>
    %1062 = arith.addf %1058, %1061 : vector<2x14x14xf32>
    %c9_582 = arith.constant 9 : index
    %c3_583 = arith.constant 3 : index
    %1063 = memref.load %arg2[%c9_582, %c3_583] : memref<16x27xf32, #tpu.memory_space<smem>>
    %1064 = vector.broadcast %1063 : f32 to vector<2x14x14xf32>
    %1065 = arith.mulf %7, %1064 : vector<2x14x14xf32>
    %1066 = arith.addf %1062, %1065 : vector<2x14x14xf32>
    %c9_584 = arith.constant 9 : index
    %c4_585 = arith.constant 4 : index
    %1067 = memref.load %arg2[%c9_584, %c4_585] : memref<16x27xf32, #tpu.memory_space<smem>>
    %1068 = vector.broadcast %1067 : f32 to vector<2x14x14xf32>
    %1069 = arith.mulf %9, %1068 : vector<2x14x14xf32>
    %1070 = arith.addf %1066, %1069 : vector<2x14x14xf32>
    %c9_586 = arith.constant 9 : index
    %c5_587 = arith.constant 5 : index
    %1071 = memref.load %arg2[%c9_586, %c5_587] : memref<16x27xf32, #tpu.memory_space<smem>>
    %1072 = vector.broadcast %1071 : f32 to vector<2x14x14xf32>
    %1073 = arith.mulf %11, %1072 : vector<2x14x14xf32>
    %1074 = arith.addf %1070, %1073 : vector<2x14x14xf32>
    %c9_588 = arith.constant 9 : index
    %c6_589 = arith.constant 6 : index
    %1075 = memref.load %arg2[%c9_588, %c6_589] : memref<16x27xf32, #tpu.memory_space<smem>>
    %1076 = vector.broadcast %1075 : f32 to vector<2x14x14xf32>
    %1077 = arith.mulf %13, %1076 : vector<2x14x14xf32>
    %1078 = arith.addf %1074, %1077 : vector<2x14x14xf32>
    %c9_590 = arith.constant 9 : index
    %c7_591 = arith.constant 7 : index
    %1079 = memref.load %arg2[%c9_590, %c7_591] : memref<16x27xf32, #tpu.memory_space<smem>>
    %1080 = vector.broadcast %1079 : f32 to vector<2x14x14xf32>
    %1081 = arith.mulf %15, %1080 : vector<2x14x14xf32>
    %1082 = arith.addf %1078, %1081 : vector<2x14x14xf32>
    %c9_592 = arith.constant 9 : index
    %c8_593 = arith.constant 8 : index
    %1083 = memref.load %arg2[%c9_592, %c8_593] : memref<16x27xf32, #tpu.memory_space<smem>>
    %1084 = vector.broadcast %1083 : f32 to vector<2x14x14xf32>
    %1085 = arith.mulf %17, %1084 : vector<2x14x14xf32>
    %1086 = arith.addf %1082, %1085 : vector<2x14x14xf32>
    %c9_594 = arith.constant 9 : index
    %c9_595 = arith.constant 9 : index
    %1087 = memref.load %arg2[%c9_594, %c9_595] : memref<16x27xf32, #tpu.memory_space<smem>>
    %1088 = vector.broadcast %1087 : f32 to vector<2x14x14xf32>
    %1089 = arith.mulf %19, %1088 : vector<2x14x14xf32>
    %1090 = arith.addf %1086, %1089 : vector<2x14x14xf32>
    %c9_596 = arith.constant 9 : index
    %c10_597 = arith.constant 10 : index
    %1091 = memref.load %arg2[%c9_596, %c10_597] : memref<16x27xf32, #tpu.memory_space<smem>>
    %1092 = vector.broadcast %1091 : f32 to vector<2x14x14xf32>
    %1093 = arith.mulf %21, %1092 : vector<2x14x14xf32>
    %1094 = arith.addf %1090, %1093 : vector<2x14x14xf32>
    %c9_598 = arith.constant 9 : index
    %c11_599 = arith.constant 11 : index
    %1095 = memref.load %arg2[%c9_598, %c11_599] : memref<16x27xf32, #tpu.memory_space<smem>>
    %1096 = vector.broadcast %1095 : f32 to vector<2x14x14xf32>
    %1097 = arith.mulf %23, %1096 : vector<2x14x14xf32>
    %1098 = arith.addf %1094, %1097 : vector<2x14x14xf32>
    %c9_600 = arith.constant 9 : index
    %c12_601 = arith.constant 12 : index
    %1099 = memref.load %arg2[%c9_600, %c12_601] : memref<16x27xf32, #tpu.memory_space<smem>>
    %1100 = vector.broadcast %1099 : f32 to vector<2x14x14xf32>
    %1101 = arith.mulf %25, %1100 : vector<2x14x14xf32>
    %1102 = arith.addf %1098, %1101 : vector<2x14x14xf32>
    %c9_602 = arith.constant 9 : index
    %c13_603 = arith.constant 13 : index
    %1103 = memref.load %arg2[%c9_602, %c13_603] : memref<16x27xf32, #tpu.memory_space<smem>>
    %1104 = vector.broadcast %1103 : f32 to vector<2x14x14xf32>
    %1105 = arith.mulf %27, %1104 : vector<2x14x14xf32>
    %1106 = arith.addf %1102, %1105 : vector<2x14x14xf32>
    %c9_604 = arith.constant 9 : index
    %c14_605 = arith.constant 14 : index
    %1107 = memref.load %arg2[%c9_604, %c14_605] : memref<16x27xf32, #tpu.memory_space<smem>>
    %1108 = vector.broadcast %1107 : f32 to vector<2x14x14xf32>
    %1109 = arith.mulf %29, %1108 : vector<2x14x14xf32>
    %1110 = arith.addf %1106, %1109 : vector<2x14x14xf32>
    %c9_606 = arith.constant 9 : index
    %c15_607 = arith.constant 15 : index
    %1111 = memref.load %arg2[%c9_606, %c15_607] : memref<16x27xf32, #tpu.memory_space<smem>>
    %1112 = vector.broadcast %1111 : f32 to vector<2x14x14xf32>
    %1113 = arith.mulf %31, %1112 : vector<2x14x14xf32>
    %1114 = arith.addf %1110, %1113 : vector<2x14x14xf32>
    %c9_608 = arith.constant 9 : index
    %c16_609 = arith.constant 16 : index
    %1115 = memref.load %arg2[%c9_608, %c16_609] : memref<16x27xf32, #tpu.memory_space<smem>>
    %1116 = vector.broadcast %1115 : f32 to vector<2x14x14xf32>
    %1117 = arith.mulf %33, %1116 : vector<2x14x14xf32>
    %1118 = arith.addf %1114, %1117 : vector<2x14x14xf32>
    %c9_610 = arith.constant 9 : index
    %c17_611 = arith.constant 17 : index
    %1119 = memref.load %arg2[%c9_610, %c17_611] : memref<16x27xf32, #tpu.memory_space<smem>>
    %1120 = vector.broadcast %1119 : f32 to vector<2x14x14xf32>
    %1121 = arith.mulf %35, %1120 : vector<2x14x14xf32>
    %1122 = arith.addf %1118, %1121 : vector<2x14x14xf32>
    %c9_612 = arith.constant 9 : index
    %c18_613 = arith.constant 18 : index
    %1123 = memref.load %arg2[%c9_612, %c18_613] : memref<16x27xf32, #tpu.memory_space<smem>>
    %1124 = vector.broadcast %1123 : f32 to vector<2x14x14xf32>
    %1125 = arith.mulf %37, %1124 : vector<2x14x14xf32>
    %1126 = arith.addf %1122, %1125 : vector<2x14x14xf32>
    %c9_614 = arith.constant 9 : index
    %c19_615 = arith.constant 19 : index
    %1127 = memref.load %arg2[%c9_614, %c19_615] : memref<16x27xf32, #tpu.memory_space<smem>>
    %1128 = vector.broadcast %1127 : f32 to vector<2x14x14xf32>
    %1129 = arith.mulf %39, %1128 : vector<2x14x14xf32>
    %1130 = arith.addf %1126, %1129 : vector<2x14x14xf32>
    %c9_616 = arith.constant 9 : index
    %c20_617 = arith.constant 20 : index
    %1131 = memref.load %arg2[%c9_616, %c20_617] : memref<16x27xf32, #tpu.memory_space<smem>>
    %1132 = vector.broadcast %1131 : f32 to vector<2x14x14xf32>
    %1133 = arith.mulf %41, %1132 : vector<2x14x14xf32>
    %1134 = arith.addf %1130, %1133 : vector<2x14x14xf32>
    %c9_618 = arith.constant 9 : index
    %c21_619 = arith.constant 21 : index
    %1135 = memref.load %arg2[%c9_618, %c21_619] : memref<16x27xf32, #tpu.memory_space<smem>>
    %1136 = vector.broadcast %1135 : f32 to vector<2x14x14xf32>
    %1137 = arith.mulf %43, %1136 : vector<2x14x14xf32>
    %1138 = arith.addf %1134, %1137 : vector<2x14x14xf32>
    %c9_620 = arith.constant 9 : index
    %c22_621 = arith.constant 22 : index
    %1139 = memref.load %arg2[%c9_620, %c22_621] : memref<16x27xf32, #tpu.memory_space<smem>>
    %1140 = vector.broadcast %1139 : f32 to vector<2x14x14xf32>
    %1141 = arith.mulf %45, %1140 : vector<2x14x14xf32>
    %1142 = arith.addf %1138, %1141 : vector<2x14x14xf32>
    %c9_622 = arith.constant 9 : index
    %c23_623 = arith.constant 23 : index
    %1143 = memref.load %arg2[%c9_622, %c23_623] : memref<16x27xf32, #tpu.memory_space<smem>>
    %1144 = vector.broadcast %1143 : f32 to vector<2x14x14xf32>
    %1145 = arith.mulf %47, %1144 : vector<2x14x14xf32>
    %1146 = arith.addf %1142, %1145 : vector<2x14x14xf32>
    %c9_624 = arith.constant 9 : index
    %c24_625 = arith.constant 24 : index
    %1147 = memref.load %arg2[%c9_624, %c24_625] : memref<16x27xf32, #tpu.memory_space<smem>>
    %1148 = vector.broadcast %1147 : f32 to vector<2x14x14xf32>
    %1149 = arith.mulf %49, %1148 : vector<2x14x14xf32>
    %1150 = arith.addf %1146, %1149 : vector<2x14x14xf32>
    %c9_626 = arith.constant 9 : index
    %c25_627 = arith.constant 25 : index
    %1151 = memref.load %arg2[%c9_626, %c25_627] : memref<16x27xf32, #tpu.memory_space<smem>>
    %1152 = vector.broadcast %1151 : f32 to vector<2x14x14xf32>
    %1153 = arith.mulf %51, %1152 : vector<2x14x14xf32>
    %1154 = arith.addf %1150, %1153 : vector<2x14x14xf32>
    %c9_628 = arith.constant 9 : index
    %c26_629 = arith.constant 26 : index
    %1155 = memref.load %arg2[%c9_628, %c26_629] : memref<16x27xf32, #tpu.memory_space<smem>>
    %1156 = vector.broadcast %1155 : f32 to vector<2x14x14xf32>
    %1157 = arith.mulf %53, %1156 : vector<2x14x14xf32>
    %1158 = arith.addf %1154, %1157 : vector<2x14x14xf32>
    %c9_630 = arith.constant 9 : index
    %1159 = memref.load %arg3[%c9_630] : memref<16xf32, #tpu.memory_space<smem>>
    %1160 = vector.broadcast %1159 : f32 to vector<2x14x14xf32>
    %1161 = arith.addf %1158, %1160 : vector<2x14x14xf32>
    %1162 = arith.minimumf %1051, %1161 : vector<2x14x14xf32>
    %c10_631 = arith.constant 10 : index
    %c0_632 = arith.constant 0 : index
    %1163 = memref.load %arg2[%c10_631, %c0_632] : memref<16x27xf32, #tpu.memory_space<smem>>
    %1164 = vector.broadcast %1163 : f32 to vector<2x14x14xf32>
    %1165 = arith.mulf %1, %1164 : vector<2x14x14xf32>
    %c10_633 = arith.constant 10 : index
    %c1_634 = arith.constant 1 : index
    %1166 = memref.load %arg2[%c10_633, %c1_634] : memref<16x27xf32, #tpu.memory_space<smem>>
    %1167 = vector.broadcast %1166 : f32 to vector<2x14x14xf32>
    %1168 = arith.mulf %3, %1167 : vector<2x14x14xf32>
    %1169 = arith.addf %1165, %1168 : vector<2x14x14xf32>
    %c10_635 = arith.constant 10 : index
    %c2_636 = arith.constant 2 : index
    %1170 = memref.load %arg2[%c10_635, %c2_636] : memref<16x27xf32, #tpu.memory_space<smem>>
    %1171 = vector.broadcast %1170 : f32 to vector<2x14x14xf32>
    %1172 = arith.mulf %5, %1171 : vector<2x14x14xf32>
    %1173 = arith.addf %1169, %1172 : vector<2x14x14xf32>
    %c10_637 = arith.constant 10 : index
    %c3_638 = arith.constant 3 : index
    %1174 = memref.load %arg2[%c10_637, %c3_638] : memref<16x27xf32, #tpu.memory_space<smem>>
    %1175 = vector.broadcast %1174 : f32 to vector<2x14x14xf32>
    %1176 = arith.mulf %7, %1175 : vector<2x14x14xf32>
    %1177 = arith.addf %1173, %1176 : vector<2x14x14xf32>
    %c10_639 = arith.constant 10 : index
    %c4_640 = arith.constant 4 : index
    %1178 = memref.load %arg2[%c10_639, %c4_640] : memref<16x27xf32, #tpu.memory_space<smem>>
    %1179 = vector.broadcast %1178 : f32 to vector<2x14x14xf32>
    %1180 = arith.mulf %9, %1179 : vector<2x14x14xf32>
    %1181 = arith.addf %1177, %1180 : vector<2x14x14xf32>
    %c10_641 = arith.constant 10 : index
    %c5_642 = arith.constant 5 : index
    %1182 = memref.load %arg2[%c10_641, %c5_642] : memref<16x27xf32, #tpu.memory_space<smem>>
    %1183 = vector.broadcast %1182 : f32 to vector<2x14x14xf32>
    %1184 = arith.mulf %11, %1183 : vector<2x14x14xf32>
    %1185 = arith.addf %1181, %1184 : vector<2x14x14xf32>
    %c10_643 = arith.constant 10 : index
    %c6_644 = arith.constant 6 : index
    %1186 = memref.load %arg2[%c10_643, %c6_644] : memref<16x27xf32, #tpu.memory_space<smem>>
    %1187 = vector.broadcast %1186 : f32 to vector<2x14x14xf32>
    %1188 = arith.mulf %13, %1187 : vector<2x14x14xf32>
    %1189 = arith.addf %1185, %1188 : vector<2x14x14xf32>
    %c10_645 = arith.constant 10 : index
    %c7_646 = arith.constant 7 : index
    %1190 = memref.load %arg2[%c10_645, %c7_646] : memref<16x27xf32, #tpu.memory_space<smem>>
    %1191 = vector.broadcast %1190 : f32 to vector<2x14x14xf32>
    %1192 = arith.mulf %15, %1191 : vector<2x14x14xf32>
    %1193 = arith.addf %1189, %1192 : vector<2x14x14xf32>
    %c10_647 = arith.constant 10 : index
    %c8_648 = arith.constant 8 : index
    %1194 = memref.load %arg2[%c10_647, %c8_648] : memref<16x27xf32, #tpu.memory_space<smem>>
    %1195 = vector.broadcast %1194 : f32 to vector<2x14x14xf32>
    %1196 = arith.mulf %17, %1195 : vector<2x14x14xf32>
    %1197 = arith.addf %1193, %1196 : vector<2x14x14xf32>
    %c10_649 = arith.constant 10 : index
    %c9_650 = arith.constant 9 : index
    %1198 = memref.load %arg2[%c10_649, %c9_650] : memref<16x27xf32, #tpu.memory_space<smem>>
    %1199 = vector.broadcast %1198 : f32 to vector<2x14x14xf32>
    %1200 = arith.mulf %19, %1199 : vector<2x14x14xf32>
    %1201 = arith.addf %1197, %1200 : vector<2x14x14xf32>
    %c10_651 = arith.constant 10 : index
    %c10_652 = arith.constant 10 : index
    %1202 = memref.load %arg2[%c10_651, %c10_652] : memref<16x27xf32, #tpu.memory_space<smem>>
    %1203 = vector.broadcast %1202 : f32 to vector<2x14x14xf32>
    %1204 = arith.mulf %21, %1203 : vector<2x14x14xf32>
    %1205 = arith.addf %1201, %1204 : vector<2x14x14xf32>
    %c10_653 = arith.constant 10 : index
    %c11_654 = arith.constant 11 : index
    %1206 = memref.load %arg2[%c10_653, %c11_654] : memref<16x27xf32, #tpu.memory_space<smem>>
    %1207 = vector.broadcast %1206 : f32 to vector<2x14x14xf32>
    %1208 = arith.mulf %23, %1207 : vector<2x14x14xf32>
    %1209 = arith.addf %1205, %1208 : vector<2x14x14xf32>
    %c10_655 = arith.constant 10 : index
    %c12_656 = arith.constant 12 : index
    %1210 = memref.load %arg2[%c10_655, %c12_656] : memref<16x27xf32, #tpu.memory_space<smem>>
    %1211 = vector.broadcast %1210 : f32 to vector<2x14x14xf32>
    %1212 = arith.mulf %25, %1211 : vector<2x14x14xf32>
    %1213 = arith.addf %1209, %1212 : vector<2x14x14xf32>
    %c10_657 = arith.constant 10 : index
    %c13_658 = arith.constant 13 : index
    %1214 = memref.load %arg2[%c10_657, %c13_658] : memref<16x27xf32, #tpu.memory_space<smem>>
    %1215 = vector.broadcast %1214 : f32 to vector<2x14x14xf32>
    %1216 = arith.mulf %27, %1215 : vector<2x14x14xf32>
    %1217 = arith.addf %1213, %1216 : vector<2x14x14xf32>
    %c10_659 = arith.constant 10 : index
    %c14_660 = arith.constant 14 : index
    %1218 = memref.load %arg2[%c10_659, %c14_660] : memref<16x27xf32, #tpu.memory_space<smem>>
    %1219 = vector.broadcast %1218 : f32 to vector<2x14x14xf32>
    %1220 = arith.mulf %29, %1219 : vector<2x14x14xf32>
    %1221 = arith.addf %1217, %1220 : vector<2x14x14xf32>
    %c10_661 = arith.constant 10 : index
    %c15_662 = arith.constant 15 : index
    %1222 = memref.load %arg2[%c10_661, %c15_662] : memref<16x27xf32, #tpu.memory_space<smem>>
    %1223 = vector.broadcast %1222 : f32 to vector<2x14x14xf32>
    %1224 = arith.mulf %31, %1223 : vector<2x14x14xf32>
    %1225 = arith.addf %1221, %1224 : vector<2x14x14xf32>
    %c10_663 = arith.constant 10 : index
    %c16_664 = arith.constant 16 : index
    %1226 = memref.load %arg2[%c10_663, %c16_664] : memref<16x27xf32, #tpu.memory_space<smem>>
    %1227 = vector.broadcast %1226 : f32 to vector<2x14x14xf32>
    %1228 = arith.mulf %33, %1227 : vector<2x14x14xf32>
    %1229 = arith.addf %1225, %1228 : vector<2x14x14xf32>
    %c10_665 = arith.constant 10 : index
    %c17_666 = arith.constant 17 : index
    %1230 = memref.load %arg2[%c10_665, %c17_666] : memref<16x27xf32, #tpu.memory_space<smem>>
    %1231 = vector.broadcast %1230 : f32 to vector<2x14x14xf32>
    %1232 = arith.mulf %35, %1231 : vector<2x14x14xf32>
    %1233 = arith.addf %1229, %1232 : vector<2x14x14xf32>
    %c10_667 = arith.constant 10 : index
    %c18_668 = arith.constant 18 : index
    %1234 = memref.load %arg2[%c10_667, %c18_668] : memref<16x27xf32, #tpu.memory_space<smem>>
    %1235 = vector.broadcast %1234 : f32 to vector<2x14x14xf32>
    %1236 = arith.mulf %37, %1235 : vector<2x14x14xf32>
    %1237 = arith.addf %1233, %1236 : vector<2x14x14xf32>
    %c10_669 = arith.constant 10 : index
    %c19_670 = arith.constant 19 : index
    %1238 = memref.load %arg2[%c10_669, %c19_670] : memref<16x27xf32, #tpu.memory_space<smem>>
    %1239 = vector.broadcast %1238 : f32 to vector<2x14x14xf32>
    %1240 = arith.mulf %39, %1239 : vector<2x14x14xf32>
    %1241 = arith.addf %1237, %1240 : vector<2x14x14xf32>
    %c10_671 = arith.constant 10 : index
    %c20_672 = arith.constant 20 : index
    %1242 = memref.load %arg2[%c10_671, %c20_672] : memref<16x27xf32, #tpu.memory_space<smem>>
    %1243 = vector.broadcast %1242 : f32 to vector<2x14x14xf32>
    %1244 = arith.mulf %41, %1243 : vector<2x14x14xf32>
    %1245 = arith.addf %1241, %1244 : vector<2x14x14xf32>
    %c10_673 = arith.constant 10 : index
    %c21_674 = arith.constant 21 : index
    %1246 = memref.load %arg2[%c10_673, %c21_674] : memref<16x27xf32, #tpu.memory_space<smem>>
    %1247 = vector.broadcast %1246 : f32 to vector<2x14x14xf32>
    %1248 = arith.mulf %43, %1247 : vector<2x14x14xf32>
    %1249 = arith.addf %1245, %1248 : vector<2x14x14xf32>
    %c10_675 = arith.constant 10 : index
    %c22_676 = arith.constant 22 : index
    %1250 = memref.load %arg2[%c10_675, %c22_676] : memref<16x27xf32, #tpu.memory_space<smem>>
    %1251 = vector.broadcast %1250 : f32 to vector<2x14x14xf32>
    %1252 = arith.mulf %45, %1251 : vector<2x14x14xf32>
    %1253 = arith.addf %1249, %1252 : vector<2x14x14xf32>
    %c10_677 = arith.constant 10 : index
    %c23_678 = arith.constant 23 : index
    %1254 = memref.load %arg2[%c10_677, %c23_678] : memref<16x27xf32, #tpu.memory_space<smem>>
    %1255 = vector.broadcast %1254 : f32 to vector<2x14x14xf32>
    %1256 = arith.mulf %47, %1255 : vector<2x14x14xf32>
    %1257 = arith.addf %1253, %1256 : vector<2x14x14xf32>
    %c10_679 = arith.constant 10 : index
    %c24_680 = arith.constant 24 : index
    %1258 = memref.load %arg2[%c10_679, %c24_680] : memref<16x27xf32, #tpu.memory_space<smem>>
    %1259 = vector.broadcast %1258 : f32 to vector<2x14x14xf32>
    %1260 = arith.mulf %49, %1259 : vector<2x14x14xf32>
    %1261 = arith.addf %1257, %1260 : vector<2x14x14xf32>
    %c10_681 = arith.constant 10 : index
    %c25_682 = arith.constant 25 : index
    %1262 = memref.load %arg2[%c10_681, %c25_682] : memref<16x27xf32, #tpu.memory_space<smem>>
    %1263 = vector.broadcast %1262 : f32 to vector<2x14x14xf32>
    %1264 = arith.mulf %51, %1263 : vector<2x14x14xf32>
    %1265 = arith.addf %1261, %1264 : vector<2x14x14xf32>
    %c10_683 = arith.constant 10 : index
    %c26_684 = arith.constant 26 : index
    %1266 = memref.load %arg2[%c10_683, %c26_684] : memref<16x27xf32, #tpu.memory_space<smem>>
    %1267 = vector.broadcast %1266 : f32 to vector<2x14x14xf32>
    %1268 = arith.mulf %53, %1267 : vector<2x14x14xf32>
    %1269 = arith.addf %1265, %1268 : vector<2x14x14xf32>
    %c10_685 = arith.constant 10 : index
    %1270 = memref.load %arg3[%c10_685] : memref<16xf32, #tpu.memory_space<smem>>
    %1271 = vector.broadcast %1270 : f32 to vector<2x14x14xf32>
    %1272 = arith.addf %1269, %1271 : vector<2x14x14xf32>
    %1273 = arith.minimumf %1162, %1272 : vector<2x14x14xf32>
    %c11_686 = arith.constant 11 : index
    %c0_687 = arith.constant 0 : index
    %1274 = memref.load %arg2[%c11_686, %c0_687] : memref<16x27xf32, #tpu.memory_space<smem>>
    %1275 = vector.broadcast %1274 : f32 to vector<2x14x14xf32>
    %1276 = arith.mulf %1, %1275 : vector<2x14x14xf32>
    %c11_688 = arith.constant 11 : index
    %c1_689 = arith.constant 1 : index
    %1277 = memref.load %arg2[%c11_688, %c1_689] : memref<16x27xf32, #tpu.memory_space<smem>>
    %1278 = vector.broadcast %1277 : f32 to vector<2x14x14xf32>
    %1279 = arith.mulf %3, %1278 : vector<2x14x14xf32>
    %1280 = arith.addf %1276, %1279 : vector<2x14x14xf32>
    %c11_690 = arith.constant 11 : index
    %c2_691 = arith.constant 2 : index
    %1281 = memref.load %arg2[%c11_690, %c2_691] : memref<16x27xf32, #tpu.memory_space<smem>>
    %1282 = vector.broadcast %1281 : f32 to vector<2x14x14xf32>
    %1283 = arith.mulf %5, %1282 : vector<2x14x14xf32>
    %1284 = arith.addf %1280, %1283 : vector<2x14x14xf32>
    %c11_692 = arith.constant 11 : index
    %c3_693 = arith.constant 3 : index
    %1285 = memref.load %arg2[%c11_692, %c3_693] : memref<16x27xf32, #tpu.memory_space<smem>>
    %1286 = vector.broadcast %1285 : f32 to vector<2x14x14xf32>
    %1287 = arith.mulf %7, %1286 : vector<2x14x14xf32>
    %1288 = arith.addf %1284, %1287 : vector<2x14x14xf32>
    %c11_694 = arith.constant 11 : index
    %c4_695 = arith.constant 4 : index
    %1289 = memref.load %arg2[%c11_694, %c4_695] : memref<16x27xf32, #tpu.memory_space<smem>>
    %1290 = vector.broadcast %1289 : f32 to vector<2x14x14xf32>
    %1291 = arith.mulf %9, %1290 : vector<2x14x14xf32>
    %1292 = arith.addf %1288, %1291 : vector<2x14x14xf32>
    %c11_696 = arith.constant 11 : index
    %c5_697 = arith.constant 5 : index
    %1293 = memref.load %arg2[%c11_696, %c5_697] : memref<16x27xf32, #tpu.memory_space<smem>>
    %1294 = vector.broadcast %1293 : f32 to vector<2x14x14xf32>
    %1295 = arith.mulf %11, %1294 : vector<2x14x14xf32>
    %1296 = arith.addf %1292, %1295 : vector<2x14x14xf32>
    %c11_698 = arith.constant 11 : index
    %c6_699 = arith.constant 6 : index
    %1297 = memref.load %arg2[%c11_698, %c6_699] : memref<16x27xf32, #tpu.memory_space<smem>>
    %1298 = vector.broadcast %1297 : f32 to vector<2x14x14xf32>
    %1299 = arith.mulf %13, %1298 : vector<2x14x14xf32>
    %1300 = arith.addf %1296, %1299 : vector<2x14x14xf32>
    %c11_700 = arith.constant 11 : index
    %c7_701 = arith.constant 7 : index
    %1301 = memref.load %arg2[%c11_700, %c7_701] : memref<16x27xf32, #tpu.memory_space<smem>>
    %1302 = vector.broadcast %1301 : f32 to vector<2x14x14xf32>
    %1303 = arith.mulf %15, %1302 : vector<2x14x14xf32>
    %1304 = arith.addf %1300, %1303 : vector<2x14x14xf32>
    %c11_702 = arith.constant 11 : index
    %c8_703 = arith.constant 8 : index
    %1305 = memref.load %arg2[%c11_702, %c8_703] : memref<16x27xf32, #tpu.memory_space<smem>>
    %1306 = vector.broadcast %1305 : f32 to vector<2x14x14xf32>
    %1307 = arith.mulf %17, %1306 : vector<2x14x14xf32>
    %1308 = arith.addf %1304, %1307 : vector<2x14x14xf32>
    %c11_704 = arith.constant 11 : index
    %c9_705 = arith.constant 9 : index
    %1309 = memref.load %arg2[%c11_704, %c9_705] : memref<16x27xf32, #tpu.memory_space<smem>>
    %1310 = vector.broadcast %1309 : f32 to vector<2x14x14xf32>
    %1311 = arith.mulf %19, %1310 : vector<2x14x14xf32>
    %1312 = arith.addf %1308, %1311 : vector<2x14x14xf32>
    %c11_706 = arith.constant 11 : index
    %c10_707 = arith.constant 10 : index
    %1313 = memref.load %arg2[%c11_706, %c10_707] : memref<16x27xf32, #tpu.memory_space<smem>>
    %1314 = vector.broadcast %1313 : f32 to vector<2x14x14xf32>
    %1315 = arith.mulf %21, %1314 : vector<2x14x14xf32>
    %1316 = arith.addf %1312, %1315 : vector<2x14x14xf32>
    %c11_708 = arith.constant 11 : index
    %c11_709 = arith.constant 11 : index
    %1317 = memref.load %arg2[%c11_708, %c11_709] : memref<16x27xf32, #tpu.memory_space<smem>>
    %1318 = vector.broadcast %1317 : f32 to vector<2x14x14xf32>
    %1319 = arith.mulf %23, %1318 : vector<2x14x14xf32>
    %1320 = arith.addf %1316, %1319 : vector<2x14x14xf32>
    %c11_710 = arith.constant 11 : index
    %c12_711 = arith.constant 12 : index
    %1321 = memref.load %arg2[%c11_710, %c12_711] : memref<16x27xf32, #tpu.memory_space<smem>>
    %1322 = vector.broadcast %1321 : f32 to vector<2x14x14xf32>
    %1323 = arith.mulf %25, %1322 : vector<2x14x14xf32>
    %1324 = arith.addf %1320, %1323 : vector<2x14x14xf32>
    %c11_712 = arith.constant 11 : index
    %c13_713 = arith.constant 13 : index
    %1325 = memref.load %arg2[%c11_712, %c13_713] : memref<16x27xf32, #tpu.memory_space<smem>>
    %1326 = vector.broadcast %1325 : f32 to vector<2x14x14xf32>
    %1327 = arith.mulf %27, %1326 : vector<2x14x14xf32>
    %1328 = arith.addf %1324, %1327 : vector<2x14x14xf32>
    %c11_714 = arith.constant 11 : index
    %c14_715 = arith.constant 14 : index
    %1329 = memref.load %arg2[%c11_714, %c14_715] : memref<16x27xf32, #tpu.memory_space<smem>>
    %1330 = vector.broadcast %1329 : f32 to vector<2x14x14xf32>
    %1331 = arith.mulf %29, %1330 : vector<2x14x14xf32>
    %1332 = arith.addf %1328, %1331 : vector<2x14x14xf32>
    %c11_716 = arith.constant 11 : index
    %c15_717 = arith.constant 15 : index
    %1333 = memref.load %arg2[%c11_716, %c15_717] : memref<16x27xf32, #tpu.memory_space<smem>>
    %1334 = vector.broadcast %1333 : f32 to vector<2x14x14xf32>
    %1335 = arith.mulf %31, %1334 : vector<2x14x14xf32>
    %1336 = arith.addf %1332, %1335 : vector<2x14x14xf32>
    %c11_718 = arith.constant 11 : index
    %c16_719 = arith.constant 16 : index
    %1337 = memref.load %arg2[%c11_718, %c16_719] : memref<16x27xf32, #tpu.memory_space<smem>>
    %1338 = vector.broadcast %1337 : f32 to vector<2x14x14xf32>
    %1339 = arith.mulf %33, %1338 : vector<2x14x14xf32>
    %1340 = arith.addf %1336, %1339 : vector<2x14x14xf32>
    %c11_720 = arith.constant 11 : index
    %c17_721 = arith.constant 17 : index
    %1341 = memref.load %arg2[%c11_720, %c17_721] : memref<16x27xf32, #tpu.memory_space<smem>>
    %1342 = vector.broadcast %1341 : f32 to vector<2x14x14xf32>
    %1343 = arith.mulf %35, %1342 : vector<2x14x14xf32>
    %1344 = arith.addf %1340, %1343 : vector<2x14x14xf32>
    %c11_722 = arith.constant 11 : index
    %c18_723 = arith.constant 18 : index
    %1345 = memref.load %arg2[%c11_722, %c18_723] : memref<16x27xf32, #tpu.memory_space<smem>>
    %1346 = vector.broadcast %1345 : f32 to vector<2x14x14xf32>
    %1347 = arith.mulf %37, %1346 : vector<2x14x14xf32>
    %1348 = arith.addf %1344, %1347 : vector<2x14x14xf32>
    %c11_724 = arith.constant 11 : index
    %c19_725 = arith.constant 19 : index
    %1349 = memref.load %arg2[%c11_724, %c19_725] : memref<16x27xf32, #tpu.memory_space<smem>>
    %1350 = vector.broadcast %1349 : f32 to vector<2x14x14xf32>
    %1351 = arith.mulf %39, %1350 : vector<2x14x14xf32>
    %1352 = arith.addf %1348, %1351 : vector<2x14x14xf32>
    %c11_726 = arith.constant 11 : index
    %c20_727 = arith.constant 20 : index
    %1353 = memref.load %arg2[%c11_726, %c20_727] : memref<16x27xf32, #tpu.memory_space<smem>>
    %1354 = vector.broadcast %1353 : f32 to vector<2x14x14xf32>
    %1355 = arith.mulf %41, %1354 : vector<2x14x14xf32>
    %1356 = arith.addf %1352, %1355 : vector<2x14x14xf32>
    %c11_728 = arith.constant 11 : index
    %c21_729 = arith.constant 21 : index
    %1357 = memref.load %arg2[%c11_728, %c21_729] : memref<16x27xf32, #tpu.memory_space<smem>>
    %1358 = vector.broadcast %1357 : f32 to vector<2x14x14xf32>
    %1359 = arith.mulf %43, %1358 : vector<2x14x14xf32>
    %1360 = arith.addf %1356, %1359 : vector<2x14x14xf32>
    %c11_730 = arith.constant 11 : index
    %c22_731 = arith.constant 22 : index
    %1361 = memref.load %arg2[%c11_730, %c22_731] : memref<16x27xf32, #tpu.memory_space<smem>>
    %1362 = vector.broadcast %1361 : f32 to vector<2x14x14xf32>
    %1363 = arith.mulf %45, %1362 : vector<2x14x14xf32>
    %1364 = arith.addf %1360, %1363 : vector<2x14x14xf32>
    %c11_732 = arith.constant 11 : index
    %c23_733 = arith.constant 23 : index
    %1365 = memref.load %arg2[%c11_732, %c23_733] : memref<16x27xf32, #tpu.memory_space<smem>>
    %1366 = vector.broadcast %1365 : f32 to vector<2x14x14xf32>
    %1367 = arith.mulf %47, %1366 : vector<2x14x14xf32>
    %1368 = arith.addf %1364, %1367 : vector<2x14x14xf32>
    %c11_734 = arith.constant 11 : index
    %c24_735 = arith.constant 24 : index
    %1369 = memref.load %arg2[%c11_734, %c24_735] : memref<16x27xf32, #tpu.memory_space<smem>>
    %1370 = vector.broadcast %1369 : f32 to vector<2x14x14xf32>
    %1371 = arith.mulf %49, %1370 : vector<2x14x14xf32>
    %1372 = arith.addf %1368, %1371 : vector<2x14x14xf32>
    %c11_736 = arith.constant 11 : index
    %c25_737 = arith.constant 25 : index
    %1373 = memref.load %arg2[%c11_736, %c25_737] : memref<16x27xf32, #tpu.memory_space<smem>>
    %1374 = vector.broadcast %1373 : f32 to vector<2x14x14xf32>
    %1375 = arith.mulf %51, %1374 : vector<2x14x14xf32>
    %1376 = arith.addf %1372, %1375 : vector<2x14x14xf32>
    %c11_738 = arith.constant 11 : index
    %c26_739 = arith.constant 26 : index
    %1377 = memref.load %arg2[%c11_738, %c26_739] : memref<16x27xf32, #tpu.memory_space<smem>>
    %1378 = vector.broadcast %1377 : f32 to vector<2x14x14xf32>
    %1379 = arith.mulf %53, %1378 : vector<2x14x14xf32>
    %1380 = arith.addf %1376, %1379 : vector<2x14x14xf32>
    %c11_740 = arith.constant 11 : index
    %1381 = memref.load %arg3[%c11_740] : memref<16xf32, #tpu.memory_space<smem>>
    %1382 = vector.broadcast %1381 : f32 to vector<2x14x14xf32>
    %1383 = arith.addf %1380, %1382 : vector<2x14x14xf32>
    %1384 = arith.minimumf %1273, %1383 : vector<2x14x14xf32>
    %c12_741 = arith.constant 12 : index
    %c0_742 = arith.constant 0 : index
    %1385 = memref.load %arg2[%c12_741, %c0_742] : memref<16x27xf32, #tpu.memory_space<smem>>
    %1386 = vector.broadcast %1385 : f32 to vector<2x14x14xf32>
    %1387 = arith.mulf %1, %1386 : vector<2x14x14xf32>
    %c12_743 = arith.constant 12 : index
    %c1_744 = arith.constant 1 : index
    %1388 = memref.load %arg2[%c12_743, %c1_744] : memref<16x27xf32, #tpu.memory_space<smem>>
    %1389 = vector.broadcast %1388 : f32 to vector<2x14x14xf32>
    %1390 = arith.mulf %3, %1389 : vector<2x14x14xf32>
    %1391 = arith.addf %1387, %1390 : vector<2x14x14xf32>
    %c12_745 = arith.constant 12 : index
    %c2_746 = arith.constant 2 : index
    %1392 = memref.load %arg2[%c12_745, %c2_746] : memref<16x27xf32, #tpu.memory_space<smem>>
    %1393 = vector.broadcast %1392 : f32 to vector<2x14x14xf32>
    %1394 = arith.mulf %5, %1393 : vector<2x14x14xf32>
    %1395 = arith.addf %1391, %1394 : vector<2x14x14xf32>
    %c12_747 = arith.constant 12 : index
    %c3_748 = arith.constant 3 : index
    %1396 = memref.load %arg2[%c12_747, %c3_748] : memref<16x27xf32, #tpu.memory_space<smem>>
    %1397 = vector.broadcast %1396 : f32 to vector<2x14x14xf32>
    %1398 = arith.mulf %7, %1397 : vector<2x14x14xf32>
    %1399 = arith.addf %1395, %1398 : vector<2x14x14xf32>
    %c12_749 = arith.constant 12 : index
    %c4_750 = arith.constant 4 : index
    %1400 = memref.load %arg2[%c12_749, %c4_750] : memref<16x27xf32, #tpu.memory_space<smem>>
    %1401 = vector.broadcast %1400 : f32 to vector<2x14x14xf32>
    %1402 = arith.mulf %9, %1401 : vector<2x14x14xf32>
    %1403 = arith.addf %1399, %1402 : vector<2x14x14xf32>
    %c12_751 = arith.constant 12 : index
    %c5_752 = arith.constant 5 : index
    %1404 = memref.load %arg2[%c12_751, %c5_752] : memref<16x27xf32, #tpu.memory_space<smem>>
    %1405 = vector.broadcast %1404 : f32 to vector<2x14x14xf32>
    %1406 = arith.mulf %11, %1405 : vector<2x14x14xf32>
    %1407 = arith.addf %1403, %1406 : vector<2x14x14xf32>
    %c12_753 = arith.constant 12 : index
    %c6_754 = arith.constant 6 : index
    %1408 = memref.load %arg2[%c12_753, %c6_754] : memref<16x27xf32, #tpu.memory_space<smem>>
    %1409 = vector.broadcast %1408 : f32 to vector<2x14x14xf32>
    %1410 = arith.mulf %13, %1409 : vector<2x14x14xf32>
    %1411 = arith.addf %1407, %1410 : vector<2x14x14xf32>
    %c12_755 = arith.constant 12 : index
    %c7_756 = arith.constant 7 : index
    %1412 = memref.load %arg2[%c12_755, %c7_756] : memref<16x27xf32, #tpu.memory_space<smem>>
    %1413 = vector.broadcast %1412 : f32 to vector<2x14x14xf32>
    %1414 = arith.mulf %15, %1413 : vector<2x14x14xf32>
    %1415 = arith.addf %1411, %1414 : vector<2x14x14xf32>
    %c12_757 = arith.constant 12 : index
    %c8_758 = arith.constant 8 : index
    %1416 = memref.load %arg2[%c12_757, %c8_758] : memref<16x27xf32, #tpu.memory_space<smem>>
    %1417 = vector.broadcast %1416 : f32 to vector<2x14x14xf32>
    %1418 = arith.mulf %17, %1417 : vector<2x14x14xf32>
    %1419 = arith.addf %1415, %1418 : vector<2x14x14xf32>
    %c12_759 = arith.constant 12 : index
    %c9_760 = arith.constant 9 : index
    %1420 = memref.load %arg2[%c12_759, %c9_760] : memref<16x27xf32, #tpu.memory_space<smem>>
    %1421 = vector.broadcast %1420 : f32 to vector<2x14x14xf32>
    %1422 = arith.mulf %19, %1421 : vector<2x14x14xf32>
    %1423 = arith.addf %1419, %1422 : vector<2x14x14xf32>
    %c12_761 = arith.constant 12 : index
    %c10_762 = arith.constant 10 : index
    %1424 = memref.load %arg2[%c12_761, %c10_762] : memref<16x27xf32, #tpu.memory_space<smem>>
    %1425 = vector.broadcast %1424 : f32 to vector<2x14x14xf32>
    %1426 = arith.mulf %21, %1425 : vector<2x14x14xf32>
    %1427 = arith.addf %1423, %1426 : vector<2x14x14xf32>
    %c12_763 = arith.constant 12 : index
    %c11_764 = arith.constant 11 : index
    %1428 = memref.load %arg2[%c12_763, %c11_764] : memref<16x27xf32, #tpu.memory_space<smem>>
    %1429 = vector.broadcast %1428 : f32 to vector<2x14x14xf32>
    %1430 = arith.mulf %23, %1429 : vector<2x14x14xf32>
    %1431 = arith.addf %1427, %1430 : vector<2x14x14xf32>
    %c12_765 = arith.constant 12 : index
    %c12_766 = arith.constant 12 : index
    %1432 = memref.load %arg2[%c12_765, %c12_766] : memref<16x27xf32, #tpu.memory_space<smem>>
    %1433 = vector.broadcast %1432 : f32 to vector<2x14x14xf32>
    %1434 = arith.mulf %25, %1433 : vector<2x14x14xf32>
    %1435 = arith.addf %1431, %1434 : vector<2x14x14xf32>
    %c12_767 = arith.constant 12 : index
    %c13_768 = arith.constant 13 : index
    %1436 = memref.load %arg2[%c12_767, %c13_768] : memref<16x27xf32, #tpu.memory_space<smem>>
    %1437 = vector.broadcast %1436 : f32 to vector<2x14x14xf32>
    %1438 = arith.mulf %27, %1437 : vector<2x14x14xf32>
    %1439 = arith.addf %1435, %1438 : vector<2x14x14xf32>
    %c12_769 = arith.constant 12 : index
    %c14_770 = arith.constant 14 : index
    %1440 = memref.load %arg2[%c12_769, %c14_770] : memref<16x27xf32, #tpu.memory_space<smem>>
    %1441 = vector.broadcast %1440 : f32 to vector<2x14x14xf32>
    %1442 = arith.mulf %29, %1441 : vector<2x14x14xf32>
    %1443 = arith.addf %1439, %1442 : vector<2x14x14xf32>
    %c12_771 = arith.constant 12 : index
    %c15_772 = arith.constant 15 : index
    %1444 = memref.load %arg2[%c12_771, %c15_772] : memref<16x27xf32, #tpu.memory_space<smem>>
    %1445 = vector.broadcast %1444 : f32 to vector<2x14x14xf32>
    %1446 = arith.mulf %31, %1445 : vector<2x14x14xf32>
    %1447 = arith.addf %1443, %1446 : vector<2x14x14xf32>
    %c12_773 = arith.constant 12 : index
    %c16_774 = arith.constant 16 : index
    %1448 = memref.load %arg2[%c12_773, %c16_774] : memref<16x27xf32, #tpu.memory_space<smem>>
    %1449 = vector.broadcast %1448 : f32 to vector<2x14x14xf32>
    %1450 = arith.mulf %33, %1449 : vector<2x14x14xf32>
    %1451 = arith.addf %1447, %1450 : vector<2x14x14xf32>
    %c12_775 = arith.constant 12 : index
    %c17_776 = arith.constant 17 : index
    %1452 = memref.load %arg2[%c12_775, %c17_776] : memref<16x27xf32, #tpu.memory_space<smem>>
    %1453 = vector.broadcast %1452 : f32 to vector<2x14x14xf32>
    %1454 = arith.mulf %35, %1453 : vector<2x14x14xf32>
    %1455 = arith.addf %1451, %1454 : vector<2x14x14xf32>
    %c12_777 = arith.constant 12 : index
    %c18_778 = arith.constant 18 : index
    %1456 = memref.load %arg2[%c12_777, %c18_778] : memref<16x27xf32, #tpu.memory_space<smem>>
    %1457 = vector.broadcast %1456 : f32 to vector<2x14x14xf32>
    %1458 = arith.mulf %37, %1457 : vector<2x14x14xf32>
    %1459 = arith.addf %1455, %1458 : vector<2x14x14xf32>
    %c12_779 = arith.constant 12 : index
    %c19_780 = arith.constant 19 : index
    %1460 = memref.load %arg2[%c12_779, %c19_780] : memref<16x27xf32, #tpu.memory_space<smem>>
    %1461 = vector.broadcast %1460 : f32 to vector<2x14x14xf32>
    %1462 = arith.mulf %39, %1461 : vector<2x14x14xf32>
    %1463 = arith.addf %1459, %1462 : vector<2x14x14xf32>
    %c12_781 = arith.constant 12 : index
    %c20_782 = arith.constant 20 : index
    %1464 = memref.load %arg2[%c12_781, %c20_782] : memref<16x27xf32, #tpu.memory_space<smem>>
    %1465 = vector.broadcast %1464 : f32 to vector<2x14x14xf32>
    %1466 = arith.mulf %41, %1465 : vector<2x14x14xf32>
    %1467 = arith.addf %1463, %1466 : vector<2x14x14xf32>
    %c12_783 = arith.constant 12 : index
    %c21_784 = arith.constant 21 : index
    %1468 = memref.load %arg2[%c12_783, %c21_784] : memref<16x27xf32, #tpu.memory_space<smem>>
    %1469 = vector.broadcast %1468 : f32 to vector<2x14x14xf32>
    %1470 = arith.mulf %43, %1469 : vector<2x14x14xf32>
    %1471 = arith.addf %1467, %1470 : vector<2x14x14xf32>
    %c12_785 = arith.constant 12 : index
    %c22_786 = arith.constant 22 : index
    %1472 = memref.load %arg2[%c12_785, %c22_786] : memref<16x27xf32, #tpu.memory_space<smem>>
    %1473 = vector.broadcast %1472 : f32 to vector<2x14x14xf32>
    %1474 = arith.mulf %45, %1473 : vector<2x14x14xf32>
    %1475 = arith.addf %1471, %1474 : vector<2x14x14xf32>
    %c12_787 = arith.constant 12 : index
    %c23_788 = arith.constant 23 : index
    %1476 = memref.load %arg2[%c12_787, %c23_788] : memref<16x27xf32, #tpu.memory_space<smem>>
    %1477 = vector.broadcast %1476 : f32 to vector<2x14x14xf32>
    %1478 = arith.mulf %47, %1477 : vector<2x14x14xf32>
    %1479 = arith.addf %1475, %1478 : vector<2x14x14xf32>
    %c12_789 = arith.constant 12 : index
    %c24_790 = arith.constant 24 : index
    %1480 = memref.load %arg2[%c12_789, %c24_790] : memref<16x27xf32, #tpu.memory_space<smem>>
    %1481 = vector.broadcast %1480 : f32 to vector<2x14x14xf32>
    %1482 = arith.mulf %49, %1481 : vector<2x14x14xf32>
    %1483 = arith.addf %1479, %1482 : vector<2x14x14xf32>
    %c12_791 = arith.constant 12 : index
    %c25_792 = arith.constant 25 : index
    %1484 = memref.load %arg2[%c12_791, %c25_792] : memref<16x27xf32, #tpu.memory_space<smem>>
    %1485 = vector.broadcast %1484 : f32 to vector<2x14x14xf32>
    %1486 = arith.mulf %51, %1485 : vector<2x14x14xf32>
    %1487 = arith.addf %1483, %1486 : vector<2x14x14xf32>
    %c12_793 = arith.constant 12 : index
    %c26_794 = arith.constant 26 : index
    %1488 = memref.load %arg2[%c12_793, %c26_794] : memref<16x27xf32, #tpu.memory_space<smem>>
    %1489 = vector.broadcast %1488 : f32 to vector<2x14x14xf32>
    %1490 = arith.mulf %53, %1489 : vector<2x14x14xf32>
    %1491 = arith.addf %1487, %1490 : vector<2x14x14xf32>
    %c12_795 = arith.constant 12 : index
    %1492 = memref.load %arg3[%c12_795] : memref<16xf32, #tpu.memory_space<smem>>
    %1493 = vector.broadcast %1492 : f32 to vector<2x14x14xf32>
    %1494 = arith.addf %1491, %1493 : vector<2x14x14xf32>
    %1495 = arith.minimumf %1384, %1494 : vector<2x14x14xf32>
    %c13_796 = arith.constant 13 : index
    %c0_797 = arith.constant 0 : index
    %1496 = memref.load %arg2[%c13_796, %c0_797] : memref<16x27xf32, #tpu.memory_space<smem>>
    %1497 = vector.broadcast %1496 : f32 to vector<2x14x14xf32>
    %1498 = arith.mulf %1, %1497 : vector<2x14x14xf32>
    %c13_798 = arith.constant 13 : index
    %c1_799 = arith.constant 1 : index
    %1499 = memref.load %arg2[%c13_798, %c1_799] : memref<16x27xf32, #tpu.memory_space<smem>>
    %1500 = vector.broadcast %1499 : f32 to vector<2x14x14xf32>
    %1501 = arith.mulf %3, %1500 : vector<2x14x14xf32>
    %1502 = arith.addf %1498, %1501 : vector<2x14x14xf32>
    %c13_800 = arith.constant 13 : index
    %c2_801 = arith.constant 2 : index
    %1503 = memref.load %arg2[%c13_800, %c2_801] : memref<16x27xf32, #tpu.memory_space<smem>>
    %1504 = vector.broadcast %1503 : f32 to vector<2x14x14xf32>
    %1505 = arith.mulf %5, %1504 : vector<2x14x14xf32>
    %1506 = arith.addf %1502, %1505 : vector<2x14x14xf32>
    %c13_802 = arith.constant 13 : index
    %c3_803 = arith.constant 3 : index
    %1507 = memref.load %arg2[%c13_802, %c3_803] : memref<16x27xf32, #tpu.memory_space<smem>>
    %1508 = vector.broadcast %1507 : f32 to vector<2x14x14xf32>
    %1509 = arith.mulf %7, %1508 : vector<2x14x14xf32>
    %1510 = arith.addf %1506, %1509 : vector<2x14x14xf32>
    %c13_804 = arith.constant 13 : index
    %c4_805 = arith.constant 4 : index
    %1511 = memref.load %arg2[%c13_804, %c4_805] : memref<16x27xf32, #tpu.memory_space<smem>>
    %1512 = vector.broadcast %1511 : f32 to vector<2x14x14xf32>
    %1513 = arith.mulf %9, %1512 : vector<2x14x14xf32>
    %1514 = arith.addf %1510, %1513 : vector<2x14x14xf32>
    %c13_806 = arith.constant 13 : index
    %c5_807 = arith.constant 5 : index
    %1515 = memref.load %arg2[%c13_806, %c5_807] : memref<16x27xf32, #tpu.memory_space<smem>>
    %1516 = vector.broadcast %1515 : f32 to vector<2x14x14xf32>
    %1517 = arith.mulf %11, %1516 : vector<2x14x14xf32>
    %1518 = arith.addf %1514, %1517 : vector<2x14x14xf32>
    %c13_808 = arith.constant 13 : index
    %c6_809 = arith.constant 6 : index
    %1519 = memref.load %arg2[%c13_808, %c6_809] : memref<16x27xf32, #tpu.memory_space<smem>>
    %1520 = vector.broadcast %1519 : f32 to vector<2x14x14xf32>
    %1521 = arith.mulf %13, %1520 : vector<2x14x14xf32>
    %1522 = arith.addf %1518, %1521 : vector<2x14x14xf32>
    %c13_810 = arith.constant 13 : index
    %c7_811 = arith.constant 7 : index
    %1523 = memref.load %arg2[%c13_810, %c7_811] : memref<16x27xf32, #tpu.memory_space<smem>>
    %1524 = vector.broadcast %1523 : f32 to vector<2x14x14xf32>
    %1525 = arith.mulf %15, %1524 : vector<2x14x14xf32>
    %1526 = arith.addf %1522, %1525 : vector<2x14x14xf32>
    %c13_812 = arith.constant 13 : index
    %c8_813 = arith.constant 8 : index
    %1527 = memref.load %arg2[%c13_812, %c8_813] : memref<16x27xf32, #tpu.memory_space<smem>>
    %1528 = vector.broadcast %1527 : f32 to vector<2x14x14xf32>
    %1529 = arith.mulf %17, %1528 : vector<2x14x14xf32>
    %1530 = arith.addf %1526, %1529 : vector<2x14x14xf32>
    %c13_814 = arith.constant 13 : index
    %c9_815 = arith.constant 9 : index
    %1531 = memref.load %arg2[%c13_814, %c9_815] : memref<16x27xf32, #tpu.memory_space<smem>>
    %1532 = vector.broadcast %1531 : f32 to vector<2x14x14xf32>
    %1533 = arith.mulf %19, %1532 : vector<2x14x14xf32>
    %1534 = arith.addf %1530, %1533 : vector<2x14x14xf32>
    %c13_816 = arith.constant 13 : index
    %c10_817 = arith.constant 10 : index
    %1535 = memref.load %arg2[%c13_816, %c10_817] : memref<16x27xf32, #tpu.memory_space<smem>>
    %1536 = vector.broadcast %1535 : f32 to vector<2x14x14xf32>
    %1537 = arith.mulf %21, %1536 : vector<2x14x14xf32>
    %1538 = arith.addf %1534, %1537 : vector<2x14x14xf32>
    %c13_818 = arith.constant 13 : index
    %c11_819 = arith.constant 11 : index
    %1539 = memref.load %arg2[%c13_818, %c11_819] : memref<16x27xf32, #tpu.memory_space<smem>>
    %1540 = vector.broadcast %1539 : f32 to vector<2x14x14xf32>
    %1541 = arith.mulf %23, %1540 : vector<2x14x14xf32>
    %1542 = arith.addf %1538, %1541 : vector<2x14x14xf32>
    %c13_820 = arith.constant 13 : index
    %c12_821 = arith.constant 12 : index
    %1543 = memref.load %arg2[%c13_820, %c12_821] : memref<16x27xf32, #tpu.memory_space<smem>>
    %1544 = vector.broadcast %1543 : f32 to vector<2x14x14xf32>
    %1545 = arith.mulf %25, %1544 : vector<2x14x14xf32>
    %1546 = arith.addf %1542, %1545 : vector<2x14x14xf32>
    %c13_822 = arith.constant 13 : index
    %c13_823 = arith.constant 13 : index
    %1547 = memref.load %arg2[%c13_822, %c13_823] : memref<16x27xf32, #tpu.memory_space<smem>>
    %1548 = vector.broadcast %1547 : f32 to vector<2x14x14xf32>
    %1549 = arith.mulf %27, %1548 : vector<2x14x14xf32>
    %1550 = arith.addf %1546, %1549 : vector<2x14x14xf32>
    %c13_824 = arith.constant 13 : index
    %c14_825 = arith.constant 14 : index
    %1551 = memref.load %arg2[%c13_824, %c14_825] : memref<16x27xf32, #tpu.memory_space<smem>>
    %1552 = vector.broadcast %1551 : f32 to vector<2x14x14xf32>
    %1553 = arith.mulf %29, %1552 : vector<2x14x14xf32>
    %1554 = arith.addf %1550, %1553 : vector<2x14x14xf32>
    %c13_826 = arith.constant 13 : index
    %c15_827 = arith.constant 15 : index
    %1555 = memref.load %arg2[%c13_826, %c15_827] : memref<16x27xf32, #tpu.memory_space<smem>>
    %1556 = vector.broadcast %1555 : f32 to vector<2x14x14xf32>
    %1557 = arith.mulf %31, %1556 : vector<2x14x14xf32>
    %1558 = arith.addf %1554, %1557 : vector<2x14x14xf32>
    %c13_828 = arith.constant 13 : index
    %c16_829 = arith.constant 16 : index
    %1559 = memref.load %arg2[%c13_828, %c16_829] : memref<16x27xf32, #tpu.memory_space<smem>>
    %1560 = vector.broadcast %1559 : f32 to vector<2x14x14xf32>
    %1561 = arith.mulf %33, %1560 : vector<2x14x14xf32>
    %1562 = arith.addf %1558, %1561 : vector<2x14x14xf32>
    %c13_830 = arith.constant 13 : index
    %c17_831 = arith.constant 17 : index
    %1563 = memref.load %arg2[%c13_830, %c17_831] : memref<16x27xf32, #tpu.memory_space<smem>>
    %1564 = vector.broadcast %1563 : f32 to vector<2x14x14xf32>
    %1565 = arith.mulf %35, %1564 : vector<2x14x14xf32>
    %1566 = arith.addf %1562, %1565 : vector<2x14x14xf32>
    %c13_832 = arith.constant 13 : index
    %c18_833 = arith.constant 18 : index
    %1567 = memref.load %arg2[%c13_832, %c18_833] : memref<16x27xf32, #tpu.memory_space<smem>>
    %1568 = vector.broadcast %1567 : f32 to vector<2x14x14xf32>
    %1569 = arith.mulf %37, %1568 : vector<2x14x14xf32>
    %1570 = arith.addf %1566, %1569 : vector<2x14x14xf32>
    %c13_834 = arith.constant 13 : index
    %c19_835 = arith.constant 19 : index
    %1571 = memref.load %arg2[%c13_834, %c19_835] : memref<16x27xf32, #tpu.memory_space<smem>>
    %1572 = vector.broadcast %1571 : f32 to vector<2x14x14xf32>
    %1573 = arith.mulf %39, %1572 : vector<2x14x14xf32>
    %1574 = arith.addf %1570, %1573 : vector<2x14x14xf32>
    %c13_836 = arith.constant 13 : index
    %c20_837 = arith.constant 20 : index
    %1575 = memref.load %arg2[%c13_836, %c20_837] : memref<16x27xf32, #tpu.memory_space<smem>>
    %1576 = vector.broadcast %1575 : f32 to vector<2x14x14xf32>
    %1577 = arith.mulf %41, %1576 : vector<2x14x14xf32>
    %1578 = arith.addf %1574, %1577 : vector<2x14x14xf32>
    %c13_838 = arith.constant 13 : index
    %c21_839 = arith.constant 21 : index
    %1579 = memref.load %arg2[%c13_838, %c21_839] : memref<16x27xf32, #tpu.memory_space<smem>>
    %1580 = vector.broadcast %1579 : f32 to vector<2x14x14xf32>
    %1581 = arith.mulf %43, %1580 : vector<2x14x14xf32>
    %1582 = arith.addf %1578, %1581 : vector<2x14x14xf32>
    %c13_840 = arith.constant 13 : index
    %c22_841 = arith.constant 22 : index
    %1583 = memref.load %arg2[%c13_840, %c22_841] : memref<16x27xf32, #tpu.memory_space<smem>>
    %1584 = vector.broadcast %1583 : f32 to vector<2x14x14xf32>
    %1585 = arith.mulf %45, %1584 : vector<2x14x14xf32>
    %1586 = arith.addf %1582, %1585 : vector<2x14x14xf32>
    %c13_842 = arith.constant 13 : index
    %c23_843 = arith.constant 23 : index
    %1587 = memref.load %arg2[%c13_842, %c23_843] : memref<16x27xf32, #tpu.memory_space<smem>>
    %1588 = vector.broadcast %1587 : f32 to vector<2x14x14xf32>
    %1589 = arith.mulf %47, %1588 : vector<2x14x14xf32>
    %1590 = arith.addf %1586, %1589 : vector<2x14x14xf32>
    %c13_844 = arith.constant 13 : index
    %c24_845 = arith.constant 24 : index
    %1591 = memref.load %arg2[%c13_844, %c24_845] : memref<16x27xf32, #tpu.memory_space<smem>>
    %1592 = vector.broadcast %1591 : f32 to vector<2x14x14xf32>
    %1593 = arith.mulf %49, %1592 : vector<2x14x14xf32>
    %1594 = arith.addf %1590, %1593 : vector<2x14x14xf32>
    %c13_846 = arith.constant 13 : index
    %c25_847 = arith.constant 25 : index
    %1595 = memref.load %arg2[%c13_846, %c25_847] : memref<16x27xf32, #tpu.memory_space<smem>>
    %1596 = vector.broadcast %1595 : f32 to vector<2x14x14xf32>
    %1597 = arith.mulf %51, %1596 : vector<2x14x14xf32>
    %1598 = arith.addf %1594, %1597 : vector<2x14x14xf32>
    %c13_848 = arith.constant 13 : index
    %c26_849 = arith.constant 26 : index
    %1599 = memref.load %arg2[%c13_848, %c26_849] : memref<16x27xf32, #tpu.memory_space<smem>>
    %1600 = vector.broadcast %1599 : f32 to vector<2x14x14xf32>
    %1601 = arith.mulf %53, %1600 : vector<2x14x14xf32>
    %1602 = arith.addf %1598, %1601 : vector<2x14x14xf32>
    %c13_850 = arith.constant 13 : index
    %1603 = memref.load %arg3[%c13_850] : memref<16xf32, #tpu.memory_space<smem>>
    %1604 = vector.broadcast %1603 : f32 to vector<2x14x14xf32>
    %1605 = arith.addf %1602, %1604 : vector<2x14x14xf32>
    %1606 = arith.minimumf %1495, %1605 : vector<2x14x14xf32>
    %c14_851 = arith.constant 14 : index
    %c0_852 = arith.constant 0 : index
    %1607 = memref.load %arg2[%c14_851, %c0_852] : memref<16x27xf32, #tpu.memory_space<smem>>
    %1608 = vector.broadcast %1607 : f32 to vector<2x14x14xf32>
    %1609 = arith.mulf %1, %1608 : vector<2x14x14xf32>
    %c14_853 = arith.constant 14 : index
    %c1_854 = arith.constant 1 : index
    %1610 = memref.load %arg2[%c14_853, %c1_854] : memref<16x27xf32, #tpu.memory_space<smem>>
    %1611 = vector.broadcast %1610 : f32 to vector<2x14x14xf32>
    %1612 = arith.mulf %3, %1611 : vector<2x14x14xf32>
    %1613 = arith.addf %1609, %1612 : vector<2x14x14xf32>
    %c14_855 = arith.constant 14 : index
    %c2_856 = arith.constant 2 : index
    %1614 = memref.load %arg2[%c14_855, %c2_856] : memref<16x27xf32, #tpu.memory_space<smem>>
    %1615 = vector.broadcast %1614 : f32 to vector<2x14x14xf32>
    %1616 = arith.mulf %5, %1615 : vector<2x14x14xf32>
    %1617 = arith.addf %1613, %1616 : vector<2x14x14xf32>
    %c14_857 = arith.constant 14 : index
    %c3_858 = arith.constant 3 : index
    %1618 = memref.load %arg2[%c14_857, %c3_858] : memref<16x27xf32, #tpu.memory_space<smem>>
    %1619 = vector.broadcast %1618 : f32 to vector<2x14x14xf32>
    %1620 = arith.mulf %7, %1619 : vector<2x14x14xf32>
    %1621 = arith.addf %1617, %1620 : vector<2x14x14xf32>
    %c14_859 = arith.constant 14 : index
    %c4_860 = arith.constant 4 : index
    %1622 = memref.load %arg2[%c14_859, %c4_860] : memref<16x27xf32, #tpu.memory_space<smem>>
    %1623 = vector.broadcast %1622 : f32 to vector<2x14x14xf32>
    %1624 = arith.mulf %9, %1623 : vector<2x14x14xf32>
    %1625 = arith.addf %1621, %1624 : vector<2x14x14xf32>
    %c14_861 = arith.constant 14 : index
    %c5_862 = arith.constant 5 : index
    %1626 = memref.load %arg2[%c14_861, %c5_862] : memref<16x27xf32, #tpu.memory_space<smem>>
    %1627 = vector.broadcast %1626 : f32 to vector<2x14x14xf32>
    %1628 = arith.mulf %11, %1627 : vector<2x14x14xf32>
    %1629 = arith.addf %1625, %1628 : vector<2x14x14xf32>
    %c14_863 = arith.constant 14 : index
    %c6_864 = arith.constant 6 : index
    %1630 = memref.load %arg2[%c14_863, %c6_864] : memref<16x27xf32, #tpu.memory_space<smem>>
    %1631 = vector.broadcast %1630 : f32 to vector<2x14x14xf32>
    %1632 = arith.mulf %13, %1631 : vector<2x14x14xf32>
    %1633 = arith.addf %1629, %1632 : vector<2x14x14xf32>
    %c14_865 = arith.constant 14 : index
    %c7_866 = arith.constant 7 : index
    %1634 = memref.load %arg2[%c14_865, %c7_866] : memref<16x27xf32, #tpu.memory_space<smem>>
    %1635 = vector.broadcast %1634 : f32 to vector<2x14x14xf32>
    %1636 = arith.mulf %15, %1635 : vector<2x14x14xf32>
    %1637 = arith.addf %1633, %1636 : vector<2x14x14xf32>
    %c14_867 = arith.constant 14 : index
    %c8_868 = arith.constant 8 : index
    %1638 = memref.load %arg2[%c14_867, %c8_868] : memref<16x27xf32, #tpu.memory_space<smem>>
    %1639 = vector.broadcast %1638 : f32 to vector<2x14x14xf32>
    %1640 = arith.mulf %17, %1639 : vector<2x14x14xf32>
    %1641 = arith.addf %1637, %1640 : vector<2x14x14xf32>
    %c14_869 = arith.constant 14 : index
    %c9_870 = arith.constant 9 : index
    %1642 = memref.load %arg2[%c14_869, %c9_870] : memref<16x27xf32, #tpu.memory_space<smem>>
    %1643 = vector.broadcast %1642 : f32 to vector<2x14x14xf32>
    %1644 = arith.mulf %19, %1643 : vector<2x14x14xf32>
    %1645 = arith.addf %1641, %1644 : vector<2x14x14xf32>
    %c14_871 = arith.constant 14 : index
    %c10_872 = arith.constant 10 : index
    %1646 = memref.load %arg2[%c14_871, %c10_872] : memref<16x27xf32, #tpu.memory_space<smem>>
    %1647 = vector.broadcast %1646 : f32 to vector<2x14x14xf32>
    %1648 = arith.mulf %21, %1647 : vector<2x14x14xf32>
    %1649 = arith.addf %1645, %1648 : vector<2x14x14xf32>
    %c14_873 = arith.constant 14 : index
    %c11_874 = arith.constant 11 : index
    %1650 = memref.load %arg2[%c14_873, %c11_874] : memref<16x27xf32, #tpu.memory_space<smem>>
    %1651 = vector.broadcast %1650 : f32 to vector<2x14x14xf32>
    %1652 = arith.mulf %23, %1651 : vector<2x14x14xf32>
    %1653 = arith.addf %1649, %1652 : vector<2x14x14xf32>
    %c14_875 = arith.constant 14 : index
    %c12_876 = arith.constant 12 : index
    %1654 = memref.load %arg2[%c14_875, %c12_876] : memref<16x27xf32, #tpu.memory_space<smem>>
    %1655 = vector.broadcast %1654 : f32 to vector<2x14x14xf32>
    %1656 = arith.mulf %25, %1655 : vector<2x14x14xf32>
    %1657 = arith.addf %1653, %1656 : vector<2x14x14xf32>
    %c14_877 = arith.constant 14 : index
    %c13_878 = arith.constant 13 : index
    %1658 = memref.load %arg2[%c14_877, %c13_878] : memref<16x27xf32, #tpu.memory_space<smem>>
    %1659 = vector.broadcast %1658 : f32 to vector<2x14x14xf32>
    %1660 = arith.mulf %27, %1659 : vector<2x14x14xf32>
    %1661 = arith.addf %1657, %1660 : vector<2x14x14xf32>
    %c14_879 = arith.constant 14 : index
    %c14_880 = arith.constant 14 : index
    %1662 = memref.load %arg2[%c14_879, %c14_880] : memref<16x27xf32, #tpu.memory_space<smem>>
    %1663 = vector.broadcast %1662 : f32 to vector<2x14x14xf32>
    %1664 = arith.mulf %29, %1663 : vector<2x14x14xf32>
    %1665 = arith.addf %1661, %1664 : vector<2x14x14xf32>
    %c14_881 = arith.constant 14 : index
    %c15_882 = arith.constant 15 : index
    %1666 = memref.load %arg2[%c14_881, %c15_882] : memref<16x27xf32, #tpu.memory_space<smem>>
    %1667 = vector.broadcast %1666 : f32 to vector<2x14x14xf32>
    %1668 = arith.mulf %31, %1667 : vector<2x14x14xf32>
    %1669 = arith.addf %1665, %1668 : vector<2x14x14xf32>
    %c14_883 = arith.constant 14 : index
    %c16_884 = arith.constant 16 : index
    %1670 = memref.load %arg2[%c14_883, %c16_884] : memref<16x27xf32, #tpu.memory_space<smem>>
    %1671 = vector.broadcast %1670 : f32 to vector<2x14x14xf32>
    %1672 = arith.mulf %33, %1671 : vector<2x14x14xf32>
    %1673 = arith.addf %1669, %1672 : vector<2x14x14xf32>
    %c14_885 = arith.constant 14 : index
    %c17_886 = arith.constant 17 : index
    %1674 = memref.load %arg2[%c14_885, %c17_886] : memref<16x27xf32, #tpu.memory_space<smem>>
    %1675 = vector.broadcast %1674 : f32 to vector<2x14x14xf32>
    %1676 = arith.mulf %35, %1675 : vector<2x14x14xf32>
    %1677 = arith.addf %1673, %1676 : vector<2x14x14xf32>
    %c14_887 = arith.constant 14 : index
    %c18_888 = arith.constant 18 : index
    %1678 = memref.load %arg2[%c14_887, %c18_888] : memref<16x27xf32, #tpu.memory_space<smem>>
    %1679 = vector.broadcast %1678 : f32 to vector<2x14x14xf32>
    %1680 = arith.mulf %37, %1679 : vector<2x14x14xf32>
    %1681 = arith.addf %1677, %1680 : vector<2x14x14xf32>
    %c14_889 = arith.constant 14 : index
    %c19_890 = arith.constant 19 : index
    %1682 = memref.load %arg2[%c14_889, %c19_890] : memref<16x27xf32, #tpu.memory_space<smem>>
    %1683 = vector.broadcast %1682 : f32 to vector<2x14x14xf32>
    %1684 = arith.mulf %39, %1683 : vector<2x14x14xf32>
    %1685 = arith.addf %1681, %1684 : vector<2x14x14xf32>
    %c14_891 = arith.constant 14 : index
    %c20_892 = arith.constant 20 : index
    %1686 = memref.load %arg2[%c14_891, %c20_892] : memref<16x27xf32, #tpu.memory_space<smem>>
    %1687 = vector.broadcast %1686 : f32 to vector<2x14x14xf32>
    %1688 = arith.mulf %41, %1687 : vector<2x14x14xf32>
    %1689 = arith.addf %1685, %1688 : vector<2x14x14xf32>
    %c14_893 = arith.constant 14 : index
    %c21_894 = arith.constant 21 : index
    %1690 = memref.load %arg2[%c14_893, %c21_894] : memref<16x27xf32, #tpu.memory_space<smem>>
    %1691 = vector.broadcast %1690 : f32 to vector<2x14x14xf32>
    %1692 = arith.mulf %43, %1691 : vector<2x14x14xf32>
    %1693 = arith.addf %1689, %1692 : vector<2x14x14xf32>
    %c14_895 = arith.constant 14 : index
    %c22_896 = arith.constant 22 : index
    %1694 = memref.load %arg2[%c14_895, %c22_896] : memref<16x27xf32, #tpu.memory_space<smem>>
    %1695 = vector.broadcast %1694 : f32 to vector<2x14x14xf32>
    %1696 = arith.mulf %45, %1695 : vector<2x14x14xf32>
    %1697 = arith.addf %1693, %1696 : vector<2x14x14xf32>
    %c14_897 = arith.constant 14 : index
    %c23_898 = arith.constant 23 : index
    %1698 = memref.load %arg2[%c14_897, %c23_898] : memref<16x27xf32, #tpu.memory_space<smem>>
    %1699 = vector.broadcast %1698 : f32 to vector<2x14x14xf32>
    %1700 = arith.mulf %47, %1699 : vector<2x14x14xf32>
    %1701 = arith.addf %1697, %1700 : vector<2x14x14xf32>
    %c14_899 = arith.constant 14 : index
    %c24_900 = arith.constant 24 : index
    %1702 = memref.load %arg2[%c14_899, %c24_900] : memref<16x27xf32, #tpu.memory_space<smem>>
    %1703 = vector.broadcast %1702 : f32 to vector<2x14x14xf32>
    %1704 = arith.mulf %49, %1703 : vector<2x14x14xf32>
    %1705 = arith.addf %1701, %1704 : vector<2x14x14xf32>
    %c14_901 = arith.constant 14 : index
    %c25_902 = arith.constant 25 : index
    %1706 = memref.load %arg2[%c14_901, %c25_902] : memref<16x27xf32, #tpu.memory_space<smem>>
    %1707 = vector.broadcast %1706 : f32 to vector<2x14x14xf32>
    %1708 = arith.mulf %51, %1707 : vector<2x14x14xf32>
    %1709 = arith.addf %1705, %1708 : vector<2x14x14xf32>
    %c14_903 = arith.constant 14 : index
    %c26_904 = arith.constant 26 : index
    %1710 = memref.load %arg2[%c14_903, %c26_904] : memref<16x27xf32, #tpu.memory_space<smem>>
    %1711 = vector.broadcast %1710 : f32 to vector<2x14x14xf32>
    %1712 = arith.mulf %53, %1711 : vector<2x14x14xf32>
    %1713 = arith.addf %1709, %1712 : vector<2x14x14xf32>
    %c14_905 = arith.constant 14 : index
    %1714 = memref.load %arg3[%c14_905] : memref<16xf32, #tpu.memory_space<smem>>
    %1715 = vector.broadcast %1714 : f32 to vector<2x14x14xf32>
    %1716 = arith.addf %1713, %1715 : vector<2x14x14xf32>
    %1717 = arith.minimumf %1606, %1716 : vector<2x14x14xf32>
    %c15_906 = arith.constant 15 : index
    %c0_907 = arith.constant 0 : index
    %1718 = memref.load %arg2[%c15_906, %c0_907] : memref<16x27xf32, #tpu.memory_space<smem>>
    %1719 = vector.broadcast %1718 : f32 to vector<2x14x14xf32>
    %1720 = arith.mulf %1, %1719 : vector<2x14x14xf32>
    %c15_908 = arith.constant 15 : index
    %c1_909 = arith.constant 1 : index
    %1721 = memref.load %arg2[%c15_908, %c1_909] : memref<16x27xf32, #tpu.memory_space<smem>>
    %1722 = vector.broadcast %1721 : f32 to vector<2x14x14xf32>
    %1723 = arith.mulf %3, %1722 : vector<2x14x14xf32>
    %1724 = arith.addf %1720, %1723 : vector<2x14x14xf32>
    %c15_910 = arith.constant 15 : index
    %c2_911 = arith.constant 2 : index
    %1725 = memref.load %arg2[%c15_910, %c2_911] : memref<16x27xf32, #tpu.memory_space<smem>>
    %1726 = vector.broadcast %1725 : f32 to vector<2x14x14xf32>
    %1727 = arith.mulf %5, %1726 : vector<2x14x14xf32>
    %1728 = arith.addf %1724, %1727 : vector<2x14x14xf32>
    %c15_912 = arith.constant 15 : index
    %c3_913 = arith.constant 3 : index
    %1729 = memref.load %arg2[%c15_912, %c3_913] : memref<16x27xf32, #tpu.memory_space<smem>>
    %1730 = vector.broadcast %1729 : f32 to vector<2x14x14xf32>
    %1731 = arith.mulf %7, %1730 : vector<2x14x14xf32>
    %1732 = arith.addf %1728, %1731 : vector<2x14x14xf32>
    %c15_914 = arith.constant 15 : index
    %c4_915 = arith.constant 4 : index
    %1733 = memref.load %arg2[%c15_914, %c4_915] : memref<16x27xf32, #tpu.memory_space<smem>>
    %1734 = vector.broadcast %1733 : f32 to vector<2x14x14xf32>
    %1735 = arith.mulf %9, %1734 : vector<2x14x14xf32>
    %1736 = arith.addf %1732, %1735 : vector<2x14x14xf32>
    %c15_916 = arith.constant 15 : index
    %c5_917 = arith.constant 5 : index
    %1737 = memref.load %arg2[%c15_916, %c5_917] : memref<16x27xf32, #tpu.memory_space<smem>>
    %1738 = vector.broadcast %1737 : f32 to vector<2x14x14xf32>
    %1739 = arith.mulf %11, %1738 : vector<2x14x14xf32>
    %1740 = arith.addf %1736, %1739 : vector<2x14x14xf32>
    %c15_918 = arith.constant 15 : index
    %c6_919 = arith.constant 6 : index
    %1741 = memref.load %arg2[%c15_918, %c6_919] : memref<16x27xf32, #tpu.memory_space<smem>>
    %1742 = vector.broadcast %1741 : f32 to vector<2x14x14xf32>
    %1743 = arith.mulf %13, %1742 : vector<2x14x14xf32>
    %1744 = arith.addf %1740, %1743 : vector<2x14x14xf32>
    %c15_920 = arith.constant 15 : index
    %c7_921 = arith.constant 7 : index
    %1745 = memref.load %arg2[%c15_920, %c7_921] : memref<16x27xf32, #tpu.memory_space<smem>>
    %1746 = vector.broadcast %1745 : f32 to vector<2x14x14xf32>
    %1747 = arith.mulf %15, %1746 : vector<2x14x14xf32>
    %1748 = arith.addf %1744, %1747 : vector<2x14x14xf32>
    %c15_922 = arith.constant 15 : index
    %c8_923 = arith.constant 8 : index
    %1749 = memref.load %arg2[%c15_922, %c8_923] : memref<16x27xf32, #tpu.memory_space<smem>>
    %1750 = vector.broadcast %1749 : f32 to vector<2x14x14xf32>
    %1751 = arith.mulf %17, %1750 : vector<2x14x14xf32>
    %1752 = arith.addf %1748, %1751 : vector<2x14x14xf32>
    %c15_924 = arith.constant 15 : index
    %c9_925 = arith.constant 9 : index
    %1753 = memref.load %arg2[%c15_924, %c9_925] : memref<16x27xf32, #tpu.memory_space<smem>>
    %1754 = vector.broadcast %1753 : f32 to vector<2x14x14xf32>
    %1755 = arith.mulf %19, %1754 : vector<2x14x14xf32>
    %1756 = arith.addf %1752, %1755 : vector<2x14x14xf32>
    %c15_926 = arith.constant 15 : index
    %c10_927 = arith.constant 10 : index
    %1757 = memref.load %arg2[%c15_926, %c10_927] : memref<16x27xf32, #tpu.memory_space<smem>>
    %1758 = vector.broadcast %1757 : f32 to vector<2x14x14xf32>
    %1759 = arith.mulf %21, %1758 : vector<2x14x14xf32>
    %1760 = arith.addf %1756, %1759 : vector<2x14x14xf32>
    %c15_928 = arith.constant 15 : index
    %c11_929 = arith.constant 11 : index
    %1761 = memref.load %arg2[%c15_928, %c11_929] : memref<16x27xf32, #tpu.memory_space<smem>>
    %1762 = vector.broadcast %1761 : f32 to vector<2x14x14xf32>
    %1763 = arith.mulf %23, %1762 : vector<2x14x14xf32>
    %1764 = arith.addf %1760, %1763 : vector<2x14x14xf32>
    %c15_930 = arith.constant 15 : index
    %c12_931 = arith.constant 12 : index
    %1765 = memref.load %arg2[%c15_930, %c12_931] : memref<16x27xf32, #tpu.memory_space<smem>>
    %1766 = vector.broadcast %1765 : f32 to vector<2x14x14xf32>
    %1767 = arith.mulf %25, %1766 : vector<2x14x14xf32>
    %1768 = arith.addf %1764, %1767 : vector<2x14x14xf32>
    %c15_932 = arith.constant 15 : index
    %c13_933 = arith.constant 13 : index
    %1769 = memref.load %arg2[%c15_932, %c13_933] : memref<16x27xf32, #tpu.memory_space<smem>>
    %1770 = vector.broadcast %1769 : f32 to vector<2x14x14xf32>
    %1771 = arith.mulf %27, %1770 : vector<2x14x14xf32>
    %1772 = arith.addf %1768, %1771 : vector<2x14x14xf32>
    %c15_934 = arith.constant 15 : index
    %c14_935 = arith.constant 14 : index
    %1773 = memref.load %arg2[%c15_934, %c14_935] : memref<16x27xf32, #tpu.memory_space<smem>>
    %1774 = vector.broadcast %1773 : f32 to vector<2x14x14xf32>
    %1775 = arith.mulf %29, %1774 : vector<2x14x14xf32>
    %1776 = arith.addf %1772, %1775 : vector<2x14x14xf32>
    %c15_936 = arith.constant 15 : index
    %c15_937 = arith.constant 15 : index
    %1777 = memref.load %arg2[%c15_936, %c15_937] : memref<16x27xf32, #tpu.memory_space<smem>>
    %1778 = vector.broadcast %1777 : f32 to vector<2x14x14xf32>
    %1779 = arith.mulf %31, %1778 : vector<2x14x14xf32>
    %1780 = arith.addf %1776, %1779 : vector<2x14x14xf32>
    %c15_938 = arith.constant 15 : index
    %c16_939 = arith.constant 16 : index
    %1781 = memref.load %arg2[%c15_938, %c16_939] : memref<16x27xf32, #tpu.memory_space<smem>>
    %1782 = vector.broadcast %1781 : f32 to vector<2x14x14xf32>
    %1783 = arith.mulf %33, %1782 : vector<2x14x14xf32>
    %1784 = arith.addf %1780, %1783 : vector<2x14x14xf32>
    %c15_940 = arith.constant 15 : index
    %c17_941 = arith.constant 17 : index
    %1785 = memref.load %arg2[%c15_940, %c17_941] : memref<16x27xf32, #tpu.memory_space<smem>>
    %1786 = vector.broadcast %1785 : f32 to vector<2x14x14xf32>
    %1787 = arith.mulf %35, %1786 : vector<2x14x14xf32>
    %1788 = arith.addf %1784, %1787 : vector<2x14x14xf32>
    %c15_942 = arith.constant 15 : index
    %c18_943 = arith.constant 18 : index
    %1789 = memref.load %arg2[%c15_942, %c18_943] : memref<16x27xf32, #tpu.memory_space<smem>>
    %1790 = vector.broadcast %1789 : f32 to vector<2x14x14xf32>
    %1791 = arith.mulf %37, %1790 : vector<2x14x14xf32>
    %1792 = arith.addf %1788, %1791 : vector<2x14x14xf32>
    %c15_944 = arith.constant 15 : index
    %c19_945 = arith.constant 19 : index
    %1793 = memref.load %arg2[%c15_944, %c19_945] : memref<16x27xf32, #tpu.memory_space<smem>>
    %1794 = vector.broadcast %1793 : f32 to vector<2x14x14xf32>
    %1795 = arith.mulf %39, %1794 : vector<2x14x14xf32>
    %1796 = arith.addf %1792, %1795 : vector<2x14x14xf32>
    %c15_946 = arith.constant 15 : index
    %c20_947 = arith.constant 20 : index
    %1797 = memref.load %arg2[%c15_946, %c20_947] : memref<16x27xf32, #tpu.memory_space<smem>>
    %1798 = vector.broadcast %1797 : f32 to vector<2x14x14xf32>
    %1799 = arith.mulf %41, %1798 : vector<2x14x14xf32>
    %1800 = arith.addf %1796, %1799 : vector<2x14x14xf32>
    %c15_948 = arith.constant 15 : index
    %c21_949 = arith.constant 21 : index
    %1801 = memref.load %arg2[%c15_948, %c21_949] : memref<16x27xf32, #tpu.memory_space<smem>>
    %1802 = vector.broadcast %1801 : f32 to vector<2x14x14xf32>
    %1803 = arith.mulf %43, %1802 : vector<2x14x14xf32>
    %1804 = arith.addf %1800, %1803 : vector<2x14x14xf32>
    %c15_950 = arith.constant 15 : index
    %c22_951 = arith.constant 22 : index
    %1805 = memref.load %arg2[%c15_950, %c22_951] : memref<16x27xf32, #tpu.memory_space<smem>>
    %1806 = vector.broadcast %1805 : f32 to vector<2x14x14xf32>
    %1807 = arith.mulf %45, %1806 : vector<2x14x14xf32>
    %1808 = arith.addf %1804, %1807 : vector<2x14x14xf32>
    %c15_952 = arith.constant 15 : index
    %c23_953 = arith.constant 23 : index
    %1809 = memref.load %arg2[%c15_952, %c23_953] : memref<16x27xf32, #tpu.memory_space<smem>>
    %1810 = vector.broadcast %1809 : f32 to vector<2x14x14xf32>
    %1811 = arith.mulf %47, %1810 : vector<2x14x14xf32>
    %1812 = arith.addf %1808, %1811 : vector<2x14x14xf32>
    %c15_954 = arith.constant 15 : index
    %c24_955 = arith.constant 24 : index
    %1813 = memref.load %arg2[%c15_954, %c24_955] : memref<16x27xf32, #tpu.memory_space<smem>>
    %1814 = vector.broadcast %1813 : f32 to vector<2x14x14xf32>
    %1815 = arith.mulf %49, %1814 : vector<2x14x14xf32>
    %1816 = arith.addf %1812, %1815 : vector<2x14x14xf32>
    %c15_956 = arith.constant 15 : index
    %c25_957 = arith.constant 25 : index
    %1817 = memref.load %arg2[%c15_956, %c25_957] : memref<16x27xf32, #tpu.memory_space<smem>>
    %1818 = vector.broadcast %1817 : f32 to vector<2x14x14xf32>
    %1819 = arith.mulf %51, %1818 : vector<2x14x14xf32>
    %1820 = arith.addf %1816, %1819 : vector<2x14x14xf32>
    %c15_958 = arith.constant 15 : index
    %c26_959 = arith.constant 26 : index
    %1821 = memref.load %arg2[%c15_958, %c26_959] : memref<16x27xf32, #tpu.memory_space<smem>>
    %1822 = vector.broadcast %1821 : f32 to vector<2x14x14xf32>
    %1823 = arith.mulf %53, %1822 : vector<2x14x14xf32>
    %1824 = arith.addf %1820, %1823 : vector<2x14x14xf32>
    %c15_960 = arith.constant 15 : index
    %1825 = memref.load %arg3[%c15_960] : memref<16xf32, #tpu.memory_space<smem>>
    %1826 = vector.broadcast %1825 : f32 to vector<2x14x14xf32>
    %1827 = arith.addf %1824, %1826 : vector<2x14x14xf32>
    %1828 = arith.minimumf %1717, %1827 : vector<2x14x14xf32>
    %1829 = math.tanh %1828 : vector<2x14x14xf32>
    %1830 = math.tanh %1829 : vector<2x14x14xf32>
    %c0_961 = arith.constant 0 : index
    %c0_962 = arith.constant 0 : index
    %c0_963 = arith.constant 0 : index
    %c0_964 = arith.constant 0 : index
    %1831 = vector.load %arg4[%c0_961, %c0_962, %c0_963, %c0_964] : memref<2x1x14x14xf32, #tpu.memory_space<vmem>>, vector<2x1x14x14xf32>
    %1832 = vector.shape_cast %1831 : vector<2x1x14x14xf32> to vector<2x14x14xf32>
    %1833 = vector.shape_cast %1830 : vector<2x14x14xf32> to vector<2x1x14x14xf32>
    tpu.vector_store %arg4[%c0_961, %c0_962, %c0_963, %c0_964], %1833 {strides = array<i32>} : memref<2x1x14x14xf32, #tpu.memory_space<vmem>>, vector<2x1x14x14xf32>,
    return
  }
  func.func @transform_0(%arg0: i32) -> (i32, i32, i32, i32) {
    %c0_i32 = arith.constant 0 : i32
    %c0_i32_0 = arith.constant 0 : i32
    %c0_i32_1 = arith.constant 0 : i32
    %c0_i32_2 = arith.constant 0 : i32
    return %arg0, %c0_i32, %c0_i32_0, %c0_i32_1 : i32, i32, i32, i32
  }
  func.func @transform_1(%arg0: i32) -> (i32, i32) {
    %c0_i32 = arith.constant 0 : i32
    %c0_i32_0 = arith.constant 0 : i32
    %c0_i32_1 = arith.constant 0 : i32
    return %c0_i32, %c0_i32_0 : i32, i32
  }
  func.func @transform_2(%arg0: i32) -> i32 {
    %c0_i32 = arith.constant 0 : i32
    %c0_i32_0 = arith.constant 0 : i32
    return %c0_i32 : i32
  }
  func.func @transform_3(%arg0: i32) -> (i32, i32, i32, i32) {
    %c0_i32 = arith.constant 0 : i32
    %c0_i32_0 = arith.constant 0 : i32
    %c0_i32_1 = arith.constant 0 : i32
    %c0_i32_2 = arith.constant 0 : i32
    return %arg0, %c0_i32, %c0_i32_0, %c0_i32_1 : i32, i32, i32, i32
  }
}

</mosaic_0001>

<llo_original>
// kernel: tpu_custom_call.1
$region0: #{tpu_custom_call.1}
  #allocation0 [shape = 'u32[]', space=smem, size = 0x4, offset = 0x4, fixed_abs, tag = 'smem constant byte address 0x4 - core index']
  #allocation1 [shape = 'u32[144,128]{1,0:T(1,128)}', space=vmem, size = 0x12000, scoped, tag = 'internal scratch']
  %s0 = inlined_call_operand.hbm [shape: f32[2,3,16,16], index: 0, kind: input, shape index: {}]
  %s1 = inlined_call_operand.hbm [shape: f32[16,27], index: 1, kind: input, shape index: {}]
  %s2 = inlined_call_operand.vmem [shape: f32[16], index: 2, kind: input, shape index: {}]
  %s3 = inlined_call_operand.vmem [shape: f32[2,1,14,14], index: 3, kind: output, shape index: {}]
  %s4 = sld [smem:[#allocation0]]
  $region34: #{tpu_custom_call.1} parent=0
    _
  %s6 = ssub.s32 1, %s4
  %s7 = scalar_select 0, %s6, %s4
  $region1: #{tpu_custom_call.1} parent=0
    #allocation2 [shape = 'u8[49152]{0}', space=vmem, size = 0xc000, scoped, tag = 'input window, operand 0, single buffered']
    #allocation3 [shape = 's32[1]{0}', space=sflag, size = 0x4, scoped, tag = 'scoped memory for tpu_custom_call.1']
    #allocation4 [shape = 's32[1]{0}', space=sflag, size = 0x4, scoped, tag = 'scoped memory for tpu_custom_call.1']
    #allocation5 [shape = 's32[1]{0}', space=sflag, size = 0x4, scoped, tag = 'scoped memory for tpu_custom_call.1']
    #allocation6 [shape = 'u8[8192]{0}', space=smem, size = 0x2000, scoped, tag = 'input window, operand 1, single buffered']
    #allocation7 [shape = 'u8[512]{0}', space=smem, size = 0x200, scoped, tag = 'input window, operand 2, single buffered']
    %8 = vsyncpa [#allocation3], 0
    %9 = vsyncpa [#allocation4], 0
    %10 = vsyncpa [#allocation5], 0
    // Predicated region
    $region2: #{tpu_custom_call.1} parent=1 // pred_check
      _
    $region3: #{tpu_custom_call.1} parent=1 // pred_check_branch
      %12 = sbr.rel (0) target = $region5
    $region4: #{tpu_custom_call.1} parent=1 // pred_region
      %s14 = ssub.s32 1536, 1536
      %15 = vsyncadd [#allocation3], %s14
      %s16 = sshll.u32 [#allocation2], 4
      %s17 = int_to_ptr.vmem [resolvable:$true] %s16
      %22 = dma.hbm_to_vmem [thread:$0]  %s0, 1536, %s17, [#allocation3], 128, 128, 8
    $region5: #{tpu_custom_call.1} parent=1 // pred_fallthru
      _
    // Predicated region
    $region6: #{tpu_custom_call.1} parent=1 // pred_check
      _
    $region7: #{tpu_custom_call.1} parent=1 // pred_check_branch
      %24 = sbr.rel (0) target = $region9
    $region8: #{tpu_custom_call.1} parent=1 // pred_region
      %s26 = ssub.s32 256, 256
      %27 = vsyncadd [#allocation4], %s26
      %32 = dma.hbm_to_smem %s1, 256, [#allocation6], [#allocation4], 128, 128, 8
    $region9: #{tpu_custom_call.1} parent=1 // pred_fallthru
      _
    // Predicated region
    $region10: #{tpu_custom_call.1} parent=1 // pred_check
      _
    $region11: #{tpu_custom_call.1} parent=1 // pred_check_branch
      %34 = sbr.rel (0) target = $region13
    $region12: #{tpu_custom_call.1} parent=1 // pred_region
      %s36 = ssub.s32 16, 16
      %37 = vsyncadd [#allocation5], %s36
      %s39 = sshll.u32 %s2, 4
      %s40 = int_to_ptr.vmem [resolvable:$true] %s39
      %42 = dma.vmem_to_smem %s40, 16, [#allocation7], [#allocation5]
    $region13: #{tpu_custom_call.1} parent=1 // pred_fallthru
      _
    // Predicated region
    $region14: #{tpu_custom_call.1} parent=1 // pred_check
      _
    $region15: #{tpu_custom_call.1} parent=1 // pred_check_branch
      %44 = sbr.rel (0) target = $region17
    $region16: #{tpu_custom_call.1} parent=1 // pred_region
      %45 = dma.done [#allocation3], 1536
    $region17: #{tpu_custom_call.1} parent=1 // pred_fallthru
      _
    // Predicated region
    $region18: #{tpu_custom_call.1} parent=1 // pred_check
      _
    $region19: #{tpu_custom_call.1} parent=1 // pred_check_branch
      %47 = sbr.rel (0) target = $region21
    $region20: #{tpu_custom_call.1} parent=1 // pred_region
      %48 = dma.done [#allocation4], 256
    $region21: #{tpu_custom_call.1} parent=1 // pred_fallthru
      _
    // Predicated region
    $region22: #{tpu_custom_call.1} parent=1 // pred_check
      _
    $region23: #{tpu_custom_call.1} parent=1 // pred_check_branch
      %50 = sbr.rel (0) target = $region25
    $region24: #{tpu_custom_call.1} parent=1 // pred_region
      %51 = dma.done [#allocation5], 16
    $region25: #{tpu_custom_call.1} parent=1 // pred_fallthru
      _
    %52 = sfence
    %v53 = vld [vmem:[#allocation2] sm:$0xff]
    %v54 = vld [vmem:[#allocation2 + $0x8] sm:$0x3f]
    %v55 = vld [vmem:[#allocation2 + $0x30] sm:$0xff]
    %v56 = vld [vmem:[#allocation2 + $0x38] sm:$0x3f]
    %v57 = vld [vmem:[#allocation2 + $0x1] sm:$0xff]
    %v58 = vld [vmem:[#allocation2 + $0x9] sm:$0x3f]
    %v59 = vld [vmem:[#allocation2 + $0x31] sm:$0xff]
    %v60 = vld [vmem:[#allocation2 + $0x39] sm:$0x3f]
    %v61 = vld [vmem:[#allocation2 + $0x2] sm:$0xff]
    %v62 = vld [vmem:[#allocation2 + $0xa] sm:$0x3f]
    %v63 = vld [vmem:[#allocation2 + $0x32] sm:$0xff]
    %v64 = vld [vmem:[#allocation2 + $0x3a] sm:$0x3f]
    %s65 = scalar_lea.vmem [#allocation2], 16
    %v66 = vld [vmem:[%s65] sm:$0xff]
    %v67 = vld [vmem:[%s65 + $0x8] sm:$0x3f]
    %v68 = vld [vmem:[%s65 + $0x30] sm:$0xff]
    %v69 = vld [vmem:[%s65 + $0x38] sm:$0x3f]
    %v70 = vld [vmem:[%s65 + $0x1] sm:$0xff]
    %v71 = vld [vmem:[%s65 + $0x9] sm:$0x3f]
    %v72 = vld [vmem:[%s65 + $0x31] sm:$0xff]
    %v73 = vld [vmem:[%s65 + $0x39] sm:$0x3f]
    %v74 = vld [vmem:[%s65 + $0x2] sm:$0xff]
    %v75 = vld [vmem:[%s65 + $0xa] sm:$0x3f]
    %v76 = vld [vmem:[%s65 + $0x32] sm:$0xff]
    %v77 = vld [vmem:[%s65 + $0x3a] sm:$0x3f]
    %s78 = scalar_lea.vmem [#allocation2], 32
    %v79 = vld [vmem:[%s78] sm:$0xff]
    %v80 = vld [vmem:[%s78 + $0x8] sm:$0x3f]
    %v81 = vld [vmem:[%s78 + $0x30] sm:$0xff]
    %v82 = vld [vmem:[%s78 + $0x38] sm:$0x3f]
    %v83 = vld [vmem:[%s78 + $0x1] sm:$0xff]
    %v84 = vld [vmem:[%s78 + $0x9] sm:$0x3f]
    %v85 = vld [vmem:[%s78 + $0x31] sm:$0xff]
    %v86 = vld [vmem:[%s78 + $0x39] sm:$0x3f]
    %v87 = vld [vmem:[%s78 + $0x2] sm:$0xff]
    %v88 = vld [vmem:[%s78 + $0xa] sm:$0x3f]
    %v89 = vld [vmem:[%s78 + $0x32] sm:$0xff]
    %v90 = vld [vmem:[%s78 + $0x3a] sm:$0x3f]
    %s91 = sld [smem:[#allocation6]]
    %v92 = vstv %s91
    %v93 = vmul.f32 %v53, %v92
    %v94 = vmul.f32 %v54, %v92
    %v95 = vmul.f32 %v55, %v92
    %v96 = vmul.f32 %v56, %v92
    %s97 = sld [smem:[#allocation6 + $0x1]]
    %v98 = vstv %s97
    %v99 = vmul.f32 %v53, %v98
    %v100 = vmul.f32 %v54, %v98
    %v101 = vmul.f32 %v55, %v98
    %v102 = vmul.f32 %v56, %v98
    %107 = vrot.lane.b32.xlu0 %v99, 127
    %v108 = vpop.permute.xlu0 %107
    %109 = vrot.lane.b32.xlu0 %v100, 127
    %v110 = vpop.permute.xlu0 %109
    %111 = vrot.lane.b32.xlu0 %v101, 127
    %v112 = vpop.permute.xlu0 %111
    %113 = vrot.lane.b32.xlu0 %v102, 127
    %v114 = vpop.permute.xlu0 %113
    %v119 = vadd.f32 %v93, %v108
    %v120 = vadd.f32 %v94, %v110
    %v121 = vadd.f32 %v95, %v112
    %v122 = vadd.f32 %v96, %v114
    %s123 = sld [smem:[#allocation6 + $0x2]]
    %v124 = vstv %s123
    %v125 = vmul.f32 %v53, %v124
    %v126 = vmul.f32 %v54, %v124
    %v127 = vmul.f32 %v55, %v124
    %v128 = vmul.f32 %v56, %v124
    %133 = vrot.lane.b32.xlu0 %v125, 126
    %v134 = vpop.permute.xlu0 %133
    %135 = vrot.lane.b32.xlu0 %v126, 126
    %v136 = vpop.permute.xlu0 %135
    %137 = vrot.lane.b32.xlu0 %v127, 126
    %v138 = vpop.permute.xlu0 %137
    %139 = vrot.lane.b32.xlu0 %v128, 126
    %v140 = vpop.permute.xlu0 %139
    %v145 = vadd.f32 %v119, %v134
    %v146 = vadd.f32 %v120, %v136
    %v147 = vadd.f32 %v121, %v138
    %v148 = vadd.f32 %v122, %v140
    %s149 = sld [smem:[#allocation6 + $0x3]]
    %v150 = vstv %s149
    %v151 = vmul.f32 %v57, %v150
    %v152 = vmul.f32 %v58, %v150
    %v153 = vmul.f32 %v59, %v150
    %v154 = vmul.f32 %v60, %v150
    %v155 = vadd.f32 %v145, %v151
    %v156 = vadd.f32 %v146, %v152
    %v157 = vadd.f32 %v147, %v153
    %v158 = vadd.f32 %v148, %v154
    %s159 = sld [smem:[#allocation6 + $0x4]]
    %v160 = vstv %s159
    %v161 = vmul.f32 %v57, %v160
    %v162 = vmul.f32 %v58, %v160
    %v163 = vmul.f32 %v59, %v160
    %v164 = vmul.f32 %v60, %v160
    %169 = vrot.lane.b32.xlu0 %v161, 127
    %v170 = vpop.permute.xlu0 %169
    %171 = vrot.lane.b32.xlu0 %v162, 127
    %v172 = vpop.permute.xlu0 %171
    %173 = vrot.lane.b32.xlu0 %v163, 127
    %v174 = vpop.permute.xlu0 %173
    %175 = vrot.lane.b32.xlu0 %v164, 127
    %v176 = vpop.permute.xlu0 %175
    %v181 = vadd.f32 %v155, %v170
    %v182 = vadd.f32 %v156, %v172
    %v183 = vadd.f32 %v157, %v174
    %v184 = vadd.f32 %v158, %v176
    %s185 = sld [smem:[#allocation6 + $0x5]]
    %v186 = vstv %s185
    %v187 = vmul.f32 %v57, %v186
    %v188 = vmul.f32 %v58, %v186
    %v189 = vmul.f32 %v59, %v186
    %v190 = vmul.f32 %v60, %v186
    %195 = vrot.lane.b32.xlu0 %v187, 126
    %v196 = vpop.permute.xlu0 %195
    %197 = vrot.lane.b32.xlu0 %v188, 126
    %v198 = vpop.permute.xlu0 %197
    %199 = vrot.lane.b32.xlu0 %v189, 126
    %v200 = vpop.permute.xlu0 %199
    %201 = vrot.lane.b32.xlu0 %v190, 126
    %v202 = vpop.permute.xlu0 %201
    %v207 = vadd.f32 %v181, %v196
    %v208 = vadd.f32 %v182, %v198
    %v209 = vadd.f32 %v183, %v200
    %v210 = vadd.f32 %v184, %v202
    %s211 = sld [smem:[#allocation6 + $0x6]]
    %v212 = vstv %s211
    %v213 = vmul.f32 %v61, %v212
    %v214 = vmul.f32 %v62, %v212
    %v215 = vmul.f32 %v63, %v212
    %v216 = vmul.f32 %v64, %v212
    %v217 = vadd.f32 %v207, %v213
    %v218 = vadd.f32 %v208, %v214
    %v219 = vadd.f32 %v209, %v215
    %v220 = vadd.f32 %v210, %v216
    %s221 = sld [smem:[#allocation6 + $0x7]]
    %v222 = vstv %s221
    %v223 = vmul.f32 %v61, %v222
    %v224 = vmul.f32 %v62, %v222
    %v225 = vmul.f32 %v63, %v222
    %v226 = vmul.f32 %v64, %v222
    %231 = vrot.lane.b32.xlu0 %v223, 127
    %v232 = vpop.permute.xlu0 %231
    %233 = vrot.lane.b32.xlu0 %v224, 127
    %v234 = vpop.permute.xlu0 %233
    %235 = vrot.lane.b32.xlu0 %v225, 127
    %v236 = vpop.permute.xlu0 %235
    %237 = vrot.lane.b32.xlu0 %v226, 127
    %v238 = vpop.permute.xlu0 %237
    %v243 = vadd.f32 %v217, %v232
    %v244 = vadd.f32 %v218, %v234
    %v245 = vadd.f32 %v219, %v236
    %v246 = vadd.f32 %v220, %v238
    %s247 = sld [smem:[#allocation6 + $0x8]]
    %v248 = vstv %s247
    %v249 = vmul.f32 %v61, %v248
    %v250 = vmul.f32 %v62, %v248
    %v251 = vmul.f32 %v63, %v248
    %v252 = vmul.f32 %v64, %v248
    %257 = vrot.lane.b32.xlu0 %v249, 126
    %v258 = vpop.permute.xlu0 %257
    %259 = vrot.lane.b32.xlu0 %v250, 126
    %v260 = vpop.permute.xlu0 %259
    %261 = vrot.lane.b32.xlu0 %v251, 126
    %v262 = vpop.permute.xlu0 %261
    %263 = vrot.lane.b32.xlu0 %v252, 126
    %v264 = vpop.permute.xlu0 %263
    %v269 = vadd.f32 %v243, %v258
    %v270 = vadd.f32 %v244, %v260
    %v271 = vadd.f32 %v245, %v262
    %v272 = vadd.f32 %v246, %v264
    %s273 = sld [smem:[#allocation6 + $0x9]]
    %v274 = vstv %s273
    %v275 = vmul.f32 %v66, %v274
    %v276 = vmul.f32 %v67, %v274
    %v277 = vmul.f32 %v68, %v274
    %v278 = vmul.f32 %v69, %v274
    %v279 = vadd.f32 %v269, %v275
    %v280 = vadd.f32 %v270, %v276
    %v281 = vadd.f32 %v271, %v277
    %v282 = vadd.f32 %v272, %v278
    %s283 = sld [smem:[#allocation6 + $0xa]]
    %v284 = vstv %s283
    %v285 = vmul.f32 %v66, %v284
    %v286 = vmul.f32 %v67, %v284
    %v287 = vmul.f32 %v68, %v284
    %v288 = vmul.f32 %v69, %v284
    %293 = vrot.lane.b32.xlu0 %v285, 127
    %v294 = vpop.permute.xlu0 %293
    %295 = vrot.lane.b32.xlu0 %v286, 127
    %v296 = vpop.permute.xlu0 %295
    %297 = vrot.lane.b32.xlu0 %v287, 127
    %v298 = vpop.permute.xlu0 %297
    %299 = vrot.lane.b32.xlu0 %v288, 127
    %v300 = vpop.permute.xlu0 %299
    %v305 = vadd.f32 %v279, %v294
    %v306 = vadd.f32 %v280, %v296
    %v307 = vadd.f32 %v281, %v298
    %v308 = vadd.f32 %v282, %v300
    %s309 = sld [smem:[#allocation6 + $0xb]]
    %v310 = vstv %s309
    %v311 = vmul.f32 %v66, %v310
    %v312 = vmul.f32 %v67, %v310
    %v313 = vmul.f32 %v68, %v310
    %v314 = vmul.f32 %v69, %v310
    %319 = vrot.lane.b32.xlu0 %v311, 126
    %v320 = vpop.permute.xlu0 %319
    %321 = vrot.lane.b32.xlu0 %v312, 126
    %v322 = vpop.permute.xlu0 %321
    %323 = vrot.lane.b32.xlu0 %v313, 126
    %v324 = vpop.permute.xlu0 %323
    %325 = vrot.lane.b32.xlu0 %v314, 126
    %v326 = vpop.permute.xlu0 %325
    %v331 = vadd.f32 %v305, %v320
    %v332 = vadd.f32 %v306, %v322
    %v333 = vadd.f32 %v307, %v324
    %v334 = vadd.f32 %v308, %v326
    %s335 = sld [smem:[#allocation6 + $0xc]]
    %v336 = vstv %s335
    %v337 = vmul.f32 %v70, %v336
    %v338 = vmul.f32 %v71, %v336
    %v339 = vmul.f32 %v72, %v336
    %v340 = vmul.f32 %v73, %v336
    %v341 = vadd.f32 %v331, %v337
    %v342 = vadd.f32 %v332, %v338
    %v343 = vadd.f32 %v333, %v339
    %v344 = vadd.f32 %v334, %v340
    %s345 = sld [smem:[#allocation6 + $0xd]]
    %v346 = vstv %s345
    %v347 = vmul.f32 %v70, %v346
    %v348 = vmul.f32 %v71, %v346
    %v349 = vmul.f32 %v72, %v346
    %v350 = vmul.f32 %v73, %v346
    %355 = vrot.lane.b32.xlu0 %v347, 127
    %v356 = vpop.permute.xlu0 %355
    %357 = vrot.lane.b32.xlu0 %v348, 127
    %v358 = vpop.permute.xlu0 %357
    %359 = vrot.lane.b32.xlu0 %v349, 127
    %v360 = vpop.permute.xlu0 %359
    %361 = vrot.lane.b32.xlu0 %v350, 127
    %v362 = vpop.permute.xlu0 %361
    %v367 = vadd.f32 %v341, %v356
    %v368 = vadd.f32 %v342, %v358
    %v369 = vadd.f32 %v343, %v360
    %v370 = vadd.f32 %v344, %v362
    %s371 = sld [smem:[#allocation6 + $0xe]]
    %v372 = vstv %s371
    %v373 = vmul.f32 %v70, %v372
    %v374 = vmul.f32 %v71, %v372
    %v375 = vmul.f32 %v72, %v372
    %v376 = vmul.f32 %v73, %v372
    %381 = vrot.lane.b32.xlu0 %v373, 126
    %v382 = vpop.permute.xlu0 %381
    %383 = vrot.lane.b32.xlu0 %v374, 126
    %v384 = vpop.permute.xlu0 %383
    %385 = vrot.lane.b32.xlu0 %v375, 126
    %v386 = vpop.permute.xlu0 %385
    %387 = vrot.lane.b32.xlu0 %v376, 126
    %v388 = vpop.permute.xlu0 %387
    %v393 = vadd.f32 %v367, %v382
    %v394 = vadd.f32 %v368, %v384
    %v395 = vadd.f32 %v369, %v386
    %v396 = vadd.f32 %v370, %v388
    %s397 = sld [smem:[#allocation6 + $0xf]]
    %v398 = vstv %s397
    %v399 = vmul.f32 %v74, %v398
    %v400 = vmul.f32 %v75, %v398
    %v401 = vmul.f32 %v76, %v398
    %v402 = vmul.f32 %v77, %v398
    %v403 = vadd.f32 %v393, %v399
    %v404 = vadd.f32 %v394, %v400
    %v405 = vadd.f32 %v395, %v401
    %v406 = vadd.f32 %v396, %v402
    %s407 = sld [smem:[#allocation6 + $0x10]]
    %v408 = vstv %s407
    %v409 = vmul.f32 %v74, %v408
    %v410 = vmul.f32 %v75, %v408
    %v411 = vmul.f32 %v76, %v408
    %v412 = vmul.f32 %v77, %v408
    %417 = vrot.lane.b32.xlu0 %v409, 127
    %v418 = vpop.permute.xlu0 %417
    %419 = vrot.lane.b32.xlu0 %v410, 127
    %v420 = vpop.permute.xlu0 %419
    %421 = vrot.lane.b32.xlu0 %v411, 127
    %v422 = vpop.permute.xlu0 %421
    %423 = vrot.lane.b32.xlu0 %v412, 127
    %v424 = vpop.permute.xlu0 %423
    %v429 = vadd.f32 %v403, %v418
    %v430 = vadd.f32 %v404, %v420
    %v431 = vadd.f32 %v405, %v422
    %v432 = vadd.f32 %v406, %v424
    %s433 = sld [smem:[#allocation6 + $0x11]]
    %v434 = vstv %s433
    %v435 = vmul.f32 %v74, %v434
    %v436 = vmul.f32 %v75, %v434
    %v437 = vmul.f32 %v76, %v434
    %v438 = vmul.f32 %v77, %v434
    %443 = vrot.lane.b32.xlu0 %v435, 126
    %v444 = vpop.permute.xlu0 %443
    %445 = vrot.lane.b32.xlu0 %v436, 126
    %v446 = vpop.permute.xlu0 %445
    %447 = vrot.lane.b32.xlu0 %v437, 126
    %v448 = vpop.permute.xlu0 %447
    %449 = vrot.lane.b32.xlu0 %v438, 126
    %v450 = vpop.permute.xlu0 %449
    %v455 = vadd.f32 %v429, %v444
    %v456 = vadd.f32 %v430, %v446
    %v457 = vadd.f32 %v431, %v448
    %v458 = vadd.f32 %v432, %v450
    %s459 = sld [smem:[#allocation6 + $0x12]]
    %v460 = vstv %s459
    %v461 = vmul.f32 %v79, %v460
    %v462 = vmul.f32 %v80, %v460
    %v463 = vmul.f32 %v81, %v460
    %v464 = vmul.f32 %v82, %v460
    %v465 = vadd.f32 %v455, %v461
    %v466 = vadd.f32 %v456, %v462
    %v467 = vadd.f32 %v457, %v463
    %v468 = vadd.f32 %v458, %v464
    %s469 = sld [smem:[#allocation6 + $0x13]]
    %v470 = vstv %s469
    %v471 = vmul.f32 %v79, %v470
    %v472 = vmul.f32 %v80, %v470
    %v473 = vmul.f32 %v81, %v470
    %v474 = vmul.f32 %v82, %v470
    %479 = vrot.lane.b32.xlu0 %v471, 127
    %v480 = vpop.permute.xlu0 %479
    %481 = vrot.lane.b32.xlu0 %v472, 127
    %v482 = vpop.permute.xlu0 %481
    %483 = vrot.lane.b32.xlu0 %v473, 127
    %v484 = vpop.permute.xlu0 %483
    %485 = vrot.lane.b32.xlu0 %v474, 127
    %v486 = vpop.permute.xlu0 %485
    %v491 = vadd.f32 %v465, %v480
    %v492 = vadd.f32 %v466, %v482
    %v493 = vadd.f32 %v467, %v484
    %v494 = vadd.f32 %v468, %v486
    %s495 = sld [smem:[#allocation6 + $0x14]]
    %v496 = vstv %s495
    %v497 = vmul.f32 %v79, %v496
    %v498 = vmul.f32 %v80, %v496
    %v499 = vmul.f32 %v81, %v496
    %v500 = vmul.f32 %v82, %v496
    %505 = vrot.lane.b32.xlu0 %v497, 126
    %v506 = vpop.permute.xlu0 %505
    %507 = vrot.lane.b32.xlu0 %v498, 126
    %v508 = vpop.permute.xlu0 %507
    %509 = vrot.lane.b32.xlu0 %v499, 126
    %v510 = vpop.permute.xlu0 %509
    %511 = vrot.lane.b32.xlu0 %v500, 126
    %v512 = vpop.permute.xlu0 %511
    %v517 = vadd.f32 %v491, %v506
    %v518 = vadd.f32 %v492, %v508
    %v519 = vadd.f32 %v493, %v510
    %v520 = vadd.f32 %v494, %v512
    %s521 = sld [smem:[#allocation6 + $0x15]]
    %v522 = vstv %s521
    %v523 = vmul.f32 %v83, %v522
    %v524 = vmul.f32 %v84, %v522
    %v525 = vmul.f32 %v85, %v522
    %v526 = vmul.f32 %v86, %v522
    %v527 = vadd.f32 %v517, %v523
    %v528 = vadd.f32 %v518, %v524
    %v529 = vadd.f32 %v519, %v525
    %v530 = vadd.f32 %v520, %v526
    %s531 = sld [smem:[#allocation6 + $0x16]]
    %v532 = vstv %s531
    %v533 = vmul.f32 %v83, %v532
    %v534 = vmul.f32 %v84, %v532
    %v535 = vmul.f32 %v85, %v532
    %v536 = vmul.f32 %v86, %v532
    %541 = vrot.lane.b32.xlu0 %v533, 127
    %v542 = vpop.permute.xlu0 %541
    %543 = vrot.lane.b32.xlu0 %v534, 127
    %v544 = vpop.permute.xlu0 %543
    %545 = vrot.lane.b32.xlu0 %v535, 127
    %v546 = vpop.permute.xlu0 %545
    %547 = vrot.lane.b32.xlu0 %v536, 127
    %v548 = vpop.permute.xlu0 %547
    %v553 = vadd.f32 %v527, %v542
    %v554 = vadd.f32 %v528, %v544
    %v555 = vadd.f32 %v529, %v546
    %v556 = vadd.f32 %v530, %v548
    %s557 = sld [smem:[#allocation6 + $0x17]]
    %v558 = vstv %s557
    %v559 = vmul.f32 %v83, %v558
    %v560 = vmul.f32 %v84, %v558
    %v561 = vmul.f32 %v85, %v558
    %v562 = vmul.f32 %v86, %v558
    %567 = vrot.lane.b32.xlu0 %v559, 126
    %v568 = vpop.permute.xlu0 %567
    %569 = vrot.lane.b32.xlu0 %v560, 126
    %v570 = vpop.permute.xlu0 %569
    %571 = vrot.lane.b32.xlu0 %v561, 126
    %v572 = vpop.permute.xlu0 %571
    %573 = vrot.lane.b32.xlu0 %v562, 126
    %v574 = vpop.permute.xlu0 %573
    %v579 = vadd.f32 %v553, %v568
    %v580 = vadd.f32 %v554, %v570
    %v581 = vadd.f32 %v555, %v572
    %v582 = vadd.f32 %v556, %v574
    %s583 = sld [smem:[#allocation6 + $0x18]]
    %v584 = vstv %s583
    %v585 = vmul.f32 %v87, %v584
    %v586 = vmul.f32 %v88, %v584
    %v587 = vmul.f32 %v89, %v584
    %v588 = vmul.f32 %v90, %v584
    %v589 = vadd.f32 %v579, %v585
    %v590 = vadd.f32 %v580, %v586
    %v591 = vadd.f32 %v581, %v587
    %v592 = vadd.f32 %v582, %v588
    %s593 = sld [smem:[#allocation6 + $0x19]]
    %v594 = vstv %s593
    %v595 = vmul.f32 %v87, %v594
    %v596 = vmul.f32 %v88, %v594
    %v597 = vmul.f32 %v89, %v594
    %v598 = vmul.f32 %v90, %v594
    %603 = vrot.lane.b32.xlu0 %v595, 127
    %v604 = vpop.permute.xlu0 %603
    %605 = vrot.lane.b32.xlu0 %v596, 127
    %v606 = vpop.permute.xlu0 %605
    %607 = vrot.lane.b32.xlu0 %v597, 127
    %v608 = vpop.permute.xlu0 %607
    %609 = vrot.lane.b32.xlu0 %v598, 127
    %v610 = vpop.permute.xlu0 %609
    %v615 = vadd.f32 %v589, %v604
    %v616 = vadd.f32 %v590, %v606
    %v617 = vadd.f32 %v591, %v608
    %v618 = vadd.f32 %v592, %v610
    %s619 = sld [smem:[#allocation6 + $0x1a]]
    %v620 = vstv %s619
    %v621 = vmul.f32 %v87, %v620
    %v622 = vmul.f32 %v88, %v620
    %v623 = vmul.f32 %v89, %v620
    %v624 = vmul.f32 %v90, %v620
    %629 = vrot.lane.b32.xlu0 %v621, 126
    %v630 = vpop.permute.xlu0 %629
    %631 = vrot.lane.b32.xlu0 %v622, 126
    %v632 = vpop.permute.xlu0 %631
    %633 = vrot.lane.b32.xlu0 %v623, 126
    %v634 = vpop.permute.xlu0 %633
    %635 = vrot.lane.b32.xlu0 %v624, 126
    %v636 = vpop.permute.xlu0 %635
    %v641 = vadd.f32 %v615, %v630
    %v642 = vadd.f32 %v616, %v632
    %v643 = vadd.f32 %v617, %v634
    %v644 = vadd.f32 %v618, %v636
    %s645 = sld [smem:[#allocation7]]
    %v646 = vstv %s645
    %v647 = vadd.f32 %v641, %v646
    %v648 = vadd.f32 %v642, %v646
    %v649 = vadd.f32 %v643, %v646
    %v650 = vadd.f32 %v644, %v646
    %s651 = sld [smem:[#allocation6 + $0x80]]
    %v652 = vstv %s651
    %v653 = vmul.f32 %v53, %v652
    %v654 = vmul.f32 %v54, %v652
    %v655 = vmul.f32 %v55, %v652
    %v656 = vmul.f32 %v56, %v652
    %s657 = sld [smem:[#allocation6 + $0x81]]
    %v658 = vstv %s657
    %v659 = vmul.f32 %v53, %v658
    %v660 = vmul.f32 %v54, %v658
    %v661 = vmul.f32 %v55, %v658
    %v662 = vmul.f32 %v56, %v658
    %667 = vrot.lane.b32.xlu0 %v659, 127
    %v668 = vpop.permute.xlu0 %667
    %669 = vrot.lane.b32.xlu0 %v660, 127
    %v670 = vpop.permute.xlu0 %669
    %671 = vrot.lane.b32.xlu0 %v661, 127
    %v672 = vpop.permute.xlu0 %671
    %673 = vrot.lane.b32.xlu0 %v662, 127
    %v674 = vpop.permute.xlu0 %673
    %v679 = vadd.f32 %v653, %v668
    %v680 = vadd.f32 %v654, %v670
    %v681 = vadd.f32 %v655, %v672
    %v682 = vadd.f32 %v656, %v674
    %s683 = sld [smem:[#allocation6 + $0x82]]
    %v684 = vstv %s683
    %v685 = vmul.f32 %v53, %v684
    %v686 = vmul.f32 %v54, %v684
    %v687 = vmul.f32 %v55, %v684
    %v688 = vmul.f32 %v56, %v684
    %693 = vrot.lane.b32.xlu0 %v685, 126
    %v694 = vpop.permute.xlu0 %693
    %695 = vrot.lane.b32.xlu0 %v686, 126
    %v696 = vpop.permute.xlu0 %695
    %697 = vrot.lane.b32.xlu0 %v687, 126
    %v698 = vpop.permute.xlu0 %697
    %699 = vrot.lane.b32.xlu0 %v688, 126
    %v700 = vpop.permute.xlu0 %699
    %v705 = vadd.f32 %v679, %v694
    %v706 = vadd.f32 %v680, %v696
    %v707 = vadd.f32 %v681, %v698
    %v708 = vadd.f32 %v682, %v700
    %s709 = sld [smem:[#allocation6 + $0x83]]
    %v710 = vstv %s709
    %v711 = vmul.f32 %v57, %v710
    %v712 = vmul.f32 %v58, %v710
    %v713 = vmul.f32 %v59, %v710
    %v714 = vmul.f32 %v60, %v710
    %v715 = vadd.f32 %v705, %v711
    %v716 = vadd.f32 %v706, %v712
    %v717 = vadd.f32 %v707, %v713
    %v718 = vadd.f32 %v708, %v714
    %s719 = sld [smem:[#allocation6 + $0x84]]
    %v720 = vstv %s719
    %v721 = vmul.f32 %v57, %v720
    %v722 = vmul.f32 %v58, %v720
    %v723 = vmul.f32 %v59, %v720
    %v724 = vmul.f32 %v60, %v720
    %729 = vrot.lane.b32.xlu0 %v721, 127
    %v730 = vpop.permute.xlu0 %729
    %731 = vrot.lane.b32.xlu0 %v722, 127
    %v732 = vpop.permute.xlu0 %731
    %733 = vrot.lane.b32.xlu0 %v723, 127
    %v734 = vpop.permute.xlu0 %733
    %735 = vrot.lane.b32.xlu0 %v724, 127
    %v736 = vpop.permute.xlu0 %735
    %v741 = vadd.f32 %v715, %v730
    %v742 = vadd.f32 %v716, %v732
    %v743 = vadd.f32 %v717, %v734
    %v744 = vadd.f32 %v718, %v736
    %s745 = sld [smem:[#allocation6 + $0x85]]
    %v746 = vstv %s745
    %v747 = vmul.f32 %v57, %v746
    %v748 = vmul.f32 %v58, %v746
    %v749 = vmul.f32 %v59, %v746
    %v750 = vmul.f32 %v60, %v746
    %755 = vrot.lane.b32.xlu0 %v747, 126
    %v756 = vpop.permute.xlu0 %755
    %757 = vrot.lane.b32.xlu0 %v748, 126
    %v758 = vpop.permute.xlu0 %757
    %759 = vrot.lane.b32.xlu0 %v749, 126
    %v760 = vpop.permute.xlu0 %759
    %761 = vrot.lane.b32.xlu0 %v750, 126
    %v762 = vpop.permute.xlu0 %761
    %v767 = vadd.f32 %v741, %v756
    %v768 = vadd.f32 %v742, %v758
    %v769 = vadd.f32 %v743, %v760
    %v770 = vadd.f32 %v744, %v762
    %s771 = sld [smem:[#allocation6 + $0x86]]
    %v772 = vstv %s771
    %v773 = vmul.f32 %v61, %v772
    %v774 = vmul.f32 %v62, %v772
    %v775 = vmul.f32 %v63, %v772
    %v776 = vmul.f32 %v64, %v772
    %v777 = vadd.f32 %v767, %v773
    %v778 = vadd.f32 %v768, %v774
    %v779 = vadd.f32 %v769, %v775
    %v780 = vadd.f32 %v770, %v776
    %s781 = sld [smem:[#allocation6 + $0x87]]
    %v782 = vstv %s781
    %v783 = vmul.f32 %v61, %v782
    %v784 = vmul.f32 %v62, %v782
    %v785 = vmul.f32 %v63, %v782
    %v786 = vmul.f32 %v64, %v782
    %791 = vrot.lane.b32.xlu0 %v783, 127
    %v792 = vpop.permute.xlu0 %791
    %793 = vrot.lane.b32.xlu0 %v784, 127
    %v794 = vpop.permute.xlu0 %793
    %795 = vrot.lane.b32.xlu0 %v785, 127
    %v796 = vpop.permute.xlu0 %795
    %797 = vrot.lane.b32.xlu0 %v786, 127
    %v798 = vpop.permute.xlu0 %797
    %v803 = vadd.f32 %v777, %v792
    %v804 = vadd.f32 %v778, %v794
    %v805 = vadd.f32 %v779, %v796
    %v806 = vadd.f32 %v780, %v798
    %s807 = sld [smem:[#allocation6 + $0x88]]
    %v808 = vstv %s807
    %v809 = vmul.f32 %v61, %v808
    %v810 = vmul.f32 %v62, %v808
    %v811 = vmul.f32 %v63, %v808
    %v812 = vmul.f32 %v64, %v808
    %817 = vrot.lane.b32.xlu0 %v809, 126
    %v818 = vpop.permute.xlu0 %817
    %819 = vrot.lane.b32.xlu0 %v810, 126
    %v820 = vpop.permute.xlu0 %819
    %821 = vrot.lane.b32.xlu0 %v811, 126
    %v822 = vpop.permute.xlu0 %821
    %823 = vrot.lane.b32.xlu0 %v812, 126
    %v824 = vpop.permute.xlu0 %823
    %v829 = vadd.f32 %v803, %v818
    %v830 = vadd.f32 %v804, %v820
    %v831 = vadd.f32 %v805, %v822
    %v832 = vadd.f32 %v806, %v824
    %s833 = sld [smem:[#allocation6 + $0x89]]
    %v834 = vstv %s833
    %v835 = vmul.f32 %v66, %v834
    %v836 = vmul.f32 %v67, %v834
    %v837 = vmul.f32 %v68, %v834
    %v838 = vmul.f32 %v69, %v834
    %v839 = vadd.f32 %v829, %v835
    %v840 = vadd.f32 %v830, %v836
    %v841 = vadd.f32 %v831, %v837
    %v842 = vadd.f32 %v832, %v838
    %s843 = sld [smem:[#allocation6 + $0x8a]]
    %v844 = vstv %s843
    %v845 = vmul.f32 %v66, %v844
    %v846 = vmul.f32 %v67, %v844
    %v847 = vmul.f32 %v68, %v844
    %v848 = vmul.f32 %v69, %v844
    %853 = vrot.lane.b32.xlu0 %v845, 127
    %v854 = vpop.permute.xlu0 %853
    %855 = vrot.lane.b32.xlu0 %v846, 127
    %v856 = vpop.permute.xlu0 %855
    %857 = vrot.lane.b32.xlu0 %v847, 127
    %v858 = vpop.permute.xlu0 %857
    %859 = vrot.lane.b32.xlu0 %v848, 127
    %v860 = vpop.permute.xlu0 %859
    %v865 = vadd.f32 %v839, %v854
    %v866 = vadd.f32 %v840, %v856
    %v867 = vadd.f32 %v841, %v858
    %v868 = vadd.f32 %v842, %v860
    %s869 = sld [smem:[#allocation6 + $0x8b]]
    %v870 = vstv %s869
    %v871 = vmul.f32 %v66, %v870
    %v872 = vmul.f32 %v67, %v870
    %v873 = vmul.f32 %v68, %v870
    %v874 = vmul.f32 %v69, %v870
    %879 = vrot.lane.b32.xlu0 %v871, 126
    %v880 = vpop.permute.xlu0 %879
    %881 = vrot.lane.b32.xlu0 %v872, 126
    %v882 = vpop.permute.xlu0 %881
    %883 = vrot.lane.b32.xlu0 %v873, 126
    %v884 = vpop.permute.xlu0 %883
    %885 = vrot.lane.b32.xlu0 %v874, 126
    %v886 = vpop.permute.xlu0 %885
    %v891 = vadd.f32 %v865, %v880
    %v892 = vadd.f32 %v866, %v882
    %v893 = vadd.f32 %v867, %v884
    %v894 = vadd.f32 %v868, %v886
    %s895 = sld [smem:[#allocation6 + $0x8c]]
    %v896 = vstv %s895
    %v897 = vmul.f32 %v70, %v896
    %v898 = vmul.f32 %v71, %v896
    %v899 = vmul.f32 %v72, %v896
    %v900 = vmul.f32 %v73, %v896
    %v901 = vadd.f32 %v891, %v897
    %v902 = vadd.f32 %v892, %v898
    %v903 = vadd.f32 %v893, %v899
    %v904 = vadd.f32 %v894, %v900
    %s905 = sld [smem:[#allocation6 + $0x8d]]
    %v906 = vstv %s905
    %v907 = vmul.f32 %v70, %v906
    %v908 = vmul.f32 %v71, %v906
    %v909 = vmul.f32 %v72, %v906
    %v910 = vmul.f32 %v73, %v906
    %915 = vrot.lane.b32.xlu0 %v907, 127
    %v916 = vpop.permute.xlu0 %915
    %917 = vrot.lane.b32.xlu0 %v908, 127
    %v918 = vpop.permute.xlu0 %917
    %919 = vrot.lane.b32.xlu0 %v909, 127
    %v920 = vpop.permute.xlu0 %919
    %921 = vrot.lane.b32.xlu0 %v910, 127
    %v922 = vpop.permute.xlu0 %921
    %v927 = vadd.f32 %v901, %v916
    %v928 = vadd.f32 %v902, %v918
    %v929 = vadd.f32 %v903, %v920
    %v930 = vadd.f32 %v904, %v922
    %s931 = sld [smem:[#allocation6 + $0x8e]]
    %v932 = vstv %s931
    %v933 = vmul.f32 %v70, %v932
    %v934 = vmul.f32 %v71, %v932
    %v935 = vmul.f32 %v72, %v932
    %v936 = vmul.f32 %v73, %v932
    %941 = vrot.lane.b32.xlu0 %v933, 126
    %v942 = vpop.permute.xlu0 %941
    %943 = vrot.lane.b32.xlu0 %v934, 126
    %v944 = vpop.permute.xlu0 %943
    %945 = vrot.lane.b32.xlu0 %v935, 126
    %v946 = vpop.permute.xlu0 %945
    %947 = vrot.lane.b32.xlu0 %v936, 126
    %v948 = vpop.permute.xlu0 %947
    %v953 = vadd.f32 %v927, %v942
    %v954 = vadd.f32 %v928, %v944
    %v955 = vadd.f32 %v929, %v946
    %v956 = vadd.f32 %v930, %v948
    %s957 = sld [smem:[#allocation6 + $0x8f]]
    %v958 = vstv %s957
    %v959 = vmul.f32 %v74, %v958
    %v960 = vmul.f32 %v75, %v958
    %v961 = vmul.f32 %v76, %v958
    %v962 = vmul.f32 %v77, %v958
    %v963 = vadd.f32 %v953, %v959
    %v964 = vadd.f32 %v954, %v960
    %v965 = vadd.f32 %v955, %v961
    %v966 = vadd.f32 %v956, %v962
    %s967 = sld [smem:[#allocation6 + $0x90]]
    %v968 = vstv %s967
    %v969 = vmul.f32 %v74, %v968
    %v970 = vmul.f32 %v75, %v968
    %v971 = vmul.f32 %v76, %v968
    %v972 = vmul.f32 %v77, %v968
    %977 = vrot.lane.b32.xlu0 %v969, 127
    %v978 = vpop.permute.xlu0 %977
    %979 = vrot.lane.b32.xlu0 %v970, 127
    %v980 = vpop.permute.xlu0 %979
    %981 = vrot.lane.b32.xlu0 %v971, 127
    %v982 = vpop.permute.xlu0 %981
    %983 = vrot.lane.b32.xlu0 %v972, 127
    %v984 = vpop.permute.xlu0 %983
    %v989 = vadd.f32 %v963, %v978
    %v990 = vadd.f32 %v964, %v980
    %v991 = vadd.f32 %v965, %v982
    %v992 = vadd.f32 %v966, %v984
    %s993 = sld [smem:[#allocation6 + $0x91]]
    %v994 = vstv %s993
    %v995 = vmul.f32 %v74, %v994
    %v996 = vmul.f32 %v75, %v994
    %v997 = vmul.f32 %v76, %v994
    %v998 = vmul.f32 %v77, %v994
    %1003 = vrot.lane.b32.xlu0 %v995, 126
    %v1004 = vpop.permute.xlu0 %1003
    %1005 = vrot.lane.b32.xlu0 %v996, 126
    %v1006 = vpop.permute.xlu0 %1005
    %1007 = vrot.lane.b32.xlu0 %v997, 126
    %v1008 = vpop.permute.xlu0 %1007
    %1009 = vrot.lane.b32.xlu0 %v998, 126
    %v1010 = vpop.permute.xlu0 %1009
    %v1015 = vadd.f32 %v989, %v1004
    %v1016 = vadd.f32 %v990, %v1006
    %v1017 = vadd.f32 %v991, %v1008
    %v1018 = vadd.f32 %v992, %v1010
    %s1019 = sld [smem:[#allocation6 + $0x92]]
    %v1020 = vstv %s1019
    %v1021 = vmul.f32 %v79, %v1020
    %v1022 = vmul.f32 %v80, %v1020
    %v1023 = vmul.f32 %v81, %v1020
    %v1024 = vmul.f32 %v82, %v1020
    %v1025 = vadd.f32 %v1015, %v1021
    %v1026 = vadd.f32 %v1016, %v1022
    %v1027 = vadd.f32 %v1017, %v1023
    %v1028 = vadd.f32 %v1018, %v1024
    %s1029 = sld [smem:[#allocation6 + $0x93]]
    %v1030 = vstv %s1029
    %v1031 = vmul.f32 %v79, %v1030
    %v1032 = vmul.f32 %v80, %v1030
    %v1033 = vmul.f32 %v81, %v1030
    %v1034 = vmul.f32 %v82, %v1030
    %1039 = vrot.lane.b32.xlu0 %v1031, 127
    %v1040 = vpop.permute.xlu0 %1039
    %1041 = vrot.lane.b32.xlu0 %v1032, 127
    %v1042 = vpop.permute.xlu0 %1041
    %1043 = vrot.lane.b32.xlu0 %v1033, 127
    %v1044 = vpop.permute.xlu0 %1043
    %1045 = vrot.lane.b32.xlu0 %v1034, 127
    %v1046 = vpop.permute.xlu0 %1045
    %v1051 = vadd.f32 %v1025, %v1040
    %v1052 = vadd.f32 %v1026, %v1042
    %v1053 = vadd.f32 %v1027, %v1044
    %v1054 = vadd.f32 %v1028, %v1046
    %s1055 = sld [smem:[#allocation6 + $0x94]]
    %v1056 = vstv %s1055
    %v1057 = vmul.f32 %v79, %v1056
    %v1058 = vmul.f32 %v80, %v1056
    %v1059 = vmul.f32 %v81, %v1056
    %v1060 = vmul.f32 %v82, %v1056
    %1065 = vrot.lane.b32.xlu0 %v1057, 126
    %v1066 = vpop.permute.xlu0 %1065
    %1067 = vrot.lane.b32.xlu0 %v1058, 126
    %v1068 = vpop.permute.xlu0 %1067
    %1069 = vrot.lane.b32.xlu0 %v1059, 126
    %v1070 = vpop.permute.xlu0 %1069
    %1071 = vrot.lane.b32.xlu0 %v1060, 126
    %v1072 = vpop.permute.xlu0 %1071
    %v1077 = vadd.f32 %v1051, %v1066
    %v1078 = vadd.f32 %v1052, %v1068
    %v1079 = vadd.f32 %v1053, %v1070
    %v1080 = vadd.f32 %v1054, %v1072
    %s1081 = sld [smem:[#allocation6 + $0x95]]
    %v1082 = vstv %s1081
    %v1083 = vmul.f32 %v83, %v1082
    %v1084 = vmul.f32 %v84, %v1082
    %v1085 = vmul.f32 %v85, %v1082
    %v1086 = vmul.f32 %v86, %v1082
    %v1087 = vadd.f32 %v1077, %v1083
    %v1088 = vadd.f32 %v1078, %v1084
    %v1089 = vadd.f32 %v1079, %v1085
    %v1090 = vadd.f32 %v1080, %v1086
    %s1091 = sld [smem:[#allocation6 + $0x96]]
    %v1092 = vstv %s1091
    %v1093 = vmul.f32 %v83, %v1092
    %v1094 = vmul.f32 %v84, %v1092
    %v1095 = vmul.f32 %v85, %v1092
    %v1096 = vmul.f32 %v86, %v1092
    %1101 = vrot.lane.b32.xlu0 %v1093, 127
    %v1102 = vpop.permute.xlu0 %1101
    %1103 = vrot.lane.b32.xlu0 %v1094, 127
    %v1104 = vpop.permute.xlu0 %1103
    %1105 = vrot.lane.b32.xlu0 %v1095, 127
    %v1106 = vpop.permute.xlu0 %1105
    %1107 = vrot.lane.b32.xlu0 %v1096, 127
    %v1108 = vpop.permute.xlu0 %1107
    %v1113 = vadd.f32 %v1087, %v1102
    %v1114 = vadd.f32 %v1088, %v1104
    %v1115 = vadd.f32 %v1089, %v1106
    %v1116 = vadd.f32 %v1090, %v1108
    %s1117 = sld [smem:[#allocation6 + $0x97]]
    %v1118 = vstv %s1117
    %v1119 = vmul.f32 %v83, %v1118
    %v1120 = vmul.f32 %v84, %v1118
    %v1121 = vmul.f32 %v85, %v1118
    %v1122 = vmul.f32 %v86, %v1118
    %1127 = vrot.lane.b32.xlu0 %v1119, 126
    %v1128 = vpop.permute.xlu0 %1127
    %1129 = vrot.lane.b32.xlu0 %v1120, 126
    %v1130 = vpop.permute.xlu0 %1129
    %1131 = vrot.lane.b32.xlu0 %v1121, 126
    %v1132 = vpop.permute.xlu0 %1131
    %1133 = vrot.lane.b32.xlu0 %v1122, 126
    %v1134 = vpop.permute.xlu0 %1133
    %v1139 = vadd.f32 %v1113, %v1128
    %v1140 = vadd.f32 %v1114, %v1130
    %v1141 = vadd.f32 %v1115, %v1132
    %v1142 = vadd.f32 %v1116, %v1134
    %s1143 = sld [smem:[#allocation6 + $0x98]]
    %v1144 = vstv %s1143
    %v1145 = vmul.f32 %v87, %v1144
    %v1146 = vmul.f32 %v88, %v1144
    %v1147 = vmul.f32 %v89, %v1144
    %v1148 = vmul.f32 %v90, %v1144
    %v1149 = vadd.f32 %v1139, %v1145
    %v1150 = vadd.f32 %v1140, %v1146
    %v1151 = vadd.f32 %v1141, %v1147
    %v1152 = vadd.f32 %v1142, %v1148
    %s1153 = sld [smem:[#allocation6 + $0x99]]
    %v1154 = vstv %s1153
    %v1155 = vmul.f32 %v87, %v1154
    %v1156 = vmul.f32 %v88, %v1154
    %v1157 = vmul.f32 %v89, %v1154
    %v1158 = vmul.f32 %v90, %v1154
    %1163 = vrot.lane.b32.xlu0 %v1155, 127
    %v1164 = vpop.permute.xlu0 %1163
    %1165 = vrot.lane.b32.xlu0 %v1156, 127
    %v1166 = vpop.permute.xlu0 %1165
    %1167 = vrot.lane.b32.xlu0 %v1157, 127
    %v1168 = vpop.permute.xlu0 %1167
    %1169 = vrot.lane.b32.xlu0 %v1158, 127
    %v1170 = vpop.permute.xlu0 %1169
    %v1175 = vadd.f32 %v1149, %v1164
    %v1176 = vadd.f32 %v1150, %v1166
    %v1177 = vadd.f32 %v1151, %v1168
    %v1178 = vadd.f32 %v1152, %v1170
    %s1179 = sld [smem:[#allocation6 + $0x9a]]
    %v1180 = vstv %s1179
    %v1181 = vmul.f32 %v87, %v1180
    %v1182 = vmul.f32 %v88, %v1180
    %v1183 = vmul.f32 %v89, %v1180
    %v1184 = vmul.f32 %v90, %v1180
    %1189 = vrot.lane.b32.xlu0 %v1181, 126
    %v1190 = vpop.permute.xlu0 %1189
    %1191 = vrot.lane.b32.xlu0 %v1182, 126
    %v1192 = vpop.permute.xlu0 %1191
    %1193 = vrot.lane.b32.xlu0 %v1183, 126
    %v1194 = vpop.permute.xlu0 %1193
    %1195 = vrot.lane.b32.xlu0 %v1184, 126
    %v1196 = vpop.permute.xlu0 %1195
    %v1201 = vadd.f32 %v1175, %v1190
    %v1202 = vadd.f32 %v1176, %v1192
    %v1203 = vadd.f32 %v1177, %v1194
    %v1204 = vadd.f32 %v1178, %v1196
    %s1205 = sld [smem:[#allocation7 + $0x1]]
    %v1206 = vstv %s1205
    %v1207 = vadd.f32 %v1201, %v1206
    %v1208 = vadd.f32 %v1202, %v1206
    %v1209 = vadd.f32 %v1203, %v1206
    %v1210 = vadd.f32 %v1204, %v1206
    %v1211 = vmin.f32 %v647, %v1207
    %v1212 = vmin.f32 %v648, %v1208
    %v1213 = vmin.f32 %v649, %v1209
    %v1214 = vmin.f32 %v650, %v1210
    %s1215 = sld [smem:[#allocation6 + $0x100]]
    %v1216 = vstv %s1215
    %v1217 = vmul.f32 %v53, %v1216
    %v1218 = vmul.f32 %v54, %v1216
    %v1219 = vmul.f32 %v55, %v1216
    %v1220 = vmul.f32 %v56, %v1216
    %s1221 = sld [smem:[#allocation6 + $0x101]]
    %v1222 = vstv %s1221
    %v1223 = vmul.f32 %v53, %v1222
    %v1224 = vmul.f32 %v54, %v1222
    %v1225 = vmul.f32 %v55, %v1222
    %v1226 = vmul.f32 %v56, %v1222
    %1231 = vrot.lane.b32.xlu0 %v1223, 127
    %v1232 = vpop.permute.xlu0 %1231
    %1233 = vrot.lane.b32.xlu0 %v1224, 127
    %v1234 = vpop.permute.xlu0 %1233
    %1235 = vrot.lane.b32.xlu0 %v1225, 127
    %v1236 = vpop.permute.xlu0 %1235
    %1237 = vrot.lane.b32.xlu0 %v1226, 127
    %v1238 = vpop.permute.xlu0 %1237
    %v1243 = vadd.f32 %v1217, %v1232
    %v1244 = vadd.f32 %v1218, %v1234
    %v1245 = vadd.f32 %v1219, %v1236
    %v1246 = vadd.f32 %v1220, %v1238
    %s1247 = sld [smem:[#allocation6 + $0x102]]
    %v1248 = vstv %s1247
    %v1249 = vmul.f32 %v53, %v1248
    %v1250 = vmul.f32 %v54, %v1248
    %v1251 = vmul.f32 %v55, %v1248
    %v1252 = vmul.f32 %v56, %v1248
    %1257 = vrot.lane.b32.xlu0 %v1249, 126
    %v1258 = vpop.permute.xlu0 %1257
    %1259 = vrot.lane.b32.xlu0 %v1250, 126
    %v1260 = vpop.permute.xlu0 %1259
    %1261 = vrot.lane.b32.xlu0 %v1251, 126
    %v1262 = vpop.permute.xlu0 %1261
    %1263 = vrot.lane.b32.xlu0 %v1252, 126
    %v1264 = vpop.permute.xlu0 %1263
    %v1269 = vadd.f32 %v1243, %v1258
    %v1270 = vadd.f32 %v1244, %v1260
    %v1271 = vadd.f32 %v1245, %v1262
    %v1272 = vadd.f32 %v1246, %v1264
    %s1273 = sld [smem:[#allocation6 + $0x103]]
    %v1274 = vstv %s1273
    %v1275 = vmul.f32 %v57, %v1274
    %v1276 = vmul.f32 %v58, %v1274
    %v1277 = vmul.f32 %v59, %v1274
    %v1278 = vmul.f32 %v60, %v1274
    %v1279 = vadd.f32 %v1269, %v1275
    %v1280 = vadd.f32 %v1270, %v1276
    %v1281 = vadd.f32 %v1271, %v1277
    %v1282 = vadd.f32 %v1272, %v1278
    %s1283 = sld [smem:[#allocation6 + $0x104]]
    %v1284 = vstv %s1283
    %v1285 = vmul.f32 %v57, %v1284
    %v1286 = vmul.f32 %v58, %v1284
    %v1287 = vmul.f32 %v59, %v1284
    %v1288 = vmul.f32 %v60, %v1284
    %1293 = vrot.lane.b32.xlu0 %v1285, 127
    %v1294 = vpop.permute.xlu0 %1293
    %1295 = vrot.lane.b32.xlu0 %v1286, 127
    %v1296 = vpop.permute.xlu0 %1295
    %1297 = vrot.lane.b32.xlu0 %v1287, 127
    %v1298 = vpop.permute.xlu0 %1297
    %1299 = vrot.lane.b32.xlu0 %v1288, 127
    %v1300 = vpop.permute.xlu0 %1299
    %v1305 = vadd.f32 %v1279, %v1294
    %v1306 = vadd.f32 %v1280, %v1296
    %v1307 = vadd.f32 %v1281, %v1298
    %v1308 = vadd.f32 %v1282, %v1300
    %s1309 = sld [smem:[#allocation6 + $0x105]]
    %v1310 = vstv %s1309
    %v1311 = vmul.f32 %v57, %v1310
    %v1312 = vmul.f32 %v58, %v1310
    %v1313 = vmul.f32 %v59, %v1310
    %v1314 = vmul.f32 %v60, %v1310
    %1319 = vrot.lane.b32.xlu0 %v1311, 126
    %v1320 = vpop.permute.xlu0 %1319
    %1321 = vrot.lane.b32.xlu0 %v1312, 126
    %v1322 = vpop.permute.xlu0 %1321
    %1323 = vrot.lane.b32.xlu0 %v1313, 126
    %v1324 = vpop.permute.xlu0 %1323
    %1325 = vrot.lane.b32.xlu0 %v1314, 126
    %v1326 = vpop.permute.xlu0 %1325
    %v1331 = vadd.f32 %v1305, %v1320
    %v1332 = vadd.f32 %v1306, %v1322
    %v1333 = vadd.f32 %v1307, %v1324
    %v1334 = vadd.f32 %v1308, %v1326
    %s1335 = sld [smem:[#allocation6 + $0x106]]
    %v1336 = vstv %s1335
    %v1337 = vmul.f32 %v61, %v1336
    %v1338 = vmul.f32 %v62, %v1336
    %v1339 = vmul.f32 %v63, %v1336
    %v1340 = vmul.f32 %v64, %v1336
    %v1341 = vadd.f32 %v1331, %v1337
    %v1342 = vadd.f32 %v1332, %v1338
    %v1343 = vadd.f32 %v1333, %v1339
    %v1344 = vadd.f32 %v1334, %v1340
    %s1345 = sld [smem:[#allocation6 + $0x107]]
    %v1346 = vstv %s1345
    %v1347 = vmul.f32 %v61, %v1346
    %v1348 = vmul.f32 %v62, %v1346
    %v1349 = vmul.f32 %v63, %v1346
    %v1350 = vmul.f32 %v64, %v1346
    %1355 = vrot.lane.b32.xlu0 %v1347, 127
    %v1356 = vpop.permute.xlu0 %1355
    %1357 = vrot.lane.b32.xlu0 %v1348, 127
    %v1358 = vpop.permute.xlu0 %1357
    %1359 = vrot.lane.b32.xlu0 %v1349, 127
    %v1360 = vpop.permute.xlu0 %1359
    %1361 = vrot.lane.b32.xlu0 %v1350, 127
    %v1362 = vpop.permute.xlu0 %1361
    %v1367 = vadd.f32 %v1341, %v1356
    %v1368 = vadd.f32 %v1342, %v1358
    %v1369 = vadd.f32 %v1343, %v1360
    %v1370 = vadd.f32 %v1344, %v1362
    %s1371 = sld [smem:[#allocation6 + $0x108]]
    %v1372 = vstv %s1371
    %v1373 = vmul.f32 %v61, %v1372
    %v1374 = vmul.f32 %v62, %v1372
    %v1375 = vmul.f32 %v63, %v1372
    %v1376 = vmul.f32 %v64, %v1372
    %1381 = vrot.lane.b32.xlu0 %v1373, 126
    %v1382 = vpop.permute.xlu0 %1381
    %1383 = vrot.lane.b32.xlu0 %v1374, 126
    %v1384 = vpop.permute.xlu0 %1383
    %1385 = vrot.lane.b32.xlu0 %v1375, 126
    %v1386 = vpop.permute.xlu0 %1385
    %1387 = vrot.lane.b32.xlu0 %v1376, 126
    %v1388 = vpop.permute.xlu0 %1387
    %v1393 = vadd.f32 %v1367, %v1382
    %v1394 = vadd.f32 %v1368, %v1384
    %v1395 = vadd.f32 %v1369, %v1386
    %v1396 = vadd.f32 %v1370, %v1388
    %s1397 = sld [smem:[#allocation6 + $0x109]]
    %v1398 = vstv %s1397
    %v1399 = vmul.f32 %v66, %v1398
    %v1400 = vmul.f32 %v67, %v1398
    %v1401 = vmul.f32 %v68, %v1398
    %v1402 = vmul.f32 %v69, %v1398
    %v1403 = vadd.f32 %v1393, %v1399
    %v1404 = vadd.f32 %v1394, %v1400
    %v1405 = vadd.f32 %v1395, %v1401
    %v1406 = vadd.f32 %v1396, %v1402
    %s1407 = sld [smem:[#allocation6 + $0x10a]]
    %v1408 = vstv %s1407
    %v1409 = vmul.f32 %v66, %v1408
    %v1410 = vmul.f32 %v67, %v1408
    %v1411 = vmul.f32 %v68, %v1408
    %v1412 = vmul.f32 %v69, %v1408
    %1417 = vrot.lane.b32.xlu0 %v1409, 127
    %v1418 = vpop.permute.xlu0 %1417
    %1419 = vrot.lane.b32.xlu0 %v1410, 127
    %v1420 = vpop.permute.xlu0 %1419
    %1421 = vrot.lane.b32.xlu0 %v1411, 127
    %v1422 = vpop.permute.xlu0 %1421
    %1423 = vrot.lane.b32.xlu0 %v1412, 127
    %v1424 = vpop.permute.xlu0 %1423
    %v1429 = vadd.f32 %v1403, %v1418
    %v1430 = vadd.f32 %v1404, %v1420
    %v1431 = vadd.f32 %v1405, %v1422
    %v1432 = vadd.f32 %v1406, %v1424
    %s1433 = sld [smem:[#allocation6 + $0x10b]]
    %v1434 = vstv %s1433
    %v1435 = vmul.f32 %v66, %v1434
    %v1436 = vmul.f32 %v67, %v1434
    %v1437 = vmul.f32 %v68, %v1434
    %v1438 = vmul.f32 %v69, %v1434
    %1443 = vrot.lane.b32.xlu0 %v1435, 126
    %v1444 = vpop.permute.xlu0 %1443
    %1445 = vrot.lane.b32.xlu0 %v1436, 126
    %v1446 = vpop.permute.xlu0 %1445
    %1447 = vrot.lane.b32.xlu0 %v1437, 126
    %v1448 = vpop.permute.xlu0 %1447
    %1449 = vrot.lane.b32.xlu0 %v1438, 126
    %v1450 = vpop.permute.xlu0 %1449
    %v1455 = vadd.f32 %v1429, %v1444
    %v1456 = vadd.f32 %v1430, %v1446
    %v1457 = vadd.f32 %v1431, %v1448
    %v1458 = vadd.f32 %v1432, %v1450
    %s1459 = sld [smem:[#allocation6 + $0x10c]]
    %v1460 = vstv %s1459
    %v1461 = vmul.f32 %v70, %v1460
    %v1462 = vmul.f32 %v71, %v1460
    %v1463 = vmul.f32 %v72, %v1460
    %v1464 = vmul.f32 %v73, %v1460
    %v1465 = vadd.f32 %v1455, %v1461
    %v1466 = vadd.f32 %v1456, %v1462
    %v1467 = vadd.f32 %v1457, %v1463
    %v1468 = vadd.f32 %v1458, %v1464
    %s1469 = sld [smem:[#allocation6 + $0x10d]]
    %v1470 = vstv %s1469
    %v1471 = vmul.f32 %v70, %v1470
    %v1472 = vmul.f32 %v71, %v1470
    %v1473 = vmul.f32 %v72, %v1470
    %v1474 = vmul.f32 %v73, %v1470
    %1479 = vrot.lane.b32.xlu0 %v1471, 127
    %v1480 = vpop.permute.xlu0 %1479
    %1481 = vrot.lane.b32.xlu0 %v1472, 127
    %v1482 = vpop.permute.xlu0 %1481
    %1483 = vrot.lane.b32.xlu0 %v1473, 127
    %v1484 = vpop.permute.xlu0 %1483
    %1485 = vrot.lane.b32.xlu0 %v1474, 127
    %v1486 = vpop.permute.xlu0 %1485
    %v1491 = vadd.f32 %v1465, %v1480
    %v1492 = vadd.f32 %v1466, %v1482
    %v1493 = vadd.f32 %v1467, %v1484
    %v1494 = vadd.f32 %v1468, %v1486
    %s1495 = sld [smem:[#allocation6 + $0x10e]]
    %v1496 = vstv %s1495
    %v1497 = vmul.f32 %v70, %v1496
    %v1498 = vmul.f32 %v71, %v1496
    %v1499 = vmul.f32 %v72, %v1496
    %v1500 = vmul.f32 %v73, %v1496
    %1505 = vrot.lane.b32.xlu0 %v1497, 126
    %v1506 = vpop.permute.xlu0 %1505
    %1507 = vrot.lane.b32.xlu0 %v1498, 126
    %v1508 = vpop.permute.xlu0 %1507
    %1509 = vrot.lane.b32.xlu0 %v1499, 126
    %v1510 = vpop.permute.xlu0 %1509
    %1511 = vrot.lane.b32.xlu0 %v1500, 126
    %v1512 = vpop.permute.xlu0 %1511
    %v1517 = vadd.f32 %v1491, %v1506
    %v1518 = vadd.f32 %v1492, %v1508
    %v1519 = vadd.f32 %v1493, %v1510
    %v1520 = vadd.f32 %v1494, %v1512
    %s1521 = sld [smem:[#allocation6 + $0x10f]]
    %v1522 = vstv %s1521
    %v1523 = vmul.f32 %v74, %v1522
    %v1524 = vmul.f32 %v75, %v1522
    %v1525 = vmul.f32 %v76, %v1522
    %v1526 = vmul.f32 %v77, %v1522
    %v1527 = vadd.f32 %v1517, %v1523
    %v1528 = vadd.f32 %v1518, %v1524
    %v1529 = vadd.f32 %v1519, %v1525
    %v1530 = vadd.f32 %v1520, %v1526
    %s1531 = sld [smem:[#allocation6 + $0x110]]
    %v1532 = vstv %s1531
    %v1533 = vmul.f32 %v74, %v1532
    %v1534 = vmul.f32 %v75, %v1532
    %v1535 = vmul.f32 %v76, %v1532
    %v1536 = vmul.f32 %v77, %v1532
    %1541 = vrot.lane.b32.xlu0 %v1533, 127
    %v1542 = vpop.permute.xlu0 %1541
    %1543 = vrot.lane.b32.xlu0 %v1534, 127
    %v1544 = vpop.permute.xlu0 %1543
    %1545 = vrot.lane.b32.xlu0 %v1535, 127
    %v1546 = vpop.permute.xlu0 %1545
    %1547 = vrot.lane.b32.xlu0 %v1536, 127
    %v1548 = vpop.permute.xlu0 %1547
    %v1553 = vadd.f32 %v1527, %v1542
    %v1554 = vadd.f32 %v1528, %v1544
    %v1555 = vadd.f32 %v1529, %v1546
    %v1556 = vadd.f32 %v1530, %v1548
    %s1557 = sld [smem:[#allocation6 + $0x111]]
    %v1558 = vstv %s1557
    %v1559 = vmul.f32 %v74, %v1558
    %v1560 = vmul.f32 %v75, %v1558
    %v1561 = vmul.f32 %v76, %v1558
    %v1562 = vmul.f32 %v77, %v1558
    %1567 = vrot.lane.b32.xlu0 %v1559, 126
    %v1568 = vpop.permute.xlu0 %1567
    %1569 = vrot.lane.b32.xlu0 %v1560, 126
    %v1570 = vpop.permute.xlu0 %1569
    %1571 = vrot.lane.b32.xlu0 %v1561, 126
    %v1572 = vpop.permute.xlu0 %1571
    %1573 = vrot.lane.b32.xlu0 %v1562, 126
    %v1574 = vpop.permute.xlu0 %1573
    %v1579 = vadd.f32 %v1553, %v1568
    %v1580 = vadd.f32 %v1554, %v1570
    %v1581 = vadd.f32 %v1555, %v1572
    %v1582 = vadd.f32 %v1556, %v1574
    %s1583 = sld [smem:[#allocation6 + $0x112]]
    %v1584 = vstv %s1583
    %v1585 = vmul.f32 %v79, %v1584
    %v1586 = vmul.f32 %v80, %v1584
    %v1587 = vmul.f32 %v81, %v1584
    %v1588 = vmul.f32 %v82, %v1584
    %v1589 = vadd.f32 %v1579, %v1585
    %v1590 = vadd.f32 %v1580, %v1586
    %v1591 = vadd.f32 %v1581, %v1587
    %v1592 = vadd.f32 %v1582, %v1588
    %s1593 = sld [smem:[#allocation6 + $0x113]]
    %v1594 = vstv %s1593
    %v1595 = vmul.f32 %v79, %v1594
    %v1596 = vmul.f32 %v80, %v1594
    %v1597 = vmul.f32 %v81, %v1594
    %v1598 = vmul.f32 %v82, %v1594
    %1603 = vrot.lane.b32.xlu0 %v1595, 127
    %v1604 = vpop.permute.xlu0 %1603
    %1605 = vrot.lane.b32.xlu0 %v1596, 127
    %v1606 = vpop.permute.xlu0 %1605
    %1607 = vrot.lane.b32.xlu0 %v1597, 127
    %v1608 = vpop.permute.xlu0 %1607
    %1609 = vrot.lane.b32.xlu0 %v1598, 127
    %v1610 = vpop.permute.xlu0 %1609
    %v1615 = vadd.f32 %v1589, %v1604
    %v1616 = vadd.f32 %v1590, %v1606
    %v1617 = vadd.f32 %v1591, %v1608
    %v1618 = vadd.f32 %v1592, %v1610
    %s1619 = sld [smem:[#allocation6 + $0x114]]
    %v1620 = vstv %s1619
    %v1621 = vmul.f32 %v79, %v1620
    %v1622 = vmul.f32 %v80, %v1620
    %v1623 = vmul.f32 %v81, %v1620
    %v1624 = vmul.f32 %v82, %v1620
    %1629 = vrot.lane.b32.xlu0 %v1621, 126
    %v1630 = vpop.permute.xlu0 %1629
    %1631 = vrot.lane.b32.xlu0 %v1622, 126
    %v1632 = vpop.permute.xlu0 %1631
    %1633 = vrot.lane.b32.xlu0 %v1623, 126
    %v1634 = vpop.permute.xlu0 %1633
    %1635 = vrot.lane.b32.xlu0 %v1624, 126
    %v1636 = vpop.permute.xlu0 %1635
    %v1641 = vadd.f32 %v1615, %v1630
    %v1642 = vadd.f32 %v1616, %v1632
    %v1643 = vadd.f32 %v1617, %v1634
    %v1644 = vadd.f32 %v1618, %v1636
    %s1645 = sld [smem:[#allocation6 + $0x115]]
    %v1646 = vstv %s1645
    %v1647 = vmul.f32 %v83, %v1646
    %v1648 = vmul.f32 %v84, %v1646
    %v1649 = vmul.f32 %v85, %v1646
    %v1650 = vmul.f32 %v86, %v1646
    %v1651 = vadd.f32 %v1641, %v1647
    %v1652 = vadd.f32 %v1642, %v1648
    %v1653 = vadd.f32 %v1643, %v1649
    %v1654 = vadd.f32 %v1644, %v1650
    %s1655 = sld [smem:[#allocation6 + $0x116]]
    %v1656 = vstv %s1655
    %v1657 = vmul.f32 %v83, %v1656
    %v1658 = vmul.f32 %v84, %v1656
    %v1659 = vmul.f32 %v85, %v1656
    %v1660 = vmul.f32 %v86, %v1656
    %1665 = vrot.lane.b32.xlu0 %v1657, 127
    %v1666 = vpop.permute.xlu0 %1665
    %1667 = vrot.lane.b32.xlu0 %v1658, 127
    %v1668 = vpop.permute.xlu0 %1667
    %1669 = vrot.lane.b32.xlu0 %v1659, 127
    %v1670 = vpop.permute.xlu0 %1669
    %1671 = vrot.lane.b32.xlu0 %v1660, 127
    %v1672 = vpop.permute.xlu0 %1671
    %v1677 = vadd.f32 %v1651, %v1666
    %v1678 = vadd.f32 %v1652, %v1668
    %v1679 = vadd.f32 %v1653, %v1670
    %v1680 = vadd.f32 %v1654, %v1672
    %s1681 = sld [smem:[#allocation6 + $0x117]]
    %v1682 = vstv %s1681
    %v1683 = vmul.f32 %v83, %v1682
    %v1684 = vmul.f32 %v84, %v1682
    %v1685 = vmul.f32 %v85, %v1682
    %v1686 = vmul.f32 %v86, %v1682
    %1691 = vrot.lane.b32.xlu0 %v1683, 126
    %v1692 = vpop.permute.xlu0 %1691
    %1693 = vrot.lane.b32.xlu0 %v1684, 126
    %v1694 = vpop.permute.xlu0 %1693
    %1695 = vrot.lane.b32.xlu0 %v1685, 126
    %v1696 = vpop.permute.xlu0 %1695
    %1697 = vrot.lane.b32.xlu0 %v1686, 126
    %v1698 = vpop.permute.xlu0 %1697
    %v1703 = vadd.f32 %v1677, %v1692
    %v1704 = vadd.f32 %v1678, %v1694
    %v1705 = vadd.f32 %v1679, %v1696
    %v1706 = vadd.f32 %v1680, %v1698
    %s1707 = sld [smem:[#allocation6 + $0x118]]
    %v1708 = vstv %s1707
    %v1709 = vmul.f32 %v87, %v1708
    %v1710 = vmul.f32 %v88, %v1708
    %v1711 = vmul.f32 %v89, %v1708
    %v1712 = vmul.f32 %v90, %v1708
    %v1713 = vadd.f32 %v1703, %v1709
    %v1714 = vadd.f32 %v1704, %v1710
    %v1715 = vadd.f32 %v1705, %v1711
    %v1716 = vadd.f32 %v1706, %v1712
    %s1717 = sld [smem:[#allocation6 + $0x119]]
    %v1718 = vstv %s1717
    %v1719 = vmul.f32 %v87, %v1718
    %v1720 = vmul.f32 %v88, %v1718
    %v1721 = vmul.f32 %v89, %v1718
    %v1722 = vmul.f32 %v90, %v1718
    %1727 = vrot.lane.b32.xlu0 %v1719, 127
    %v1728 = vpop.permute.xlu0 %1727
    %1729 = vrot.lane.b32.xlu0 %v1720, 127
    %v1730 = vpop.permute.xlu0 %1729
    %1731 = vrot.lane.b32.xlu0 %v1721, 127
    %v1732 = vpop.permute.xlu0 %1731
    %1733 = vrot.lane.b32.xlu0 %v1722, 127
    %v1734 = vpop.permute.xlu0 %1733
    %v1739 = vadd.f32 %v1713, %v1728
    %v1740 = vadd.f32 %v1714, %v1730
    %v1741 = vadd.f32 %v1715, %v1732
    %v1742 = vadd.f32 %v1716, %v1734
    %s1743 = sld [smem:[#allocation6 + $0x11a]]
    %v1744 = vstv %s1743
    %v1745 = vmul.f32 %v87, %v1744
    %v1746 = vmul.f32 %v88, %v1744
    %v1747 = vmul.f32 %v89, %v1744
    %v1748 = vmul.f32 %v90, %v1744
    %1753 = vrot.lane.b32.xlu0 %v1745, 126
    %v1754 = vpop.permute.xlu0 %1753
    %1755 = vrot.lane.b32.xlu0 %v1746, 126
    %v1756 = vpop.permute.xlu0 %1755
    %1757 = vrot.lane.b32.xlu0 %v1747, 126
    %v1758 = vpop.permute.xlu0 %1757
    %1759 = vrot.lane.b32.xlu0 %v1748, 126
    %v1760 = vpop.permute.xlu0 %1759
    %v1765 = vadd.f32 %v1739, %v1754
    %v1766 = vadd.f32 %v1740, %v1756
    %v1767 = vadd.f32 %v1741, %v1758
    %v1768 = vadd.f32 %v1742, %v1760
    %s1769 = sld [smem:[#allocation7 + $0x2]]
    %v1770 = vstv %s1769
    %v1771 = vadd.f32 %v1765, %v1770
    %v1772 = vadd.f32 %v1766, %v1770
    %v1773 = vadd.f32 %v1767, %v1770
    %v1774 = vadd.f32 %v1768, %v1770
    %v1775 = vmin.f32 %v1211, %v1771
    %v1776 = vmin.f32 %v1212, %v1772
    %v1777 = vmin.f32 %v1213, %v1773
    %v1778 = vmin.f32 %v1214, %v1774
    %s1779 = sld [smem:[#allocation6 + $0x180]]
    %v1780 = vstv %s1779
    %v1781 = vmul.f32 %v53, %v1780
    %v1782 = vmul.f32 %v54, %v1780
    %v1783 = vmul.f32 %v55, %v1780
    %v1784 = vmul.f32 %v56, %v1780
    %s1785 = sld [smem:[#allocation6 + $0x181]]
    %v1786 = vstv %s1785
    %v1787 = vmul.f32 %v53, %v1786
    %v1788 = vmul.f32 %v54, %v1786
    %v1789 = vmul.f32 %v55, %v1786
    %v1790 = vmul.f32 %v56, %v1786
    %1795 = vrot.lane.b32.xlu0 %v1787, 127
    %v1796 = vpop.permute.xlu0 %1795
    %1797 = vrot.lane.b32.xlu0 %v1788, 127
    %v1798 = vpop.permute.xlu0 %1797
    %1799 = vrot.lane.b32.xlu0 %v1789, 127
    %v1800 = vpop.permute.xlu0 %1799
    %1801 = vrot.lane.b32.xlu0 %v1790, 127
    %v1802 = vpop.permute.xlu0 %1801
    %v1807 = vadd.f32 %v1781, %v1796
    %v1808 = vadd.f32 %v1782, %v1798
    %v1809 = vadd.f32 %v1783, %v1800
    %v1810 = vadd.f32 %v1784, %v1802
    %s1811 = sld [smem:[#allocation6 + $0x182]]
    %v1812 = vstv %s1811
    %v1813 = vmul.f32 %v53, %v1812
    %v1814 = vmul.f32 %v54, %v1812
    %v1815 = vmul.f32 %v55, %v1812
    %v1816 = vmul.f32 %v56, %v1812
    %1821 = vrot.lane.b32.xlu0 %v1813, 126
    %v1822 = vpop.permute.xlu0 %1821
    %1823 = vrot.lane.b32.xlu0 %v1814, 126
    %v1824 = vpop.permute.xlu0 %1823
    %1825 = vrot.lane.b32.xlu0 %v1815, 126
    %v1826 = vpop.permute.xlu0 %1825
    %1827 = vrot.lane.b32.xlu0 %v1816, 126
    %v1828 = vpop.permute.xlu0 %1827
    %v1833 = vadd.f32 %v1807, %v1822
    %v1834 = vadd.f32 %v1808, %v1824
    %v1835 = vadd.f32 %v1809, %v1826
    %v1836 = vadd.f32 %v1810, %v1828
    %s1837 = sld [smem:[#allocation6 + $0x183]]
    %v1838 = vstv %s1837
    %v1839 = vmul.f32 %v57, %v1838
    %v1840 = vmul.f32 %v58, %v1838
    %v1841 = vmul.f32 %v59, %v1838
    %v1842 = vmul.f32 %v60, %v1838
    %v1843 = vadd.f32 %v1833, %v1839
    %v1844 = vadd.f32 %v1834, %v1840
    %v1845 = vadd.f32 %v1835, %v1841
    %v1846 = vadd.f32 %v1836, %v1842
    %s1847 = sld [smem:[#allocation6 + $0x184]]
    %v1848 = vstv %s1847
    %v1849 = vmul.f32 %v57, %v1848
    %v1850 = vmul.f32 %v58, %v1848
    %v1851 = vmul.f32 %v59, %v1848
    %v1852 = vmul.f32 %v60, %v1848
    %1857 = vrot.lane.b32.xlu0 %v1849, 127
    %v1858 = vpop.permute.xlu0 %1857
    %1859 = vrot.lane.b32.xlu0 %v1850, 127
    %v1860 = vpop.permute.xlu0 %1859
    %1861 = vrot.lane.b32.xlu0 %v1851, 127
    %v1862 = vpop.permute.xlu0 %1861
    %1863 = vrot.lane.b32.xlu0 %v1852, 127
    %v1864 = vpop.permute.xlu0 %1863
    %v1869 = vadd.f32 %v1843, %v1858
    %v1870 = vadd.f32 %v1844, %v1860
    %v1871 = vadd.f32 %v1845, %v1862
    %v1872 = vadd.f32 %v1846, %v1864
    %s1873 = sld [smem:[#allocation6 + $0x185]]
    %v1874 = vstv %s1873
    %v1875 = vmul.f32 %v57, %v1874
    %v1876 = vmul.f32 %v58, %v1874
    %v1877 = vmul.f32 %v59, %v1874
    %v1878 = vmul.f32 %v60, %v1874
    %1883 = vrot.lane.b32.xlu0 %v1875, 126
    %v1884 = vpop.permute.xlu0 %1883
    %1885 = vrot.lane.b32.xlu0 %v1876, 126
    %v1886 = vpop.permute.xlu0 %1885
    %1887 = vrot.lane.b32.xlu0 %v1877, 126
    %v1888 = vpop.permute.xlu0 %1887
    %1889 = vrot.lane.b32.xlu0 %v1878, 126
    %v1890 = vpop.permute.xlu0 %1889
    %v1895 = vadd.f32 %v1869, %v1884
    %v1896 = vadd.f32 %v1870, %v1886
    %v1897 = vadd.f32 %v1871, %v1888
    %v1898 = vadd.f32 %v1872, %v1890
    %s1899 = sld [smem:[#allocation6 + $0x186]]
    %v1900 = vstv %s1899
    %v1901 = vmul.f32 %v61, %v1900
    %v1902 = vmul.f32 %v62, %v1900
    %v1903 = vmul.f32 %v63, %v1900
    %v1904 = vmul.f32 %v64, %v1900
    %v1905 = vadd.f32 %v1895, %v1901
    %v1906 = vadd.f32 %v1896, %v1902
    %v1907 = vadd.f32 %v1897, %v1903
    %v1908 = vadd.f32 %v1898, %v1904
    %s1909 = sld [smem:[#allocation6 + $0x187]]
    %v1910 = vstv %s1909
    %v1911 = vmul.f32 %v61, %v1910
    %v1912 = vmul.f32 %v62, %v1910
    %v1913 = vmul.f32 %v63, %v1910
    %v1914 = vmul.f32 %v64, %v1910
    %1919 = vrot.lane.b32.xlu0 %v1911, 127
    %v1920 = vpop.permute.xlu0 %1919
    %1921 = vrot.lane.b32.xlu0 %v1912, 127
    %v1922 = vpop.permute.xlu0 %1921
    %1923 = vrot.lane.b32.xlu0 %v1913, 127
    %v1924 = vpop.permute.xlu0 %1923
    %1925 = vrot.lane.b32.xlu0 %v1914, 127
    %v1926 = vpop.permute.xlu0 %1925
    %v1931 = vadd.f32 %v1905, %v1920
    %v1932 = vadd.f32 %v1906, %v1922
    %v1933 = vadd.f32 %v1907, %v1924
    %v1934 = vadd.f32 %v1908, %v1926
    %s1935 = sld [smem:[#allocation6 + $0x188]]
    %v1936 = vstv %s1935
    %v1937 = vmul.f32 %v61, %v1936
    %v1938 = vmul.f32 %v62, %v1936
    %v1939 = vmul.f32 %v63, %v1936
    %v1940 = vmul.f32 %v64, %v1936
    %1945 = vrot.lane.b32.xlu0 %v1937, 126
    %v1946 = vpop.permute.xlu0 %1945
    %1947 = vrot.lane.b32.xlu0 %v1938, 126
    %v1948 = vpop.permute.xlu0 %1947
    %1949 = vrot.lane.b32.xlu0 %v1939, 126
    %v1950 = vpop.permute.xlu0 %1949
    %1951 = vrot.lane.b32.xlu0 %v1940, 126
    %v1952 = vpop.permute.xlu0 %1951
    %v1957 = vadd.f32 %v1931, %v1946
    %v1958 = vadd.f32 %v1932, %v1948
    %v1959 = vadd.f32 %v1933, %v1950
    %v1960 = vadd.f32 %v1934, %v1952
    %s1961 = sld [smem:[#allocation6 + $0x189]]
    %v1962 = vstv %s1961
    %v1963 = vmul.f32 %v66, %v1962
    %v1964 = vmul.f32 %v67, %v1962
    %v1965 = vmul.f32 %v68, %v1962
    %v1966 = vmul.f32 %v69, %v1962
    %v1967 = vadd.f32 %v1957, %v1963
    %v1968 = vadd.f32 %v1958, %v1964
    %v1969 = vadd.f32 %v1959, %v1965
    %v1970 = vadd.f32 %v1960, %v1966
    %s1971 = sld [smem:[#allocation6 + $0x18a]]
    %v1972 = vstv %s1971
    %v1973 = vmul.f32 %v66, %v1972
    %v1974 = vmul.f32 %v67, %v1972
    %v1975 = vmul.f32 %v68, %v1972
    %v1976 = vmul.f32 %v69, %v1972
    %1981 = vrot.lane.b32.xlu0 %v1973, 127
    %v1982 = vpop.permute.xlu0 %1981
    %1983 = vrot.lane.b32.xlu0 %v1974, 127
    %v1984 = vpop.permute.xlu0 %1983
    %1985 = vrot.lane.b32.xlu0 %v1975, 127
    %v1986 = vpop.permute.xlu0 %1985
    %1987 = vrot.lane.b32.xlu0 %v1976, 127
    %v1988 = vpop.permute.xlu0 %1987
    %v1993 = vadd.f32 %v1967, %v1982
    %v1994 = vadd.f32 %v1968, %v1984
    %v1995 = vadd.f32 %v1969, %v1986
    %v1996 = vadd.f32 %v1970, %v1988
    %s1997 = sld [smem:[#allocation6 + $0x18b]]
    %v1998 = vstv %s1997
    %v1999 = vmul.f32 %v66, %v1998
    %v2000 = vmul.f32 %v67, %v1998
    %v2001 = vmul.f32 %v68, %v1998
    %v2002 = vmul.f32 %v69, %v1998
    %2007 = vrot.lane.b32.xlu0 %v1999, 126
    %v2008 = vpop.permute.xlu0 %2007
    %2009 = vrot.lane.b32.xlu0 %v2000, 126
    %v2010 = vpop.permute.xlu0 %2009
    %2011 = vrot.lane.b32.xlu0 %v2001, 126
    %v2012 = vpop.permute.xlu0 %2011
    %2013 = vrot.lane.b32.xlu0 %v2002, 126
    %v2014 = vpop.permute.xlu0 %2013
    %v2019 = vadd.f32 %v1993, %v2008
    %v2020 = vadd.f32 %v1994, %v2010
    %v2021 = vadd.f32 %v1995, %v2012
    %v2022 = vadd.f32 %v1996, %v2014
    %s2023 = sld [smem:[#allocation6 + $0x18c]]
    %v2024 = vstv %s2023
    %v2025 = vmul.f32 %v70, %v2024
    %v2026 = vmul.f32 %v71, %v2024
    %v2027 = vmul.f32 %v72, %v2024
    %v2028 = vmul.f32 %v73, %v2024
    %v2029 = vadd.f32 %v2019, %v2025
    %v2030 = vadd.f32 %v2020, %v2026
    %v2031 = vadd.f32 %v2021, %v2027
    %v2032 = vadd.f32 %v2022, %v2028
    %s2033 = sld [smem:[#allocation6 + $0x18d]]
    %v2034 = vstv %s2033
    %v2035 = vmul.f32 %v70, %v2034
    %v2036 = vmul.f32 %v71, %v2034
    %v2037 = vmul.f32 %v72, %v2034
    %v2038 = vmul.f32 %v73, %v2034
    %2043 = vrot.lane.b32.xlu0 %v2035, 127
    %v2044 = vpop.permute.xlu0 %2043
    %2045 = vrot.lane.b32.xlu0 %v2036, 127
    %v2046 = vpop.permute.xlu0 %2045
    %2047 = vrot.lane.b32.xlu0 %v2037, 127
    %v2048 = vpop.permute.xlu0 %2047
    %2049 = vrot.lane.b32.xlu0 %v2038, 127
    %v2050 = vpop.permute.xlu0 %2049
    %v2055 = vadd.f32 %v2029, %v2044
    %v2056 = vadd.f32 %v2030, %v2046
    %v2057 = vadd.f32 %v2031, %v2048
    %v2058 = vadd.f32 %v2032, %v2050
    %s2059 = sld [smem:[#allocation6 + $0x18e]]
    %v2060 = vstv %s2059
    %v2061 = vmul.f32 %v70, %v2060
    %v2062 = vmul.f32 %v71, %v2060
    %v2063 = vmul.f32 %v72, %v2060
    %v2064 = vmul.f32 %v73, %v2060
    %2069 = vrot.lane.b32.xlu0 %v2061, 126
    %v2070 = vpop.permute.xlu0 %2069
    %2071 = vrot.lane.b32.xlu0 %v2062, 126
    %v2072 = vpop.permute.xlu0 %2071
    %2073 = vrot.lane.b32.xlu0 %v2063, 126
    %v2074 = vpop.permute.xlu0 %2073
    %2075 = vrot.lane.b32.xlu0 %v2064, 126
    %v2076 = vpop.permute.xlu0 %2075
    %v2081 = vadd.f32 %v2055, %v2070
    %v2082 = vadd.f32 %v2056, %v2072
    %v2083 = vadd.f32 %v2057, %v2074
    %v2084 = vadd.f32 %v2058, %v2076
    %s2085 = sld [smem:[#allocation6 + $0x18f]]
    %v2086 = vstv %s2085
    %v2087 = vmul.f32 %v74, %v2086
    %v2088 = vmul.f32 %v75, %v2086
    %v2089 = vmul.f32 %v76, %v2086
    %v2090 = vmul.f32 %v77, %v2086
    %v2091 = vadd.f32 %v2081, %v2087
    %v2092 = vadd.f32 %v2082, %v2088
    %v2093 = vadd.f32 %v2083, %v2089
    %v2094 = vadd.f32 %v2084, %v2090
    %s2095 = sld [smem:[#allocation6 + $0x190]]
    %v2096 = vstv %s2095
    %v2097 = vmul.f32 %v74, %v2096
    %v2098 = vmul.f32 %v75, %v2096
    %v2099 = vmul.f32 %v76, %v2096
    %v2100 = vmul.f32 %v77, %v2096
    %2105 = vrot.lane.b32.xlu0 %v2097, 127
    %v2106 = vpop.permute.xlu0 %2105
    %2107 = vrot.lane.b32.xlu0 %v2098, 127
    %v2108 = vpop.permute.xlu0 %2107
    %2109 = vrot.lane.b32.xlu0 %v2099, 127
    %v2110 = vpop.permute.xlu0 %2109
    %2111 = vrot.lane.b32.xlu0 %v2100, 127
    %v2112 = vpop.permute.xlu0 %2111
    %v2117 = vadd.f32 %v2091, %v2106
    %v2118 = vadd.f32 %v2092, %v2108
    %v2119 = vadd.f32 %v2093, %v2110
    %v2120 = vadd.f32 %v2094, %v2112
    %s2121 = sld [smem:[#allocation6 + $0x191]]
    %v2122 = vstv %s2121
    %v2123 = vmul.f32 %v74, %v2122
    %v2124 = vmul.f32 %v75, %v2122
    %v2125 = vmul.f32 %v76, %v2122
    %v2126 = vmul.f32 %v77, %v2122
    %2131 = vrot.lane.b32.xlu0 %v2123, 126
    %v2132 = vpop.permute.xlu0 %2131
    %2133 = vrot.lane.b32.xlu0 %v2124, 126
    %v2134 = vpop.permute.xlu0 %2133
    %2135 = vrot.lane.b32.xlu0 %v2125, 126
    %v2136 = vpop.permute.xlu0 %2135
    %2137 = vrot.lane.b32.xlu0 %v2126, 126
    %v2138 = vpop.permute.xlu0 %2137
    %v2143 = vadd.f32 %v2117, %v2132
    %v2144 = vadd.f32 %v2118, %v2134
    %v2145 = vadd.f32 %v2119, %v2136
    %v2146 = vadd.f32 %v2120, %v2138
    %s2147 = sld [smem:[#allocation6 + $0x192]]
    %v2148 = vstv %s2147
    %v2149 = vmul.f32 %v79, %v2148
    %v2150 = vmul.f32 %v80, %v2148
    %v2151 = vmul.f32 %v81, %v2148
    %v2152 = vmul.f32 %v82, %v2148
    %v2153 = vadd.f32 %v2143, %v2149
    %v2154 = vadd.f32 %v2144, %v2150
    %v2155 = vadd.f32 %v2145, %v2151
    %v2156 = vadd.f32 %v2146, %v2152
    %s2157 = sld [smem:[#allocation6 + $0x193]]
    %v2158 = vstv %s2157
    %v2159 = vmul.f32 %v79, %v2158
    %v2160 = vmul.f32 %v80, %v2158
    %v2161 = vmul.f32 %v81, %v2158
    %v2162 = vmul.f32 %v82, %v2158
    %2167 = vrot.lane.b32.xlu0 %v2159, 127
    %v2168 = vpop.permute.xlu0 %2167
    %2169 = vrot.lane.b32.xlu0 %v2160, 127
    %v2170 = vpop.permute.xlu0 %2169
    %2171 = vrot.lane.b32.xlu0 %v2161, 127
    %v2172 = vpop.permute.xlu0 %2171
    %2173 = vrot.lane.b32.xlu0 %v2162, 127
    %v2174 = vpop.permute.xlu0 %2173
    %v2179 = vadd.f32 %v2153, %v2168
    %v2180 = vadd.f32 %v2154, %v2170
    %v2181 = vadd.f32 %v2155, %v2172
    %v2182 = vadd.f32 %v2156, %v2174
    %s2183 = sld [smem:[#allocation6 + $0x194]]
    %v2184 = vstv %s2183
    %v2185 = vmul.f32 %v79, %v2184
    %v2186 = vmul.f32 %v80, %v2184
    %v2187 = vmul.f32 %v81, %v2184
    %v2188 = vmul.f32 %v82, %v2184
    %2193 = vrot.lane.b32.xlu0 %v2185, 126
    %v2194 = vpop.permute.xlu0 %2193
    %2195 = vrot.lane.b32.xlu0 %v2186, 126
    %v2196 = vpop.permute.xlu0 %2195
    %2197 = vrot.lane.b32.xlu0 %v2187, 126
    %v2198 = vpop.permute.xlu0 %2197
    %2199 = vrot.lane.b32.xlu0 %v2188, 126
    %v2200 = vpop.permute.xlu0 %2199
    %v2205 = vadd.f32 %v2179, %v2194
    %v2206 = vadd.f32 %v2180, %v2196
    %v2207 = vadd.f32 %v2181, %v2198
    %v2208 = vadd.f32 %v2182, %v2200
    %s2209 = sld [smem:[#allocation6 + $0x195]]
    %v2210 = vstv %s2209
    %v2211 = vmul.f32 %v83, %v2210
    %v2212 = vmul.f32 %v84, %v2210
    %v2213 = vmul.f32 %v85, %v2210
    %v2214 = vmul.f32 %v86, %v2210
    %v2215 = vadd.f32 %v2205, %v2211
    %v2216 = vadd.f32 %v2206, %v2212
    %v2217 = vadd.f32 %v2207, %v2213
    %v2218 = vadd.f32 %v2208, %v2214
    %s2219 = sld [smem:[#allocation6 + $0x196]]
    %v2220 = vstv %s2219
    %v2221 = vmul.f32 %v83, %v2220
    %v2222 = vmul.f32 %v84, %v2220
    %v2223 = vmul.f32 %v85, %v2220
    %v2224 = vmul.f32 %v86, %v2220
    %2229 = vrot.lane.b32.xlu0 %v2221, 127
    %v2230 = vpop.permute.xlu0 %2229
    %2231 = vrot.lane.b32.xlu0 %v2222, 127
    %v2232 = vpop.permute.xlu0 %2231
    %2233 = vrot.lane.b32.xlu0 %v2223, 127
    %v2234 = vpop.permute.xlu0 %2233
    %2235 = vrot.lane.b32.xlu0 %v2224, 127
    %v2236 = vpop.permute.xlu0 %2235
    %v2241 = vadd.f32 %v2215, %v2230
    %v2242 = vadd.f32 %v2216, %v2232
    %v2243 = vadd.f32 %v2217, %v2234
    %v2244 = vadd.f32 %v2218, %v2236
    %s2245 = sld [smem:[#allocation6 + $0x197]]
    %v2246 = vstv %s2245
    %v2247 = vmul.f32 %v83, %v2246
    %v2248 = vmul.f32 %v84, %v2246
    %v2249 = vmul.f32 %v85, %v2246
    %v2250 = vmul.f32 %v86, %v2246
    %2255 = vrot.lane.b32.xlu0 %v2247, 126
    %v2256 = vpop.permute.xlu0 %2255
    %2257 = vrot.lane.b32.xlu0 %v2248, 126
    %v2258 = vpop.permute.xlu0 %2257
    %2259 = vrot.lane.b32.xlu0 %v2249, 126
    %v2260 = vpop.permute.xlu0 %2259
    %2261 = vrot.lane.b32.xlu0 %v2250, 126
    %v2262 = vpop.permute.xlu0 %2261
    %v2267 = vadd.f32 %v2241, %v2256
    %v2268 = vadd.f32 %v2242, %v2258
    %v2269 = vadd.f32 %v2243, %v2260
    %v2270 = vadd.f32 %v2244, %v2262
    %s2271 = sld [smem:[#allocation6 + $0x198]]
    %v2272 = vstv %s2271
    %v2273 = vmul.f32 %v87, %v2272
    %v2274 = vmul.f32 %v88, %v2272
    %v2275 = vmul.f32 %v89, %v2272
    %v2276 = vmul.f32 %v90, %v2272
    %v2277 = vadd.f32 %v2267, %v2273
    %v2278 = vadd.f32 %v2268, %v2274
    %v2279 = vadd.f32 %v2269, %v2275
    %v2280 = vadd.f32 %v2270, %v2276
    %s2281 = sld [smem:[#allocation6 + $0x199]]
    %v2282 = vstv %s2281
    %v2283 = vmul.f32 %v87, %v2282
    %v2284 = vmul.f32 %v88, %v2282
    %v2285 = vmul.f32 %v89, %v2282
    %v2286 = vmul.f32 %v90, %v2282
    %2291 = vrot.lane.b32.xlu0 %v2283, 127
    %v2292 = vpop.permute.xlu0 %2291
    %2293 = vrot.lane.b32.xlu0 %v2284, 127
    %v2294 = vpop.permute.xlu0 %2293
    %2295 = vrot.lane.b32.xlu0 %v2285, 127
    %v2296 = vpop.permute.xlu0 %2295
    %2297 = vrot.lane.b32.xlu0 %v2286, 127
    %v2298 = vpop.permute.xlu0 %2297
    %v2303 = vadd.f32 %v2277, %v2292
    %v2304 = vadd.f32 %v2278, %v2294
    %v2305 = vadd.f32 %v2279, %v2296
    %v2306 = vadd.f32 %v2280, %v2298
    %s2307 = sld [smem:[#allocation6 + $0x19a]]
    %v2308 = vstv %s2307
    %v2309 = vmul.f32 %v87, %v2308
    %v2310 = vmul.f32 %v88, %v2308
    %v2311 = vmul.f32 %v89, %v2308
    %v2312 = vmul.f32 %v90, %v2308
    %2317 = vrot.lane.b32.xlu0 %v2309, 126
    %v2318 = vpop.permute.xlu0 %2317
    %2319 = vrot.lane.b32.xlu0 %v2310, 126
    %v2320 = vpop.permute.xlu0 %2319
    %2321 = vrot.lane.b32.xlu0 %v2311, 126
    %v2322 = vpop.permute.xlu0 %2321
    %2323 = vrot.lane.b32.xlu0 %v2312, 126
    %v2324 = vpop.permute.xlu0 %2323
    %v2329 = vadd.f32 %v2303, %v2318
    %v2330 = vadd.f32 %v2304, %v2320
    %v2331 = vadd.f32 %v2305, %v2322
    %v2332 = vadd.f32 %v2306, %v2324
    %s2333 = sld [smem:[#allocation7 + $0x3]]
    %v2334 = vstv %s2333
    %v2335 = vadd.f32 %v2329, %v2334
    %v2336 = vadd.f32 %v2330, %v2334
    %v2337 = vadd.f32 %v2331, %v2334
    %v2338 = vadd.f32 %v2332, %v2334
    %v2339 = vmin.f32 %v1775, %v2335
    %v2340 = vmin.f32 %v1776, %v2336
    %v2341 = vmin.f32 %v1777, %v2337
    %v2342 = vmin.f32 %v1778, %v2338
    %s2343 = sld [smem:[#allocation6 + $0x200]]
    %v2344 = vstv %s2343
    %v2345 = vmul.f32 %v53, %v2344
    %v2346 = vmul.f32 %v54, %v2344
    %v2347 = vmul.f32 %v55, %v2344
    %v2348 = vmul.f32 %v56, %v2344
    %s2349 = sld [smem:[#allocation6 + $0x201]]
    %v2350 = vstv %s2349
    %v2351 = vmul.f32 %v53, %v2350
    %v2352 = vmul.f32 %v54, %v2350
    %v2353 = vmul.f32 %v55, %v2350
    %v2354 = vmul.f32 %v56, %v2350
    %2359 = vrot.lane.b32.xlu0 %v2351, 127
    %v2360 = vpop.permute.xlu0 %2359
    %2361 = vrot.lane.b32.xlu0 %v2352, 127
    %v2362 = vpop.permute.xlu0 %2361
    %2363 = vrot.lane.b32.xlu0 %v2353, 127
    %v2364 = vpop.permute.xlu0 %2363
    %2365 = vrot.lane.b32.xlu0 %v2354, 127
    %v2366 = vpop.permute.xlu0 %2365
    %v2371 = vadd.f32 %v2345, %v2360
    %v2372 = vadd.f32 %v2346, %v2362
    %v2373 = vadd.f32 %v2347, %v2364
    %v2374 = vadd.f32 %v2348, %v2366
    %s2375 = sld [smem:[#allocation6 + $0x202]]
    %v2376 = vstv %s2375
    %v2377 = vmul.f32 %v53, %v2376
    %v2378 = vmul.f32 %v54, %v2376
    %v2379 = vmul.f32 %v55, %v2376
    %v2380 = vmul.f32 %v56, %v2376
    %2385 = vrot.lane.b32.xlu0 %v2377, 126
    %v2386 = vpop.permute.xlu0 %2385
    %2387 = vrot.lane.b32.xlu0 %v2378, 126
    %v2388 = vpop.permute.xlu0 %2387
    %2389 = vrot.lane.b32.xlu0 %v2379, 126
    %v2390 = vpop.permute.xlu0 %2389
    %2391 = vrot.lane.b32.xlu0 %v2380, 126
    %v2392 = vpop.permute.xlu0 %2391
    %v2397 = vadd.f32 %v2371, %v2386
    %v2398 = vadd.f32 %v2372, %v2388
    %v2399 = vadd.f32 %v2373, %v2390
    %v2400 = vadd.f32 %v2374, %v2392
    %s2401 = sld [smem:[#allocation6 + $0x203]]
    %v2402 = vstv %s2401
    %v2403 = vmul.f32 %v57, %v2402
    %v2404 = vmul.f32 %v58, %v2402
    %v2405 = vmul.f32 %v59, %v2402
    %v2406 = vmul.f32 %v60, %v2402
    %v2407 = vadd.f32 %v2397, %v2403
    %v2408 = vadd.f32 %v2398, %v2404
    %v2409 = vadd.f32 %v2399, %v2405
    %v2410 = vadd.f32 %v2400, %v2406
    %s2411 = sld [smem:[#allocation6 + $0x204]]
    %v2412 = vstv %s2411
    %v2413 = vmul.f32 %v57, %v2412
    %v2414 = vmul.f32 %v58, %v2412
    %v2415 = vmul.f32 %v59, %v2412
    %v2416 = vmul.f32 %v60, %v2412
    %2421 = vrot.lane.b32.xlu0 %v2413, 127
    %v2422 = vpop.permute.xlu0 %2421
    %2423 = vrot.lane.b32.xlu0 %v2414, 127
    %v2424 = vpop.permute.xlu0 %2423
    %2425 = vrot.lane.b32.xlu0 %v2415, 127
    %v2426 = vpop.permute.xlu0 %2425
    %2427 = vrot.lane.b32.xlu0 %v2416, 127
    %v2428 = vpop.permute.xlu0 %2427
    %v2433 = vadd.f32 %v2407, %v2422
    %v2434 = vadd.f32 %v2408, %v2424
    %v2435 = vadd.f32 %v2409, %v2426
    %v2436 = vadd.f32 %v2410, %v2428
    %s2437 = sld [smem:[#allocation6 + $0x205]]
    %v2438 = vstv %s2437
    %v2439 = vmul.f32 %v57, %v2438
    %v2440 = vmul.f32 %v58, %v2438
    %v2441 = vmul.f32 %v59, %v2438
    %v2442 = vmul.f32 %v60, %v2438
    %2447 = vrot.lane.b32.xlu0 %v2439, 126
    %v2448 = vpop.permute.xlu0 %2447
    %2449 = vrot.lane.b32.xlu0 %v2440, 126
    %v2450 = vpop.permute.xlu0 %2449
    %2451 = vrot.lane.b32.xlu0 %v2441, 126
    %v2452 = vpop.permute.xlu0 %2451
    %2453 = vrot.lane.b32.xlu0 %v2442, 126
    %v2454 = vpop.permute.xlu0 %2453
    %v2459 = vadd.f32 %v2433, %v2448
    %v2460 = vadd.f32 %v2434, %v2450
    %v2461 = vadd.f32 %v2435, %v2452
    %v2462 = vadd.f32 %v2436, %v2454
    %s2463 = sld [smem:[#allocation6 + $0x206]]
    %v2464 = vstv %s2463
    %v2465 = vmul.f32 %v61, %v2464
    %v2466 = vmul.f32 %v62, %v2464
    %v2467 = vmul.f32 %v63, %v2464
    %v2468 = vmul.f32 %v64, %v2464
    %v2469 = vadd.f32 %v2459, %v2465
    %v2470 = vadd.f32 %v2460, %v2466
    %v2471 = vadd.f32 %v2461, %v2467
    %v2472 = vadd.f32 %v2462, %v2468
    %s2473 = sld [smem:[#allocation6 + $0x207]]
    %v2474 = vstv %s2473
    %v2475 = vmul.f32 %v61, %v2474
    %v2476 = vmul.f32 %v62, %v2474
    %v2477 = vmul.f32 %v63, %v2474
    %v2478 = vmul.f32 %v64, %v2474
    %2483 = vrot.lane.b32.xlu0 %v2475, 127
    %v2484 = vpop.permute.xlu0 %2483
    %2485 = vrot.lane.b32.xlu0 %v2476, 127
    %v2486 = vpop.permute.xlu0 %2485
    %2487 = vrot.lane.b32.xlu0 %v2477, 127
    %v2488 = vpop.permute.xlu0 %2487
    %2489 = vrot.lane.b32.xlu0 %v2478, 127
    %v2490 = vpop.permute.xlu0 %2489
    %v2495 = vadd.f32 %v2469, %v2484
    %v2496 = vadd.f32 %v2470, %v2486
    %v2497 = vadd.f32 %v2471, %v2488
    %v2498 = vadd.f32 %v2472, %v2490
    %s2499 = sld [smem:[#allocation6 + $0x208]]
    %v2500 = vstv %s2499
    %v2501 = vmul.f32 %v61, %v2500
    %v2502 = vmul.f32 %v62, %v2500
    %v2503 = vmul.f32 %v63, %v2500
    %v2504 = vmul.f32 %v64, %v2500
    %2509 = vrot.lane.b32.xlu0 %v2501, 126
    %v2510 = vpop.permute.xlu0 %2509
    %2511 = vrot.lane.b32.xlu0 %v2502, 126
    %v2512 = vpop.permute.xlu0 %2511
    %2513 = vrot.lane.b32.xlu0 %v2503, 126
    %v2514 = vpop.permute.xlu0 %2513
    %2515 = vrot.lane.b32.xlu0 %v2504, 126
    %v2516 = vpop.permute.xlu0 %2515
    %v2521 = vadd.f32 %v2495, %v2510
    %v2522 = vadd.f32 %v2496, %v2512
    %v2523 = vadd.f32 %v2497, %v2514
    %v2524 = vadd.f32 %v2498, %v2516
    %s2525 = sld [smem:[#allocation6 + $0x209]]
    %v2526 = vstv %s2525
    %v2527 = vmul.f32 %v66, %v2526
    %v2528 = vmul.f32 %v67, %v2526
    %v2529 = vmul.f32 %v68, %v2526
    %v2530 = vmul.f32 %v69, %v2526
    %v2531 = vadd.f32 %v2521, %v2527
    %v2532 = vadd.f32 %v2522, %v2528
    %v2533 = vadd.f32 %v2523, %v2529
    %v2534 = vadd.f32 %v2524, %v2530
    %s2535 = sld [smem:[#allocation6 + $0x20a]]
    %v2536 = vstv %s2535
    %v2537 = vmul.f32 %v66, %v2536
    %v2538 = vmul.f32 %v67, %v2536
    %v2539 = vmul.f32 %v68, %v2536
    %v2540 = vmul.f32 %v69, %v2536
    %2545 = vrot.lane.b32.xlu0 %v2537, 127
    %v2546 = vpop.permute.xlu0 %2545
    %2547 = vrot.lane.b32.xlu0 %v2538, 127
    %v2548 = vpop.permute.xlu0 %2547
    %2549 = vrot.lane.b32.xlu0 %v2539, 127
    %v2550 = vpop.permute.xlu0 %2549
    %2551 = vrot.lane.b32.xlu0 %v2540, 127
    %v2552 = vpop.permute.xlu0 %2551
    %v2557 = vadd.f32 %v2531, %v2546
    %v2558 = vadd.f32 %v2532, %v2548
    %v2559 = vadd.f32 %v2533, %v2550
    %v2560 = vadd.f32 %v2534, %v2552
    %s2561 = sld [smem:[#allocation6 + $0x20b]]
    %v2562 = vstv %s2561
    %v2563 = vmul.f32 %v66, %v2562
    %v2564 = vmul.f32 %v67, %v2562
    %v2565 = vmul.f32 %v68, %v2562
    %v2566 = vmul.f32 %v69, %v2562
    %2571 = vrot.lane.b32.xlu0 %v2563, 126
    %v2572 = vpop.permute.xlu0 %2571
    %2573 = vrot.lane.b32.xlu0 %v2564, 126
    %v2574 = vpop.permute.xlu0 %2573
    %2575 = vrot.lane.b32.xlu0 %v2565, 126
    %v2576 = vpop.permute.xlu0 %2575
    %2577 = vrot.lane.b32.xlu0 %v2566, 126
    %v2578 = vpop.permute.xlu0 %2577
    %v2583 = vadd.f32 %v2557, %v2572
    %v2584 = vadd.f32 %v2558, %v2574
    %v2585 = vadd.f32 %v2559, %v2576
    %v2586 = vadd.f32 %v2560, %v2578
    %s2587 = sld [smem:[#allocation6 + $0x20c]]
    %v2588 = vstv %s2587
    %v2589 = vmul.f32 %v70, %v2588
    %v2590 = vmul.f32 %v71, %v2588
    %v2591 = vmul.f32 %v72, %v2588
    %v2592 = vmul.f32 %v73, %v2588
    %v2593 = vadd.f32 %v2583, %v2589
    %v2594 = vadd.f32 %v2584, %v2590
    %v2595 = vadd.f32 %v2585, %v2591
    %v2596 = vadd.f32 %v2586, %v2592
    %s2597 = sld [smem:[#allocation6 + $0x20d]]
    %v2598 = vstv %s2597
    %v2599 = vmul.f32 %v70, %v2598
    %v2600 = vmul.f32 %v71, %v2598
    %v2601 = vmul.f32 %v72, %v2598
    %v2602 = vmul.f32 %v73, %v2598
    %2607 = vrot.lane.b32.xlu0 %v2599, 127
    %v2608 = vpop.permute.xlu0 %2607
    %2609 = vrot.lane.b32.xlu0 %v2600, 127
    %v2610 = vpop.permute.xlu0 %2609
    %2611 = vrot.lane.b32.xlu0 %v2601, 127
    %v2612 = vpop.permute.xlu0 %2611
    %2613 = vrot.lane.b32.xlu0 %v2602, 127
    %v2614 = vpop.permute.xlu0 %2613
    %v2619 = vadd.f32 %v2593, %v2608
    %v2620 = vadd.f32 %v2594, %v2610
    %v2621 = vadd.f32 %v2595, %v2612
    %v2622 = vadd.f32 %v2596, %v2614
    %s2623 = sld [smem:[#allocation6 + $0x20e]]
    %v2624 = vstv %s2623
    %v2625 = vmul.f32 %v70, %v2624
    %v2626 = vmul.f32 %v71, %v2624
    %v2627 = vmul.f32 %v72, %v2624
    %v2628 = vmul.f32 %v73, %v2624
    %2633 = vrot.lane.b32.xlu0 %v2625, 126
    %v2634 = vpop.permute.xlu0 %2633
    %2635 = vrot.lane.b32.xlu0 %v2626, 126
    %v2636 = vpop.permute.xlu0 %2635
    %2637 = vrot.lane.b32.xlu0 %v2627, 126
    %v2638 = vpop.permute.xlu0 %2637
    %2639 = vrot.lane.b32.xlu0 %v2628, 126
    %v2640 = vpop.permute.xlu0 %2639
    %v2645 = vadd.f32 %v2619, %v2634
    %v2646 = vadd.f32 %v2620, %v2636
    %v2647 = vadd.f32 %v2621, %v2638
    %v2648 = vadd.f32 %v2622, %v2640
    %s2649 = sld [smem:[#allocation6 + $0x20f]]
    %v2650 = vstv %s2649
    %v2651 = vmul.f32 %v74, %v2650
    %v2652 = vmul.f32 %v75, %v2650
    %v2653 = vmul.f32 %v76, %v2650
    %v2654 = vmul.f32 %v77, %v2650
    %v2655 = vadd.f32 %v2645, %v2651
    %v2656 = vadd.f32 %v2646, %v2652
    %v2657 = vadd.f32 %v2647, %v2653
    %v2658 = vadd.f32 %v2648, %v2654
    %s2659 = sld [smem:[#allocation6 + $0x210]]
    %v2660 = vstv %s2659
    %v2661 = vmul.f32 %v74, %v2660
    %v2662 = vmul.f32 %v75, %v2660
    %v2663 = vmul.f32 %v76, %v2660
    %v2664 = vmul.f32 %v77, %v2660
    %2669 = vrot.lane.b32.xlu0 %v2661, 127
    %v2670 = vpop.permute.xlu0 %2669
    %2671 = vrot.lane.b32.xlu0 %v2662, 127
    %v2672 = vpop.permute.xlu0 %2671
    %2673 = vrot.lane.b32.xlu0 %v2663, 127
    %v2674 = vpop.permute.xlu0 %2673
    %2675 = vrot.lane.b32.xlu0 %v2664, 127
    %v2676 = vpop.permute.xlu0 %2675
    %v2681 = vadd.f32 %v2655, %v2670
    %v2682 = vadd.f32 %v2656, %v2672
    %v2683 = vadd.f32 %v2657, %v2674
    %v2684 = vadd.f32 %v2658, %v2676
    %s2685 = sld [smem:[#allocation6 + $0x211]]
    %v2686 = vstv %s2685
    %v2687 = vmul.f32 %v74, %v2686
    %v2688 = vmul.f32 %v75, %v2686
    %v2689 = vmul.f32 %v76, %v2686
    %v2690 = vmul.f32 %v77, %v2686
    %2695 = vrot.lane.b32.xlu0 %v2687, 126
    %v2696 = vpop.permute.xlu0 %2695
    %2697 = vrot.lane.b32.xlu0 %v2688, 126
    %v2698 = vpop.permute.xlu0 %2697
    %2699 = vrot.lane.b32.xlu0 %v2689, 126
    %v2700 = vpop.permute.xlu0 %2699
    %2701 = vrot.lane.b32.xlu0 %v2690, 126
    %v2702 = vpop.permute.xlu0 %2701
    %v2707 = vadd.f32 %v2681, %v2696
    %v2708 = vadd.f32 %v2682, %v2698
    %v2709 = vadd.f32 %v2683, %v2700
    %v2710 = vadd.f32 %v2684, %v2702
    %s2711 = sld [smem:[#allocation6 + $0x212]]
    %v2712 = vstv %s2711
    %v2713 = vmul.f32 %v79, %v2712
    %v2714 = vmul.f32 %v80, %v2712
    %v2715 = vmul.f32 %v81, %v2712
    %v2716 = vmul.f32 %v82, %v2712
    %v2717 = vadd.f32 %v2707, %v2713
    %v2718 = vadd.f32 %v2708, %v2714
    %v2719 = vadd.f32 %v2709, %v2715
    %v2720 = vadd.f32 %v2710, %v2716
    %s2721 = sld [smem:[#allocation6 + $0x213]]
    %v2722 = vstv %s2721
    %v2723 = vmul.f32 %v79, %v2722
    %v2724 = vmul.f32 %v80, %v2722
    %v2725 = vmul.f32 %v81, %v2722
    %v2726 = vmul.f32 %v82, %v2722
    %2731 = vrot.lane.b32.xlu0 %v2723, 127
    %v2732 = vpop.permute.xlu0 %2731
    %2733 = vrot.lane.b32.xlu0 %v2724, 127
    %v2734 = vpop.permute.xlu0 %2733
    %2735 = vrot.lane.b32.xlu0 %v2725, 127
    %v2736 = vpop.permute.xlu0 %2735
    %2737 = vrot.lane.b32.xlu0 %v2726, 127
    %v2738 = vpop.permute.xlu0 %2737
    %v2743 = vadd.f32 %v2717, %v2732
    %v2744 = vadd.f32 %v2718, %v2734
    %v2745 = vadd.f32 %v2719, %v2736
    %v2746 = vadd.f32 %v2720, %v2738
    %s2747 = sld [smem:[#allocation6 + $0x214]]
    %v2748 = vstv %s2747
    %v2749 = vmul.f32 %v79, %v2748
    %v2750 = vmul.f32 %v80, %v2748
    %v2751 = vmul.f32 %v81, %v2748
    %v2752 = vmul.f32 %v82, %v2748
    %2757 = vrot.lane.b32.xlu0 %v2749, 126
    %v2758 = vpop.permute.xlu0 %2757
    %2759 = vrot.lane.b32.xlu0 %v2750, 126
    %v2760 = vpop.permute.xlu0 %2759
    %2761 = vrot.lane.b32.xlu0 %v2751, 126
    %v2762 = vpop.permute.xlu0 %2761
    %2763 = vrot.lane.b32.xlu0 %v2752, 126
    %v2764 = vpop.permute.xlu0 %2763
    %v2769 = vadd.f32 %v2743, %v2758
    %v2770 = vadd.f32 %v2744, %v2760
    %v2771 = vadd.f32 %v2745, %v2762
    %v2772 = vadd.f32 %v2746, %v2764
    %s2773 = sld [smem:[#allocation6 + $0x215]]
    %v2774 = vstv %s2773
    %v2775 = vmul.f32 %v83, %v2774
    %v2776 = vmul.f32 %v84, %v2774
    %v2777 = vmul.f32 %v85, %v2774
    %v2778 = vmul.f32 %v86, %v2774
    %v2779 = vadd.f32 %v2769, %v2775
    %v2780 = vadd.f32 %v2770, %v2776
    %v2781 = vadd.f32 %v2771, %v2777
    %v2782 = vadd.f32 %v2772, %v2778
    %s2783 = sld [smem:[#allocation6 + $0x216]]
    %v2784 = vstv %s2783
    %v2785 = vmul.f32 %v83, %v2784
    %v2786 = vmul.f32 %v84, %v2784
    %v2787 = vmul.f32 %v85, %v2784
    %v2788 = vmul.f32 %v86, %v2784
    %2793 = vrot.lane.b32.xlu0 %v2785, 127
    %v2794 = vpop.permute.xlu0 %2793
    %2795 = vrot.lane.b32.xlu0 %v2786, 127
    %v2796 = vpop.permute.xlu0 %2795
    %2797 = vrot.lane.b32.xlu0 %v2787, 127
    %v2798 = vpop.permute.xlu0 %2797
    %2799 = vrot.lane.b32.xlu0 %v2788, 127
    %v2800 = vpop.permute.xlu0 %2799
    %v2805 = vadd.f32 %v2779, %v2794
    %v2806 = vadd.f32 %v2780, %v2796
    %v2807 = vadd.f32 %v2781, %v2798
    %v2808 = vadd.f32 %v2782, %v2800
    %s2809 = sld [smem:[#allocation6 + $0x217]]
    %v2810 = vstv %s2809
    %v2811 = vmul.f32 %v83, %v2810
    %v2812 = vmul.f32 %v84, %v2810
    %v2813 = vmul.f32 %v85, %v2810
    %v2814 = vmul.f32 %v86, %v2810
    %2819 = vrot.lane.b32.xlu0 %v2811, 126
    %v2820 = vpop.permute.xlu0 %2819
    %2821 = vrot.lane.b32.xlu0 %v2812, 126
    %v2822 = vpop.permute.xlu0 %2821
    %2823 = vrot.lane.b32.xlu0 %v2813, 126
    %v2824 = vpop.permute.xlu0 %2823
    %2825 = vrot.lane.b32.xlu0 %v2814, 126
    %v2826 = vpop.permute.xlu0 %2825
    %v2831 = vadd.f32 %v2805, %v2820
    %v2832 = vadd.f32 %v2806, %v2822
    %v2833 = vadd.f32 %v2807, %v2824
    %v2834 = vadd.f32 %v2808, %v2826
    %s2835 = sld [smem:[#allocation6 + $0x218]]
    %v2836 = vstv %s2835
    %v2837 = vmul.f32 %v87, %v2836
    %v2838 = vmul.f32 %v88, %v2836
    %v2839 = vmul.f32 %v89, %v2836
    %v2840 = vmul.f32 %v90, %v2836
    %v2841 = vadd.f32 %v2831, %v2837
    %v2842 = vadd.f32 %v2832, %v2838
    %v2843 = vadd.f32 %v2833, %v2839
    %v2844 = vadd.f32 %v2834, %v2840
    %s2845 = sld [smem:[#allocation6 + $0x219]]
    %v2846 = vstv %s2845
    %v2847 = vmul.f32 %v87, %v2846
    %v2848 = vmul.f32 %v88, %v2846
    %v2849 = vmul.f32 %v89, %v2846
    %v2850 = vmul.f32 %v90, %v2846
    %2855 = vrot.lane.b32.xlu0 %v2847, 127
    %v2856 = vpop.permute.xlu0 %2855
    %2857 = vrot.lane.b32.xlu0 %v2848, 127
    %v2858 = vpop.permute.xlu0 %2857
    %2859 = vrot.lane.b32.xlu0 %v2849, 127
    %v2860 = vpop.permute.xlu0 %2859
    %2861 = vrot.lane.b32.xlu0 %v2850, 127
    %v2862 = vpop.permute.xlu0 %2861
    %v2867 = vadd.f32 %v2841, %v2856
    %v2868 = vadd.f32 %v2842, %v2858
    %v2869 = vadd.f32 %v2843, %v2860
    %v2870 = vadd.f32 %v2844, %v2862
    %s2871 = sld [smem:[#allocation6 + $0x21a]]
    %v2872 = vstv %s2871
    %v2873 = vmul.f32 %v87, %v2872
    %v2874 = vmul.f32 %v88, %v2872
    %v2875 = vmul.f32 %v89, %v2872
    %v2876 = vmul.f32 %v90, %v2872
    %2881 = vrot.lane.b32.xlu0 %v2873, 126
    %v2882 = vpop.permute.xlu0 %2881
    %2883 = vrot.lane.b32.xlu0 %v2874, 126
    %v2884 = vpop.permute.xlu0 %2883
    %2885 = vrot.lane.b32.xlu0 %v2875, 126
    %v2886 = vpop.permute.xlu0 %2885
    %2887 = vrot.lane.b32.xlu0 %v2876, 126
    %v2888 = vpop.permute.xlu0 %2887
    %v2893 = vadd.f32 %v2867, %v2882
    %v2894 = vadd.f32 %v2868, %v2884
    %v2895 = vadd.f32 %v2869, %v2886
    %v2896 = vadd.f32 %v2870, %v2888
    %s2897 = sld [smem:[#allocation7 + $0x4]]
    %v2898 = vstv %s2897
    %v2899 = vadd.f32 %v2893, %v2898
    %v2900 = vadd.f32 %v2894, %v2898
    %v2901 = vadd.f32 %v2895, %v2898
    %v2902 = vadd.f32 %v2896, %v2898
    %v2903 = vmin.f32 %v2339, %v2899
    %v2904 = vmin.f32 %v2340, %v2900
    %v2905 = vmin.f32 %v2341, %v2901
    %v2906 = vmin.f32 %v2342, %v2902
    %s2907 = sld [smem:[#allocation6 + $0x280]]
    %v2908 = vstv %s2907
    %v2909 = vmul.f32 %v53, %v2908
    %v2910 = vmul.f32 %v54, %v2908
    %v2911 = vmul.f32 %v55, %v2908
    %v2912 = vmul.f32 %v56, %v2908
    %s2913 = sld [smem:[#allocation6 + $0x281]]
    %v2914 = vstv %s2913
    %v2915 = vmul.f32 %v53, %v2914
    %v2916 = vmul.f32 %v54, %v2914
    %v2917 = vmul.f32 %v55, %v2914
    %v2918 = vmul.f32 %v56, %v2914
    %2923 = vrot.lane.b32.xlu0 %v2915, 127
    %v2924 = vpop.permute.xlu0 %2923
    %2925 = vrot.lane.b32.xlu0 %v2916, 127
    %v2926 = vpop.permute.xlu0 %2925
    %2927 = vrot.lane.b32.xlu0 %v2917, 127
    %v2928 = vpop.permute.xlu0 %2927
    %2929 = vrot.lane.b32.xlu0 %v2918, 127
    %v2930 = vpop.permute.xlu0 %2929
    %v2935 = vadd.f32 %v2909, %v2924
    %v2936 = vadd.f32 %v2910, %v2926
    %v2937 = vadd.f32 %v2911, %v2928
    %v2938 = vadd.f32 %v2912, %v2930
    %s2939 = sld [smem:[#allocation6 + $0x282]]
    %v2940 = vstv %s2939
    %v2941 = vmul.f32 %v53, %v2940
    %v2942 = vmul.f32 %v54, %v2940
    %v2943 = vmul.f32 %v55, %v2940
    %v2944 = vmul.f32 %v56, %v2940
    %2949 = vrot.lane.b32.xlu0 %v2941, 126
    %v2950 = vpop.permute.xlu0 %2949
    %2951 = vrot.lane.b32.xlu0 %v2942, 126
    %v2952 = vpop.permute.xlu0 %2951
    %2953 = vrot.lane.b32.xlu0 %v2943, 126
    %v2954 = vpop.permute.xlu0 %2953
    %2955 = vrot.lane.b32.xlu0 %v2944, 126
    %v2956 = vpop.permute.xlu0 %2955
    %v2961 = vadd.f32 %v2935, %v2950
    %v2962 = vadd.f32 %v2936, %v2952
    %v2963 = vadd.f32 %v2937, %v2954
    %v2964 = vadd.f32 %v2938, %v2956
    %s2965 = sld [smem:[#allocation6 + $0x283]]
    %v2966 = vstv %s2965
    %v2967 = vmul.f32 %v57, %v2966
    %v2968 = vmul.f32 %v58, %v2966
    %v2969 = vmul.f32 %v59, %v2966
    %v2970 = vmul.f32 %v60, %v2966
    %v2971 = vadd.f32 %v2961, %v2967
    %v2972 = vadd.f32 %v2962, %v2968
    %v2973 = vadd.f32 %v2963, %v2969
    %v2974 = vadd.f32 %v2964, %v2970
    %s2975 = sld [smem:[#allocation6 + $0x284]]
    %v2976 = vstv %s2975
    %v2977 = vmul.f32 %v57, %v2976
    %v2978 = vmul.f32 %v58, %v2976
    %v2979 = vmul.f32 %v59, %v2976
    %v2980 = vmul.f32 %v60, %v2976
    %2985 = vrot.lane.b32.xlu0 %v2977, 127
    %v2986 = vpop.permute.xlu0 %2985
    %2987 = vrot.lane.b32.xlu0 %v2978, 127
    %v2988 = vpop.permute.xlu0 %2987
    %2989 = vrot.lane.b32.xlu0 %v2979, 127
    %v2990 = vpop.permute.xlu0 %2989
    %2991 = vrot.lane.b32.xlu0 %v2980, 127
    %v2992 = vpop.permute.xlu0 %2991
    %v2997 = vadd.f32 %v2971, %v2986
    %v2998 = vadd.f32 %v2972, %v2988
    %v2999 = vadd.f32 %v2973, %v2990
    %v3000 = vadd.f32 %v2974, %v2992
    %s3001 = sld [smem:[#allocation6 + $0x285]]
    %v3002 = vstv %s3001
    %v3003 = vmul.f32 %v57, %v3002
    %v3004 = vmul.f32 %v58, %v3002
    %v3005 = vmul.f32 %v59, %v3002
    %v3006 = vmul.f32 %v60, %v3002
    %3011 = vrot.lane.b32.xlu0 %v3003, 126
    %v3012 = vpop.permute.xlu0 %3011
    %3013 = vrot.lane.b32.xlu0 %v3004, 126
    %v3014 = vpop.permute.xlu0 %3013
    %3015 = vrot.lane.b32.xlu0 %v3005, 126
    %v3016 = vpop.permute.xlu0 %3015
    %3017 = vrot.lane.b32.xlu0 %v3006, 126
    %v3018 = vpop.permute.xlu0 %3017
    %v3023 = vadd.f32 %v2997, %v3012
    %v3024 = vadd.f32 %v2998, %v3014
    %v3025 = vadd.f32 %v2999, %v3016
    %v3026 = vadd.f32 %v3000, %v3018
    %s3027 = sld [smem:[#allocation6 + $0x286]]
    %v3028 = vstv %s3027
    %v3029 = vmul.f32 %v61, %v3028
    %v3030 = vmul.f32 %v62, %v3028
    %v3031 = vmul.f32 %v63, %v3028
    %v3032 = vmul.f32 %v64, %v3028
    %v3033 = vadd.f32 %v3023, %v3029
    %v3034 = vadd.f32 %v3024, %v3030
    %v3035 = vadd.f32 %v3025, %v3031
    %v3036 = vadd.f32 %v3026, %v3032
    %s3037 = sld [smem:[#allocation6 + $0x287]]
    %v3038 = vstv %s3037
    %v3039 = vmul.f32 %v61, %v3038
    %v3040 = vmul.f32 %v62, %v3038
    %v3041 = vmul.f32 %v63, %v3038
    %v3042 = vmul.f32 %v64, %v3038
    %3047 = vrot.lane.b32.xlu0 %v3039, 127
    %v3048 = vpop.permute.xlu0 %3047
    %3049 = vrot.lane.b32.xlu0 %v3040, 127
    %v3050 = vpop.permute.xlu0 %3049
    %3051 = vrot.lane.b32.xlu0 %v3041, 127
    %v3052 = vpop.permute.xlu0 %3051
    %3053 = vrot.lane.b32.xlu0 %v3042, 127
    %v3054 = vpop.permute.xlu0 %3053
    %v3059 = vadd.f32 %v3033, %v3048
    %v3060 = vadd.f32 %v3034, %v3050
    %v3061 = vadd.f32 %v3035, %v3052
    %v3062 = vadd.f32 %v3036, %v3054
    %s3063 = sld [smem:[#allocation6 + $0x288]]
    %v3064 = vstv %s3063
    %v3065 = vmul.f32 %v61, %v3064
    %v3066 = vmul.f32 %v62, %v3064
    %v3067 = vmul.f32 %v63, %v3064
    %v3068 = vmul.f32 %v64, %v3064
    %3073 = vrot.lane.b32.xlu0 %v3065, 126
    %v3074 = vpop.permute.xlu0 %3073
    %3075 = vrot.lane.b32.xlu0 %v3066, 126
    %v3076 = vpop.permute.xlu0 %3075
    %3077 = vrot.lane.b32.xlu0 %v3067, 126
    %v3078 = vpop.permute.xlu0 %3077
    %3079 = vrot.lane.b32.xlu0 %v3068, 126
    %v3080 = vpop.permute.xlu0 %3079
    %v3085 = vadd.f32 %v3059, %v3074
    %v3086 = vadd.f32 %v3060, %v3076
    %v3087 = vadd.f32 %v3061, %v3078
    %v3088 = vadd.f32 %v3062, %v3080
    %s3089 = sld [smem:[#allocation6 + $0x289]]
    %v3090 = vstv %s3089
    %v3091 = vmul.f32 %v66, %v3090
    %v3092 = vmul.f32 %v67, %v3090
    %v3093 = vmul.f32 %v68, %v3090
    %v3094 = vmul.f32 %v69, %v3090
    %v3095 = vadd.f32 %v3085, %v3091
    %v3096 = vadd.f32 %v3086, %v3092
    %v3097 = vadd.f32 %v3087, %v3093
    %v3098 = vadd.f32 %v3088, %v3094
    %s3099 = sld [smem:[#allocation6 + $0x28a]]
    %v3100 = vstv %s3099
    %v3101 = vmul.f32 %v66, %v3100
    %v3102 = vmul.f32 %v67, %v3100
    %v3103 = vmul.f32 %v68, %v3100
    %v3104 = vmul.f32 %v69, %v3100
    %3109 = vrot.lane.b32.xlu0 %v3101, 127
    %v3110 = vpop.permute.xlu0 %3109
    %3111 = vrot.lane.b32.xlu0 %v3102, 127
    %v3112 = vpop.permute.xlu0 %3111
    %3113 = vrot.lane.b32.xlu0 %v3103, 127
    %v3114 = vpop.permute.xlu0 %3113
    %3115 = vrot.lane.b32.xlu0 %v3104, 127
    %v3116 = vpop.permute.xlu0 %3115
    %v3121 = vadd.f32 %v3095, %v3110
    %v3122 = vadd.f32 %v3096, %v3112
    %v3123 = vadd.f32 %v3097, %v3114
    %v3124 = vadd.f32 %v3098, %v3116
    %s3125 = sld [smem:[#allocation6 + $0x28b]]
    %v3126 = vstv %s3125
    %v3127 = vmul.f32 %v66, %v3126
    %v3128 = vmul.f32 %v67, %v3126
    %v3129 = vmul.f32 %v68, %v3126
    %v3130 = vmul.f32 %v69, %v3126
    %3135 = vrot.lane.b32.xlu0 %v3127, 126
    %v3136 = vpop.permute.xlu0 %3135
    %3137 = vrot.lane.b32.xlu0 %v3128, 126
    %v3138 = vpop.permute.xlu0 %3137
    %3139 = vrot.lane.b32.xlu0 %v3129, 126
    %v3140 = vpop.permute.xlu0 %3139
    %3141 = vrot.lane.b32.xlu0 %v3130, 126
    %v3142 = vpop.permute.xlu0 %3141
    %v3147 = vadd.f32 %v3121, %v3136
    %v3148 = vadd.f32 %v3122, %v3138
    %v3149 = vadd.f32 %v3123, %v3140
    %v3150 = vadd.f32 %v3124, %v3142
    %s3151 = sld [smem:[#allocation6 + $0x28c]]
    %v3152 = vstv %s3151
    %v3153 = vmul.f32 %v70, %v3152
    %v3154 = vmul.f32 %v71, %v3152
    %v3155 = vmul.f32 %v72, %v3152
    %v3156 = vmul.f32 %v73, %v3152
    %v3157 = vadd.f32 %v3147, %v3153
    %v3158 = vadd.f32 %v3148, %v3154
    %v3159 = vadd.f32 %v3149, %v3155
    %v3160 = vadd.f32 %v3150, %v3156
    %s3161 = sld [smem:[#allocation6 + $0x28d]]
    %v3162 = vstv %s3161
    %v3163 = vmul.f32 %v70, %v3162
    %v3164 = vmul.f32 %v71, %v3162
    %v3165 = vmul.f32 %v72, %v3162
    %v3166 = vmul.f32 %v73, %v3162
    %3171 = vrot.lane.b32.xlu0 %v3163, 127
    %v3172 = vpop.permute.xlu0 %3171
    %3173 = vrot.lane.b32.xlu0 %v3164, 127
    %v3174 = vpop.permute.xlu0 %3173
    %3175 = vrot.lane.b32.xlu0 %v3165, 127
    %v3176 = vpop.permute.xlu0 %3175
    %3177 = vrot.lane.b32.xlu0 %v3166, 127
    %v3178 = vpop.permute.xlu0 %3177
    %v3183 = vadd.f32 %v3157, %v3172
    %v3184 = vadd.f32 %v3158, %v3174
    %v3185 = vadd.f32 %v3159, %v3176
    %v3186 = vadd.f32 %v3160, %v3178
    %s3187 = sld [smem:[#allocation6 + $0x28e]]
    %v3188 = vstv %s3187
    %v3189 = vmul.f32 %v70, %v3188
    %v3190 = vmul.f32 %v71, %v3188
    %v3191 = vmul.f32 %v72, %v3188
    %v3192 = vmul.f32 %v73, %v3188
    %3197 = vrot.lane.b32.xlu0 %v3189, 126
    %v3198 = vpop.permute.xlu0 %3197
    %3199 = vrot.lane.b32.xlu0 %v3190, 126
    %v3200 = vpop.permute.xlu0 %3199
    %3201 = vrot.lane.b32.xlu0 %v3191, 126
    %v3202 = vpop.permute.xlu0 %3201
    %3203 = vrot.lane.b32.xlu0 %v3192, 126
    %v3204 = vpop.permute.xlu0 %3203
    %v3209 = vadd.f32 %v3183, %v3198
    %v3210 = vadd.f32 %v3184, %v3200
    %v3211 = vadd.f32 %v3185, %v3202
    %v3212 = vadd.f32 %v3186, %v3204
    %s3213 = sld [smem:[#allocation6 + $0x28f]]
    %v3214 = vstv %s3213
    %v3215 = vmul.f32 %v74, %v3214
    %v3216 = vmul.f32 %v75, %v3214
    %v3217 = vmul.f32 %v76, %v3214
    %v3218 = vmul.f32 %v77, %v3214
    %v3219 = vadd.f32 %v3209, %v3215
    %v3220 = vadd.f32 %v3210, %v3216
    %v3221 = vadd.f32 %v3211, %v3217
    %v3222 = vadd.f32 %v3212, %v3218
    %s3223 = sld [smem:[#allocation6 + $0x290]]
    %v3224 = vstv %s3223
    %v3225 = vmul.f32 %v74, %v3224
    %v3226 = vmul.f32 %v75, %v3224
    %v3227 = vmul.f32 %v76, %v3224
    %v3228 = vmul.f32 %v77, %v3224
    %3233 = vrot.lane.b32.xlu0 %v3225, 127
    %v3234 = vpop.permute.xlu0 %3233
    %3235 = vrot.lane.b32.xlu0 %v3226, 127
    %v3236 = vpop.permute.xlu0 %3235
    %3237 = vrot.lane.b32.xlu0 %v3227, 127
    %v3238 = vpop.permute.xlu0 %3237
    %3239 = vrot.lane.b32.xlu0 %v3228, 127
    %v3240 = vpop.permute.xlu0 %3239
    %v3245 = vadd.f32 %v3219, %v3234
    %v3246 = vadd.f32 %v3220, %v3236
    %v3247 = vadd.f32 %v3221, %v3238
    %v3248 = vadd.f32 %v3222, %v3240
    %s3249 = sld [smem:[#allocation6 + $0x291]]
    %v3250 = vstv %s3249
    %v3251 = vmul.f32 %v74, %v3250
    %v3252 = vmul.f32 %v75, %v3250
    %v3253 = vmul.f32 %v76, %v3250
    %v3254 = vmul.f32 %v77, %v3250
    %3259 = vrot.lane.b32.xlu0 %v3251, 126
    %v3260 = vpop.permute.xlu0 %3259
    %3261 = vrot.lane.b32.xlu0 %v3252, 126
    %v3262 = vpop.permute.xlu0 %3261
    %3263 = vrot.lane.b32.xlu0 %v3253, 126
    %v3264 = vpop.permute.xlu0 %3263
    %3265 = vrot.lane.b32.xlu0 %v3254, 126
    %v3266 = vpop.permute.xlu0 %3265
    %v3271 = vadd.f32 %v3245, %v3260
    %v3272 = vadd.f32 %v3246, %v3262
    %v3273 = vadd.f32 %v3247, %v3264
    %v3274 = vadd.f32 %v3248, %v3266
    %s3275 = sld [smem:[#allocation6 + $0x292]]
    %v3276 = vstv %s3275
    %v3277 = vmul.f32 %v79, %v3276
    %v3278 = vmul.f32 %v80, %v3276
    %v3279 = vmul.f32 %v81, %v3276
    %v3280 = vmul.f32 %v82, %v3276
    %v3281 = vadd.f32 %v3271, %v3277
    %v3282 = vadd.f32 %v3272, %v3278
    %v3283 = vadd.f32 %v3273, %v3279
    %v3284 = vadd.f32 %v3274, %v3280
    %s3285 = sld [smem:[#allocation6 + $0x293]]
    %v3286 = vstv %s3285
    %v3287 = vmul.f32 %v79, %v3286
    %v3288 = vmul.f32 %v80, %v3286
    %v3289 = vmul.f32 %v81, %v3286
    %v3290 = vmul.f32 %v82, %v3286
    %3295 = vrot.lane.b32.xlu0 %v3287, 127
    %v3296 = vpop.permute.xlu0 %3295
    %3297 = vrot.lane.b32.xlu0 %v3288, 127
    %v3298 = vpop.permute.xlu0 %3297
    %3299 = vrot.lane.b32.xlu0 %v3289, 127
    %v3300 = vpop.permute.xlu0 %3299
    %3301 = vrot.lane.b32.xlu0 %v3290, 127
    %v3302 = vpop.permute.xlu0 %3301
    %v3307 = vadd.f32 %v3281, %v3296
    %v3308 = vadd.f32 %v3282, %v3298
    %v3309 = vadd.f32 %v3283, %v3300
    %v3310 = vadd.f32 %v3284, %v3302
    %s3311 = sld [smem:[#allocation6 + $0x294]]
    %v3312 = vstv %s3311
    %v3313 = vmul.f32 %v79, %v3312
    %v3314 = vmul.f32 %v80, %v3312
    %v3315 = vmul.f32 %v81, %v3312
    %v3316 = vmul.f32 %v82, %v3312
    %3321 = vrot.lane.b32.xlu0 %v3313, 126
    %v3322 = vpop.permute.xlu0 %3321
    %3323 = vrot.lane.b32.xlu0 %v3314, 126
    %v3324 = vpop.permute.xlu0 %3323
    %3325 = vrot.lane.b32.xlu0 %v3315, 126
    %v3326 = vpop.permute.xlu0 %3325
    %3327 = vrot.lane.b32.xlu0 %v3316, 126
    %v3328 = vpop.permute.xlu0 %3327
    %v3333 = vadd.f32 %v3307, %v3322
    %v3334 = vadd.f32 %v3308, %v3324
    %v3335 = vadd.f32 %v3309, %v3326
    %v3336 = vadd.f32 %v3310, %v3328
    %s3337 = sld [smem:[#allocation6 + $0x295]]
    %v3338 = vstv %s3337
    %v3339 = vmul.f32 %v83, %v3338
    %v3340 = vmul.f32 %v84, %v3338
    %v3341 = vmul.f32 %v85, %v3338
    %v3342 = vmul.f32 %v86, %v3338
    %v3343 = vadd.f32 %v3333, %v3339
    %v3344 = vadd.f32 %v3334, %v3340
    %v3345 = vadd.f32 %v3335, %v3341
    %v3346 = vadd.f32 %v3336, %v3342
    %s3347 = sld [smem:[#allocation6 + $0x296]]
    %v3348 = vstv %s3347
    %v3349 = vmul.f32 %v83, %v3348
    %v3350 = vmul.f32 %v84, %v3348
    %v3351 = vmul.f32 %v85, %v3348
    %v3352 = vmul.f32 %v86, %v3348
    %3357 = vrot.lane.b32.xlu0 %v3349, 127
    %v3358 = vpop.permute.xlu0 %3357
    %3359 = vrot.lane.b32.xlu0 %v3350, 127
    %v3360 = vpop.permute.xlu0 %3359
    %3361 = vrot.lane.b32.xlu0 %v3351, 127
    %v3362 = vpop.permute.xlu0 %3361
    %3363 = vrot.lane.b32.xlu0 %v3352, 127
    %v3364 = vpop.permute.xlu0 %3363
    %v3369 = vadd.f32 %v3343, %v3358
    %v3370 = vadd.f32 %v3344, %v3360
    %v3371 = vadd.f32 %v3345, %v3362
    %v3372 = vadd.f32 %v3346, %v3364
    %s3373 = sld [smem:[#allocation6 + $0x297]]
    %v3374 = vstv %s3373
    %v3375 = vmul.f32 %v83, %v3374
    %v3376 = vmul.f32 %v84, %v3374
    %v3377 = vmul.f32 %v85, %v3374
    %v3378 = vmul.f32 %v86, %v3374
    %3383 = vrot.lane.b32.xlu0 %v3375, 126
    %v3384 = vpop.permute.xlu0 %3383
    %3385 = vrot.lane.b32.xlu0 %v3376, 126
    %v3386 = vpop.permute.xlu0 %3385
    %3387 = vrot.lane.b32.xlu0 %v3377, 126
    %v3388 = vpop.permute.xlu0 %3387
    %3389 = vrot.lane.b32.xlu0 %v3378, 126
    %v3390 = vpop.permute.xlu0 %3389
    %v3395 = vadd.f32 %v3369, %v3384
    %v3396 = vadd.f32 %v3370, %v3386
    %v3397 = vadd.f32 %v3371, %v3388
    %v3398 = vadd.f32 %v3372, %v3390
    %s3399 = sld [smem:[#allocation6 + $0x298]]
    %v3400 = vstv %s3399
    %v3401 = vmul.f32 %v87, %v3400
    %v3402 = vmul.f32 %v88, %v3400
    %v3403 = vmul.f32 %v89, %v3400
    %v3404 = vmul.f32 %v90, %v3400
    %v3405 = vadd.f32 %v3395, %v3401
    %v3406 = vadd.f32 %v3396, %v3402
    %v3407 = vadd.f32 %v3397, %v3403
    %v3408 = vadd.f32 %v3398, %v3404
    %s3409 = sld [smem:[#allocation6 + $0x299]]
    %v3410 = vstv %s3409
    %v3411 = vmul.f32 %v87, %v3410
    %v3412 = vmul.f32 %v88, %v3410
    %v3413 = vmul.f32 %v89, %v3410
    %v3414 = vmul.f32 %v90, %v3410
    %3419 = vrot.lane.b32.xlu0 %v3411, 127
    %v3420 = vpop.permute.xlu0 %3419
    %3421 = vrot.lane.b32.xlu0 %v3412, 127
    %v3422 = vpop.permute.xlu0 %3421
    %3423 = vrot.lane.b32.xlu0 %v3413, 127
    %v3424 = vpop.permute.xlu0 %3423
    %3425 = vrot.lane.b32.xlu0 %v3414, 127
    %v3426 = vpop.permute.xlu0 %3425
    %v3431 = vadd.f32 %v3405, %v3420
    %v3432 = vadd.f32 %v3406, %v3422
    %v3433 = vadd.f32 %v3407, %v3424
    %v3434 = vadd.f32 %v3408, %v3426
    %s3435 = sld [smem:[#allocation6 + $0x29a]]
    %v3436 = vstv %s3435
    %v3437 = vmul.f32 %v87, %v3436
    %v3438 = vmul.f32 %v88, %v3436
    %v3439 = vmul.f32 %v89, %v3436
    %v3440 = vmul.f32 %v90, %v3436
    %3445 = vrot.lane.b32.xlu0 %v3437, 126
    %v3446 = vpop.permute.xlu0 %3445
    %3447 = vrot.lane.b32.xlu0 %v3438, 126
    %v3448 = vpop.permute.xlu0 %3447
    %3449 = vrot.lane.b32.xlu0 %v3439, 126
    %v3450 = vpop.permute.xlu0 %3449
    %3451 = vrot.lane.b32.xlu0 %v3440, 126
    %v3452 = vpop.permute.xlu0 %3451
    %v3457 = vadd.f32 %v3431, %v3446
    %v3458 = vadd.f32 %v3432, %v3448
    %v3459 = vadd.f32 %v3433, %v3450
    %v3460 = vadd.f32 %v3434, %v3452
    %s3461 = sld [smem:[#allocation7 + $0x5]]
    %v3462 = vstv %s3461
    %v3463 = vadd.f32 %v3457, %v3462
    %v3464 = vadd.f32 %v3458, %v3462
    %v3465 = vadd.f32 %v3459, %v3462
    %v3466 = vadd.f32 %v3460, %v3462
    %v3467 = vmin.f32 %v2903, %v3463
    %v3468 = vmin.f32 %v2904, %v3464
    %v3469 = vmin.f32 %v2905, %v3465
    %v3470 = vmin.f32 %v2906, %v3466
    %s3471 = sld [smem:[#allocation6 + $0x300]]
    %v3472 = vstv %s3471
    %v3473 = vmul.f32 %v53, %v3472
    %v3474 = vmul.f32 %v54, %v3472
    %v3475 = vmul.f32 %v55, %v3472
    %v3476 = vmul.f32 %v56, %v3472
    %s3477 = sld [smem:[#allocation6 + $0x301]]
    %v3478 = vstv %s3477
    %v3479 = vmul.f32 %v53, %v3478
    %v3480 = vmul.f32 %v54, %v3478
    %v3481 = vmul.f32 %v55, %v3478
    %v3482 = vmul.f32 %v56, %v3478
    %3487 = vrot.lane.b32.xlu0 %v3479, 127
    %v3488 = vpop.permute.xlu0 %3487
    %3489 = vrot.lane.b32.xlu0 %v3480, 127
    %v3490 = vpop.permute.xlu0 %3489
    %3491 = vrot.lane.b32.xlu0 %v3481, 127
    %v3492 = vpop.permute.xlu0 %3491
    %3493 = vrot.lane.b32.xlu0 %v3482, 127
    %v3494 = vpop.permute.xlu0 %3493
    %v3499 = vadd.f32 %v3473, %v3488
    %v3500 = vadd.f32 %v3474, %v3490
    %v3501 = vadd.f32 %v3475, %v3492
    %v3502 = vadd.f32 %v3476, %v3494
    %s3503 = sld [smem:[#allocation6 + $0x302]]
    %v3504 = vstv %s3503
    %v3505 = vmul.f32 %v53, %v3504
    %v3506 = vmul.f32 %v54, %v3504
    %v3507 = vmul.f32 %v55, %v3504
    %v3508 = vmul.f32 %v56, %v3504
    %3513 = vrot.lane.b32.xlu0 %v3505, 126
    %v3514 = vpop.permute.xlu0 %3513
    %3515 = vrot.lane.b32.xlu0 %v3506, 126
    %v3516 = vpop.permute.xlu0 %3515
    %3517 = vrot.lane.b32.xlu0 %v3507, 126
    %v3518 = vpop.permute.xlu0 %3517
    %3519 = vrot.lane.b32.xlu0 %v3508, 126
    %v3520 = vpop.permute.xlu0 %3519
    %v3525 = vadd.f32 %v3499, %v3514
    %v3526 = vadd.f32 %v3500, %v3516
    %v3527 = vadd.f32 %v3501, %v3518
    %v3528 = vadd.f32 %v3502, %v3520
    %s3529 = sld [smem:[#allocation6 + $0x303]]
    %v3530 = vstv %s3529
    %v3531 = vmul.f32 %v57, %v3530
    %v3532 = vmul.f32 %v58, %v3530
    %v3533 = vmul.f32 %v59, %v3530
    %v3534 = vmul.f32 %v60, %v3530
    %v3535 = vadd.f32 %v3525, %v3531
    %v3536 = vadd.f32 %v3526, %v3532
    %v3537 = vadd.f32 %v3527, %v3533
    %v3538 = vadd.f32 %v3528, %v3534
    %s3539 = sld [smem:[#allocation6 + $0x304]]
    %v3540 = vstv %s3539
    %v3541 = vmul.f32 %v57, %v3540
    %v3542 = vmul.f32 %v58, %v3540
    %v3543 = vmul.f32 %v59, %v3540
    %v3544 = vmul.f32 %v60, %v3540
    %3549 = vrot.lane.b32.xlu0 %v3541, 127
    %v3550 = vpop.permute.xlu0 %3549
    %3551 = vrot.lane.b32.xlu0 %v3542, 127
    %v3552 = vpop.permute.xlu0 %3551
    %3553 = vrot.lane.b32.xlu0 %v3543, 127
    %v3554 = vpop.permute.xlu0 %3553
    %3555 = vrot.lane.b32.xlu0 %v3544, 127
    %v3556 = vpop.permute.xlu0 %3555
    %v3561 = vadd.f32 %v3535, %v3550
    %v3562 = vadd.f32 %v3536, %v3552
    %v3563 = vadd.f32 %v3537, %v3554
    %v3564 = vadd.f32 %v3538, %v3556
    %s3565 = sld [smem:[#allocation6 + $0x305]]
    %v3566 = vstv %s3565
    %v3567 = vmul.f32 %v57, %v3566
    %v3568 = vmul.f32 %v58, %v3566
    %v3569 = vmul.f32 %v59, %v3566
    %v3570 = vmul.f32 %v60, %v3566
    %3575 = vrot.lane.b32.xlu0 %v3567, 126
    %v3576 = vpop.permute.xlu0 %3575
    %3577 = vrot.lane.b32.xlu0 %v3568, 126
    %v3578 = vpop.permute.xlu0 %3577
    %3579 = vrot.lane.b32.xlu0 %v3569, 126
    %v3580 = vpop.permute.xlu0 %3579
    %3581 = vrot.lane.b32.xlu0 %v3570, 126
    %v3582 = vpop.permute.xlu0 %3581
    %v3587 = vadd.f32 %v3561, %v3576
    %v3588 = vadd.f32 %v3562, %v3578
    %v3589 = vadd.f32 %v3563, %v3580
    %v3590 = vadd.f32 %v3564, %v3582
    %s3591 = sld [smem:[#allocation6 + $0x306]]
    %v3592 = vstv %s3591
    %v3593 = vmul.f32 %v61, %v3592
    %v3594 = vmul.f32 %v62, %v3592
    %v3595 = vmul.f32 %v63, %v3592
    %v3596 = vmul.f32 %v64, %v3592
    %v3597 = vadd.f32 %v3587, %v3593
    %v3598 = vadd.f32 %v3588, %v3594
    %v3599 = vadd.f32 %v3589, %v3595
    %v3600 = vadd.f32 %v3590, %v3596
    %s3601 = sld [smem:[#allocation6 + $0x307]]
    %v3602 = vstv %s3601
    %v3603 = vmul.f32 %v61, %v3602
    %v3604 = vmul.f32 %v62, %v3602
    %v3605 = vmul.f32 %v63, %v3602
    %v3606 = vmul.f32 %v64, %v3602
    %3611 = vrot.lane.b32.xlu0 %v3603, 127
    %v3612 = vpop.permute.xlu0 %3611
    %3613 = vrot.lane.b32.xlu0 %v3604, 127
    %v3614 = vpop.permute.xlu0 %3613
    %3615 = vrot.lane.b32.xlu0 %v3605, 127
    %v3616 = vpop.permute.xlu0 %3615
    %3617 = vrot.lane.b32.xlu0 %v3606, 127
    %v3618 = vpop.permute.xlu0 %3617
    %v3623 = vadd.f32 %v3597, %v3612
    %v3624 = vadd.f32 %v3598, %v3614
    %v3625 = vadd.f32 %v3599, %v3616
    %v3626 = vadd.f32 %v3600, %v3618
    %s3627 = sld [smem:[#allocation6 + $0x308]]
    %v3628 = vstv %s3627
    %v3629 = vmul.f32 %v61, %v3628
    %v3630 = vmul.f32 %v62, %v3628
    %v3631 = vmul.f32 %v63, %v3628
    %v3632 = vmul.f32 %v64, %v3628
    %3637 = vrot.lane.b32.xlu0 %v3629, 126
    %v3638 = vpop.permute.xlu0 %3637
    %3639 = vrot.lane.b32.xlu0 %v3630, 126
    %v3640 = vpop.permute.xlu0 %3639
    %3641 = vrot.lane.b32.xlu0 %v3631, 126
    %v3642 = vpop.permute.xlu0 %3641
    %3643 = vrot.lane.b32.xlu0 %v3632, 126
    %v3644 = vpop.permute.xlu0 %3643
    %v3649 = vadd.f32 %v3623, %v3638
    %v3650 = vadd.f32 %v3624, %v3640
    %v3651 = vadd.f32 %v3625, %v3642
    %v3652 = vadd.f32 %v3626, %v3644
    %s3653 = sld [smem:[#allocation6 + $0x309]]
    %v3654 = vstv %s3653
    %v3655 = vmul.f32 %v66, %v3654
    %v3656 = vmul.f32 %v67, %v3654
    %v3657 = vmul.f32 %v68, %v3654
    %v3658 = vmul.f32 %v69, %v3654
    %v3659 = vadd.f32 %v3649, %v3655
    %v3660 = vadd.f32 %v3650, %v3656
    %v3661 = vadd.f32 %v3651, %v3657
    %v3662 = vadd.f32 %v3652, %v3658
    %s3663 = sld [smem:[#allocation6 + $0x30a]]
    %v3664 = vstv %s3663
    %v3665 = vmul.f32 %v66, %v3664
    %v3666 = vmul.f32 %v67, %v3664
    %v3667 = vmul.f32 %v68, %v3664
    %v3668 = vmul.f32 %v69, %v3664
    %3673 = vrot.lane.b32.xlu0 %v3665, 127
    %v3674 = vpop.permute.xlu0 %3673
    %3675 = vrot.lane.b32.xlu0 %v3666, 127
    %v3676 = vpop.permute.xlu0 %3675
    %3677 = vrot.lane.b32.xlu0 %v3667, 127
    %v3678 = vpop.permute.xlu0 %3677
    %3679 = vrot.lane.b32.xlu0 %v3668, 127
    %v3680 = vpop.permute.xlu0 %3679
    %v3685 = vadd.f32 %v3659, %v3674
    %v3686 = vadd.f32 %v3660, %v3676
    %v3687 = vadd.f32 %v3661, %v3678
    %v3688 = vadd.f32 %v3662, %v3680
    %s3689 = sld [smem:[#allocation6 + $0x30b]]
    %v3690 = vstv %s3689
    %v3691 = vmul.f32 %v66, %v3690
    %v3692 = vmul.f32 %v67, %v3690
    %v3693 = vmul.f32 %v68, %v3690
    %v3694 = vmul.f32 %v69, %v3690
    %3699 = vrot.lane.b32.xlu0 %v3691, 126
    %v3700 = vpop.permute.xlu0 %3699
    %3701 = vrot.lane.b32.xlu0 %v3692, 126
    %v3702 = vpop.permute.xlu0 %3701
    %3703 = vrot.lane.b32.xlu0 %v3693, 126
    %v3704 = vpop.permute.xlu0 %3703
    %3705 = vrot.lane.b32.xlu0 %v3694, 126
    %v3706 = vpop.permute.xlu0 %3705
    %v3711 = vadd.f32 %v3685, %v3700
    %v3712 = vadd.f32 %v3686, %v3702
    %v3713 = vadd.f32 %v3687, %v3704
    %v3714 = vadd.f32 %v3688, %v3706
    %s3715 = sld [smem:[#allocation6 + $0x30c]]
    %v3716 = vstv %s3715
    %v3717 = vmul.f32 %v70, %v3716
    %v3718 = vmul.f32 %v71, %v3716
    %v3719 = vmul.f32 %v72, %v3716
    %v3720 = vmul.f32 %v73, %v3716
    %v3721 = vadd.f32 %v3711, %v3717
    %v3722 = vadd.f32 %v3712, %v3718
    %v3723 = vadd.f32 %v3713, %v3719
    %v3724 = vadd.f32 %v3714, %v3720
    %s3725 = sld [smem:[#allocation6 + $0x30d]]
    %v3726 = vstv %s3725
    %v3727 = vmul.f32 %v70, %v3726
    %v3728 = vmul.f32 %v71, %v3726
    %v3729 = vmul.f32 %v72, %v3726
    %v3730 = vmul.f32 %v73, %v3726
    %3735 = vrot.lane.b32.xlu0 %v3727, 127
    %v3736 = vpop.permute.xlu0 %3735
    %3737 = vrot.lane.b32.xlu0 %v3728, 127
    %v3738 = vpop.permute.xlu0 %3737
    %3739 = vrot.lane.b32.xlu0 %v3729, 127
    %v3740 = vpop.permute.xlu0 %3739
    %3741 = vrot.lane.b32.xlu0 %v3730, 127
    %v3742 = vpop.permute.xlu0 %3741
    %v3747 = vadd.f32 %v3721, %v3736
    %v3748 = vadd.f32 %v3722, %v3738
    %v3749 = vadd.f32 %v3723, %v3740
    %v3750 = vadd.f32 %v3724, %v3742
    %s3751 = sld [smem:[#allocation6 + $0x30e]]
    %v3752 = vstv %s3751
    %v3753 = vmul.f32 %v70, %v3752
    %v3754 = vmul.f32 %v71, %v3752
    %v3755 = vmul.f32 %v72, %v3752
    %v3756 = vmul.f32 %v73, %v3752
    %3761 = vrot.lane.b32.xlu0 %v3753, 126
    %v3762 = vpop.permute.xlu0 %3761
    %3763 = vrot.lane.b32.xlu0 %v3754, 126
    %v3764 = vpop.permute.xlu0 %3763
    %3765 = vrot.lane.b32.xlu0 %v3755, 126
    %v3766 = vpop.permute.xlu0 %3765
    %3767 = vrot.lane.b32.xlu0 %v3756, 126
    %v3768 = vpop.permute.xlu0 %3767
    %v3773 = vadd.f32 %v3747, %v3762
    %v3774 = vadd.f32 %v3748, %v3764
    %v3775 = vadd.f32 %v3749, %v3766
    %v3776 = vadd.f32 %v3750, %v3768
    %s3777 = sld [smem:[#allocation6 + $0x30f]]
    %v3778 = vstv %s3777
    %v3779 = vmul.f32 %v74, %v3778
    %v3780 = vmul.f32 %v75, %v3778
    %v3781 = vmul.f32 %v76, %v3778
    %v3782 = vmul.f32 %v77, %v3778
    %v3783 = vadd.f32 %v3773, %v3779
    %v3784 = vadd.f32 %v3774, %v3780
    %v3785 = vadd.f32 %v3775, %v3781
    %v3786 = vadd.f32 %v3776, %v3782
    %s3787 = sld [smem:[#allocation6 + $0x310]]
    %v3788 = vstv %s3787
    %v3789 = vmul.f32 %v74, %v3788
    %v3790 = vmul.f32 %v75, %v3788
    %v3791 = vmul.f32 %v76, %v3788
    %v3792 = vmul.f32 %v77, %v3788
    %3797 = vrot.lane.b32.xlu0 %v3789, 127
    %v3798 = vpop.permute.xlu0 %3797
    %3799 = vrot.lane.b32.xlu0 %v3790, 127
    %v3800 = vpop.permute.xlu0 %3799
    %3801 = vrot.lane.b32.xlu0 %v3791, 127
    %v3802 = vpop.permute.xlu0 %3801
    %3803 = vrot.lane.b32.xlu0 %v3792, 127
    %v3804 = vpop.permute.xlu0 %3803
    %v3809 = vadd.f32 %v3783, %v3798
    %v3810 = vadd.f32 %v3784, %v3800
    %v3811 = vadd.f32 %v3785, %v3802
    %v3812 = vadd.f32 %v3786, %v3804
    %s3813 = sld [smem:[#allocation6 + $0x311]]
    %v3814 = vstv %s3813
    %v3815 = vmul.f32 %v74, %v3814
    %v3816 = vmul.f32 %v75, %v3814
    %v3817 = vmul.f32 %v76, %v3814
    %v3818 = vmul.f32 %v77, %v3814
    %3823 = vrot.lane.b32.xlu0 %v3815, 126
    %v3824 = vpop.permute.xlu0 %3823
    %3825 = vrot.lane.b32.xlu0 %v3816, 126
    %v3826 = vpop.permute.xlu0 %3825
    %3827 = vrot.lane.b32.xlu0 %v3817, 126
    %v3828 = vpop.permute.xlu0 %3827
    %3829 = vrot.lane.b32.xlu0 %v3818, 126
    %v3830 = vpop.permute.xlu0 %3829
    %v3835 = vadd.f32 %v3809, %v3824
    %v3836 = vadd.f32 %v3810, %v3826
    %v3837 = vadd.f32 %v3811, %v3828
    %v3838 = vadd.f32 %v3812, %v3830
    %s3839 = sld [smem:[#allocation6 + $0x312]]
    %v3840 = vstv %s3839
    %v3841 = vmul.f32 %v79, %v3840
    %v3842 = vmul.f32 %v80, %v3840
    %v3843 = vmul.f32 %v81, %v3840
    %v3844 = vmul.f32 %v82, %v3840
    %v3845 = vadd.f32 %v3835, %v3841
    %v3846 = vadd.f32 %v3836, %v3842
    %v3847 = vadd.f32 %v3837, %v3843
    %v3848 = vadd.f32 %v3838, %v3844
    %s3849 = sld [smem:[#allocation6 + $0x313]]
    %v3850 = vstv %s3849
    %v3851 = vmul.f32 %v79, %v3850
    %v3852 = vmul.f32 %v80, %v3850
    %v3853 = vmul.f32 %v81, %v3850
    %v3854 = vmul.f32 %v82, %v3850
    %3859 = vrot.lane.b32.xlu0 %v3851, 127
    %v3860 = vpop.permute.xlu0 %3859
    %3861 = vrot.lane.b32.xlu0 %v3852, 127
    %v3862 = vpop.permute.xlu0 %3861
    %3863 = vrot.lane.b32.xlu0 %v3853, 127
    %v3864 = vpop.permute.xlu0 %3863
    %3865 = vrot.lane.b32.xlu0 %v3854, 127
    %v3866 = vpop.permute.xlu0 %3865
    %v3871 = vadd.f32 %v3845, %v3860
    %v3872 = vadd.f32 %v3846, %v3862
    %v3873 = vadd.f32 %v3847, %v3864
    %v3874 = vadd.f32 %v3848, %v3866
    %s3875 = sld [smem:[#allocation6 + $0x314]]
    %v3876 = vstv %s3875
    %v3877 = vmul.f32 %v79, %v3876
    %v3878 = vmul.f32 %v80, %v3876
    %v3879 = vmul.f32 %v81, %v3876
    %v3880 = vmul.f32 %v82, %v3876
    %3885 = vrot.lane.b32.xlu0 %v3877, 126
    %v3886 = vpop.permute.xlu0 %3885
    %3887 = vrot.lane.b32.xlu0 %v3878, 126
    %v3888 = vpop.permute.xlu0 %3887
    %3889 = vrot.lane.b32.xlu0 %v3879, 126
    %v3890 = vpop.permute.xlu0 %3889
    %3891 = vrot.lane.b32.xlu0 %v3880, 126
    %v3892 = vpop.permute.xlu0 %3891
    %v3897 = vadd.f32 %v3871, %v3886
    %v3898 = vadd.f32 %v3872, %v3888
    %v3899 = vadd.f32 %v3873, %v3890
    %v3900 = vadd.f32 %v3874, %v3892
    %s3901 = sld [smem:[#allocation6 + $0x315]]
    %v3902 = vstv %s3901
    %v3903 = vmul.f32 %v83, %v3902
    %v3904 = vmul.f32 %v84, %v3902
    %v3905 = vmul.f32 %v85, %v3902
    %v3906 = vmul.f32 %v86, %v3902
    %v3907 = vadd.f32 %v3897, %v3903
    %v3908 = vadd.f32 %v3898, %v3904
    %v3909 = vadd.f32 %v3899, %v3905
    %v3910 = vadd.f32 %v3900, %v3906
    %s3911 = sld [smem:[#allocation6 + $0x316]]
    %v3912 = vstv %s3911
    %v3913 = vmul.f32 %v83, %v3912
    %v3914 = vmul.f32 %v84, %v3912
    %v3915 = vmul.f32 %v85, %v3912
    %v3916 = vmul.f32 %v86, %v3912
    %3921 = vrot.lane.b32.xlu0 %v3913, 127
    %v3922 = vpop.permute.xlu0 %3921
    %3923 = vrot.lane.b32.xlu0 %v3914, 127
    %v3924 = vpop.permute.xlu0 %3923
    %3925 = vrot.lane.b32.xlu0 %v3915, 127
    %v3926 = vpop.permute.xlu0 %3925
    %3927 = vrot.lane.b32.xlu0 %v3916, 127
    %v3928 = vpop.permute.xlu0 %3927
    %v3933 = vadd.f32 %v3907, %v3922
    %v3934 = vadd.f32 %v3908, %v3924
    %v3935 = vadd.f32 %v3909, %v3926
    %v3936 = vadd.f32 %v3910, %v3928
    %s3937 = sld [smem:[#allocation6 + $0x317]]
    %v3938 = vstv %s3937
    %v3939 = vmul.f32 %v83, %v3938
    %v3940 = vmul.f32 %v84, %v3938
    %v3941 = vmul.f32 %v85, %v3938
    %v3942 = vmul.f32 %v86, %v3938
    %3947 = vrot.lane.b32.xlu0 %v3939, 126
    %v3948 = vpop.permute.xlu0 %3947
    %3949 = vrot.lane.b32.xlu0 %v3940, 126
    %v3950 = vpop.permute.xlu0 %3949
    %3951 = vrot.lane.b32.xlu0 %v3941, 126
    %v3952 = vpop.permute.xlu0 %3951
    %3953 = vrot.lane.b32.xlu0 %v3942, 126
    %v3954 = vpop.permute.xlu0 %3953
    %v3959 = vadd.f32 %v3933, %v3948
    %v3960 = vadd.f32 %v3934, %v3950
    %v3961 = vadd.f32 %v3935, %v3952
    %v3962 = vadd.f32 %v3936, %v3954
    %s3963 = sld [smem:[#allocation6 + $0x318]]
    %v3964 = vstv %s3963
    %v3965 = vmul.f32 %v87, %v3964
    %v3966 = vmul.f32 %v88, %v3964
    %v3967 = vmul.f32 %v89, %v3964
    %v3968 = vmul.f32 %v90, %v3964
    %v3969 = vadd.f32 %v3959, %v3965
    %v3970 = vadd.f32 %v3960, %v3966
    %v3971 = vadd.f32 %v3961, %v3967
    %v3972 = vadd.f32 %v3962, %v3968
    %s3973 = sld [smem:[#allocation6 + $0x319]]
    %v3974 = vstv %s3973
    %v3975 = vmul.f32 %v87, %v3974
    %v3976 = vmul.f32 %v88, %v3974
    %v3977 = vmul.f32 %v89, %v3974
    %v3978 = vmul.f32 %v90, %v3974
    %3983 = vrot.lane.b32.xlu0 %v3975, 127
    %v3984 = vpop.permute.xlu0 %3983
    %3985 = vrot.lane.b32.xlu0 %v3976, 127
    %v3986 = vpop.permute.xlu0 %3985
    %3987 = vrot.lane.b32.xlu0 %v3977, 127
    %v3988 = vpop.permute.xlu0 %3987
    %3989 = vrot.lane.b32.xlu0 %v3978, 127
    %v3990 = vpop.permute.xlu0 %3989
    %v3995 = vadd.f32 %v3969, %v3984
    %v3996 = vadd.f32 %v3970, %v3986
    %v3997 = vadd.f32 %v3971, %v3988
    %v3998 = vadd.f32 %v3972, %v3990
    %s3999 = sld [smem:[#allocation6 + $0x31a]]
    %v4000 = vstv %s3999
    %v4001 = vmul.f32 %v87, %v4000
    %v4002 = vmul.f32 %v88, %v4000
    %v4003 = vmul.f32 %v89, %v4000
    %v4004 = vmul.f32 %v90, %v4000
    %4009 = vrot.lane.b32.xlu0 %v4001, 126
    %v4010 = vpop.permute.xlu0 %4009
    %4011 = vrot.lane.b32.xlu0 %v4002, 126
    %v4012 = vpop.permute.xlu0 %4011
    %4013 = vrot.lane.b32.xlu0 %v4003, 126
    %v4014 = vpop.permute.xlu0 %4013
    %4015 = vrot.lane.b32.xlu0 %v4004, 126
    %v4016 = vpop.permute.xlu0 %4015
    %v4021 = vadd.f32 %v3995, %v4010
    %v4022 = vadd.f32 %v3996, %v4012
    %v4023 = vadd.f32 %v3997, %v4014
    %v4024 = vadd.f32 %v3998, %v4016
    %s4025 = sld [smem:[#allocation7 + $0x6]]
    %v4026 = vstv %s4025
    %v4027 = vadd.f32 %v4021, %v4026
    %v4028 = vadd.f32 %v4022, %v4026
    %v4029 = vadd.f32 %v4023, %v4026
    %v4030 = vadd.f32 %v4024, %v4026
    %v4031 = vmin.f32 %v3467, %v4027
    %v4032 = vmin.f32 %v3468, %v4028
    %v4033 = vmin.f32 %v3469, %v4029
    %v4034 = vmin.f32 %v3470, %v4030
    %s4035 = sld [smem:[#allocation6 + $0x380]]
    %v4036 = vstv %s4035
    %v4037 = vmul.f32 %v53, %v4036
    %v4038 = vmul.f32 %v54, %v4036
    %v4039 = vmul.f32 %v55, %v4036
    %v4040 = vmul.f32 %v56, %v4036
    %s4041 = sld [smem:[#allocation6 + $0x381]]
    %v4042 = vstv %s4041
    %v4043 = vmul.f32 %v53, %v4042
    %v4044 = vmul.f32 %v54, %v4042
    %v4045 = vmul.f32 %v55, %v4042
    %v4046 = vmul.f32 %v56, %v4042
    %4051 = vrot.lane.b32.xlu0 %v4043, 127
    %v4052 = vpop.permute.xlu0 %4051
    %4053 = vrot.lane.b32.xlu0 %v4044, 127
    %v4054 = vpop.permute.xlu0 %4053
    %4055 = vrot.lane.b32.xlu0 %v4045, 127
    %v4056 = vpop.permute.xlu0 %4055
    %4057 = vrot.lane.b32.xlu0 %v4046, 127
    %v4058 = vpop.permute.xlu0 %4057
    %v4063 = vadd.f32 %v4037, %v4052
    %v4064 = vadd.f32 %v4038, %v4054
    %v4065 = vadd.f32 %v4039, %v4056
    %v4066 = vadd.f32 %v4040, %v4058
    %s4067 = sld [smem:[#allocation6 + $0x382]]
    %v4068 = vstv %s4067
    %v4069 = vmul.f32 %v53, %v4068
    %v4070 = vmul.f32 %v54, %v4068
    %v4071 = vmul.f32 %v55, %v4068
    %v4072 = vmul.f32 %v56, %v4068
    %4077 = vrot.lane.b32.xlu0 %v4069, 126
    %v4078 = vpop.permute.xlu0 %4077
    %4079 = vrot.lane.b32.xlu0 %v4070, 126
    %v4080 = vpop.permute.xlu0 %4079
    %4081 = vrot.lane.b32.xlu0 %v4071, 126
    %v4082 = vpop.permute.xlu0 %4081
    %4083 = vrot.lane.b32.xlu0 %v4072, 126
    %v4084 = vpop.permute.xlu0 %4083
    %v4089 = vadd.f32 %v4063, %v4078
    %v4090 = vadd.f32 %v4064, %v4080
    %v4091 = vadd.f32 %v4065, %v4082
    %v4092 = vadd.f32 %v4066, %v4084
    %s4093 = sld [smem:[#allocation6 + $0x383]]
    %v4094 = vstv %s4093
    %v4095 = vmul.f32 %v57, %v4094
    %v4096 = vmul.f32 %v58, %v4094
    %v4097 = vmul.f32 %v59, %v4094
    %v4098 = vmul.f32 %v60, %v4094
    %v4099 = vadd.f32 %v4089, %v4095
    %v4100 = vadd.f32 %v4090, %v4096
    %v4101 = vadd.f32 %v4091, %v4097
    %v4102 = vadd.f32 %v4092, %v4098
    %s4103 = sld [smem:[#allocation6 + $0x384]]
    %v4104 = vstv %s4103
    %v4105 = vmul.f32 %v57, %v4104
    %v4106 = vmul.f32 %v58, %v4104
    %v4107 = vmul.f32 %v59, %v4104
    %v4108 = vmul.f32 %v60, %v4104
    %4113 = vrot.lane.b32.xlu0 %v4105, 127
    %v4114 = vpop.permute.xlu0 %4113
    %4115 = vrot.lane.b32.xlu0 %v4106, 127
    %v4116 = vpop.permute.xlu0 %4115
    %4117 = vrot.lane.b32.xlu0 %v4107, 127
    %v4118 = vpop.permute.xlu0 %4117
    %4119 = vrot.lane.b32.xlu0 %v4108, 127
    %v4120 = vpop.permute.xlu0 %4119
    %v4125 = vadd.f32 %v4099, %v4114
    %v4126 = vadd.f32 %v4100, %v4116
    %v4127 = vadd.f32 %v4101, %v4118
    %v4128 = vadd.f32 %v4102, %v4120
    %s4129 = sld [smem:[#allocation6 + $0x385]]
    %v4130 = vstv %s4129
    %v4131 = vmul.f32 %v57, %v4130
    %v4132 = vmul.f32 %v58, %v4130
    %v4133 = vmul.f32 %v59, %v4130
    %v4134 = vmul.f32 %v60, %v4130
    %4139 = vrot.lane.b32.xlu0 %v4131, 126
    %v4140 = vpop.permute.xlu0 %4139
    %4141 = vrot.lane.b32.xlu0 %v4132, 126
    %v4142 = vpop.permute.xlu0 %4141
    %4143 = vrot.lane.b32.xlu0 %v4133, 126
    %v4144 = vpop.permute.xlu0 %4143
    %4145 = vrot.lane.b32.xlu0 %v4134, 126
    %v4146 = vpop.permute.xlu0 %4145
    %v4151 = vadd.f32 %v4125, %v4140
    %v4152 = vadd.f32 %v4126, %v4142
    %v4153 = vadd.f32 %v4127, %v4144
    %v4154 = vadd.f32 %v4128, %v4146
    %s4155 = sld [smem:[#allocation6 + $0x386]]
    %v4156 = vstv %s4155
    %v4157 = vmul.f32 %v61, %v4156
    %v4158 = vmul.f32 %v62, %v4156
    %v4159 = vmul.f32 %v63, %v4156
    %v4160 = vmul.f32 %v64, %v4156
    %v4161 = vadd.f32 %v4151, %v4157
    %v4162 = vadd.f32 %v4152, %v4158
    %v4163 = vadd.f32 %v4153, %v4159
    %v4164 = vadd.f32 %v4154, %v4160
    %s4165 = sld [smem:[#allocation6 + $0x387]]
    %v4166 = vstv %s4165
    %v4167 = vmul.f32 %v61, %v4166
    %v4168 = vmul.f32 %v62, %v4166
    %v4169 = vmul.f32 %v63, %v4166
    %v4170 = vmul.f32 %v64, %v4166
    %4175 = vrot.lane.b32.xlu0 %v4167, 127
    %v4176 = vpop.permute.xlu0 %4175
    %4177 = vrot.lane.b32.xlu0 %v4168, 127
    %v4178 = vpop.permute.xlu0 %4177
    %4179 = vrot.lane.b32.xlu0 %v4169, 127
    %v4180 = vpop.permute.xlu0 %4179
    %4181 = vrot.lane.b32.xlu0 %v4170, 127
    %v4182 = vpop.permute.xlu0 %4181
    %v4187 = vadd.f32 %v4161, %v4176
    %v4188 = vadd.f32 %v4162, %v4178
    %v4189 = vadd.f32 %v4163, %v4180
    %v4190 = vadd.f32 %v4164, %v4182
    %s4191 = sld [smem:[#allocation6 + $0x388]]
    %v4192 = vstv %s4191
    %v4193 = vmul.f32 %v61, %v4192
    %v4194 = vmul.f32 %v62, %v4192
    %v4195 = vmul.f32 %v63, %v4192
    %v4196 = vmul.f32 %v64, %v4192
    %4201 = vrot.lane.b32.xlu0 %v4193, 126
    %v4202 = vpop.permute.xlu0 %4201
    %4203 = vrot.lane.b32.xlu0 %v4194, 126
    %v4204 = vpop.permute.xlu0 %4203
    %4205 = vrot.lane.b32.xlu0 %v4195, 126
    %v4206 = vpop.permute.xlu0 %4205
    %4207 = vrot.lane.b32.xlu0 %v4196, 126
    %v4208 = vpop.permute.xlu0 %4207
    %v4213 = vadd.f32 %v4187, %v4202
    %v4214 = vadd.f32 %v4188, %v4204
    %v4215 = vadd.f32 %v4189, %v4206
    %v4216 = vadd.f32 %v4190, %v4208
    %s4217 = sld [smem:[#allocation6 + $0x389]]
    %v4218 = vstv %s4217
    %v4219 = vmul.f32 %v66, %v4218
    %v4220 = vmul.f32 %v67, %v4218
    %v4221 = vmul.f32 %v68, %v4218
    %v4222 = vmul.f32 %v69, %v4218
    %v4223 = vadd.f32 %v4213, %v4219
    %v4224 = vadd.f32 %v4214, %v4220
    %v4225 = vadd.f32 %v4215, %v4221
    %v4226 = vadd.f32 %v4216, %v4222
    %s4227 = sld [smem:[#allocation6 + $0x38a]]
    %v4228 = vstv %s4227
    %v4229 = vmul.f32 %v66, %v4228
    %v4230 = vmul.f32 %v67, %v4228
    %v4231 = vmul.f32 %v68, %v4228
    %v4232 = vmul.f32 %v69, %v4228
    %4237 = vrot.lane.b32.xlu0 %v4229, 127
    %v4238 = vpop.permute.xlu0 %4237
    %4239 = vrot.lane.b32.xlu0 %v4230, 127
    %v4240 = vpop.permute.xlu0 %4239
    %4241 = vrot.lane.b32.xlu0 %v4231, 127
    %v4242 = vpop.permute.xlu0 %4241
    %4243 = vrot.lane.b32.xlu0 %v4232, 127
    %v4244 = vpop.permute.xlu0 %4243
    %v4249 = vadd.f32 %v4223, %v4238
    %v4250 = vadd.f32 %v4224, %v4240
    %v4251 = vadd.f32 %v4225, %v4242
    %v4252 = vadd.f32 %v4226, %v4244
    %s4253 = sld [smem:[#allocation6 + $0x38b]]
    %v4254 = vstv %s4253
    %v4255 = vmul.f32 %v66, %v4254
    %v4256 = vmul.f32 %v67, %v4254
    %v4257 = vmul.f32 %v68, %v4254
    %v4258 = vmul.f32 %v69, %v4254
    %4263 = vrot.lane.b32.xlu0 %v4255, 126
    %v4264 = vpop.permute.xlu0 %4263
    %4265 = vrot.lane.b32.xlu0 %v4256, 126
    %v4266 = vpop.permute.xlu0 %4265
    %4267 = vrot.lane.b32.xlu0 %v4257, 126
    %v4268 = vpop.permute.xlu0 %4267
    %4269 = vrot.lane.b32.xlu0 %v4258, 126
    %v4270 = vpop.permute.xlu0 %4269
    %v4275 = vadd.f32 %v4249, %v4264
    %v4276 = vadd.f32 %v4250, %v4266
    %v4277 = vadd.f32 %v4251, %v4268
    %v4278 = vadd.f32 %v4252, %v4270
    %s4279 = sld [smem:[#allocation6 + $0x38c]]
    %v4280 = vstv %s4279
    %v4281 = vmul.f32 %v70, %v4280
    %v4282 = vmul.f32 %v71, %v4280
    %v4283 = vmul.f32 %v72, %v4280
    %v4284 = vmul.f32 %v73, %v4280
    %v4285 = vadd.f32 %v4275, %v4281
    %v4286 = vadd.f32 %v4276, %v4282
    %v4287 = vadd.f32 %v4277, %v4283
    %v4288 = vadd.f32 %v4278, %v4284
    %s4289 = sld [smem:[#allocation6 + $0x38d]]
    %v4290 = vstv %s4289
    %v4291 = vmul.f32 %v70, %v4290
    %v4292 = vmul.f32 %v71, %v4290
    %v4293 = vmul.f32 %v72, %v4290
    %v4294 = vmul.f32 %v73, %v4290
    %4299 = vrot.lane.b32.xlu0 %v4291, 127
    %v4300 = vpop.permute.xlu0 %4299
    %4301 = vrot.lane.b32.xlu0 %v4292, 127
    %v4302 = vpop.permute.xlu0 %4301
    %4303 = vrot.lane.b32.xlu0 %v4293, 127
    %v4304 = vpop.permute.xlu0 %4303
    %4305 = vrot.lane.b32.xlu0 %v4294, 127
    %v4306 = vpop.permute.xlu0 %4305
    %v4311 = vadd.f32 %v4285, %v4300
    %v4312 = vadd.f32 %v4286, %v4302
    %v4313 = vadd.f32 %v4287, %v4304
    %v4314 = vadd.f32 %v4288, %v4306
    %s4315 = sld [smem:[#allocation6 + $0x38e]]
    %v4316 = vstv %s4315
    %v4317 = vmul.f32 %v70, %v4316
    %v4318 = vmul.f32 %v71, %v4316
    %v4319 = vmul.f32 %v72, %v4316
    %v4320 = vmul.f32 %v73, %v4316
    %4325 = vrot.lane.b32.xlu0 %v4317, 126
    %v4326 = vpop.permute.xlu0 %4325
    %4327 = vrot.lane.b32.xlu0 %v4318, 126
    %v4328 = vpop.permute.xlu0 %4327
    %4329 = vrot.lane.b32.xlu0 %v4319, 126
    %v4330 = vpop.permute.xlu0 %4329
    %4331 = vrot.lane.b32.xlu0 %v4320, 126
    %v4332 = vpop.permute.xlu0 %4331
    %v4337 = vadd.f32 %v4311, %v4326
    %v4338 = vadd.f32 %v4312, %v4328
    %v4339 = vadd.f32 %v4313, %v4330
    %v4340 = vadd.f32 %v4314, %v4332
    %s4341 = sld [smem:[#allocation6 + $0x38f]]
    %v4342 = vstv %s4341
    %v4343 = vmul.f32 %v74, %v4342
    %v4344 = vmul.f32 %v75, %v4342
    %v4345 = vmul.f32 %v76, %v4342
    %v4346 = vmul.f32 %v77, %v4342
    %v4347 = vadd.f32 %v4337, %v4343
    %v4348 = vadd.f32 %v4338, %v4344
    %v4349 = vadd.f32 %v4339, %v4345
    %v4350 = vadd.f32 %v4340, %v4346
    %s4351 = sld [smem:[#allocation6 + $0x390]]
    %v4352 = vstv %s4351
    %v4353 = vmul.f32 %v74, %v4352
    %v4354 = vmul.f32 %v75, %v4352
    %v4355 = vmul.f32 %v76, %v4352
    %v4356 = vmul.f32 %v77, %v4352
    %4361 = vrot.lane.b32.xlu0 %v4353, 127
    %v4362 = vpop.permute.xlu0 %4361
    %4363 = vrot.lane.b32.xlu0 %v4354, 127
    %v4364 = vpop.permute.xlu0 %4363
    %4365 = vrot.lane.b32.xlu0 %v4355, 127
    %v4366 = vpop.permute.xlu0 %4365
    %4367 = vrot.lane.b32.xlu0 %v4356, 127
    %v4368 = vpop.permute.xlu0 %4367
    %v4373 = vadd.f32 %v4347, %v4362
    %v4374 = vadd.f32 %v4348, %v4364
    %v4375 = vadd.f32 %v4349, %v4366
    %v4376 = vadd.f32 %v4350, %v4368
    %s4377 = sld [smem:[#allocation6 + $0x391]]
    %v4378 = vstv %s4377
    %v4379 = vmul.f32 %v74, %v4378
    %v4380 = vmul.f32 %v75, %v4378
    %v4381 = vmul.f32 %v76, %v4378
    %v4382 = vmul.f32 %v77, %v4378
    %4387 = vrot.lane.b32.xlu0 %v4379, 126
    %v4388 = vpop.permute.xlu0 %4387
    %4389 = vrot.lane.b32.xlu0 %v4380, 126
    %v4390 = vpop.permute.xlu0 %4389
    %4391 = vrot.lane.b32.xlu0 %v4381, 126
    %v4392 = vpop.permute.xlu0 %4391
    %4393 = vrot.lane.b32.xlu0 %v4382, 126
    %v4394 = vpop.permute.xlu0 %4393
    %v4399 = vadd.f32 %v4373, %v4388
    %v4400 = vadd.f32 %v4374, %v4390
    %v4401 = vadd.f32 %v4375, %v4392
    %v4402 = vadd.f32 %v4376, %v4394
    %s4403 = sld [smem:[#allocation6 + $0x392]]
    %v4404 = vstv %s4403
    %v4405 = vmul.f32 %v79, %v4404
    %v4406 = vmul.f32 %v80, %v4404
    %v4407 = vmul.f32 %v81, %v4404
    %v4408 = vmul.f32 %v82, %v4404
    %v4409 = vadd.f32 %v4399, %v4405
    %v4410 = vadd.f32 %v4400, %v4406
    %v4411 = vadd.f32 %v4401, %v4407
    %v4412 = vadd.f32 %v4402, %v4408
    %s4413 = sld [smem:[#allocation6 + $0x393]]
    %v4414 = vstv %s4413
    %v4415 = vmul.f32 %v79, %v4414
    %v4416 = vmul.f32 %v80, %v4414
    %v4417 = vmul.f32 %v81, %v4414
    %v4418 = vmul.f32 %v82, %v4414
    %4423 = vrot.lane.b32.xlu0 %v4415, 127
    %v4424 = vpop.permute.xlu0 %4423
    %4425 = vrot.lane.b32.xlu0 %v4416, 127
    %v4426 = vpop.permute.xlu0 %4425
    %4427 = vrot.lane.b32.xlu0 %v4417, 127
    %v4428 = vpop.permute.xlu0 %4427
    %4429 = vrot.lane.b32.xlu0 %v4418, 127
    %v4430 = vpop.permute.xlu0 %4429
    %v4435 = vadd.f32 %v4409, %v4424
    %v4436 = vadd.f32 %v4410, %v4426
    %v4437 = vadd.f32 %v4411, %v4428
    %v4438 = vadd.f32 %v4412, %v4430
    %s4439 = sld [smem:[#allocation6 + $0x394]]
    %v4440 = vstv %s4439
    %v4441 = vmul.f32 %v79, %v4440
    %v4442 = vmul.f32 %v80, %v4440
    %v4443 = vmul.f32 %v81, %v4440
    %v4444 = vmul.f32 %v82, %v4440
    %4449 = vrot.lane.b32.xlu0 %v4441, 126
    %v4450 = vpop.permute.xlu0 %4449
    %4451 = vrot.lane.b32.xlu0 %v4442, 126
    %v4452 = vpop.permute.xlu0 %4451
    %4453 = vrot.lane.b32.xlu0 %v4443, 126
    %v4454 = vpop.permute.xlu0 %4453
    %4455 = vrot.lane.b32.xlu0 %v4444, 126
    %v4456 = vpop.permute.xlu0 %4455
    %v4461 = vadd.f32 %v4435, %v4450
    %v4462 = vadd.f32 %v4436, %v4452
    %v4463 = vadd.f32 %v4437, %v4454
    %v4464 = vadd.f32 %v4438, %v4456
    %s4465 = sld [smem:[#allocation6 + $0x395]]
    %v4466 = vstv %s4465
    %v4467 = vmul.f32 %v83, %v4466
    %v4468 = vmul.f32 %v84, %v4466
    %v4469 = vmul.f32 %v85, %v4466
    %v4470 = vmul.f32 %v86, %v4466
    %v4471 = vadd.f32 %v4461, %v4467
    %v4472 = vadd.f32 %v4462, %v4468
    %v4473 = vadd.f32 %v4463, %v4469
    %v4474 = vadd.f32 %v4464, %v4470
    %s4475 = sld [smem:[#allocation6 + $0x396]]
    %v4476 = vstv %s4475
    %v4477 = vmul.f32 %v83, %v4476
    %v4478 = vmul.f32 %v84, %v4476
    %v4479 = vmul.f32 %v85, %v4476
    %v4480 = vmul.f32 %v86, %v4476
    %4485 = vrot.lane.b32.xlu0 %v4477, 127
    %v4486 = vpop.permute.xlu0 %4485
    %4487 = vrot.lane.b32.xlu0 %v4478, 127
    %v4488 = vpop.permute.xlu0 %4487
    %4489 = vrot.lane.b32.xlu0 %v4479, 127
    %v4490 = vpop.permute.xlu0 %4489
    %4491 = vrot.lane.b32.xlu0 %v4480, 127
    %v4492 = vpop.permute.xlu0 %4491
    %v4497 = vadd.f32 %v4471, %v4486
    %v4498 = vadd.f32 %v4472, %v4488
    %v4499 = vadd.f32 %v4473, %v4490
    %v4500 = vadd.f32 %v4474, %v4492
    %s4501 = sld [smem:[#allocation6 + $0x397]]
    %v4502 = vstv %s4501
    %v4503 = vmul.f32 %v83, %v4502
    %v4504 = vmul.f32 %v84, %v4502
    %v4505 = vmul.f32 %v85, %v4502
    %v4506 = vmul.f32 %v86, %v4502
    %4511 = vrot.lane.b32.xlu0 %v4503, 126
    %v4512 = vpop.permute.xlu0 %4511
    %4513 = vrot.lane.b32.xlu0 %v4504, 126
    %v4514 = vpop.permute.xlu0 %4513
    %4515 = vrot.lane.b32.xlu0 %v4505, 126
    %v4516 = vpop.permute.xlu0 %4515
    %4517 = vrot.lane.b32.xlu0 %v4506, 126
    %v4518 = vpop.permute.xlu0 %4517
    %v4523 = vadd.f32 %v4497, %v4512
    %v4524 = vadd.f32 %v4498, %v4514
    %v4525 = vadd.f32 %v4499, %v4516
    %v4526 = vadd.f32 %v4500, %v4518
    %s4527 = sld [smem:[#allocation6 + $0x398]]
    %v4528 = vstv %s4527
    %v4529 = vmul.f32 %v87, %v4528
    %v4530 = vmul.f32 %v88, %v4528
    %v4531 = vmul.f32 %v89, %v4528
    %v4532 = vmul.f32 %v90, %v4528
    %v4533 = vadd.f32 %v4523, %v4529
    %v4534 = vadd.f32 %v4524, %v4530
    %v4535 = vadd.f32 %v4525, %v4531
    %v4536 = vadd.f32 %v4526, %v4532
    %s4537 = sld [smem:[#allocation6 + $0x399]]
    %v4538 = vstv %s4537
    %v4539 = vmul.f32 %v87, %v4538
    %v4540 = vmul.f32 %v88, %v4538
    %v4541 = vmul.f32 %v89, %v4538
    %v4542 = vmul.f32 %v90, %v4538
    %4547 = vrot.lane.b32.xlu0 %v4539, 127
    %v4548 = vpop.permute.xlu0 %4547
    %4549 = vrot.lane.b32.xlu0 %v4540, 127
    %v4550 = vpop.permute.xlu0 %4549
    %4551 = vrot.lane.b32.xlu0 %v4541, 127
    %v4552 = vpop.permute.xlu0 %4551
    %4553 = vrot.lane.b32.xlu0 %v4542, 127
    %v4554 = vpop.permute.xlu0 %4553
    %v4559 = vadd.f32 %v4533, %v4548
    %v4560 = vadd.f32 %v4534, %v4550
    %v4561 = vadd.f32 %v4535, %v4552
    %v4562 = vadd.f32 %v4536, %v4554
    %s4563 = sld [smem:[#allocation6 + $0x39a]]
    %v4564 = vstv %s4563
    %v4565 = vmul.f32 %v87, %v4564
    %v4566 = vmul.f32 %v88, %v4564
    %v4567 = vmul.f32 %v89, %v4564
    %v4568 = vmul.f32 %v90, %v4564
    %4573 = vrot.lane.b32.xlu0 %v4565, 126
    %v4574 = vpop.permute.xlu0 %4573
    %4575 = vrot.lane.b32.xlu0 %v4566, 126
    %v4576 = vpop.permute.xlu0 %4575
    %4577 = vrot.lane.b32.xlu0 %v4567, 126
    %v4578 = vpop.permute.xlu0 %4577
    %4579 = vrot.lane.b32.xlu0 %v4568, 126
    %v4580 = vpop.permute.xlu0 %4579
    %v4585 = vadd.f32 %v4559, %v4574
    %v4586 = vadd.f32 %v4560, %v4576
    %v4587 = vadd.f32 %v4561, %v4578
    %v4588 = vadd.f32 %v4562, %v4580
    %s4589 = sld [smem:[#allocation7 + $0x7]]
    %v4590 = vstv %s4589
    %v4591 = vadd.f32 %v4585, %v4590
    %v4592 = vadd.f32 %v4586, %v4590
    %v4593 = vadd.f32 %v4587, %v4590
    %v4594 = vadd.f32 %v4588, %v4590
    %v4595 = vmin.f32 %v4031, %v4591
    %v4596 = vmin.f32 %v4032, %v4592
    %v4597 = vmin.f32 %v4033, %v4593
    %v4598 = vmin.f32 %v4034, %v4594
    %s4599 = sld [smem:[#allocation6 + $0x400]]
    %v4600 = vstv %s4599
    %v4601 = vmul.f32 %v53, %v4600
    %v4602 = vmul.f32 %v54, %v4600
    %v4603 = vmul.f32 %v55, %v4600
    %v4604 = vmul.f32 %v56, %v4600
    %s4605 = sld [smem:[#allocation6 + $0x401]]
    %v4606 = vstv %s4605
    %v4607 = vmul.f32 %v53, %v4606
    %v4608 = vmul.f32 %v54, %v4606
    %v4609 = vmul.f32 %v55, %v4606
    %v4610 = vmul.f32 %v56, %v4606
    %4615 = vrot.lane.b32.xlu0 %v4607, 127
    %v4616 = vpop.permute.xlu0 %4615
    %4617 = vrot.lane.b32.xlu0 %v4608, 127
    %v4618 = vpop.permute.xlu0 %4617
    %4619 = vrot.lane.b32.xlu0 %v4609, 127
    %v4620 = vpop.permute.xlu0 %4619
    %4621 = vrot.lane.b32.xlu0 %v4610, 127
    %v4622 = vpop.permute.xlu0 %4621
    %v4627 = vadd.f32 %v4601, %v4616
    %v4628 = vadd.f32 %v4602, %v4618
    %v4629 = vadd.f32 %v4603, %v4620
    %v4630 = vadd.f32 %v4604, %v4622
    %s4631 = sld [smem:[#allocation6 + $0x402]]
    %v4632 = vstv %s4631
    %v4633 = vmul.f32 %v53, %v4632
    %v4634 = vmul.f32 %v54, %v4632
    %v4635 = vmul.f32 %v55, %v4632
    %v4636 = vmul.f32 %v56, %v4632
    %4641 = vrot.lane.b32.xlu0 %v4633, 126
    %v4642 = vpop.permute.xlu0 %4641
    %4643 = vrot.lane.b32.xlu0 %v4634, 126
    %v4644 = vpop.permute.xlu0 %4643
    %4645 = vrot.lane.b32.xlu0 %v4635, 126
    %v4646 = vpop.permute.xlu0 %4645
    %4647 = vrot.lane.b32.xlu0 %v4636, 126
    %v4648 = vpop.permute.xlu0 %4647
    %v4653 = vadd.f32 %v4627, %v4642
    %v4654 = vadd.f32 %v4628, %v4644
    %v4655 = vadd.f32 %v4629, %v4646
    %v4656 = vadd.f32 %v4630, %v4648
    %s4657 = sld [smem:[#allocation6 + $0x403]]
    %v4658 = vstv %s4657
    %v4659 = vmul.f32 %v57, %v4658
    %v4660 = vmul.f32 %v58, %v4658
    %v4661 = vmul.f32 %v59, %v4658
    %v4662 = vmul.f32 %v60, %v4658
    %v4663 = vadd.f32 %v4653, %v4659
    %v4664 = vadd.f32 %v4654, %v4660
    %v4665 = vadd.f32 %v4655, %v4661
    %v4666 = vadd.f32 %v4656, %v4662
    %s4667 = sld [smem:[#allocation6 + $0x404]]
    %v4668 = vstv %s4667
    %v4669 = vmul.f32 %v57, %v4668
    %v4670 = vmul.f32 %v58, %v4668
    %v4671 = vmul.f32 %v59, %v4668
    %v4672 = vmul.f32 %v60, %v4668
    %4677 = vrot.lane.b32.xlu0 %v4669, 127
    %v4678 = vpop.permute.xlu0 %4677
    %4679 = vrot.lane.b32.xlu0 %v4670, 127
    %v4680 = vpop.permute.xlu0 %4679
    %4681 = vrot.lane.b32.xlu0 %v4671, 127
    %v4682 = vpop.permute.xlu0 %4681
    %4683 = vrot.lane.b32.xlu0 %v4672, 127
    %v4684 = vpop.permute.xlu0 %4683
    %v4689 = vadd.f32 %v4663, %v4678
    %v4690 = vadd.f32 %v4664, %v4680
    %v4691 = vadd.f32 %v4665, %v4682
    %v4692 = vadd.f32 %v4666, %v4684
    %s4693 = sld [smem:[#allocation6 + $0x405]]
    %v4694 = vstv %s4693
    %v4695 = vmul.f32 %v57, %v4694
    %v4696 = vmul.f32 %v58, %v4694
    %v4697 = vmul.f32 %v59, %v4694
    %v4698 = vmul.f32 %v60, %v4694
    %4703 = vrot.lane.b32.xlu0 %v4695, 126
    %v4704 = vpop.permute.xlu0 %4703
    %4705 = vrot.lane.b32.xlu0 %v4696, 126
    %v4706 = vpop.permute.xlu0 %4705
    %4707 = vrot.lane.b32.xlu0 %v4697, 126
    %v4708 = vpop.permute.xlu0 %4707
    %4709 = vrot.lane.b32.xlu0 %v4698, 126
    %v4710 = vpop.permute.xlu0 %4709
    %v4715 = vadd.f32 %v4689, %v4704
    %v4716 = vadd.f32 %v4690, %v4706
    %v4717 = vadd.f32 %v4691, %v4708
    %v4718 = vadd.f32 %v4692, %v4710
    %s4719 = sld [smem:[#allocation6 + $0x406]]
    %v4720 = vstv %s4719
    %v4721 = vmul.f32 %v61, %v4720
    %v4722 = vmul.f32 %v62, %v4720
    %v4723 = vmul.f32 %v63, %v4720
    %v4724 = vmul.f32 %v64, %v4720
    %v4725 = vadd.f32 %v4715, %v4721
    %v4726 = vadd.f32 %v4716, %v4722
    %v4727 = vadd.f32 %v4717, %v4723
    %v4728 = vadd.f32 %v4718, %v4724
    %s4729 = sld [smem:[#allocation6 + $0x407]]
    %v4730 = vstv %s4729
    %v4731 = vmul.f32 %v61, %v4730
    %v4732 = vmul.f32 %v62, %v4730
    %v4733 = vmul.f32 %v63, %v4730
    %v4734 = vmul.f32 %v64, %v4730
    %4739 = vrot.lane.b32.xlu0 %v4731, 127
    %v4740 = vpop.permute.xlu0 %4739
    %4741 = vrot.lane.b32.xlu0 %v4732, 127
    %v4742 = vpop.permute.xlu0 %4741
    %4743 = vrot.lane.b32.xlu0 %v4733, 127
    %v4744 = vpop.permute.xlu0 %4743
    %4745 = vrot.lane.b32.xlu0 %v4734, 127
    %v4746 = vpop.permute.xlu0 %4745
    %v4751 = vadd.f32 %v4725, %v4740
    %v4752 = vadd.f32 %v4726, %v4742
    %v4753 = vadd.f32 %v4727, %v4744
    %v4754 = vadd.f32 %v4728, %v4746
    %s4755 = sld [smem:[#allocation6 + $0x408]]
    %v4756 = vstv %s4755
    %v4757 = vmul.f32 %v61, %v4756
    %v4758 = vmul.f32 %v62, %v4756
    %v4759 = vmul.f32 %v63, %v4756
    %v4760 = vmul.f32 %v64, %v4756
    %4765 = vrot.lane.b32.xlu0 %v4757, 126
    %v4766 = vpop.permute.xlu0 %4765
    %4767 = vrot.lane.b32.xlu0 %v4758, 126
    %v4768 = vpop.permute.xlu0 %4767
    %4769 = vrot.lane.b32.xlu0 %v4759, 126
    %v4770 = vpop.permute.xlu0 %4769
    %4771 = vrot.lane.b32.xlu0 %v4760, 126
    %v4772 = vpop.permute.xlu0 %4771
    %v4777 = vadd.f32 %v4751, %v4766
    %v4778 = vadd.f32 %v4752, %v4768
    %v4779 = vadd.f32 %v4753, %v4770
    %v4780 = vadd.f32 %v4754, %v4772
    %s4781 = sld [smem:[#allocation6 + $0x409]]
    %v4782 = vstv %s4781
    %v4783 = vmul.f32 %v66, %v4782
    %v4784 = vmul.f32 %v67, %v4782
    %v4785 = vmul.f32 %v68, %v4782
    %v4786 = vmul.f32 %v69, %v4782
    %v4787 = vadd.f32 %v4777, %v4783
    %v4788 = vadd.f32 %v4778, %v4784
    %v4789 = vadd.f32 %v4779, %v4785
    %v4790 = vadd.f32 %v4780, %v4786
    %s4791 = sld [smem:[#allocation6 + $0x40a]]
    %v4792 = vstv %s4791
    %v4793 = vmul.f32 %v66, %v4792
    %v4794 = vmul.f32 %v67, %v4792
    %v4795 = vmul.f32 %v68, %v4792
    %v4796 = vmul.f32 %v69, %v4792
    %4801 = vrot.lane.b32.xlu0 %v4793, 127
    %v4802 = vpop.permute.xlu0 %4801
    %4803 = vrot.lane.b32.xlu0 %v4794, 127
    %v4804 = vpop.permute.xlu0 %4803
    %4805 = vrot.lane.b32.xlu0 %v4795, 127
    %v4806 = vpop.permute.xlu0 %4805
    %4807 = vrot.lane.b32.xlu0 %v4796, 127
    %v4808 = vpop.permute.xlu0 %4807
    %v4813 = vadd.f32 %v4787, %v4802
    %v4814 = vadd.f32 %v4788, %v4804
    %v4815 = vadd.f32 %v4789, %v4806
    %v4816 = vadd.f32 %v4790, %v4808
    %s4817 = sld [smem:[#allocation6 + $0x40b]]
    %v4818 = vstv %s4817
    %v4819 = vmul.f32 %v66, %v4818
    %v4820 = vmul.f32 %v67, %v4818
    %v4821 = vmul.f32 %v68, %v4818
    %v4822 = vmul.f32 %v69, %v4818
    %4827 = vrot.lane.b32.xlu0 %v4819, 126
    %v4828 = vpop.permute.xlu0 %4827
    %4829 = vrot.lane.b32.xlu0 %v4820, 126
    %v4830 = vpop.permute.xlu0 %4829
    %4831 = vrot.lane.b32.xlu0 %v4821, 126
    %v4832 = vpop.permute.xlu0 %4831
    %4833 = vrot.lane.b32.xlu0 %v4822, 126
    %v4834 = vpop.permute.xlu0 %4833
    %v4839 = vadd.f32 %v4813, %v4828
    %v4840 = vadd.f32 %v4814, %v4830
    %v4841 = vadd.f32 %v4815, %v4832
    %v4842 = vadd.f32 %v4816, %v4834
    %s4843 = sld [smem:[#allocation6 + $0x40c]]
    %v4844 = vstv %s4843
    %v4845 = vmul.f32 %v70, %v4844
    %v4846 = vmul.f32 %v71, %v4844
    %v4847 = vmul.f32 %v72, %v4844
    %v4848 = vmul.f32 %v73, %v4844
    %v4849 = vadd.f32 %v4839, %v4845
    %v4850 = vadd.f32 %v4840, %v4846
    %v4851 = vadd.f32 %v4841, %v4847
    %v4852 = vadd.f32 %v4842, %v4848
    %s4853 = sld [smem:[#allocation6 + $0x40d]]
    %v4854 = vstv %s4853
    %v4855 = vmul.f32 %v70, %v4854
    %v4856 = vmul.f32 %v71, %v4854
    %v4857 = vmul.f32 %v72, %v4854
    %v4858 = vmul.f32 %v73, %v4854
    %4863 = vrot.lane.b32.xlu0 %v4855, 127
    %v4864 = vpop.permute.xlu0 %4863
    %4865 = vrot.lane.b32.xlu0 %v4856, 127
    %v4866 = vpop.permute.xlu0 %4865
    %4867 = vrot.lane.b32.xlu0 %v4857, 127
    %v4868 = vpop.permute.xlu0 %4867
    %4869 = vrot.lane.b32.xlu0 %v4858, 127
    %v4870 = vpop.permute.xlu0 %4869
    %v4875 = vadd.f32 %v4849, %v4864
    %v4876 = vadd.f32 %v4850, %v4866
    %v4877 = vadd.f32 %v4851, %v4868
    %v4878 = vadd.f32 %v4852, %v4870
    %s4879 = sld [smem:[#allocation6 + $0x40e]]
    %v4880 = vstv %s4879
    %v4881 = vmul.f32 %v70, %v4880
    %v4882 = vmul.f32 %v71, %v4880
    %v4883 = vmul.f32 %v72, %v4880
    %v4884 = vmul.f32 %v73, %v4880
    %4889 = vrot.lane.b32.xlu0 %v4881, 126
    %v4890 = vpop.permute.xlu0 %4889
    %4891 = vrot.lane.b32.xlu0 %v4882, 126
    %v4892 = vpop.permute.xlu0 %4891
    %4893 = vrot.lane.b32.xlu0 %v4883, 126
    %v4894 = vpop.permute.xlu0 %4893
    %4895 = vrot.lane.b32.xlu0 %v4884, 126
    %v4896 = vpop.permute.xlu0 %4895
    %v4901 = vadd.f32 %v4875, %v4890
    %v4902 = vadd.f32 %v4876, %v4892
    %v4903 = vadd.f32 %v4877, %v4894
    %v4904 = vadd.f32 %v4878, %v4896
    %s4905 = sld [smem:[#allocation6 + $0x40f]]
    %v4906 = vstv %s4905
    %v4907 = vmul.f32 %v74, %v4906
    %v4908 = vmul.f32 %v75, %v4906
    %v4909 = vmul.f32 %v76, %v4906
    %v4910 = vmul.f32 %v77, %v4906
    %v4911 = vadd.f32 %v4901, %v4907
    %v4912 = vadd.f32 %v4902, %v4908
    %v4913 = vadd.f32 %v4903, %v4909
    %v4914 = vadd.f32 %v4904, %v4910
    %s4915 = sld [smem:[#allocation6 + $0x410]]
    %v4916 = vstv %s4915
    %v4917 = vmul.f32 %v74, %v4916
    %v4918 = vmul.f32 %v75, %v4916
    %v4919 = vmul.f32 %v76, %v4916
    %v4920 = vmul.f32 %v77, %v4916
    %4925 = vrot.lane.b32.xlu0 %v4917, 127
    %v4926 = vpop.permute.xlu0 %4925
    %4927 = vrot.lane.b32.xlu0 %v4918, 127
    %v4928 = vpop.permute.xlu0 %4927
    %4929 = vrot.lane.b32.xlu0 %v4919, 127
    %v4930 = vpop.permute.xlu0 %4929
    %4931 = vrot.lane.b32.xlu0 %v4920, 127
    %v4932 = vpop.permute.xlu0 %4931
    %v4937 = vadd.f32 %v4911, %v4926
    %v4938 = vadd.f32 %v4912, %v4928
    %v4939 = vadd.f32 %v4913, %v4930
    %v4940 = vadd.f32 %v4914, %v4932
    %s4941 = sld [smem:[#allocation6 + $0x411]]
    %v4942 = vstv %s4941
    %v4943 = vmul.f32 %v74, %v4942
    %v4944 = vmul.f32 %v75, %v4942
    %v4945 = vmul.f32 %v76, %v4942
    %v4946 = vmul.f32 %v77, %v4942
    %4951 = vrot.lane.b32.xlu0 %v4943, 126
    %v4952 = vpop.permute.xlu0 %4951
    %4953 = vrot.lane.b32.xlu0 %v4944, 126
    %v4954 = vpop.permute.xlu0 %4953
    %4955 = vrot.lane.b32.xlu0 %v4945, 126
    %v4956 = vpop.permute.xlu0 %4955
    %4957 = vrot.lane.b32.xlu0 %v4946, 126
    %v4958 = vpop.permute.xlu0 %4957
    %v4963 = vadd.f32 %v4937, %v4952
    %v4964 = vadd.f32 %v4938, %v4954
    %v4965 = vadd.f32 %v4939, %v4956
    %v4966 = vadd.f32 %v4940, %v4958
    %s4967 = sld [smem:[#allocation6 + $0x412]]
    %v4968 = vstv %s4967
    %v4969 = vmul.f32 %v79, %v4968
    %v4970 = vmul.f32 %v80, %v4968
    %v4971 = vmul.f32 %v81, %v4968
    %v4972 = vmul.f32 %v82, %v4968
    %v4973 = vadd.f32 %v4963, %v4969
    %v4974 = vadd.f32 %v4964, %v4970
    %v4975 = vadd.f32 %v4965, %v4971
    %v4976 = vadd.f32 %v4966, %v4972
    %s4977 = sld [smem:[#allocation6 + $0x413]]
    %v4978 = vstv %s4977
    %v4979 = vmul.f32 %v79, %v4978
    %v4980 = vmul.f32 %v80, %v4978
    %v4981 = vmul.f32 %v81, %v4978
    %v4982 = vmul.f32 %v82, %v4978
    %4987 = vrot.lane.b32.xlu0 %v4979, 127
    %v4988 = vpop.permute.xlu0 %4987
    %4989 = vrot.lane.b32.xlu0 %v4980, 127
    %v4990 = vpop.permute.xlu0 %4989
    %4991 = vrot.lane.b32.xlu0 %v4981, 127
    %v4992 = vpop.permute.xlu0 %4991
    %4993 = vrot.lane.b32.xlu0 %v4982, 127
    %v4994 = vpop.permute.xlu0 %4993
    %v4999 = vadd.f32 %v4973, %v4988
    %v5000 = vadd.f32 %v4974, %v4990
    %v5001 = vadd.f32 %v4975, %v4992
    %v5002 = vadd.f32 %v4976, %v4994
    %s5003 = sld [smem:[#allocation6 + $0x414]]
    %v5004 = vstv %s5003
    %v5005 = vmul.f32 %v79, %v5004
    %v5006 = vmul.f32 %v80, %v5004
    %v5007 = vmul.f32 %v81, %v5004
    %v5008 = vmul.f32 %v82, %v5004
    %5013 = vrot.lane.b32.xlu0 %v5005, 126
    %v5014 = vpop.permute.xlu0 %5013
    %5015 = vrot.lane.b32.xlu0 %v5006, 126
    %v5016 = vpop.permute.xlu0 %5015
    %5017 = vrot.lane.b32.xlu0 %v5007, 126
    %v5018 = vpop.permute.xlu0 %5017
    %5019 = vrot.lane.b32.xlu0 %v5008, 126
    %v5020 = vpop.permute.xlu0 %5019
    %v5025 = vadd.f32 %v4999, %v5014
    %v5026 = vadd.f32 %v5000, %v5016
    %v5027 = vadd.f32 %v5001, %v5018
    %v5028 = vadd.f32 %v5002, %v5020
    %s5029 = sld [smem:[#allocation6 + $0x415]]
    %v5030 = vstv %s5029
    %v5031 = vmul.f32 %v83, %v5030
    %v5032 = vmul.f32 %v84, %v5030
    %v5033 = vmul.f32 %v85, %v5030
    %v5034 = vmul.f32 %v86, %v5030
    %v5035 = vadd.f32 %v5025, %v5031
    %v5036 = vadd.f32 %v5026, %v5032
    %v5037 = vadd.f32 %v5027, %v5033
    %v5038 = vadd.f32 %v5028, %v5034
    %s5039 = sld [smem:[#allocation6 + $0x416]]
    %v5040 = vstv %s5039
    %v5041 = vmul.f32 %v83, %v5040
    %v5042 = vmul.f32 %v84, %v5040
    %v5043 = vmul.f32 %v85, %v5040
    %v5044 = vmul.f32 %v86, %v5040
    %5049 = vrot.lane.b32.xlu0 %v5041, 127
    %v5050 = vpop.permute.xlu0 %5049
    %5051 = vrot.lane.b32.xlu0 %v5042, 127
    %v5052 = vpop.permute.xlu0 %5051
    %5053 = vrot.lane.b32.xlu0 %v5043, 127
    %v5054 = vpop.permute.xlu0 %5053
    %5055 = vrot.lane.b32.xlu0 %v5044, 127
    %v5056 = vpop.permute.xlu0 %5055
    %v5061 = vadd.f32 %v5035, %v5050
    %v5062 = vadd.f32 %v5036, %v5052
    %v5063 = vadd.f32 %v5037, %v5054
    %v5064 = vadd.f32 %v5038, %v5056
    %s5065 = sld [smem:[#allocation6 + $0x417]]
    %v5066 = vstv %s5065
    %v5067 = vmul.f32 %v83, %v5066
    %v5068 = vmul.f32 %v84, %v5066
    %v5069 = vmul.f32 %v85, %v5066
    %v5070 = vmul.f32 %v86, %v5066
    %5075 = vrot.lane.b32.xlu0 %v5067, 126
    %v5076 = vpop.permute.xlu0 %5075
    %5077 = vrot.lane.b32.xlu0 %v5068, 126
    %v5078 = vpop.permute.xlu0 %5077
    %5079 = vrot.lane.b32.xlu0 %v5069, 126
    %v5080 = vpop.permute.xlu0 %5079
    %5081 = vrot.lane.b32.xlu0 %v5070, 126
    %v5082 = vpop.permute.xlu0 %5081
    %v5087 = vadd.f32 %v5061, %v5076
    %v5088 = vadd.f32 %v5062, %v5078
    %v5089 = vadd.f32 %v5063, %v5080
    %v5090 = vadd.f32 %v5064, %v5082
    %s5091 = sld [smem:[#allocation6 + $0x418]]
    %v5092 = vstv %s5091
    %v5093 = vmul.f32 %v87, %v5092
    %v5094 = vmul.f32 %v88, %v5092
    %v5095 = vmul.f32 %v89, %v5092
    %v5096 = vmul.f32 %v90, %v5092
    %v5097 = vadd.f32 %v5087, %v5093
    %v5098 = vadd.f32 %v5088, %v5094
    %v5099 = vadd.f32 %v5089, %v5095
    %v5100 = vadd.f32 %v5090, %v5096
    %s5101 = sld [smem:[#allocation6 + $0x419]]
    %v5102 = vstv %s5101
    %v5103 = vmul.f32 %v87, %v5102
    %v5104 = vmul.f32 %v88, %v5102
    %v5105 = vmul.f32 %v89, %v5102
    %v5106 = vmul.f32 %v90, %v5102
    %5111 = vrot.lane.b32.xlu0 %v5103, 127
    %v5112 = vpop.permute.xlu0 %5111
    %5113 = vrot.lane.b32.xlu0 %v5104, 127
    %v5114 = vpop.permute.xlu0 %5113
    %5115 = vrot.lane.b32.xlu0 %v5105, 127
    %v5116 = vpop.permute.xlu0 %5115
    %5117 = vrot.lane.b32.xlu0 %v5106, 127
    %v5118 = vpop.permute.xlu0 %5117
    %v5123 = vadd.f32 %v5097, %v5112
    %v5124 = vadd.f32 %v5098, %v5114
    %v5125 = vadd.f32 %v5099, %v5116
    %v5126 = vadd.f32 %v5100, %v5118
    %s5127 = sld [smem:[#allocation6 + $0x41a]]
    %v5128 = vstv %s5127
    %v5129 = vmul.f32 %v87, %v5128
    %v5130 = vmul.f32 %v88, %v5128
    %v5131 = vmul.f32 %v89, %v5128
    %v5132 = vmul.f32 %v90, %v5128
    %5137 = vrot.lane.b32.xlu0 %v5129, 126
    %v5138 = vpop.permute.xlu0 %5137
    %5139 = vrot.lane.b32.xlu0 %v5130, 126
    %v5140 = vpop.permute.xlu0 %5139
    %5141 = vrot.lane.b32.xlu0 %v5131, 126
    %v5142 = vpop.permute.xlu0 %5141
    %5143 = vrot.lane.b32.xlu0 %v5132, 126
    %v5144 = vpop.permute.xlu0 %5143
    %v5149 = vadd.f32 %v5123, %v5138
    %v5150 = vadd.f32 %v5124, %v5140
    %v5151 = vadd.f32 %v5125, %v5142
    %v5152 = vadd.f32 %v5126, %v5144
    %s5153 = sld [smem:[#allocation7 + $0x8]]
    %v5154 = vstv %s5153
    %v5155 = vadd.f32 %v5149, %v5154
    %v5156 = vadd.f32 %v5150, %v5154
    %v5157 = vadd.f32 %v5151, %v5154
    %v5158 = vadd.f32 %v5152, %v5154
    %v5159 = vmin.f32 %v4595, %v5155
    %v5160 = vmin.f32 %v4596, %v5156
    %v5161 = vmin.f32 %v4597, %v5157
    %v5162 = vmin.f32 %v4598, %v5158
    %s5163 = sld [smem:[#allocation6 + $0x480]]
    %v5164 = vstv %s5163
    %v5165 = vmul.f32 %v53, %v5164
    %v5166 = vmul.f32 %v54, %v5164
    %v5167 = vmul.f32 %v55, %v5164
    %v5168 = vmul.f32 %v56, %v5164
    %s5169 = sld [smem:[#allocation6 + $0x481]]
    %v5170 = vstv %s5169
    %v5171 = vmul.f32 %v53, %v5170
    %v5172 = vmul.f32 %v54, %v5170
    %v5173 = vmul.f32 %v55, %v5170
    %v5174 = vmul.f32 %v56, %v5170
    %5179 = vrot.lane.b32.xlu0 %v5171, 127
    %v5180 = vpop.permute.xlu0 %5179
    %5181 = vrot.lane.b32.xlu0 %v5172, 127
    %v5182 = vpop.permute.xlu0 %5181
    %5183 = vrot.lane.b32.xlu0 %v5173, 127
    %v5184 = vpop.permute.xlu0 %5183
    %5185 = vrot.lane.b32.xlu0 %v5174, 127
    %v5186 = vpop.permute.xlu0 %5185
    %v5191 = vadd.f32 %v5165, %v5180
    %v5192 = vadd.f32 %v5166, %v5182
    %v5193 = vadd.f32 %v5167, %v5184
    %v5194 = vadd.f32 %v5168, %v5186
    %s5195 = sld [smem:[#allocation6 + $0x482]]
    %v5196 = vstv %s5195
    %v5197 = vmul.f32 %v53, %v5196
    %v5198 = vmul.f32 %v54, %v5196
    %v5199 = vmul.f32 %v55, %v5196
    %v5200 = vmul.f32 %v56, %v5196
    %5205 = vrot.lane.b32.xlu0 %v5197, 126
    %v5206 = vpop.permute.xlu0 %5205
    %5207 = vrot.lane.b32.xlu0 %v5198, 126
    %v5208 = vpop.permute.xlu0 %5207
    %5209 = vrot.lane.b32.xlu0 %v5199, 126
    %v5210 = vpop.permute.xlu0 %5209
    %5211 = vrot.lane.b32.xlu0 %v5200, 126
    %v5212 = vpop.permute.xlu0 %5211
    %v5217 = vadd.f32 %v5191, %v5206
    %v5218 = vadd.f32 %v5192, %v5208
    %v5219 = vadd.f32 %v5193, %v5210
    %v5220 = vadd.f32 %v5194, %v5212
    %s5221 = sld [smem:[#allocation6 + $0x483]]
    %v5222 = vstv %s5221
    %v5223 = vmul.f32 %v57, %v5222
    %v5224 = vmul.f32 %v58, %v5222
    %v5225 = vmul.f32 %v59, %v5222
    %v5226 = vmul.f32 %v60, %v5222
    %v5227 = vadd.f32 %v5217, %v5223
    %v5228 = vadd.f32 %v5218, %v5224
    %v5229 = vadd.f32 %v5219, %v5225
    %v5230 = vadd.f32 %v5220, %v5226
    %s5231 = sld [smem:[#allocation6 + $0x484]]
    %v5232 = vstv %s5231
    %v5233 = vmul.f32 %v57, %v5232
    %v5234 = vmul.f32 %v58, %v5232
    %v5235 = vmul.f32 %v59, %v5232
    %v5236 = vmul.f32 %v60, %v5232
    %5241 = vrot.lane.b32.xlu0 %v5233, 127
    %v5242 = vpop.permute.xlu0 %5241
    %5243 = vrot.lane.b32.xlu0 %v5234, 127
    %v5244 = vpop.permute.xlu0 %5243
    %5245 = vrot.lane.b32.xlu0 %v5235, 127
    %v5246 = vpop.permute.xlu0 %5245
    %5247 = vrot.lane.b32.xlu0 %v5236, 127
    %v5248 = vpop.permute.xlu0 %5247
    %v5253 = vadd.f32 %v5227, %v5242
    %v5254 = vadd.f32 %v5228, %v5244
    %v5255 = vadd.f32 %v5229, %v5246
    %v5256 = vadd.f32 %v5230, %v5248
    %s5257 = sld [smem:[#allocation6 + $0x485]]
    %v5258 = vstv %s5257
    %v5259 = vmul.f32 %v57, %v5258
    %v5260 = vmul.f32 %v58, %v5258
    %v5261 = vmul.f32 %v59, %v5258
    %v5262 = vmul.f32 %v60, %v5258
    %5267 = vrot.lane.b32.xlu0 %v5259, 126
    %v5268 = vpop.permute.xlu0 %5267
    %5269 = vrot.lane.b32.xlu0 %v5260, 126
    %v5270 = vpop.permute.xlu0 %5269
    %5271 = vrot.lane.b32.xlu0 %v5261, 126
    %v5272 = vpop.permute.xlu0 %5271
    %5273 = vrot.lane.b32.xlu0 %v5262, 126
    %v5274 = vpop.permute.xlu0 %5273
    %v5279 = vadd.f32 %v5253, %v5268
    %v5280 = vadd.f32 %v5254, %v5270
    %v5281 = vadd.f32 %v5255, %v5272
    %v5282 = vadd.f32 %v5256, %v5274
    %s5283 = sld [smem:[#allocation6 + $0x486]]
    %v5284 = vstv %s5283
    %v5285 = vmul.f32 %v61, %v5284
    %v5286 = vmul.f32 %v62, %v5284
    %v5287 = vmul.f32 %v63, %v5284
    %v5288 = vmul.f32 %v64, %v5284
    %v5289 = vadd.f32 %v5279, %v5285
    %v5290 = vadd.f32 %v5280, %v5286
    %v5291 = vadd.f32 %v5281, %v5287
    %v5292 = vadd.f32 %v5282, %v5288
    %s5293 = sld [smem:[#allocation6 + $0x487]]
    %v5294 = vstv %s5293
    %v5295 = vmul.f32 %v61, %v5294
    %v5296 = vmul.f32 %v62, %v5294
    %v5297 = vmul.f32 %v63, %v5294
    %v5298 = vmul.f32 %v64, %v5294
    %5303 = vrot.lane.b32.xlu0 %v5295, 127
    %v5304 = vpop.permute.xlu0 %5303
    %5305 = vrot.lane.b32.xlu0 %v5296, 127
    %v5306 = vpop.permute.xlu0 %5305
    %5307 = vrot.lane.b32.xlu0 %v5297, 127
    %v5308 = vpop.permute.xlu0 %5307
    %5309 = vrot.lane.b32.xlu0 %v5298, 127
    %v5310 = vpop.permute.xlu0 %5309
    %v5315 = vadd.f32 %v5289, %v5304
    %v5316 = vadd.f32 %v5290, %v5306
    %v5317 = vadd.f32 %v5291, %v5308
    %v5318 = vadd.f32 %v5292, %v5310
    %s5319 = sld [smem:[#allocation6 + $0x488]]
    %v5320 = vstv %s5319
    %v5321 = vmul.f32 %v61, %v5320
    %v5322 = vmul.f32 %v62, %v5320
    %v5323 = vmul.f32 %v63, %v5320
    %v5324 = vmul.f32 %v64, %v5320
    %5329 = vrot.lane.b32.xlu0 %v5321, 126
    %v5330 = vpop.permute.xlu0 %5329
    %5331 = vrot.lane.b32.xlu0 %v5322, 126
    %v5332 = vpop.permute.xlu0 %5331
    %5333 = vrot.lane.b32.xlu0 %v5323, 126
    %v5334 = vpop.permute.xlu0 %5333
    %5335 = vrot.lane.b32.xlu0 %v5324, 126
    %v5336 = vpop.permute.xlu0 %5335
    %v5341 = vadd.f32 %v5315, %v5330
    %v5342 = vadd.f32 %v5316, %v5332
    %v5343 = vadd.f32 %v5317, %v5334
    %v5344 = vadd.f32 %v5318, %v5336
    %s5345 = sld [smem:[#allocation6 + $0x489]]
    %v5346 = vstv %s5345
    %v5347 = vmul.f32 %v66, %v5346
    %v5348 = vmul.f32 %v67, %v5346
    %v5349 = vmul.f32 %v68, %v5346
    %v5350 = vmul.f32 %v69, %v5346
    %v5351 = vadd.f32 %v5341, %v5347
    %v5352 = vadd.f32 %v5342, %v5348
    %v5353 = vadd.f32 %v5343, %v5349
    %v5354 = vadd.f32 %v5344, %v5350
    %s5355 = sld [smem:[#allocation6 + $0x48a]]
    %v5356 = vstv %s5355
    %v5357 = vmul.f32 %v66, %v5356
    %v5358 = vmul.f32 %v67, %v5356
    %v5359 = vmul.f32 %v68, %v5356
    %v5360 = vmul.f32 %v69, %v5356
    %5365 = vrot.lane.b32.xlu0 %v5357, 127
    %v5366 = vpop.permute.xlu0 %5365
    %5367 = vrot.lane.b32.xlu0 %v5358, 127
    %v5368 = vpop.permute.xlu0 %5367
    %5369 = vrot.lane.b32.xlu0 %v5359, 127
    %v5370 = vpop.permute.xlu0 %5369
    %5371 = vrot.lane.b32.xlu0 %v5360, 127
    %v5372 = vpop.permute.xlu0 %5371
    %v5377 = vadd.f32 %v5351, %v5366
    %v5378 = vadd.f32 %v5352, %v5368
    %v5379 = vadd.f32 %v5353, %v5370
    %v5380 = vadd.f32 %v5354, %v5372
    %s5381 = sld [smem:[#allocation6 + $0x48b]]
    %v5382 = vstv %s5381
    %v5383 = vmul.f32 %v66, %v5382
    %v5384 = vmul.f32 %v67, %v5382
    %v5385 = vmul.f32 %v68, %v5382
    %v5386 = vmul.f32 %v69, %v5382
    %5391 = vrot.lane.b32.xlu0 %v5383, 126
    %v5392 = vpop.permute.xlu0 %5391
    %5393 = vrot.lane.b32.xlu0 %v5384, 126
    %v5394 = vpop.permute.xlu0 %5393
    %5395 = vrot.lane.b32.xlu0 %v5385, 126
    %v5396 = vpop.permute.xlu0 %5395
    %5397 = vrot.lane.b32.xlu0 %v5386, 126
    %v5398 = vpop.permute.xlu0 %5397
    %v5403 = vadd.f32 %v5377, %v5392
    %v5404 = vadd.f32 %v5378, %v5394
    %v5405 = vadd.f32 %v5379, %v5396
    %v5406 = vadd.f32 %v5380, %v5398
    %s5407 = sld [smem:[#allocation6 + $0x48c]]
    %v5408 = vstv %s5407
    %v5409 = vmul.f32 %v70, %v5408
    %v5410 = vmul.f32 %v71, %v5408
    %v5411 = vmul.f32 %v72, %v5408
    %v5412 = vmul.f32 %v73, %v5408
    %v5413 = vadd.f32 %v5403, %v5409
    %v5414 = vadd.f32 %v5404, %v5410
    %v5415 = vadd.f32 %v5405, %v5411
    %v5416 = vadd.f32 %v5406, %v5412
    %s5417 = sld [smem:[#allocation6 + $0x48d]]
    %v5418 = vstv %s5417
    %v5419 = vmul.f32 %v70, %v5418
    %v5420 = vmul.f32 %v71, %v5418
    %v5421 = vmul.f32 %v72, %v5418
    %v5422 = vmul.f32 %v73, %v5418
    %5427 = vrot.lane.b32.xlu0 %v5419, 127
    %v5428 = vpop.permute.xlu0 %5427
    %5429 = vrot.lane.b32.xlu0 %v5420, 127
    %v5430 = vpop.permute.xlu0 %5429
    %5431 = vrot.lane.b32.xlu0 %v5421, 127
    %v5432 = vpop.permute.xlu0 %5431
    %5433 = vrot.lane.b32.xlu0 %v5422, 127
    %v5434 = vpop.permute.xlu0 %5433
    %v5439 = vadd.f32 %v5413, %v5428
    %v5440 = vadd.f32 %v5414, %v5430
    %v5441 = vadd.f32 %v5415, %v5432
    %v5442 = vadd.f32 %v5416, %v5434
    %s5443 = sld [smem:[#allocation6 + $0x48e]]
    %v5444 = vstv %s5443
    %v5445 = vmul.f32 %v70, %v5444
    %v5446 = vmul.f32 %v71, %v5444
    %v5447 = vmul.f32 %v72, %v5444
    %v5448 = vmul.f32 %v73, %v5444
    %5453 = vrot.lane.b32.xlu0 %v5445, 126
    %v5454 = vpop.permute.xlu0 %5453
    %5455 = vrot.lane.b32.xlu0 %v5446, 126
    %v5456 = vpop.permute.xlu0 %5455
    %5457 = vrot.lane.b32.xlu0 %v5447, 126
    %v5458 = vpop.permute.xlu0 %5457
    %5459 = vrot.lane.b32.xlu0 %v5448, 126
    %v5460 = vpop.permute.xlu0 %5459
    %v5465 = vadd.f32 %v5439, %v5454
    %v5466 = vadd.f32 %v5440, %v5456
    %v5467 = vadd.f32 %v5441, %v5458
    %v5468 = vadd.f32 %v5442, %v5460
    %s5469 = sld [smem:[#allocation6 + $0x48f]]
    %v5470 = vstv %s5469
    %v5471 = vmul.f32 %v74, %v5470
    %v5472 = vmul.f32 %v75, %v5470
    %v5473 = vmul.f32 %v76, %v5470
    %v5474 = vmul.f32 %v77, %v5470
    %v5475 = vadd.f32 %v5465, %v5471
    %v5476 = vadd.f32 %v5466, %v5472
    %v5477 = vadd.f32 %v5467, %v5473
    %v5478 = vadd.f32 %v5468, %v5474
    %s5479 = sld [smem:[#allocation6 + $0x490]]
    %v5480 = vstv %s5479
    %v5481 = vmul.f32 %v74, %v5480
    %v5482 = vmul.f32 %v75, %v5480
    %v5483 = vmul.f32 %v76, %v5480
    %v5484 = vmul.f32 %v77, %v5480
    %5489 = vrot.lane.b32.xlu0 %v5481, 127
    %v5490 = vpop.permute.xlu0 %5489
    %5491 = vrot.lane.b32.xlu0 %v5482, 127
    %v5492 = vpop.permute.xlu0 %5491
    %5493 = vrot.lane.b32.xlu0 %v5483, 127
    %v5494 = vpop.permute.xlu0 %5493
    %5495 = vrot.lane.b32.xlu0 %v5484, 127
    %v5496 = vpop.permute.xlu0 %5495
    %v5501 = vadd.f32 %v5475, %v5490
    %v5502 = vadd.f32 %v5476, %v5492
    %v5503 = vadd.f32 %v5477, %v5494
    %v5504 = vadd.f32 %v5478, %v5496
    %s5505 = sld [smem:[#allocation6 + $0x491]]
    %v5506 = vstv %s5505
    %v5507 = vmul.f32 %v74, %v5506
    %v5508 = vmul.f32 %v75, %v5506
    %v5509 = vmul.f32 %v76, %v5506
    %v5510 = vmul.f32 %v77, %v5506
    %5515 = vrot.lane.b32.xlu0 %v5507, 126
    %v5516 = vpop.permute.xlu0 %5515
    %5517 = vrot.lane.b32.xlu0 %v5508, 126
    %v5518 = vpop.permute.xlu0 %5517
    %5519 = vrot.lane.b32.xlu0 %v5509, 126
    %v5520 = vpop.permute.xlu0 %5519
    %5521 = vrot.lane.b32.xlu0 %v5510, 126
    %v5522 = vpop.permute.xlu0 %5521
    %v5527 = vadd.f32 %v5501, %v5516
    %v5528 = vadd.f32 %v5502, %v5518
    %v5529 = vadd.f32 %v5503, %v5520
    %v5530 = vadd.f32 %v5504, %v5522
    %s5531 = sld [smem:[#allocation6 + $0x492]]
    %v5532 = vstv %s5531
    %v5533 = vmul.f32 %v79, %v5532
    %v5534 = vmul.f32 %v80, %v5532
    %v5535 = vmul.f32 %v81, %v5532
    %v5536 = vmul.f32 %v82, %v5532
    %v5537 = vadd.f32 %v5527, %v5533
    %v5538 = vadd.f32 %v5528, %v5534
    %v5539 = vadd.f32 %v5529, %v5535
    %v5540 = vadd.f32 %v5530, %v5536
    %s5541 = sld [smem:[#allocation6 + $0x493]]
    %v5542 = vstv %s5541
    %v5543 = vmul.f32 %v79, %v5542
    %v5544 = vmul.f32 %v80, %v5542
    %v5545 = vmul.f32 %v81, %v5542
    %v5546 = vmul.f32 %v82, %v5542
    %5551 = vrot.lane.b32.xlu0 %v5543, 127
    %v5552 = vpop.permute.xlu0 %5551
    %5553 = vrot.lane.b32.xlu0 %v5544, 127
    %v5554 = vpop.permute.xlu0 %5553
    %5555 = vrot.lane.b32.xlu0 %v5545, 127
    %v5556 = vpop.permute.xlu0 %5555
    %5557 = vrot.lane.b32.xlu0 %v5546, 127
    %v5558 = vpop.permute.xlu0 %5557
    %v5563 = vadd.f32 %v5537, %v5552
    %v5564 = vadd.f32 %v5538, %v5554
    %v5565 = vadd.f32 %v5539, %v5556
    %v5566 = vadd.f32 %v5540, %v5558
    %s5567 = sld [smem:[#allocation6 + $0x494]]
    %v5568 = vstv %s5567
    %v5569 = vmul.f32 %v79, %v5568
    %v5570 = vmul.f32 %v80, %v5568
    %v5571 = vmul.f32 %v81, %v5568
    %v5572 = vmul.f32 %v82, %v5568
    %5577 = vrot.lane.b32.xlu0 %v5569, 126
    %v5578 = vpop.permute.xlu0 %5577
    %5579 = vrot.lane.b32.xlu0 %v5570, 126
    %v5580 = vpop.permute.xlu0 %5579
    %5581 = vrot.lane.b32.xlu0 %v5571, 126
    %v5582 = vpop.permute.xlu0 %5581
    %5583 = vrot.lane.b32.xlu0 %v5572, 126
    %v5584 = vpop.permute.xlu0 %5583
    %v5589 = vadd.f32 %v5563, %v5578
    %v5590 = vadd.f32 %v5564, %v5580
    %v5591 = vadd.f32 %v5565, %v5582
    %v5592 = vadd.f32 %v5566, %v5584
    %s5593 = sld [smem:[#allocation6 + $0x495]]
    %v5594 = vstv %s5593
    %v5595 = vmul.f32 %v83, %v5594
    %v5596 = vmul.f32 %v84, %v5594
    %v5597 = vmul.f32 %v85, %v5594
    %v5598 = vmul.f32 %v86, %v5594
    %v5599 = vadd.f32 %v5589, %v5595
    %v5600 = vadd.f32 %v5590, %v5596
    %v5601 = vadd.f32 %v5591, %v5597
    %v5602 = vadd.f32 %v5592, %v5598
    %s5603 = sld [smem:[#allocation6 + $0x496]]
    %v5604 = vstv %s5603
    %v5605 = vmul.f32 %v83, %v5604
    %v5606 = vmul.f32 %v84, %v5604
    %v5607 = vmul.f32 %v85, %v5604
    %v5608 = vmul.f32 %v86, %v5604
    %5613 = vrot.lane.b32.xlu0 %v5605, 127
    %v5614 = vpop.permute.xlu0 %5613
    %5615 = vrot.lane.b32.xlu0 %v5606, 127
    %v5616 = vpop.permute.xlu0 %5615
    %5617 = vrot.lane.b32.xlu0 %v5607, 127
    %v5618 = vpop.permute.xlu0 %5617
    %5619 = vrot.lane.b32.xlu0 %v5608, 127
    %v5620 = vpop.permute.xlu0 %5619
    %v5625 = vadd.f32 %v5599, %v5614
    %v5626 = vadd.f32 %v5600, %v5616
    %v5627 = vadd.f32 %v5601, %v5618
    %v5628 = vadd.f32 %v5602, %v5620
    %s5629 = sld [smem:[#allocation6 + $0x497]]
    %v5630 = vstv %s5629
    %v5631 = vmul.f32 %v83, %v5630
    %v5632 = vmul.f32 %v84, %v5630
    %v5633 = vmul.f32 %v85, %v5630
    %v5634 = vmul.f32 %v86, %v5630
    %5639 = vrot.lane.b32.xlu0 %v5631, 126
    %v5640 = vpop.permute.xlu0 %5639
    %5641 = vrot.lane.b32.xlu0 %v5632, 126
    %v5642 = vpop.permute.xlu0 %5641
    %5643 = vrot.lane.b32.xlu0 %v5633, 126
    %v5644 = vpop.permute.xlu0 %5643
    %5645 = vrot.lane.b32.xlu0 %v5634, 126
    %v5646 = vpop.permute.xlu0 %5645
    %v5651 = vadd.f32 %v5625, %v5640
    %v5652 = vadd.f32 %v5626, %v5642
    %v5653 = vadd.f32 %v5627, %v5644
    %v5654 = vadd.f32 %v5628, %v5646
    %s5655 = sld [smem:[#allocation6 + $0x498]]
    %v5656 = vstv %s5655
    %v5657 = vmul.f32 %v87, %v5656
    %v5658 = vmul.f32 %v88, %v5656
    %v5659 = vmul.f32 %v89, %v5656
    %v5660 = vmul.f32 %v90, %v5656
    %v5661 = vadd.f32 %v5651, %v5657
    %v5662 = vadd.f32 %v5652, %v5658
    %v5663 = vadd.f32 %v5653, %v5659
    %v5664 = vadd.f32 %v5654, %v5660
    %s5665 = sld [smem:[#allocation6 + $0x499]]
    %v5666 = vstv %s5665
    %v5667 = vmul.f32 %v87, %v5666
    %v5668 = vmul.f32 %v88, %v5666
    %v5669 = vmul.f32 %v89, %v5666
    %v5670 = vmul.f32 %v90, %v5666
    %5675 = vrot.lane.b32.xlu0 %v5667, 127
    %v5676 = vpop.permute.xlu0 %5675
    %5677 = vrot.lane.b32.xlu0 %v5668, 127
    %v5678 = vpop.permute.xlu0 %5677
    %5679 = vrot.lane.b32.xlu0 %v5669, 127
    %v5680 = vpop.permute.xlu0 %5679
    %5681 = vrot.lane.b32.xlu0 %v5670, 127
    %v5682 = vpop.permute.xlu0 %5681
    %v5687 = vadd.f32 %v5661, %v5676
    %v5688 = vadd.f32 %v5662, %v5678
    %v5689 = vadd.f32 %v5663, %v5680
    %v5690 = vadd.f32 %v5664, %v5682
    %s5691 = sld [smem:[#allocation6 + $0x49a]]
    %v5692 = vstv %s5691
    %v5693 = vmul.f32 %v87, %v5692
    %v5694 = vmul.f32 %v88, %v5692
    %v5695 = vmul.f32 %v89, %v5692
    %v5696 = vmul.f32 %v90, %v5692
    %5701 = vrot.lane.b32.xlu0 %v5693, 126
    %v5702 = vpop.permute.xlu0 %5701
    %5703 = vrot.lane.b32.xlu0 %v5694, 126
    %v5704 = vpop.permute.xlu0 %5703
    %5705 = vrot.lane.b32.xlu0 %v5695, 126
    %v5706 = vpop.permute.xlu0 %5705
    %5707 = vrot.lane.b32.xlu0 %v5696, 126
    %v5708 = vpop.permute.xlu0 %5707
    %v5713 = vadd.f32 %v5687, %v5702
    %v5714 = vadd.f32 %v5688, %v5704
    %v5715 = vadd.f32 %v5689, %v5706
    %v5716 = vadd.f32 %v5690, %v5708
    %s5717 = sld [smem:[#allocation7 + $0x9]]
    %v5718 = vstv %s5717
    %v5719 = vadd.f32 %v5713, %v5718
    %v5720 = vadd.f32 %v5714, %v5718
    %v5721 = vadd.f32 %v5715, %v5718
    %v5722 = vadd.f32 %v5716, %v5718
    %v5723 = vmin.f32 %v5159, %v5719
    %v5724 = vmin.f32 %v5160, %v5720
    %v5725 = vmin.f32 %v5161, %v5721
    %v5726 = vmin.f32 %v5162, %v5722
    %s5727 = sld [smem:[#allocation6 + $0x500]]
    %v5728 = vstv %s5727
    %v5729 = vmul.f32 %v53, %v5728
    %v5730 = vmul.f32 %v54, %v5728
    %v5731 = vmul.f32 %v55, %v5728
    %v5732 = vmul.f32 %v56, %v5728
    %s5733 = sld [smem:[#allocation6 + $0x501]]
    %v5734 = vstv %s5733
    %v5735 = vmul.f32 %v53, %v5734
    %v5736 = vmul.f32 %v54, %v5734
    %v5737 = vmul.f32 %v55, %v5734
    %v5738 = vmul.f32 %v56, %v5734
    %5743 = vrot.lane.b32.xlu0 %v5735, 127
    %v5744 = vpop.permute.xlu0 %5743
    %5745 = vrot.lane.b32.xlu0 %v5736, 127
    %v5746 = vpop.permute.xlu0 %5745
    %5747 = vrot.lane.b32.xlu0 %v5737, 127
    %v5748 = vpop.permute.xlu0 %5747
    %5749 = vrot.lane.b32.xlu0 %v5738, 127
    %v5750 = vpop.permute.xlu0 %5749
    %v5755 = vadd.f32 %v5729, %v5744
    %v5756 = vadd.f32 %v5730, %v5746
    %v5757 = vadd.f32 %v5731, %v5748
    %v5758 = vadd.f32 %v5732, %v5750
    %s5759 = sld [smem:[#allocation6 + $0x502]]
    %v5760 = vstv %s5759
    %v5761 = vmul.f32 %v53, %v5760
    %v5762 = vmul.f32 %v54, %v5760
    %v5763 = vmul.f32 %v55, %v5760
    %v5764 = vmul.f32 %v56, %v5760
    %5769 = vrot.lane.b32.xlu0 %v5761, 126
    %v5770 = vpop.permute.xlu0 %5769
    %5771 = vrot.lane.b32.xlu0 %v5762, 126
    %v5772 = vpop.permute.xlu0 %5771
    %5773 = vrot.lane.b32.xlu0 %v5763, 126
    %v5774 = vpop.permute.xlu0 %5773
    %5775 = vrot.lane.b32.xlu0 %v5764, 126
    %v5776 = vpop.permute.xlu0 %5775
    %v5781 = vadd.f32 %v5755, %v5770
    %v5782 = vadd.f32 %v5756, %v5772
    %v5783 = vadd.f32 %v5757, %v5774
    %v5784 = vadd.f32 %v5758, %v5776
    %s5785 = sld [smem:[#allocation6 + $0x503]]
    %v5786 = vstv %s5785
    %v5787 = vmul.f32 %v57, %v5786
    %v5788 = vmul.f32 %v58, %v5786
    %v5789 = vmul.f32 %v59, %v5786
    %v5790 = vmul.f32 %v60, %v5786
    %v5791 = vadd.f32 %v5781, %v5787
    %v5792 = vadd.f32 %v5782, %v5788
    %v5793 = vadd.f32 %v5783, %v5789
    %v5794 = vadd.f32 %v5784, %v5790
    %s5795 = sld [smem:[#allocation6 + $0x504]]
    %v5796 = vstv %s5795
    %v5797 = vmul.f32 %v57, %v5796
    %v5798 = vmul.f32 %v58, %v5796
    %v5799 = vmul.f32 %v59, %v5796
    %v5800 = vmul.f32 %v60, %v5796
    %5805 = vrot.lane.b32.xlu0 %v5797, 127
    %v5806 = vpop.permute.xlu0 %5805
    %5807 = vrot.lane.b32.xlu0 %v5798, 127
    %v5808 = vpop.permute.xlu0 %5807
    %5809 = vrot.lane.b32.xlu0 %v5799, 127
    %v5810 = vpop.permute.xlu0 %5809
    %5811 = vrot.lane.b32.xlu0 %v5800, 127
    %v5812 = vpop.permute.xlu0 %5811
    %v5817 = vadd.f32 %v5791, %v5806
    %v5818 = vadd.f32 %v5792, %v5808
    %v5819 = vadd.f32 %v5793, %v5810
    %v5820 = vadd.f32 %v5794, %v5812
    %s5821 = sld [smem:[#allocation6 + $0x505]]
    %v5822 = vstv %s5821
    %v5823 = vmul.f32 %v57, %v5822
    %v5824 = vmul.f32 %v58, %v5822
    %v5825 = vmul.f32 %v59, %v5822
    %v5826 = vmul.f32 %v60, %v5822
    %5831 = vrot.lane.b32.xlu0 %v5823, 126
    %v5832 = vpop.permute.xlu0 %5831
    %5833 = vrot.lane.b32.xlu0 %v5824, 126
    %v5834 = vpop.permute.xlu0 %5833
    %5835 = vrot.lane.b32.xlu0 %v5825, 126
    %v5836 = vpop.permute.xlu0 %5835
    %5837 = vrot.lane.b32.xlu0 %v5826, 126
    %v5838 = vpop.permute.xlu0 %5837
    %v5843 = vadd.f32 %v5817, %v5832
    %v5844 = vadd.f32 %v5818, %v5834
    %v5845 = vadd.f32 %v5819, %v5836
    %v5846 = vadd.f32 %v5820, %v5838
    %s5847 = sld [smem:[#allocation6 + $0x506]]
    %v5848 = vstv %s5847
    %v5849 = vmul.f32 %v61, %v5848
    %v5850 = vmul.f32 %v62, %v5848
    %v5851 = vmul.f32 %v63, %v5848
    %v5852 = vmul.f32 %v64, %v5848
    %v5853 = vadd.f32 %v5843, %v5849
    %v5854 = vadd.f32 %v5844, %v5850
    %v5855 = vadd.f32 %v5845, %v5851
    %v5856 = vadd.f32 %v5846, %v5852
    %s5857 = sld [smem:[#allocation6 + $0x507]]
    %v5858 = vstv %s5857
    %v5859 = vmul.f32 %v61, %v5858
    %v5860 = vmul.f32 %v62, %v5858
    %v5861 = vmul.f32 %v63, %v5858
    %v5862 = vmul.f32 %v64, %v5858
    %5867 = vrot.lane.b32.xlu0 %v5859, 127
    %v5868 = vpop.permute.xlu0 %5867
    %5869 = vrot.lane.b32.xlu0 %v5860, 127
    %v5870 = vpop.permute.xlu0 %5869
    %5871 = vrot.lane.b32.xlu0 %v5861, 127
    %v5872 = vpop.permute.xlu0 %5871
    %5873 = vrot.lane.b32.xlu0 %v5862, 127
    %v5874 = vpop.permute.xlu0 %5873
    %v5879 = vadd.f32 %v5853, %v5868
    %v5880 = vadd.f32 %v5854, %v5870
    %v5881 = vadd.f32 %v5855, %v5872
    %v5882 = vadd.f32 %v5856, %v5874
    %s5883 = sld [smem:[#allocation6 + $0x508]]
    %v5884 = vstv %s5883
    %v5885 = vmul.f32 %v61, %v5884
    %v5886 = vmul.f32 %v62, %v5884
    %v5887 = vmul.f32 %v63, %v5884
    %v5888 = vmul.f32 %v64, %v5884
    %5893 = vrot.lane.b32.xlu0 %v5885, 126
    %v5894 = vpop.permute.xlu0 %5893
    %5895 = vrot.lane.b32.xlu0 %v5886, 126
    %v5896 = vpop.permute.xlu0 %5895
    %5897 = vrot.lane.b32.xlu0 %v5887, 126
    %v5898 = vpop.permute.xlu0 %5897
    %5899 = vrot.lane.b32.xlu0 %v5888, 126
    %v5900 = vpop.permute.xlu0 %5899
    %v5905 = vadd.f32 %v5879, %v5894
    %v5906 = vadd.f32 %v5880, %v5896
    %v5907 = vadd.f32 %v5881, %v5898
    %v5908 = vadd.f32 %v5882, %v5900
    %s5909 = sld [smem:[#allocation6 + $0x509]]
    %v5910 = vstv %s5909
    %v5911 = vmul.f32 %v66, %v5910
    %v5912 = vmul.f32 %v67, %v5910
    %v5913 = vmul.f32 %v68, %v5910
    %v5914 = vmul.f32 %v69, %v5910
    %v5915 = vadd.f32 %v5905, %v5911
    %v5916 = vadd.f32 %v5906, %v5912
    %v5917 = vadd.f32 %v5907, %v5913
    %v5918 = vadd.f32 %v5908, %v5914
    %s5919 = sld [smem:[#allocation6 + $0x50a]]
    %v5920 = vstv %s5919
    %v5921 = vmul.f32 %v66, %v5920
    %v5922 = vmul.f32 %v67, %v5920
    %v5923 = vmul.f32 %v68, %v5920
    %v5924 = vmul.f32 %v69, %v5920
    %5929 = vrot.lane.b32.xlu0 %v5921, 127
    %v5930 = vpop.permute.xlu0 %5929
    %5931 = vrot.lane.b32.xlu0 %v5922, 127
    %v5932 = vpop.permute.xlu0 %5931
    %5933 = vrot.lane.b32.xlu0 %v5923, 127
    %v5934 = vpop.permute.xlu0 %5933
    %5935 = vrot.lane.b32.xlu0 %v5924, 127
    %v5936 = vpop.permute.xlu0 %5935
    %v5941 = vadd.f32 %v5915, %v5930
    %v5942 = vadd.f32 %v5916, %v5932
    %v5943 = vadd.f32 %v5917, %v5934
    %v5944 = vadd.f32 %v5918, %v5936
    %s5945 = sld [smem:[#allocation6 + $0x50b]]
    %v5946 = vstv %s5945
    %v5947 = vmul.f32 %v66, %v5946
    %v5948 = vmul.f32 %v67, %v5946
    %v5949 = vmul.f32 %v68, %v5946
    %v5950 = vmul.f32 %v69, %v5946
    %5955 = vrot.lane.b32.xlu0 %v5947, 126
    %v5956 = vpop.permute.xlu0 %5955
    %5957 = vrot.lane.b32.xlu0 %v5948, 126
    %v5958 = vpop.permute.xlu0 %5957
    %5959 = vrot.lane.b32.xlu0 %v5949, 126
    %v5960 = vpop.permute.xlu0 %5959
    %5961 = vrot.lane.b32.xlu0 %v5950, 126
    %v5962 = vpop.permute.xlu0 %5961
    %v5967 = vadd.f32 %v5941, %v5956
    %v5968 = vadd.f32 %v5942, %v5958
    %v5969 = vadd.f32 %v5943, %v5960
    %v5970 = vadd.f32 %v5944, %v5962
    %s5971 = sld [smem:[#allocation6 + $0x50c]]
    %v5972 = vstv %s5971
    %v5973 = vmul.f32 %v70, %v5972
    %v5974 = vmul.f32 %v71, %v5972
    %v5975 = vmul.f32 %v72, %v5972
    %v5976 = vmul.f32 %v73, %v5972
    %v5977 = vadd.f32 %v5967, %v5973
    %v5978 = vadd.f32 %v5968, %v5974
    %v5979 = vadd.f32 %v5969, %v5975
    %v5980 = vadd.f32 %v5970, %v5976
    %s5981 = sld [smem:[#allocation6 + $0x50d]]
    %v5982 = vstv %s5981
    %v5983 = vmul.f32 %v70, %v5982
    %v5984 = vmul.f32 %v71, %v5982
    %v5985 = vmul.f32 %v72, %v5982
    %v5986 = vmul.f32 %v73, %v5982
    %5991 = vrot.lane.b32.xlu0 %v5983, 127
    %v5992 = vpop.permute.xlu0 %5991
    %5993 = vrot.lane.b32.xlu0 %v5984, 127
    %v5994 = vpop.permute.xlu0 %5993
    %5995 = vrot.lane.b32.xlu0 %v5985, 127
    %v5996 = vpop.permute.xlu0 %5995
    %5997 = vrot.lane.b32.xlu0 %v5986, 127
    %v5998 = vpop.permute.xlu0 %5997
    %v6003 = vadd.f32 %v5977, %v5992
    %v6004 = vadd.f32 %v5978, %v5994
    %v6005 = vadd.f32 %v5979, %v5996
    %v6006 = vadd.f32 %v5980, %v5998
    %s6007 = sld [smem:[#allocation6 + $0x50e]]
    %v6008 = vstv %s6007
    %v6009 = vmul.f32 %v70, %v6008
    %v6010 = vmul.f32 %v71, %v6008
    %v6011 = vmul.f32 %v72, %v6008
    %v6012 = vmul.f32 %v73, %v6008
    %6017 = vrot.lane.b32.xlu0 %v6009, 126
    %v6018 = vpop.permute.xlu0 %6017
    %6019 = vrot.lane.b32.xlu0 %v6010, 126
    %v6020 = vpop.permute.xlu0 %6019
    %6021 = vrot.lane.b32.xlu0 %v6011, 126
    %v6022 = vpop.permute.xlu0 %6021
    %6023 = vrot.lane.b32.xlu0 %v6012, 126
    %v6024 = vpop.permute.xlu0 %6023
    %v6029 = vadd.f32 %v6003, %v6018
    %v6030 = vadd.f32 %v6004, %v6020
    %v6031 = vadd.f32 %v6005, %v6022
    %v6032 = vadd.f32 %v6006, %v6024
    %s6033 = sld [smem:[#allocation6 + $0x50f]]
    %v6034 = vstv %s6033
    %v6035 = vmul.f32 %v74, %v6034
    %v6036 = vmul.f32 %v75, %v6034
    %v6037 = vmul.f32 %v76, %v6034
    %v6038 = vmul.f32 %v77, %v6034
    %v6039 = vadd.f32 %v6029, %v6035
    %v6040 = vadd.f32 %v6030, %v6036
    %v6041 = vadd.f32 %v6031, %v6037
    %v6042 = vadd.f32 %v6032, %v6038
    %s6043 = sld [smem:[#allocation6 + $0x510]]
    %v6044 = vstv %s6043
    %v6045 = vmul.f32 %v74, %v6044
    %v6046 = vmul.f32 %v75, %v6044
    %v6047 = vmul.f32 %v76, %v6044
    %v6048 = vmul.f32 %v77, %v6044
    %6053 = vrot.lane.b32.xlu0 %v6045, 127
    %v6054 = vpop.permute.xlu0 %6053
    %6055 = vrot.lane.b32.xlu0 %v6046, 127
    %v6056 = vpop.permute.xlu0 %6055
    %6057 = vrot.lane.b32.xlu0 %v6047, 127
    %v6058 = vpop.permute.xlu0 %6057
    %6059 = vrot.lane.b32.xlu0 %v6048, 127
    %v6060 = vpop.permute.xlu0 %6059
    %v6065 = vadd.f32 %v6039, %v6054
    %v6066 = vadd.f32 %v6040, %v6056
    %v6067 = vadd.f32 %v6041, %v6058
    %v6068 = vadd.f32 %v6042, %v6060
    %s6069 = sld [smem:[#allocation6 + $0x511]]
    %v6070 = vstv %s6069
    %v6071 = vmul.f32 %v74, %v6070
    %v6072 = vmul.f32 %v75, %v6070
    %v6073 = vmul.f32 %v76, %v6070
    %v6074 = vmul.f32 %v77, %v6070
    %6079 = vrot.lane.b32.xlu0 %v6071, 126
    %v6080 = vpop.permute.xlu0 %6079
    %6081 = vrot.lane.b32.xlu0 %v6072, 126
    %v6082 = vpop.permute.xlu0 %6081
    %6083 = vrot.lane.b32.xlu0 %v6073, 126
    %v6084 = vpop.permute.xlu0 %6083
    %6085 = vrot.lane.b32.xlu0 %v6074, 126
    %v6086 = vpop.permute.xlu0 %6085
    %v6091 = vadd.f32 %v6065, %v6080
    %v6092 = vadd.f32 %v6066, %v6082
    %v6093 = vadd.f32 %v6067, %v6084
    %v6094 = vadd.f32 %v6068, %v6086
    %s6095 = sld [smem:[#allocation6 + $0x512]]
    %v6096 = vstv %s6095
    %v6097 = vmul.f32 %v79, %v6096
    %v6098 = vmul.f32 %v80, %v6096
    %v6099 = vmul.f32 %v81, %v6096
    %v6100 = vmul.f32 %v82, %v6096
    %v6101 = vadd.f32 %v6091, %v6097
    %v6102 = vadd.f32 %v6092, %v6098
    %v6103 = vadd.f32 %v6093, %v6099
    %v6104 = vadd.f32 %v6094, %v6100
    %s6105 = sld [smem:[#allocation6 + $0x513]]
    %v6106 = vstv %s6105
    %v6107 = vmul.f32 %v79, %v6106
    %v6108 = vmul.f32 %v80, %v6106
    %v6109 = vmul.f32 %v81, %v6106
    %v6110 = vmul.f32 %v82, %v6106
    %6115 = vrot.lane.b32.xlu0 %v6107, 127
    %v6116 = vpop.permute.xlu0 %6115
    %6117 = vrot.lane.b32.xlu0 %v6108, 127
    %v6118 = vpop.permute.xlu0 %6117
    %6119 = vrot.lane.b32.xlu0 %v6109, 127
    %v6120 = vpop.permute.xlu0 %6119
    %6121 = vrot.lane.b32.xlu0 %v6110, 127
    %v6122 = vpop.permute.xlu0 %6121
    %v6127 = vadd.f32 %v6101, %v6116
    %v6128 = vadd.f32 %v6102, %v6118
    %v6129 = vadd.f32 %v6103, %v6120
    %v6130 = vadd.f32 %v6104, %v6122
    %s6131 = sld [smem:[#allocation6 + $0x514]]
    %v6132 = vstv %s6131
    %v6133 = vmul.f32 %v79, %v6132
    %v6134 = vmul.f32 %v80, %v6132
    %v6135 = vmul.f32 %v81, %v6132
    %v6136 = vmul.f32 %v82, %v6132
    %6141 = vrot.lane.b32.xlu0 %v6133, 126
    %v6142 = vpop.permute.xlu0 %6141
    %6143 = vrot.lane.b32.xlu0 %v6134, 126
    %v6144 = vpop.permute.xlu0 %6143
    %6145 = vrot.lane.b32.xlu0 %v6135, 126
    %v6146 = vpop.permute.xlu0 %6145
    %6147 = vrot.lane.b32.xlu0 %v6136, 126
    %v6148 = vpop.permute.xlu0 %6147
    %v6153 = vadd.f32 %v6127, %v6142
    %v6154 = vadd.f32 %v6128, %v6144
    %v6155 = vadd.f32 %v6129, %v6146
    %v6156 = vadd.f32 %v6130, %v6148
    %s6157 = sld [smem:[#allocation6 + $0x515]]
    %v6158 = vstv %s6157
    %v6159 = vmul.f32 %v83, %v6158
    %v6160 = vmul.f32 %v84, %v6158
    %v6161 = vmul.f32 %v85, %v6158
    %v6162 = vmul.f32 %v86, %v6158
    %v6163 = vadd.f32 %v6153, %v6159
    %v6164 = vadd.f32 %v6154, %v6160
    %v6165 = vadd.f32 %v6155, %v6161
    %v6166 = vadd.f32 %v6156, %v6162
    %s6167 = sld [smem:[#allocation6 + $0x516]]
    %v6168 = vstv %s6167
    %v6169 = vmul.f32 %v83, %v6168
    %v6170 = vmul.f32 %v84, %v6168
    %v6171 = vmul.f32 %v85, %v6168
    %v6172 = vmul.f32 %v86, %v6168
    %6177 = vrot.lane.b32.xlu0 %v6169, 127
    %v6178 = vpop.permute.xlu0 %6177
    %6179 = vrot.lane.b32.xlu0 %v6170, 127
    %v6180 = vpop.permute.xlu0 %6179
    %6181 = vrot.lane.b32.xlu0 %v6171, 127
    %v6182 = vpop.permute.xlu0 %6181
    %6183 = vrot.lane.b32.xlu0 %v6172, 127
    %v6184 = vpop.permute.xlu0 %6183
    %v6189 = vadd.f32 %v6163, %v6178
    %v6190 = vadd.f32 %v6164, %v6180
    %v6191 = vadd.f32 %v6165, %v6182
    %v6192 = vadd.f32 %v6166, %v6184
    %s6193 = sld [smem:[#allocation6 + $0x517]]
    %v6194 = vstv %s6193
    %v6195 = vmul.f32 %v83, %v6194
    %v6196 = vmul.f32 %v84, %v6194
    %v6197 = vmul.f32 %v85, %v6194
    %v6198 = vmul.f32 %v86, %v6194
    %6203 = vrot.lane.b32.xlu0 %v6195, 126
    %v6204 = vpop.permute.xlu0 %6203
    %6205 = vrot.lane.b32.xlu0 %v6196, 126
    %v6206 = vpop.permute.xlu0 %6205
    %6207 = vrot.lane.b32.xlu0 %v6197, 126
    %v6208 = vpop.permute.xlu0 %6207
    %6209 = vrot.lane.b32.xlu0 %v6198, 126
    %v6210 = vpop.permute.xlu0 %6209
    %v6215 = vadd.f32 %v6189, %v6204
    %v6216 = vadd.f32 %v6190, %v6206
    %v6217 = vadd.f32 %v6191, %v6208
    %v6218 = vadd.f32 %v6192, %v6210
    %s6219 = sld [smem:[#allocation6 + $0x518]]
    %v6220 = vstv %s6219
    %v6221 = vmul.f32 %v87, %v6220
    %v6222 = vmul.f32 %v88, %v6220
    %v6223 = vmul.f32 %v89, %v6220
    %v6224 = vmul.f32 %v90, %v6220
    %v6225 = vadd.f32 %v6215, %v6221
    %v6226 = vadd.f32 %v6216, %v6222
    %v6227 = vadd.f32 %v6217, %v6223
    %v6228 = vadd.f32 %v6218, %v6224
    %s6229 = sld [smem:[#allocation6 + $0x519]]
    %v6230 = vstv %s6229
    %v6231 = vmul.f32 %v87, %v6230
    %v6232 = vmul.f32 %v88, %v6230
    %v6233 = vmul.f32 %v89, %v6230
    %v6234 = vmul.f32 %v90, %v6230
    %6239 = vrot.lane.b32.xlu0 %v6231, 127
    %v6240 = vpop.permute.xlu0 %6239
    %6241 = vrot.lane.b32.xlu0 %v6232, 127
    %v6242 = vpop.permute.xlu0 %6241
    %6243 = vrot.lane.b32.xlu0 %v6233, 127
    %v6244 = vpop.permute.xlu0 %6243
    %6245 = vrot.lane.b32.xlu0 %v6234, 127
    %v6246 = vpop.permute.xlu0 %6245
    %v6251 = vadd.f32 %v6225, %v6240
    %v6252 = vadd.f32 %v6226, %v6242
    %v6253 = vadd.f32 %v6227, %v6244
    %v6254 = vadd.f32 %v6228, %v6246
    %s6255 = sld [smem:[#allocation6 + $0x51a]]
    %v6256 = vstv %s6255
    %v6257 = vmul.f32 %v87, %v6256
    %v6258 = vmul.f32 %v88, %v6256
    %v6259 = vmul.f32 %v89, %v6256
    %v6260 = vmul.f32 %v90, %v6256
    %6265 = vrot.lane.b32.xlu0 %v6257, 126
    %v6266 = vpop.permute.xlu0 %6265
    %6267 = vrot.lane.b32.xlu0 %v6258, 126
    %v6268 = vpop.permute.xlu0 %6267
    %6269 = vrot.lane.b32.xlu0 %v6259, 126
    %v6270 = vpop.permute.xlu0 %6269
    %6271 = vrot.lane.b32.xlu0 %v6260, 126
    %v6272 = vpop.permute.xlu0 %6271
    %v6277 = vadd.f32 %v6251, %v6266
    %v6278 = vadd.f32 %v6252, %v6268
    %v6279 = vadd.f32 %v6253, %v6270
    %v6280 = vadd.f32 %v6254, %v6272
    %s6281 = sld [smem:[#allocation7 + $0xa]]
    %v6282 = vstv %s6281
    %v6283 = vadd.f32 %v6277, %v6282
    %v6284 = vadd.f32 %v6278, %v6282
    %v6285 = vadd.f32 %v6279, %v6282
    %v6286 = vadd.f32 %v6280, %v6282
    %v6287 = vmin.f32 %v5723, %v6283
    %v6288 = vmin.f32 %v5724, %v6284
    %v6289 = vmin.f32 %v5725, %v6285
    %v6290 = vmin.f32 %v5726, %v6286
    %s6291 = sld [smem:[#allocation6 + $0x580]]
    %v6292 = vstv %s6291
    %v6293 = vmul.f32 %v53, %v6292
    %v6294 = vmul.f32 %v54, %v6292
    %v6295 = vmul.f32 %v55, %v6292
    %v6296 = vmul.f32 %v56, %v6292
    %s6297 = sld [smem:[#allocation6 + $0x581]]
    %v6298 = vstv %s6297
    %v6299 = vmul.f32 %v53, %v6298
    %v6300 = vmul.f32 %v54, %v6298
    %v6301 = vmul.f32 %v55, %v6298
    %v6302 = vmul.f32 %v56, %v6298
    %6307 = vrot.lane.b32.xlu0 %v6299, 127
    %v6308 = vpop.permute.xlu0 %6307
    %6309 = vrot.lane.b32.xlu0 %v6300, 127
    %v6310 = vpop.permute.xlu0 %6309
    %6311 = vrot.lane.b32.xlu0 %v6301, 127
    %v6312 = vpop.permute.xlu0 %6311
    %6313 = vrot.lane.b32.xlu0 %v6302, 127
    %v6314 = vpop.permute.xlu0 %6313
    %v6319 = vadd.f32 %v6293, %v6308
    %v6320 = vadd.f32 %v6294, %v6310
    %v6321 = vadd.f32 %v6295, %v6312
    %v6322 = vadd.f32 %v6296, %v6314
    %s6323 = sld [smem:[#allocation6 + $0x582]]
    %v6324 = vstv %s6323
    %v6325 = vmul.f32 %v53, %v6324
    %v6326 = vmul.f32 %v54, %v6324
    %v6327 = vmul.f32 %v55, %v6324
    %v6328 = vmul.f32 %v56, %v6324
    %6333 = vrot.lane.b32.xlu0 %v6325, 126
    %v6334 = vpop.permute.xlu0 %6333
    %6335 = vrot.lane.b32.xlu0 %v6326, 126
    %v6336 = vpop.permute.xlu0 %6335
    %6337 = vrot.lane.b32.xlu0 %v6327, 126
    %v6338 = vpop.permute.xlu0 %6337
    %6339 = vrot.lane.b32.xlu0 %v6328, 126
    %v6340 = vpop.permute.xlu0 %6339
    %v6345 = vadd.f32 %v6319, %v6334
    %v6346 = vadd.f32 %v6320, %v6336
    %v6347 = vadd.f32 %v6321, %v6338
    %v6348 = vadd.f32 %v6322, %v6340
    %s6349 = sld [smem:[#allocation6 + $0x583]]
    %v6350 = vstv %s6349
    %v6351 = vmul.f32 %v57, %v6350
    %v6352 = vmul.f32 %v58, %v6350
    %v6353 = vmul.f32 %v59, %v6350
    %v6354 = vmul.f32 %v60, %v6350
    %v6355 = vadd.f32 %v6345, %v6351
    %v6356 = vadd.f32 %v6346, %v6352
    %v6357 = vadd.f32 %v6347, %v6353
    %v6358 = vadd.f32 %v6348, %v6354
    %s6359 = sld [smem:[#allocation6 + $0x584]]
    %v6360 = vstv %s6359
    %v6361 = vmul.f32 %v57, %v6360
    %v6362 = vmul.f32 %v58, %v6360
    %v6363 = vmul.f32 %v59, %v6360
    %v6364 = vmul.f32 %v60, %v6360
    %6369 = vrot.lane.b32.xlu0 %v6361, 127
    %v6370 = vpop.permute.xlu0 %6369
    %6371 = vrot.lane.b32.xlu0 %v6362, 127
    %v6372 = vpop.permute.xlu0 %6371
    %6373 = vrot.lane.b32.xlu0 %v6363, 127
    %v6374 = vpop.permute.xlu0 %6373
    %6375 = vrot.lane.b32.xlu0 %v6364, 127
    %v6376 = vpop.permute.xlu0 %6375
    %v6381 = vadd.f32 %v6355, %v6370
    %v6382 = vadd.f32 %v6356, %v6372
    %v6383 = vadd.f32 %v6357, %v6374
    %v6384 = vadd.f32 %v6358, %v6376
    %s6385 = sld [smem:[#allocation6 + $0x585]]
    %v6386 = vstv %s6385
    %v6387 = vmul.f32 %v57, %v6386
    %v6388 = vmul.f32 %v58, %v6386
    %v6389 = vmul.f32 %v59, %v6386
    %v6390 = vmul.f32 %v60, %v6386
    %6395 = vrot.lane.b32.xlu0 %v6387, 126
    %v6396 = vpop.permute.xlu0 %6395
    %6397 = vrot.lane.b32.xlu0 %v6388, 126
    %v6398 = vpop.permute.xlu0 %6397
    %6399 = vrot.lane.b32.xlu0 %v6389, 126
    %v6400 = vpop.permute.xlu0 %6399
    %6401 = vrot.lane.b32.xlu0 %v6390, 126
    %v6402 = vpop.permute.xlu0 %6401
    %v6407 = vadd.f32 %v6381, %v6396
    %v6408 = vadd.f32 %v6382, %v6398
    %v6409 = vadd.f32 %v6383, %v6400
    %v6410 = vadd.f32 %v6384, %v6402
    %s6411 = sld [smem:[#allocation6 + $0x586]]
    %v6412 = vstv %s6411
    %v6413 = vmul.f32 %v61, %v6412
    %v6414 = vmul.f32 %v62, %v6412
    %v6415 = vmul.f32 %v63, %v6412
    %v6416 = vmul.f32 %v64, %v6412
    %v6417 = vadd.f32 %v6407, %v6413
    %v6418 = vadd.f32 %v6408, %v6414
    %v6419 = vadd.f32 %v6409, %v6415
    %v6420 = vadd.f32 %v6410, %v6416
    %s6421 = sld [smem:[#allocation6 + $0x587]]
    %v6422 = vstv %s6421
    %v6423 = vmul.f32 %v61, %v6422
    %v6424 = vmul.f32 %v62, %v6422
    %v6425 = vmul.f32 %v63, %v6422
    %v6426 = vmul.f32 %v64, %v6422
    %6431 = vrot.lane.b32.xlu0 %v6423, 127
    %v6432 = vpop.permute.xlu0 %6431
    %6433 = vrot.lane.b32.xlu0 %v6424, 127
    %v6434 = vpop.permute.xlu0 %6433
    %6435 = vrot.lane.b32.xlu0 %v6425, 127
    %v6436 = vpop.permute.xlu0 %6435
    %6437 = vrot.lane.b32.xlu0 %v6426, 127
    %v6438 = vpop.permute.xlu0 %6437
    %v6443 = vadd.f32 %v6417, %v6432
    %v6444 = vadd.f32 %v6418, %v6434
    %v6445 = vadd.f32 %v6419, %v6436
    %v6446 = vadd.f32 %v6420, %v6438
    %s6447 = sld [smem:[#allocation6 + $0x588]]
    %v6448 = vstv %s6447
    %v6449 = vmul.f32 %v61, %v6448
    %v6450 = vmul.f32 %v62, %v6448
    %v6451 = vmul.f32 %v63, %v6448
    %v6452 = vmul.f32 %v64, %v6448
    %6457 = vrot.lane.b32.xlu0 %v6449, 126
    %v6458 = vpop.permute.xlu0 %6457
    %6459 = vrot.lane.b32.xlu0 %v6450, 126
    %v6460 = vpop.permute.xlu0 %6459
    %6461 = vrot.lane.b32.xlu0 %v6451, 126
    %v6462 = vpop.permute.xlu0 %6461
    %6463 = vrot.lane.b32.xlu0 %v6452, 126
    %v6464 = vpop.permute.xlu0 %6463
    %v6469 = vadd.f32 %v6443, %v6458
    %v6470 = vadd.f32 %v6444, %v6460
    %v6471 = vadd.f32 %v6445, %v6462
    %v6472 = vadd.f32 %v6446, %v6464
    %s6473 = sld [smem:[#allocation6 + $0x589]]
    %v6474 = vstv %s6473
    %v6475 = vmul.f32 %v66, %v6474
    %v6476 = vmul.f32 %v67, %v6474
    %v6477 = vmul.f32 %v68, %v6474
    %v6478 = vmul.f32 %v69, %v6474
    %v6479 = vadd.f32 %v6469, %v6475
    %v6480 = vadd.f32 %v6470, %v6476
    %v6481 = vadd.f32 %v6471, %v6477
    %v6482 = vadd.f32 %v6472, %v6478
    %s6483 = sld [smem:[#allocation6 + $0x58a]]
    %v6484 = vstv %s6483
    %v6485 = vmul.f32 %v66, %v6484
    %v6486 = vmul.f32 %v67, %v6484
    %v6487 = vmul.f32 %v68, %v6484
    %v6488 = vmul.f32 %v69, %v6484
    %6493 = vrot.lane.b32.xlu0 %v6485, 127
    %v6494 = vpop.permute.xlu0 %6493
    %6495 = vrot.lane.b32.xlu0 %v6486, 127
    %v6496 = vpop.permute.xlu0 %6495
    %6497 = vrot.lane.b32.xlu0 %v6487, 127
    %v6498 = vpop.permute.xlu0 %6497
    %6499 = vrot.lane.b32.xlu0 %v6488, 127
    %v6500 = vpop.permute.xlu0 %6499
    %v6505 = vadd.f32 %v6479, %v6494
    %v6506 = vadd.f32 %v6480, %v6496
    %v6507 = vadd.f32 %v6481, %v6498
    %v6508 = vadd.f32 %v6482, %v6500
    %s6509 = sld [smem:[#allocation6 + $0x58b]]
    %v6510 = vstv %s6509
    %v6511 = vmul.f32 %v66, %v6510
    %v6512 = vmul.f32 %v67, %v6510
    %v6513 = vmul.f32 %v68, %v6510
    %v6514 = vmul.f32 %v69, %v6510
    %6519 = vrot.lane.b32.xlu0 %v6511, 126
    %v6520 = vpop.permute.xlu0 %6519
    %6521 = vrot.lane.b32.xlu0 %v6512, 126
    %v6522 = vpop.permute.xlu0 %6521
    %6523 = vrot.lane.b32.xlu0 %v6513, 126
    %v6524 = vpop.permute.xlu0 %6523
    %6525 = vrot.lane.b32.xlu0 %v6514, 126
    %v6526 = vpop.permute.xlu0 %6525
    %v6531 = vadd.f32 %v6505, %v6520
    %v6532 = vadd.f32 %v6506, %v6522
    %v6533 = vadd.f32 %v6507, %v6524
    %v6534 = vadd.f32 %v6508, %v6526
    %s6535 = sld [smem:[#allocation6 + $0x58c]]
    %v6536 = vstv %s6535
    %v6537 = vmul.f32 %v70, %v6536
    %v6538 = vmul.f32 %v71, %v6536
    %v6539 = vmul.f32 %v72, %v6536
    %v6540 = vmul.f32 %v73, %v6536
    %v6541 = vadd.f32 %v6531, %v6537
    %v6542 = vadd.f32 %v6532, %v6538
    %v6543 = vadd.f32 %v6533, %v6539
    %v6544 = vadd.f32 %v6534, %v6540
    %s6545 = sld [smem:[#allocation6 + $0x58d]]
    %v6546 = vstv %s6545
    %v6547 = vmul.f32 %v70, %v6546
    %v6548 = vmul.f32 %v71, %v6546
    %v6549 = vmul.f32 %v72, %v6546
    %v6550 = vmul.f32 %v73, %v6546
    %6555 = vrot.lane.b32.xlu0 %v6547, 127
    %v6556 = vpop.permute.xlu0 %6555
    %6557 = vrot.lane.b32.xlu0 %v6548, 127
    %v6558 = vpop.permute.xlu0 %6557
    %6559 = vrot.lane.b32.xlu0 %v6549, 127
    %v6560 = vpop.permute.xlu0 %6559
    %6561 = vrot.lane.b32.xlu0 %v6550, 127
    %v6562 = vpop.permute.xlu0 %6561
    %v6567 = vadd.f32 %v6541, %v6556
    %v6568 = vadd.f32 %v6542, %v6558
    %v6569 = vadd.f32 %v6543, %v6560
    %v6570 = vadd.f32 %v6544, %v6562
    %s6571 = sld [smem:[#allocation6 + $0x58e]]
    %v6572 = vstv %s6571
    %v6573 = vmul.f32 %v70, %v6572
    %v6574 = vmul.f32 %v71, %v6572
    %v6575 = vmul.f32 %v72, %v6572
    %v6576 = vmul.f32 %v73, %v6572
    %6581 = vrot.lane.b32.xlu0 %v6573, 126
    %v6582 = vpop.permute.xlu0 %6581
    %6583 = vrot.lane.b32.xlu0 %v6574, 126
    %v6584 = vpop.permute.xlu0 %6583
    %6585 = vrot.lane.b32.xlu0 %v6575, 126
    %v6586 = vpop.permute.xlu0 %6585
    %6587 = vrot.lane.b32.xlu0 %v6576, 126
    %v6588 = vpop.permute.xlu0 %6587
    %v6593 = vadd.f32 %v6567, %v6582
    %v6594 = vadd.f32 %v6568, %v6584
    %v6595 = vadd.f32 %v6569, %v6586
    %v6596 = vadd.f32 %v6570, %v6588
    %s6597 = sld [smem:[#allocation6 + $0x58f]]
    %v6598 = vstv %s6597
    %v6599 = vmul.f32 %v74, %v6598
    %v6600 = vmul.f32 %v75, %v6598
    %v6601 = vmul.f32 %v76, %v6598
    %v6602 = vmul.f32 %v77, %v6598
    %v6603 = vadd.f32 %v6593, %v6599
    %v6604 = vadd.f32 %v6594, %v6600
    %v6605 = vadd.f32 %v6595, %v6601
    %v6606 = vadd.f32 %v6596, %v6602
    %s6607 = sld [smem:[#allocation6 + $0x590]]
    %v6608 = vstv %s6607
    %v6609 = vmul.f32 %v74, %v6608
    %v6610 = vmul.f32 %v75, %v6608
    %v6611 = vmul.f32 %v76, %v6608
    %v6612 = vmul.f32 %v77, %v6608
    %6617 = vrot.lane.b32.xlu0 %v6609, 127
    %v6618 = vpop.permute.xlu0 %6617
    %6619 = vrot.lane.b32.xlu0 %v6610, 127
    %v6620 = vpop.permute.xlu0 %6619
    %6621 = vrot.lane.b32.xlu0 %v6611, 127
    %v6622 = vpop.permute.xlu0 %6621
    %6623 = vrot.lane.b32.xlu0 %v6612, 127
    %v6624 = vpop.permute.xlu0 %6623
    %v6629 = vadd.f32 %v6603, %v6618
    %v6630 = vadd.f32 %v6604, %v6620
    %v6631 = vadd.f32 %v6605, %v6622
    %v6632 = vadd.f32 %v6606, %v6624
    %s6633 = sld [smem:[#allocation6 + $0x591]]
    %v6634 = vstv %s6633
    %v6635 = vmul.f32 %v74, %v6634
    %v6636 = vmul.f32 %v75, %v6634
    %v6637 = vmul.f32 %v76, %v6634
    %v6638 = vmul.f32 %v77, %v6634
    %6643 = vrot.lane.b32.xlu0 %v6635, 126
    %v6644 = vpop.permute.xlu0 %6643
    %6645 = vrot.lane.b32.xlu0 %v6636, 126
    %v6646 = vpop.permute.xlu0 %6645
    %6647 = vrot.lane.b32.xlu0 %v6637, 126
    %v6648 = vpop.permute.xlu0 %6647
    %6649 = vrot.lane.b32.xlu0 %v6638, 126
    %v6650 = vpop.permute.xlu0 %6649
    %v6655 = vadd.f32 %v6629, %v6644
    %v6656 = vadd.f32 %v6630, %v6646
    %v6657 = vadd.f32 %v6631, %v6648
    %v6658 = vadd.f32 %v6632, %v6650
    %s6659 = sld [smem:[#allocation6 + $0x592]]
    %v6660 = vstv %s6659
    %v6661 = vmul.f32 %v79, %v6660
    %v6662 = vmul.f32 %v80, %v6660
    %v6663 = vmul.f32 %v81, %v6660
    %v6664 = vmul.f32 %v82, %v6660
    %v6665 = vadd.f32 %v6655, %v6661
    %v6666 = vadd.f32 %v6656, %v6662
    %v6667 = vadd.f32 %v6657, %v6663
    %v6668 = vadd.f32 %v6658, %v6664
    %s6669 = sld [smem:[#allocation6 + $0x593]]
    %v6670 = vstv %s6669
    %v6671 = vmul.f32 %v79, %v6670
    %v6672 = vmul.f32 %v80, %v6670
    %v6673 = vmul.f32 %v81, %v6670
    %v6674 = vmul.f32 %v82, %v6670
    %6679 = vrot.lane.b32.xlu0 %v6671, 127
    %v6680 = vpop.permute.xlu0 %6679
    %6681 = vrot.lane.b32.xlu0 %v6672, 127
    %v6682 = vpop.permute.xlu0 %6681
    %6683 = vrot.lane.b32.xlu0 %v6673, 127
    %v6684 = vpop.permute.xlu0 %6683
    %6685 = vrot.lane.b32.xlu0 %v6674, 127
    %v6686 = vpop.permute.xlu0 %6685
    %v6691 = vadd.f32 %v6665, %v6680
    %v6692 = vadd.f32 %v6666, %v6682
    %v6693 = vadd.f32 %v6667, %v6684
    %v6694 = vadd.f32 %v6668, %v6686
    %s6695 = sld [smem:[#allocation6 + $0x594]]
    %v6696 = vstv %s6695
    %v6697 = vmul.f32 %v79, %v6696
    %v6698 = vmul.f32 %v80, %v6696
    %v6699 = vmul.f32 %v81, %v6696
    %v6700 = vmul.f32 %v82, %v6696
    %6705 = vrot.lane.b32.xlu0 %v6697, 126
    %v6706 = vpop.permute.xlu0 %6705
    %6707 = vrot.lane.b32.xlu0 %v6698, 126
    %v6708 = vpop.permute.xlu0 %6707
    %6709 = vrot.lane.b32.xlu0 %v6699, 126
    %v6710 = vpop.permute.xlu0 %6709
    %6711 = vrot.lane.b32.xlu0 %v6700, 126
    %v6712 = vpop.permute.xlu0 %6711
    %v6717 = vadd.f32 %v6691, %v6706
    %v6718 = vadd.f32 %v6692, %v6708
    %v6719 = vadd.f32 %v6693, %v6710
    %v6720 = vadd.f32 %v6694, %v6712
    %s6721 = sld [smem:[#allocation6 + $0x595]]
    %v6722 = vstv %s6721
    %v6723 = vmul.f32 %v83, %v6722
    %v6724 = vmul.f32 %v84, %v6722
    %v6725 = vmul.f32 %v85, %v6722
    %v6726 = vmul.f32 %v86, %v6722
    %v6727 = vadd.f32 %v6717, %v6723
    %v6728 = vadd.f32 %v6718, %v6724
    %v6729 = vadd.f32 %v6719, %v6725
    %v6730 = vadd.f32 %v6720, %v6726
    %s6731 = sld [smem:[#allocation6 + $0x596]]
    %v6732 = vstv %s6731
    %v6733 = vmul.f32 %v83, %v6732
    %v6734 = vmul.f32 %v84, %v6732
    %v6735 = vmul.f32 %v85, %v6732
    %v6736 = vmul.f32 %v86, %v6732
    %6741 = vrot.lane.b32.xlu0 %v6733, 127
    %v6742 = vpop.permute.xlu0 %6741
    %6743 = vrot.lane.b32.xlu0 %v6734, 127
    %v6744 = vpop.permute.xlu0 %6743
    %6745 = vrot.lane.b32.xlu0 %v6735, 127
    %v6746 = vpop.permute.xlu0 %6745
    %6747 = vrot.lane.b32.xlu0 %v6736, 127
    %v6748 = vpop.permute.xlu0 %6747
    %v6753 = vadd.f32 %v6727, %v6742
    %v6754 = vadd.f32 %v6728, %v6744
    %v6755 = vadd.f32 %v6729, %v6746
    %v6756 = vadd.f32 %v6730, %v6748
    %s6757 = sld [smem:[#allocation6 + $0x597]]
    %v6758 = vstv %s6757
    %v6759 = vmul.f32 %v83, %v6758
    %v6760 = vmul.f32 %v84, %v6758
    %v6761 = vmul.f32 %v85, %v6758
    %v6762 = vmul.f32 %v86, %v6758
    %6767 = vrot.lane.b32.xlu0 %v6759, 126
    %v6768 = vpop.permute.xlu0 %6767
    %6769 = vrot.lane.b32.xlu0 %v6760, 126
    %v6770 = vpop.permute.xlu0 %6769
    %6771 = vrot.lane.b32.xlu0 %v6761, 126
    %v6772 = vpop.permute.xlu0 %6771
    %6773 = vrot.lane.b32.xlu0 %v6762, 126
    %v6774 = vpop.permute.xlu0 %6773
    %v6779 = vadd.f32 %v6753, %v6768
    %v6780 = vadd.f32 %v6754, %v6770
    %v6781 = vadd.f32 %v6755, %v6772
    %v6782 = vadd.f32 %v6756, %v6774
    %s6783 = sld [smem:[#allocation6 + $0x598]]
    %v6784 = vstv %s6783
    %v6785 = vmul.f32 %v87, %v6784
    %v6786 = vmul.f32 %v88, %v6784
    %v6787 = vmul.f32 %v89, %v6784
    %v6788 = vmul.f32 %v90, %v6784
    %v6789 = vadd.f32 %v6779, %v6785
    %v6790 = vadd.f32 %v6780, %v6786
    %v6791 = vadd.f32 %v6781, %v6787
    %v6792 = vadd.f32 %v6782, %v6788
    %s6793 = sld [smem:[#allocation6 + $0x599]]
    %v6794 = vstv %s6793
    %v6795 = vmul.f32 %v87, %v6794
    %v6796 = vmul.f32 %v88, %v6794
    %v6797 = vmul.f32 %v89, %v6794
    %v6798 = vmul.f32 %v90, %v6794
    %6803 = vrot.lane.b32.xlu0 %v6795, 127
    %v6804 = vpop.permute.xlu0 %6803
    %6805 = vrot.lane.b32.xlu0 %v6796, 127
    %v6806 = vpop.permute.xlu0 %6805
    %6807 = vrot.lane.b32.xlu0 %v6797, 127
    %v6808 = vpop.permute.xlu0 %6807
    %6809 = vrot.lane.b32.xlu0 %v6798, 127
    %v6810 = vpop.permute.xlu0 %6809
    %v6815 = vadd.f32 %v6789, %v6804
    %v6816 = vadd.f32 %v6790, %v6806
    %v6817 = vadd.f32 %v6791, %v6808
    %v6818 = vadd.f32 %v6792, %v6810
    %s6819 = sld [smem:[#allocation6 + $0x59a]]
    %v6820 = vstv %s6819
    %v6821 = vmul.f32 %v87, %v6820
    %v6822 = vmul.f32 %v88, %v6820
    %v6823 = vmul.f32 %v89, %v6820
    %v6824 = vmul.f32 %v90, %v6820
    %6829 = vrot.lane.b32.xlu0 %v6821, 126
    %v6830 = vpop.permute.xlu0 %6829
    %6831 = vrot.lane.b32.xlu0 %v6822, 126
    %v6832 = vpop.permute.xlu0 %6831
    %6833 = vrot.lane.b32.xlu0 %v6823, 126
    %v6834 = vpop.permute.xlu0 %6833
    %6835 = vrot.lane.b32.xlu0 %v6824, 126
    %v6836 = vpop.permute.xlu0 %6835
    %v6841 = vadd.f32 %v6815, %v6830
    %v6842 = vadd.f32 %v6816, %v6832
    %v6843 = vadd.f32 %v6817, %v6834
    %v6844 = vadd.f32 %v6818, %v6836
    %s6845 = sld [smem:[#allocation7 + $0xb]]
    %v6846 = vstv %s6845
    %v6847 = vadd.f32 %v6841, %v6846
    %v6848 = vadd.f32 %v6842, %v6846
    %v6849 = vadd.f32 %v6843, %v6846
    %v6850 = vadd.f32 %v6844, %v6846
    %v6851 = vmin.f32 %v6287, %v6847
    %v6852 = vmin.f32 %v6288, %v6848
    %v6853 = vmin.f32 %v6289, %v6849
    %v6854 = vmin.f32 %v6290, %v6850
    %s6855 = sld [smem:[#allocation6 + $0x600]]
    %v6856 = vstv %s6855
    %v6857 = vmul.f32 %v53, %v6856
    %v6858 = vmul.f32 %v54, %v6856
    %v6859 = vmul.f32 %v55, %v6856
    %v6860 = vmul.f32 %v56, %v6856
    %s6861 = sld [smem:[#allocation6 + $0x601]]
    %v6862 = vstv %s6861
    %v6863 = vmul.f32 %v53, %v6862
    %v6864 = vmul.f32 %v54, %v6862
    %v6865 = vmul.f32 %v55, %v6862
    %v6866 = vmul.f32 %v56, %v6862
    %6871 = vrot.lane.b32.xlu0 %v6863, 127
    %v6872 = vpop.permute.xlu0 %6871
    %6873 = vrot.lane.b32.xlu0 %v6864, 127
    %v6874 = vpop.permute.xlu0 %6873
    %6875 = vrot.lane.b32.xlu0 %v6865, 127
    %v6876 = vpop.permute.xlu0 %6875
    %6877 = vrot.lane.b32.xlu0 %v6866, 127
    %v6878 = vpop.permute.xlu0 %6877
    %v6883 = vadd.f32 %v6857, %v6872
    %v6884 = vadd.f32 %v6858, %v6874
    %v6885 = vadd.f32 %v6859, %v6876
    %v6886 = vadd.f32 %v6860, %v6878
    %s6887 = sld [smem:[#allocation6 + $0x602]]
    %v6888 = vstv %s6887
    %v6889 = vmul.f32 %v53, %v6888
    %v6890 = vmul.f32 %v54, %v6888
    %v6891 = vmul.f32 %v55, %v6888
    %v6892 = vmul.f32 %v56, %v6888
    %6897 = vrot.lane.b32.xlu0 %v6889, 126
    %v6898 = vpop.permute.xlu0 %6897
    %6899 = vrot.lane.b32.xlu0 %v6890, 126
    %v6900 = vpop.permute.xlu0 %6899
    %6901 = vrot.lane.b32.xlu0 %v6891, 126
    %v6902 = vpop.permute.xlu0 %6901
    %6903 = vrot.lane.b32.xlu0 %v6892, 126
    %v6904 = vpop.permute.xlu0 %6903
    %v6909 = vadd.f32 %v6883, %v6898
    %v6910 = vadd.f32 %v6884, %v6900
    %v6911 = vadd.f32 %v6885, %v6902
    %v6912 = vadd.f32 %v6886, %v6904
    %s6913 = sld [smem:[#allocation6 + $0x603]]
    %v6914 = vstv %s6913
    %v6915 = vmul.f32 %v57, %v6914
    %v6916 = vmul.f32 %v58, %v6914
    %v6917 = vmul.f32 %v59, %v6914
    %v6918 = vmul.f32 %v60, %v6914
    %v6919 = vadd.f32 %v6909, %v6915
    %v6920 = vadd.f32 %v6910, %v6916
    %v6921 = vadd.f32 %v6911, %v6917
    %v6922 = vadd.f32 %v6912, %v6918
    %s6923 = sld [smem:[#allocation6 + $0x604]]
    %v6924 = vstv %s6923
    %v6925 = vmul.f32 %v57, %v6924
    %v6926 = vmul.f32 %v58, %v6924
    %v6927 = vmul.f32 %v59, %v6924
    %v6928 = vmul.f32 %v60, %v6924
    %6933 = vrot.lane.b32.xlu0 %v6925, 127
    %v6934 = vpop.permute.xlu0 %6933
    %6935 = vrot.lane.b32.xlu0 %v6926, 127
    %v6936 = vpop.permute.xlu0 %6935
    %6937 = vrot.lane.b32.xlu0 %v6927, 127
    %v6938 = vpop.permute.xlu0 %6937
    %6939 = vrot.lane.b32.xlu0 %v6928, 127
    %v6940 = vpop.permute.xlu0 %6939
    %v6945 = vadd.f32 %v6919, %v6934
    %v6946 = vadd.f32 %v6920, %v6936
    %v6947 = vadd.f32 %v6921, %v6938
    %v6948 = vadd.f32 %v6922, %v6940
    %s6949 = sld [smem:[#allocation6 + $0x605]]
    %v6950 = vstv %s6949
    %v6951 = vmul.f32 %v57, %v6950
    %v6952 = vmul.f32 %v58, %v6950
    %v6953 = vmul.f32 %v59, %v6950
    %v6954 = vmul.f32 %v60, %v6950
    %6959 = vrot.lane.b32.xlu0 %v6951, 126
    %v6960 = vpop.permute.xlu0 %6959
    %6961 = vrot.lane.b32.xlu0 %v6952, 126
    %v6962 = vpop.permute.xlu0 %6961
    %6963 = vrot.lane.b32.xlu0 %v6953, 126
    %v6964 = vpop.permute.xlu0 %6963
    %6965 = vrot.lane.b32.xlu0 %v6954, 126
    %v6966 = vpop.permute.xlu0 %6965
    %v6971 = vadd.f32 %v6945, %v6960
    %v6972 = vadd.f32 %v6946, %v6962
    %v6973 = vadd.f32 %v6947, %v6964
    %v6974 = vadd.f32 %v6948, %v6966
    %s6975 = sld [smem:[#allocation6 + $0x606]]
    %v6976 = vstv %s6975
    %v6977 = vmul.f32 %v61, %v6976
    %v6978 = vmul.f32 %v62, %v6976
    %v6979 = vmul.f32 %v63, %v6976
    %v6980 = vmul.f32 %v64, %v6976
    %v6981 = vadd.f32 %v6971, %v6977
    %v6982 = vadd.f32 %v6972, %v6978
    %v6983 = vadd.f32 %v6973, %v6979
    %v6984 = vadd.f32 %v6974, %v6980
    %s6985 = sld [smem:[#allocation6 + $0x607]]
    %v6986 = vstv %s6985
    %v6987 = vmul.f32 %v61, %v6986
    %v6988 = vmul.f32 %v62, %v6986
    %v6989 = vmul.f32 %v63, %v6986
    %v6990 = vmul.f32 %v64, %v6986
    %6995 = vrot.lane.b32.xlu0 %v6987, 127
    %v6996 = vpop.permute.xlu0 %6995
    %6997 = vrot.lane.b32.xlu0 %v6988, 127
    %v6998 = vpop.permute.xlu0 %6997
    %6999 = vrot.lane.b32.xlu0 %v6989, 127
    %v7000 = vpop.permute.xlu0 %6999
    %7001 = vrot.lane.b32.xlu0 %v6990, 127
    %v7002 = vpop.permute.xlu0 %7001
    %v7007 = vadd.f32 %v6981, %v6996
    %v7008 = vadd.f32 %v6982, %v6998
    %v7009 = vadd.f32 %v6983, %v7000
    %v7010 = vadd.f32 %v6984, %v7002
    %s7011 = sld [smem:[#allocation6 + $0x608]]
    %v7012 = vstv %s7011
    %v7013 = vmul.f32 %v61, %v7012
    %v7014 = vmul.f32 %v62, %v7012
    %v7015 = vmul.f32 %v63, %v7012
    %v7016 = vmul.f32 %v64, %v7012
    %7021 = vrot.lane.b32.xlu0 %v7013, 126
    %v7022 = vpop.permute.xlu0 %7021
    %7023 = vrot.lane.b32.xlu0 %v7014, 126
    %v7024 = vpop.permute.xlu0 %7023
    %7025 = vrot.lane.b32.xlu0 %v7015, 126
    %v7026 = vpop.permute.xlu0 %7025
    %7027 = vrot.lane.b32.xlu0 %v7016, 126
    %v7028 = vpop.permute.xlu0 %7027
    %v7033 = vadd.f32 %v7007, %v7022
    %v7034 = vadd.f32 %v7008, %v7024
    %v7035 = vadd.f32 %v7009, %v7026
    %v7036 = vadd.f32 %v7010, %v7028
    %s7037 = sld [smem:[#allocation6 + $0x609]]
    %v7038 = vstv %s7037
    %v7039 = vmul.f32 %v66, %v7038
    %v7040 = vmul.f32 %v67, %v7038
    %v7041 = vmul.f32 %v68, %v7038
    %v7042 = vmul.f32 %v69, %v7038
    %v7043 = vadd.f32 %v7033, %v7039
    %v7044 = vadd.f32 %v7034, %v7040
    %v7045 = vadd.f32 %v7035, %v7041
    %v7046 = vadd.f32 %v7036, %v7042
    %s7047 = sld [smem:[#allocation6 + $0x60a]]
    %v7048 = vstv %s7047
    %v7049 = vmul.f32 %v66, %v7048
    %v7050 = vmul.f32 %v67, %v7048
    %v7051 = vmul.f32 %v68, %v7048
    %v7052 = vmul.f32 %v69, %v7048
    %7057 = vrot.lane.b32.xlu0 %v7049, 127
    %v7058 = vpop.permute.xlu0 %7057
    %7059 = vrot.lane.b32.xlu0 %v7050, 127
    %v7060 = vpop.permute.xlu0 %7059
    %7061 = vrot.lane.b32.xlu0 %v7051, 127
    %v7062 = vpop.permute.xlu0 %7061
    %7063 = vrot.lane.b32.xlu0 %v7052, 127
    %v7064 = vpop.permute.xlu0 %7063
    %v7069 = vadd.f32 %v7043, %v7058
    %v7070 = vadd.f32 %v7044, %v7060
    %v7071 = vadd.f32 %v7045, %v7062
    %v7072 = vadd.f32 %v7046, %v7064
    %s7073 = sld [smem:[#allocation6 + $0x60b]]
    %v7074 = vstv %s7073
    %v7075 = vmul.f32 %v66, %v7074
    %v7076 = vmul.f32 %v67, %v7074
    %v7077 = vmul.f32 %v68, %v7074
    %v7078 = vmul.f32 %v69, %v7074
    %7083 = vrot.lane.b32.xlu0 %v7075, 126
    %v7084 = vpop.permute.xlu0 %7083
    %7085 = vrot.lane.b32.xlu0 %v7076, 126
    %v7086 = vpop.permute.xlu0 %7085
    %7087 = vrot.lane.b32.xlu0 %v7077, 126
    %v7088 = vpop.permute.xlu0 %7087
    %7089 = vrot.lane.b32.xlu0 %v7078, 126
    %v7090 = vpop.permute.xlu0 %7089
    %v7095 = vadd.f32 %v7069, %v7084
    %v7096 = vadd.f32 %v7070, %v7086
    %v7097 = vadd.f32 %v7071, %v7088
    %v7098 = vadd.f32 %v7072, %v7090
    %s7099 = sld [smem:[#allocation6 + $0x60c]]
    %v7100 = vstv %s7099
    %v7101 = vmul.f32 %v70, %v7100
    %v7102 = vmul.f32 %v71, %v7100
    %v7103 = vmul.f32 %v72, %v7100
    %v7104 = vmul.f32 %v73, %v7100
    %v7105 = vadd.f32 %v7095, %v7101
    %v7106 = vadd.f32 %v7096, %v7102
    %v7107 = vadd.f32 %v7097, %v7103
    %v7108 = vadd.f32 %v7098, %v7104
    %s7109 = sld [smem:[#allocation6 + $0x60d]]
    %v7110 = vstv %s7109
    %v7111 = vmul.f32 %v70, %v7110
    %v7112 = vmul.f32 %v71, %v7110
    %v7113 = vmul.f32 %v72, %v7110
    %v7114 = vmul.f32 %v73, %v7110
    %7119 = vrot.lane.b32.xlu0 %v7111, 127
    %v7120 = vpop.permute.xlu0 %7119
    %7121 = vrot.lane.b32.xlu0 %v7112, 127
    %v7122 = vpop.permute.xlu0 %7121
    %7123 = vrot.lane.b32.xlu0 %v7113, 127
    %v7124 = vpop.permute.xlu0 %7123
    %7125 = vrot.lane.b32.xlu0 %v7114, 127
    %v7126 = vpop.permute.xlu0 %7125
    %v7131 = vadd.f32 %v7105, %v7120
    %v7132 = vadd.f32 %v7106, %v7122
    %v7133 = vadd.f32 %v7107, %v7124
    %v7134 = vadd.f32 %v7108, %v7126
    %s7135 = sld [smem:[#allocation6 + $0x60e]]
    %v7136 = vstv %s7135
    %v7137 = vmul.f32 %v70, %v7136
    %v7138 = vmul.f32 %v71, %v7136
    %v7139 = vmul.f32 %v72, %v7136
    %v7140 = vmul.f32 %v73, %v7136
    %7145 = vrot.lane.b32.xlu0 %v7137, 126
    %v7146 = vpop.permute.xlu0 %7145
    %7147 = vrot.lane.b32.xlu0 %v7138, 126
    %v7148 = vpop.permute.xlu0 %7147
    %7149 = vrot.lane.b32.xlu0 %v7139, 126
    %v7150 = vpop.permute.xlu0 %7149
    %7151 = vrot.lane.b32.xlu0 %v7140, 126
    %v7152 = vpop.permute.xlu0 %7151
    %v7157 = vadd.f32 %v7131, %v7146
    %v7158 = vadd.f32 %v7132, %v7148
    %v7159 = vadd.f32 %v7133, %v7150
    %v7160 = vadd.f32 %v7134, %v7152
    %s7161 = sld [smem:[#allocation6 + $0x60f]]
    %v7162 = vstv %s7161
    %v7163 = vmul.f32 %v74, %v7162
    %v7164 = vmul.f32 %v75, %v7162
    %v7165 = vmul.f32 %v76, %v7162
    %v7166 = vmul.f32 %v77, %v7162
    %v7167 = vadd.f32 %v7157, %v7163
    %v7168 = vadd.f32 %v7158, %v7164
    %v7169 = vadd.f32 %v7159, %v7165
    %v7170 = vadd.f32 %v7160, %v7166
    %s7171 = sld [smem:[#allocation6 + $0x610]]
    %v7172 = vstv %s7171
    %v7173 = vmul.f32 %v74, %v7172
    %v7174 = vmul.f32 %v75, %v7172
    %v7175 = vmul.f32 %v76, %v7172
    %v7176 = vmul.f32 %v77, %v7172
    %7181 = vrot.lane.b32.xlu0 %v7173, 127
    %v7182 = vpop.permute.xlu0 %7181
    %7183 = vrot.lane.b32.xlu0 %v7174, 127
    %v7184 = vpop.permute.xlu0 %7183
    %7185 = vrot.lane.b32.xlu0 %v7175, 127
    %v7186 = vpop.permute.xlu0 %7185
    %7187 = vrot.lane.b32.xlu0 %v7176, 127
    %v7188 = vpop.permute.xlu0 %7187
    %v7193 = vadd.f32 %v7167, %v7182
    %v7194 = vadd.f32 %v7168, %v7184
    %v7195 = vadd.f32 %v7169, %v7186
    %v7196 = vadd.f32 %v7170, %v7188
    %s7197 = sld [smem:[#allocation6 + $0x611]]
    %v7198 = vstv %s7197
    %v7199 = vmul.f32 %v74, %v7198
    %v7200 = vmul.f32 %v75, %v7198
    %v7201 = vmul.f32 %v76, %v7198
    %v7202 = vmul.f32 %v77, %v7198
    %7207 = vrot.lane.b32.xlu0 %v7199, 126
    %v7208 = vpop.permute.xlu0 %7207
    %7209 = vrot.lane.b32.xlu0 %v7200, 126
    %v7210 = vpop.permute.xlu0 %7209
    %7211 = vrot.lane.b32.xlu0 %v7201, 126
    %v7212 = vpop.permute.xlu0 %7211
    %7213 = vrot.lane.b32.xlu0 %v7202, 126
    %v7214 = vpop.permute.xlu0 %7213
    %v7219 = vadd.f32 %v7193, %v7208
    %v7220 = vadd.f32 %v7194, %v7210
    %v7221 = vadd.f32 %v7195, %v7212
    %v7222 = vadd.f32 %v7196, %v7214
    %s7223 = sld [smem:[#allocation6 + $0x612]]
    %v7224 = vstv %s7223
    %v7225 = vmul.f32 %v79, %v7224
    %v7226 = vmul.f32 %v80, %v7224
    %v7227 = vmul.f32 %v81, %v7224
    %v7228 = vmul.f32 %v82, %v7224
    %v7229 = vadd.f32 %v7219, %v7225
    %v7230 = vadd.f32 %v7220, %v7226
    %v7231 = vadd.f32 %v7221, %v7227
    %v7232 = vadd.f32 %v7222, %v7228
    %s7233 = sld [smem:[#allocation6 + $0x613]]
    %v7234 = vstv %s7233
    %v7235 = vmul.f32 %v79, %v7234
    %v7236 = vmul.f32 %v80, %v7234
    %v7237 = vmul.f32 %v81, %v7234
    %v7238 = vmul.f32 %v82, %v7234
    %7243 = vrot.lane.b32.xlu0 %v7235, 127
    %v7244 = vpop.permute.xlu0 %7243
    %7245 = vrot.lane.b32.xlu0 %v7236, 127
    %v7246 = vpop.permute.xlu0 %7245
    %7247 = vrot.lane.b32.xlu0 %v7237, 127
    %v7248 = vpop.permute.xlu0 %7247
    %7249 = vrot.lane.b32.xlu0 %v7238, 127
    %v7250 = vpop.permute.xlu0 %7249
    %v7255 = vadd.f32 %v7229, %v7244
    %v7256 = vadd.f32 %v7230, %v7246
    %v7257 = vadd.f32 %v7231, %v7248
    %v7258 = vadd.f32 %v7232, %v7250
    %s7259 = sld [smem:[#allocation6 + $0x614]]
    %v7260 = vstv %s7259
    %v7261 = vmul.f32 %v79, %v7260
    %v7262 = vmul.f32 %v80, %v7260
    %v7263 = vmul.f32 %v81, %v7260
    %v7264 = vmul.f32 %v82, %v7260
    %7269 = vrot.lane.b32.xlu0 %v7261, 126
    %v7270 = vpop.permute.xlu0 %7269
    %7271 = vrot.lane.b32.xlu0 %v7262, 126
    %v7272 = vpop.permute.xlu0 %7271
    %7273 = vrot.lane.b32.xlu0 %v7263, 126
    %v7274 = vpop.permute.xlu0 %7273
    %7275 = vrot.lane.b32.xlu0 %v7264, 126
    %v7276 = vpop.permute.xlu0 %7275
    %v7281 = vadd.f32 %v7255, %v7270
    %v7282 = vadd.f32 %v7256, %v7272
    %v7283 = vadd.f32 %v7257, %v7274
    %v7284 = vadd.f32 %v7258, %v7276
    %s7285 = sld [smem:[#allocation6 + $0x615]]
    %v7286 = vstv %s7285
    %v7287 = vmul.f32 %v83, %v7286
    %v7288 = vmul.f32 %v84, %v7286
    %v7289 = vmul.f32 %v85, %v7286
    %v7290 = vmul.f32 %v86, %v7286
    %v7291 = vadd.f32 %v7281, %v7287
    %v7292 = vadd.f32 %v7282, %v7288
    %v7293 = vadd.f32 %v7283, %v7289
    %v7294 = vadd.f32 %v7284, %v7290
    %s7295 = sld [smem:[#allocation6 + $0x616]]
    %v7296 = vstv %s7295
    %v7297 = vmul.f32 %v83, %v7296
    %v7298 = vmul.f32 %v84, %v7296
    %v7299 = vmul.f32 %v85, %v7296
    %v7300 = vmul.f32 %v86, %v7296
    %7305 = vrot.lane.b32.xlu0 %v7297, 127
    %v7306 = vpop.permute.xlu0 %7305
    %7307 = vrot.lane.b32.xlu0 %v7298, 127
    %v7308 = vpop.permute.xlu0 %7307
    %7309 = vrot.lane.b32.xlu0 %v7299, 127
    %v7310 = vpop.permute.xlu0 %7309
    %7311 = vrot.lane.b32.xlu0 %v7300, 127
    %v7312 = vpop.permute.xlu0 %7311
    %v7317 = vadd.f32 %v7291, %v7306
    %v7318 = vadd.f32 %v7292, %v7308
    %v7319 = vadd.f32 %v7293, %v7310
    %v7320 = vadd.f32 %v7294, %v7312
    %s7321 = sld [smem:[#allocation6 + $0x617]]
    %v7322 = vstv %s7321
    %v7323 = vmul.f32 %v83, %v7322
    %v7324 = vmul.f32 %v84, %v7322
    %v7325 = vmul.f32 %v85, %v7322
    %v7326 = vmul.f32 %v86, %v7322
    %7331 = vrot.lane.b32.xlu0 %v7323, 126
    %v7332 = vpop.permute.xlu0 %7331
    %7333 = vrot.lane.b32.xlu0 %v7324, 126
    %v7334 = vpop.permute.xlu0 %7333
    %7335 = vrot.lane.b32.xlu0 %v7325, 126
    %v7336 = vpop.permute.xlu0 %7335
    %7337 = vrot.lane.b32.xlu0 %v7326, 126
    %v7338 = vpop.permute.xlu0 %7337
    %v7343 = vadd.f32 %v7317, %v7332
    %v7344 = vadd.f32 %v7318, %v7334
    %v7345 = vadd.f32 %v7319, %v7336
    %v7346 = vadd.f32 %v7320, %v7338
    %s7347 = sld [smem:[#allocation6 + $0x618]]
    %v7348 = vstv %s7347
    %v7349 = vmul.f32 %v87, %v7348
    %v7350 = vmul.f32 %v88, %v7348
    %v7351 = vmul.f32 %v89, %v7348
    %v7352 = vmul.f32 %v90, %v7348
    %v7353 = vadd.f32 %v7343, %v7349
    %v7354 = vadd.f32 %v7344, %v7350
    %v7355 = vadd.f32 %v7345, %v7351
    %v7356 = vadd.f32 %v7346, %v7352
    %s7357 = sld [smem:[#allocation6 + $0x619]]
    %v7358 = vstv %s7357
    %v7359 = vmul.f32 %v87, %v7358
    %v7360 = vmul.f32 %v88, %v7358
    %v7361 = vmul.f32 %v89, %v7358
    %v7362 = vmul.f32 %v90, %v7358
    %7367 = vrot.lane.b32.xlu0 %v7359, 127
    %v7368 = vpop.permute.xlu0 %7367
    %7369 = vrot.lane.b32.xlu0 %v7360, 127
    %v7370 = vpop.permute.xlu0 %7369
    %7371 = vrot.lane.b32.xlu0 %v7361, 127
    %v7372 = vpop.permute.xlu0 %7371
    %7373 = vrot.lane.b32.xlu0 %v7362, 127
    %v7374 = vpop.permute.xlu0 %7373
    %v7379 = vadd.f32 %v7353, %v7368
    %v7380 = vadd.f32 %v7354, %v7370
    %v7381 = vadd.f32 %v7355, %v7372
    %v7382 = vadd.f32 %v7356, %v7374
    %s7383 = sld [smem:[#allocation6 + $0x61a]]
    %v7384 = vstv %s7383
    %v7385 = vmul.f32 %v87, %v7384
    %v7386 = vmul.f32 %v88, %v7384
    %v7387 = vmul.f32 %v89, %v7384
    %v7388 = vmul.f32 %v90, %v7384
    %7393 = vrot.lane.b32.xlu0 %v7385, 126
    %v7394 = vpop.permute.xlu0 %7393
    %7395 = vrot.lane.b32.xlu0 %v7386, 126
    %v7396 = vpop.permute.xlu0 %7395
    %7397 = vrot.lane.b32.xlu0 %v7387, 126
    %v7398 = vpop.permute.xlu0 %7397
    %7399 = vrot.lane.b32.xlu0 %v7388, 126
    %v7400 = vpop.permute.xlu0 %7399
    %v7405 = vadd.f32 %v7379, %v7394
    %v7406 = vadd.f32 %v7380, %v7396
    %v7407 = vadd.f32 %v7381, %v7398
    %v7408 = vadd.f32 %v7382, %v7400
    %s7409 = sld [smem:[#allocation7 + $0xc]]
    %v7410 = vstv %s7409
    %v7411 = vadd.f32 %v7405, %v7410
    %v7412 = vadd.f32 %v7406, %v7410
    %v7413 = vadd.f32 %v7407, %v7410
    %v7414 = vadd.f32 %v7408, %v7410
    %v7415 = vmin.f32 %v6851, %v7411
    %v7416 = vmin.f32 %v6852, %v7412
    %v7417 = vmin.f32 %v6853, %v7413
    %v7418 = vmin.f32 %v6854, %v7414
    %s7419 = sld [smem:[#allocation6 + $0x680]]
    %v7420 = vstv %s7419
    %v7421 = vmul.f32 %v53, %v7420
    %v7422 = vmul.f32 %v54, %v7420
    %v7423 = vmul.f32 %v55, %v7420
    %v7424 = vmul.f32 %v56, %v7420
    %s7425 = sld [smem:[#allocation6 + $0x681]]
    %v7426 = vstv %s7425
    %v7427 = vmul.f32 %v53, %v7426
    %v7428 = vmul.f32 %v54, %v7426
    %v7429 = vmul.f32 %v55, %v7426
    %v7430 = vmul.f32 %v56, %v7426
    %7435 = vrot.lane.b32.xlu0 %v7427, 127
    %v7436 = vpop.permute.xlu0 %7435
    %7437 = vrot.lane.b32.xlu0 %v7428, 127
    %v7438 = vpop.permute.xlu0 %7437
    %7439 = vrot.lane.b32.xlu0 %v7429, 127
    %v7440 = vpop.permute.xlu0 %7439
    %7441 = vrot.lane.b32.xlu0 %v7430, 127
    %v7442 = vpop.permute.xlu0 %7441
    %v7447 = vadd.f32 %v7421, %v7436
    %v7448 = vadd.f32 %v7422, %v7438
    %v7449 = vadd.f32 %v7423, %v7440
    %v7450 = vadd.f32 %v7424, %v7442
    %s7451 = sld [smem:[#allocation6 + $0x682]]
    %v7452 = vstv %s7451
    %v7453 = vmul.f32 %v53, %v7452
    %v7454 = vmul.f32 %v54, %v7452
    %v7455 = vmul.f32 %v55, %v7452
    %v7456 = vmul.f32 %v56, %v7452
    %7461 = vrot.lane.b32.xlu0 %v7453, 126
    %v7462 = vpop.permute.xlu0 %7461
    %7463 = vrot.lane.b32.xlu0 %v7454, 126
    %v7464 = vpop.permute.xlu0 %7463
    %7465 = vrot.lane.b32.xlu0 %v7455, 126
    %v7466 = vpop.permute.xlu0 %7465
    %7467 = vrot.lane.b32.xlu0 %v7456, 126
    %v7468 = vpop.permute.xlu0 %7467
    %v7473 = vadd.f32 %v7447, %v7462
    %v7474 = vadd.f32 %v7448, %v7464
    %v7475 = vadd.f32 %v7449, %v7466
    %v7476 = vadd.f32 %v7450, %v7468
    %s7477 = sld [smem:[#allocation6 + $0x683]]
    %v7478 = vstv %s7477
    %v7479 = vmul.f32 %v57, %v7478
    %v7480 = vmul.f32 %v58, %v7478
    %v7481 = vmul.f32 %v59, %v7478
    %v7482 = vmul.f32 %v60, %v7478
    %v7483 = vadd.f32 %v7473, %v7479
    %v7484 = vadd.f32 %v7474, %v7480
    %v7485 = vadd.f32 %v7475, %v7481
    %v7486 = vadd.f32 %v7476, %v7482
    %s7487 = sld [smem:[#allocation6 + $0x684]]
    %v7488 = vstv %s7487
    %v7489 = vmul.f32 %v57, %v7488
    %v7490 = vmul.f32 %v58, %v7488
    %v7491 = vmul.f32 %v59, %v7488
    %v7492 = vmul.f32 %v60, %v7488
    %7497 = vrot.lane.b32.xlu0 %v7489, 127
    %v7498 = vpop.permute.xlu0 %7497
    %7499 = vrot.lane.b32.xlu0 %v7490, 127
    %v7500 = vpop.permute.xlu0 %7499
    %7501 = vrot.lane.b32.xlu0 %v7491, 127
    %v7502 = vpop.permute.xlu0 %7501
    %7503 = vrot.lane.b32.xlu0 %v7492, 127
    %v7504 = vpop.permute.xlu0 %7503
    %v7509 = vadd.f32 %v7483, %v7498
    %v7510 = vadd.f32 %v7484, %v7500
    %v7511 = vadd.f32 %v7485, %v7502
    %v7512 = vadd.f32 %v7486, %v7504
    %s7513 = sld [smem:[#allocation6 + $0x685]]
    %v7514 = vstv %s7513
    %v7515 = vmul.f32 %v57, %v7514
    %v7516 = vmul.f32 %v58, %v7514
    %v7517 = vmul.f32 %v59, %v7514
    %v7518 = vmul.f32 %v60, %v7514
    %7523 = vrot.lane.b32.xlu0 %v7515, 126
    %v7524 = vpop.permute.xlu0 %7523
    %7525 = vrot.lane.b32.xlu0 %v7516, 126
    %v7526 = vpop.permute.xlu0 %7525
    %7527 = vrot.lane.b32.xlu0 %v7517, 126
    %v7528 = vpop.permute.xlu0 %7527
    %7529 = vrot.lane.b32.xlu0 %v7518, 126
    %v7530 = vpop.permute.xlu0 %7529
    %v7535 = vadd.f32 %v7509, %v7524
    %v7536 = vadd.f32 %v7510, %v7526
    %v7537 = vadd.f32 %v7511, %v7528
    %v7538 = vadd.f32 %v7512, %v7530
    %s7539 = sld [smem:[#allocation6 + $0x686]]
    %v7540 = vstv %s7539
    %v7541 = vmul.f32 %v61, %v7540
    %v7542 = vmul.f32 %v62, %v7540
    %v7543 = vmul.f32 %v63, %v7540
    %v7544 = vmul.f32 %v64, %v7540
    %v7545 = vadd.f32 %v7535, %v7541
    %v7546 = vadd.f32 %v7536, %v7542
    %v7547 = vadd.f32 %v7537, %v7543
    %v7548 = vadd.f32 %v7538, %v7544
    %s7549 = sld [smem:[#allocation6 + $0x687]]
    %v7550 = vstv %s7549
    %v7551 = vmul.f32 %v61, %v7550
    %v7552 = vmul.f32 %v62, %v7550
    %v7553 = vmul.f32 %v63, %v7550
    %v7554 = vmul.f32 %v64, %v7550
    %7559 = vrot.lane.b32.xlu0 %v7551, 127
    %v7560 = vpop.permute.xlu0 %7559
    %7561 = vrot.lane.b32.xlu0 %v7552, 127
    %v7562 = vpop.permute.xlu0 %7561
    %7563 = vrot.lane.b32.xlu0 %v7553, 127
    %v7564 = vpop.permute.xlu0 %7563
    %7565 = vrot.lane.b32.xlu0 %v7554, 127
    %v7566 = vpop.permute.xlu0 %7565
    %v7571 = vadd.f32 %v7545, %v7560
    %v7572 = vadd.f32 %v7546, %v7562
    %v7573 = vadd.f32 %v7547, %v7564
    %v7574 = vadd.f32 %v7548, %v7566
    %s7575 = sld [smem:[#allocation6 + $0x688]]
    %v7576 = vstv %s7575
    %v7577 = vmul.f32 %v61, %v7576
    %v7578 = vmul.f32 %v62, %v7576
    %v7579 = vmul.f32 %v63, %v7576
    %v7580 = vmul.f32 %v64, %v7576
    %7585 = vrot.lane.b32.xlu0 %v7577, 126
    %v7586 = vpop.permute.xlu0 %7585
    %7587 = vrot.lane.b32.xlu0 %v7578, 126
    %v7588 = vpop.permute.xlu0 %7587
    %7589 = vrot.lane.b32.xlu0 %v7579, 126
    %v7590 = vpop.permute.xlu0 %7589
    %7591 = vrot.lane.b32.xlu0 %v7580, 126
    %v7592 = vpop.permute.xlu0 %7591
    %v7597 = vadd.f32 %v7571, %v7586
    %v7598 = vadd.f32 %v7572, %v7588
    %v7599 = vadd.f32 %v7573, %v7590
    %v7600 = vadd.f32 %v7574, %v7592
    %s7601 = sld [smem:[#allocation6 + $0x689]]
    %v7602 = vstv %s7601
    %v7603 = vmul.f32 %v66, %v7602
    %v7604 = vmul.f32 %v67, %v7602
    %v7605 = vmul.f32 %v68, %v7602
    %v7606 = vmul.f32 %v69, %v7602
    %v7607 = vadd.f32 %v7597, %v7603
    %v7608 = vadd.f32 %v7598, %v7604
    %v7609 = vadd.f32 %v7599, %v7605
    %v7610 = vadd.f32 %v7600, %v7606
    %s7611 = sld [smem:[#allocation6 + $0x68a]]
    %v7612 = vstv %s7611
    %v7613 = vmul.f32 %v66, %v7612
    %v7614 = vmul.f32 %v67, %v7612
    %v7615 = vmul.f32 %v68, %v7612
    %v7616 = vmul.f32 %v69, %v7612
    %7621 = vrot.lane.b32.xlu0 %v7613, 127
    %v7622 = vpop.permute.xlu0 %7621
    %7623 = vrot.lane.b32.xlu0 %v7614, 127
    %v7624 = vpop.permute.xlu0 %7623
    %7625 = vrot.lane.b32.xlu0 %v7615, 127
    %v7626 = vpop.permute.xlu0 %7625
    %7627 = vrot.lane.b32.xlu0 %v7616, 127
    %v7628 = vpop.permute.xlu0 %7627
    %v7633 = vadd.f32 %v7607, %v7622
    %v7634 = vadd.f32 %v7608, %v7624
    %v7635 = vadd.f32 %v7609, %v7626
    %v7636 = vadd.f32 %v7610, %v7628
    %s7637 = sld [smem:[#allocation6 + $0x68b]]
    %v7638 = vstv %s7637
    %v7639 = vmul.f32 %v66, %v7638
    %v7640 = vmul.f32 %v67, %v7638
    %v7641 = vmul.f32 %v68, %v7638
    %v7642 = vmul.f32 %v69, %v7638
    %7647 = vrot.lane.b32.xlu0 %v7639, 126
    %v7648 = vpop.permute.xlu0 %7647
    %7649 = vrot.lane.b32.xlu0 %v7640, 126
    %v7650 = vpop.permute.xlu0 %7649
    %7651 = vrot.lane.b32.xlu0 %v7641, 126
    %v7652 = vpop.permute.xlu0 %7651
    %7653 = vrot.lane.b32.xlu0 %v7642, 126
    %v7654 = vpop.permute.xlu0 %7653
    %v7659 = vadd.f32 %v7633, %v7648
    %v7660 = vadd.f32 %v7634, %v7650
    %v7661 = vadd.f32 %v7635, %v7652
    %v7662 = vadd.f32 %v7636, %v7654
    %s7663 = sld [smem:[#allocation6 + $0x68c]]
    %v7664 = vstv %s7663
    %v7665 = vmul.f32 %v70, %v7664
    %v7666 = vmul.f32 %v71, %v7664
    %v7667 = vmul.f32 %v72, %v7664
    %v7668 = vmul.f32 %v73, %v7664
    %v7669 = vadd.f32 %v7659, %v7665
    %v7670 = vadd.f32 %v7660, %v7666
    %v7671 = vadd.f32 %v7661, %v7667
    %v7672 = vadd.f32 %v7662, %v7668
    %s7673 = sld [smem:[#allocation6 + $0x68d]]
    %v7674 = vstv %s7673
    %v7675 = vmul.f32 %v70, %v7674
    %v7676 = vmul.f32 %v71, %v7674
    %v7677 = vmul.f32 %v72, %v7674
    %v7678 = vmul.f32 %v73, %v7674
    %7683 = vrot.lane.b32.xlu0 %v7675, 127
    %v7684 = vpop.permute.xlu0 %7683
    %7685 = vrot.lane.b32.xlu0 %v7676, 127
    %v7686 = vpop.permute.xlu0 %7685
    %7687 = vrot.lane.b32.xlu0 %v7677, 127
    %v7688 = vpop.permute.xlu0 %7687
    %7689 = vrot.lane.b32.xlu0 %v7678, 127
    %v7690 = vpop.permute.xlu0 %7689
    %v7695 = vadd.f32 %v7669, %v7684
    %v7696 = vadd.f32 %v7670, %v7686
    %v7697 = vadd.f32 %v7671, %v7688
    %v7698 = vadd.f32 %v7672, %v7690
    %s7699 = sld [smem:[#allocation6 + $0x68e]]
    %v7700 = vstv %s7699
    %v7701 = vmul.f32 %v70, %v7700
    %v7702 = vmul.f32 %v71, %v7700
    %v7703 = vmul.f32 %v72, %v7700
    %v7704 = vmul.f32 %v73, %v7700
    %7709 = vrot.lane.b32.xlu0 %v7701, 126
    %v7710 = vpop.permute.xlu0 %7709
    %7711 = vrot.lane.b32.xlu0 %v7702, 126
    %v7712 = vpop.permute.xlu0 %7711
    %7713 = vrot.lane.b32.xlu0 %v7703, 126
    %v7714 = vpop.permute.xlu0 %7713
    %7715 = vrot.lane.b32.xlu0 %v7704, 126
    %v7716 = vpop.permute.xlu0 %7715
    %v7721 = vadd.f32 %v7695, %v7710
    %v7722 = vadd.f32 %v7696, %v7712
    %v7723 = vadd.f32 %v7697, %v7714
    %v7724 = vadd.f32 %v7698, %v7716
    %s7725 = sld [smem:[#allocation6 + $0x68f]]
    %v7726 = vstv %s7725
    %v7727 = vmul.f32 %v74, %v7726
    %v7728 = vmul.f32 %v75, %v7726
    %v7729 = vmul.f32 %v76, %v7726
    %v7730 = vmul.f32 %v77, %v7726
    %v7731 = vadd.f32 %v7721, %v7727
    %v7732 = vadd.f32 %v7722, %v7728
    %v7733 = vadd.f32 %v7723, %v7729
    %v7734 = vadd.f32 %v7724, %v7730
    %s7735 = sld [smem:[#allocation6 + $0x690]]
    %v7736 = vstv %s7735
    %v7737 = vmul.f32 %v74, %v7736
    %v7738 = vmul.f32 %v75, %v7736
    %v7739 = vmul.f32 %v76, %v7736
    %v7740 = vmul.f32 %v77, %v7736
    %7745 = vrot.lane.b32.xlu0 %v7737, 127
    %v7746 = vpop.permute.xlu0 %7745
    %7747 = vrot.lane.b32.xlu0 %v7738, 127
    %v7748 = vpop.permute.xlu0 %7747
    %7749 = vrot.lane.b32.xlu0 %v7739, 127
    %v7750 = vpop.permute.xlu0 %7749
    %7751 = vrot.lane.b32.xlu0 %v7740, 127
    %v7752 = vpop.permute.xlu0 %7751
    %v7757 = vadd.f32 %v7731, %v7746
    %v7758 = vadd.f32 %v7732, %v7748
    %v7759 = vadd.f32 %v7733, %v7750
    %v7760 = vadd.f32 %v7734, %v7752
    %s7761 = sld [smem:[#allocation6 + $0x691]]
    %v7762 = vstv %s7761
    %v7763 = vmul.f32 %v74, %v7762
    %v7764 = vmul.f32 %v75, %v7762
    %v7765 = vmul.f32 %v76, %v7762
    %v7766 = vmul.f32 %v77, %v7762
    %7771 = vrot.lane.b32.xlu0 %v7763, 126
    %v7772 = vpop.permute.xlu0 %7771
    %7773 = vrot.lane.b32.xlu0 %v7764, 126
    %v7774 = vpop.permute.xlu0 %7773
    %7775 = vrot.lane.b32.xlu0 %v7765, 126
    %v7776 = vpop.permute.xlu0 %7775
    %7777 = vrot.lane.b32.xlu0 %v7766, 126
    %v7778 = vpop.permute.xlu0 %7777
    %v7783 = vadd.f32 %v7757, %v7772
    %v7784 = vadd.f32 %v7758, %v7774
    %v7785 = vadd.f32 %v7759, %v7776
    %v7786 = vadd.f32 %v7760, %v7778
    %s7787 = sld [smem:[#allocation6 + $0x692]]
    %v7788 = vstv %s7787
    %v7789 = vmul.f32 %v79, %v7788
    %v7790 = vmul.f32 %v80, %v7788
    %v7791 = vmul.f32 %v81, %v7788
    %v7792 = vmul.f32 %v82, %v7788
    %v7793 = vadd.f32 %v7783, %v7789
    %v7794 = vadd.f32 %v7784, %v7790
    %v7795 = vadd.f32 %v7785, %v7791
    %v7796 = vadd.f32 %v7786, %v7792
    %s7797 = sld [smem:[#allocation6 + $0x693]]
    %v7798 = vstv %s7797
    %v7799 = vmul.f32 %v79, %v7798
    %v7800 = vmul.f32 %v80, %v7798
    %v7801 = vmul.f32 %v81, %v7798
    %v7802 = vmul.f32 %v82, %v7798
    %7807 = vrot.lane.b32.xlu0 %v7799, 127
    %v7808 = vpop.permute.xlu0 %7807
    %7809 = vrot.lane.b32.xlu0 %v7800, 127
    %v7810 = vpop.permute.xlu0 %7809
    %7811 = vrot.lane.b32.xlu0 %v7801, 127
    %v7812 = vpop.permute.xlu0 %7811
    %7813 = vrot.lane.b32.xlu0 %v7802, 127
    %v7814 = vpop.permute.xlu0 %7813
    %v7819 = vadd.f32 %v7793, %v7808
    %v7820 = vadd.f32 %v7794, %v7810
    %v7821 = vadd.f32 %v7795, %v7812
    %v7822 = vadd.f32 %v7796, %v7814
    %s7823 = sld [smem:[#allocation6 + $0x694]]
    %v7824 = vstv %s7823
    %v7825 = vmul.f32 %v79, %v7824
    %v7826 = vmul.f32 %v80, %v7824
    %v7827 = vmul.f32 %v81, %v7824
    %v7828 = vmul.f32 %v82, %v7824
    %7833 = vrot.lane.b32.xlu0 %v7825, 126
    %v7834 = vpop.permute.xlu0 %7833
    %7835 = vrot.lane.b32.xlu0 %v7826, 126
    %v7836 = vpop.permute.xlu0 %7835
    %7837 = vrot.lane.b32.xlu0 %v7827, 126
    %v7838 = vpop.permute.xlu0 %7837
    %7839 = vrot.lane.b32.xlu0 %v7828, 126
    %v7840 = vpop.permute.xlu0 %7839
    %v7845 = vadd.f32 %v7819, %v7834
    %v7846 = vadd.f32 %v7820, %v7836
    %v7847 = vadd.f32 %v7821, %v7838
    %v7848 = vadd.f32 %v7822, %v7840
    %s7849 = sld [smem:[#allocation6 + $0x695]]
    %v7850 = vstv %s7849
    %v7851 = vmul.f32 %v83, %v7850
    %v7852 = vmul.f32 %v84, %v7850
    %v7853 = vmul.f32 %v85, %v7850
    %v7854 = vmul.f32 %v86, %v7850
    %v7855 = vadd.f32 %v7845, %v7851
    %v7856 = vadd.f32 %v7846, %v7852
    %v7857 = vadd.f32 %v7847, %v7853
    %v7858 = vadd.f32 %v7848, %v7854
    %s7859 = sld [smem:[#allocation6 + $0x696]]
    %v7860 = vstv %s7859
    %v7861 = vmul.f32 %v83, %v7860
    %v7862 = vmul.f32 %v84, %v7860
    %v7863 = vmul.f32 %v85, %v7860
    %v7864 = vmul.f32 %v86, %v7860
    %7869 = vrot.lane.b32.xlu0 %v7861, 127
    %v7870 = vpop.permute.xlu0 %7869
    %7871 = vrot.lane.b32.xlu0 %v7862, 127
    %v7872 = vpop.permute.xlu0 %7871
    %7873 = vrot.lane.b32.xlu0 %v7863, 127
    %v7874 = vpop.permute.xlu0 %7873
    %7875 = vrot.lane.b32.xlu0 %v7864, 127
    %v7876 = vpop.permute.xlu0 %7875
    %v7881 = vadd.f32 %v7855, %v7870
    %v7882 = vadd.f32 %v7856, %v7872
    %v7883 = vadd.f32 %v7857, %v7874
    %v7884 = vadd.f32 %v7858, %v7876
    %s7885 = sld [smem:[#allocation6 + $0x697]]
    %v7886 = vstv %s7885
    %v7887 = vmul.f32 %v83, %v7886
    %v7888 = vmul.f32 %v84, %v7886
    %v7889 = vmul.f32 %v85, %v7886
    %v7890 = vmul.f32 %v86, %v7886
    %7895 = vrot.lane.b32.xlu0 %v7887, 126
    %v7896 = vpop.permute.xlu0 %7895
    %7897 = vrot.lane.b32.xlu0 %v7888, 126
    %v7898 = vpop.permute.xlu0 %7897
    %7899 = vrot.lane.b32.xlu0 %v7889, 126
    %v7900 = vpop.permute.xlu0 %7899
    %7901 = vrot.lane.b32.xlu0 %v7890, 126
    %v7902 = vpop.permute.xlu0 %7901
    %v7907 = vadd.f32 %v7881, %v7896
    %v7908 = vadd.f32 %v7882, %v7898
    %v7909 = vadd.f32 %v7883, %v7900
    %v7910 = vadd.f32 %v7884, %v7902
    %s7911 = sld [smem:[#allocation6 + $0x698]]
    %v7912 = vstv %s7911
    %v7913 = vmul.f32 %v87, %v7912
    %v7914 = vmul.f32 %v88, %v7912
    %v7915 = vmul.f32 %v89, %v7912
    %v7916 = vmul.f32 %v90, %v7912
    %v7917 = vadd.f32 %v7907, %v7913
    %v7918 = vadd.f32 %v7908, %v7914
    %v7919 = vadd.f32 %v7909, %v7915
    %v7920 = vadd.f32 %v7910, %v7916
    %s7921 = sld [smem:[#allocation6 + $0x699]]
    %v7922 = vstv %s7921
    %v7923 = vmul.f32 %v87, %v7922
    %v7924 = vmul.f32 %v88, %v7922
    %v7925 = vmul.f32 %v89, %v7922
    %v7926 = vmul.f32 %v90, %v7922
    %7931 = vrot.lane.b32.xlu0 %v7923, 127
    %v7932 = vpop.permute.xlu0 %7931
    %7933 = vrot.lane.b32.xlu0 %v7924, 127
    %v7934 = vpop.permute.xlu0 %7933
    %7935 = vrot.lane.b32.xlu0 %v7925, 127
    %v7936 = vpop.permute.xlu0 %7935
    %7937 = vrot.lane.b32.xlu0 %v7926, 127
    %v7938 = vpop.permute.xlu0 %7937
    %v7943 = vadd.f32 %v7917, %v7932
    %v7944 = vadd.f32 %v7918, %v7934
    %v7945 = vadd.f32 %v7919, %v7936
    %v7946 = vadd.f32 %v7920, %v7938
    %s7947 = sld [smem:[#allocation6 + $0x69a]]
    %v7948 = vstv %s7947
    %v7949 = vmul.f32 %v87, %v7948
    %v7950 = vmul.f32 %v88, %v7948
    %v7951 = vmul.f32 %v89, %v7948
    %v7952 = vmul.f32 %v90, %v7948
    %7957 = vrot.lane.b32.xlu0 %v7949, 126
    %v7958 = vpop.permute.xlu0 %7957
    %7959 = vrot.lane.b32.xlu0 %v7950, 126
    %v7960 = vpop.permute.xlu0 %7959
    %7961 = vrot.lane.b32.xlu0 %v7951, 126
    %v7962 = vpop.permute.xlu0 %7961
    %7963 = vrot.lane.b32.xlu0 %v7952, 126
    %v7964 = vpop.permute.xlu0 %7963
    %v7969 = vadd.f32 %v7943, %v7958
    %v7970 = vadd.f32 %v7944, %v7960
    %v7971 = vadd.f32 %v7945, %v7962
    %v7972 = vadd.f32 %v7946, %v7964
    %s7973 = sld [smem:[#allocation7 + $0xd]]
    %v7974 = vstv %s7973
    %v7975 = vadd.f32 %v7969, %v7974
    %v7976 = vadd.f32 %v7970, %v7974
    %v7977 = vadd.f32 %v7971, %v7974
    %v7978 = vadd.f32 %v7972, %v7974
    %v7979 = vmin.f32 %v7415, %v7975
    %v7980 = vmin.f32 %v7416, %v7976
    %v7981 = vmin.f32 %v7417, %v7977
    %v7982 = vmin.f32 %v7418, %v7978
    %s7983 = sld [smem:[#allocation6 + $0x700]]
    %v7984 = vstv %s7983
    %v7985 = vmul.f32 %v53, %v7984
    %v7986 = vmul.f32 %v54, %v7984
    %v7987 = vmul.f32 %v55, %v7984
    %v7988 = vmul.f32 %v56, %v7984
    %s7989 = sld [smem:[#allocation6 + $0x701]]
    %v7990 = vstv %s7989
    %v7991 = vmul.f32 %v53, %v7990
    %v7992 = vmul.f32 %v54, %v7990
    %v7993 = vmul.f32 %v55, %v7990
    %v7994 = vmul.f32 %v56, %v7990
    %7999 = vrot.lane.b32.xlu0 %v7991, 127
    %v8000 = vpop.permute.xlu0 %7999
    %8001 = vrot.lane.b32.xlu0 %v7992, 127
    %v8002 = vpop.permute.xlu0 %8001
    %8003 = vrot.lane.b32.xlu0 %v7993, 127
    %v8004 = vpop.permute.xlu0 %8003
    %8005 = vrot.lane.b32.xlu0 %v7994, 127
    %v8006 = vpop.permute.xlu0 %8005
    %v8011 = vadd.f32 %v7985, %v8000
    %v8012 = vadd.f32 %v7986, %v8002
    %v8013 = vadd.f32 %v7987, %v8004
    %v8014 = vadd.f32 %v7988, %v8006
    %s8015 = sld [smem:[#allocation6 + $0x702]]
    %v8016 = vstv %s8015
    %v8017 = vmul.f32 %v53, %v8016
    %v8018 = vmul.f32 %v54, %v8016
    %v8019 = vmul.f32 %v55, %v8016
    %v8020 = vmul.f32 %v56, %v8016
    %8025 = vrot.lane.b32.xlu0 %v8017, 126
    %v8026 = vpop.permute.xlu0 %8025
    %8027 = vrot.lane.b32.xlu0 %v8018, 126
    %v8028 = vpop.permute.xlu0 %8027
    %8029 = vrot.lane.b32.xlu0 %v8019, 126
    %v8030 = vpop.permute.xlu0 %8029
    %8031 = vrot.lane.b32.xlu0 %v8020, 126
    %v8032 = vpop.permute.xlu0 %8031
    %v8037 = vadd.f32 %v8011, %v8026
    %v8038 = vadd.f32 %v8012, %v8028
    %v8039 = vadd.f32 %v8013, %v8030
    %v8040 = vadd.f32 %v8014, %v8032
    %s8041 = sld [smem:[#allocation6 + $0x703]]
    %v8042 = vstv %s8041
    %v8043 = vmul.f32 %v57, %v8042
    %v8044 = vmul.f32 %v58, %v8042
    %v8045 = vmul.f32 %v59, %v8042
    %v8046 = vmul.f32 %v60, %v8042
    %v8047 = vadd.f32 %v8037, %v8043
    %v8048 = vadd.f32 %v8038, %v8044
    %v8049 = vadd.f32 %v8039, %v8045
    %v8050 = vadd.f32 %v8040, %v8046
    %s8051 = sld [smem:[#allocation6 + $0x704]]
    %v8052 = vstv %s8051
    %v8053 = vmul.f32 %v57, %v8052
    %v8054 = vmul.f32 %v58, %v8052
    %v8055 = vmul.f32 %v59, %v8052
    %v8056 = vmul.f32 %v60, %v8052
    %8061 = vrot.lane.b32.xlu0 %v8053, 127
    %v8062 = vpop.permute.xlu0 %8061
    %8063 = vrot.lane.b32.xlu0 %v8054, 127
    %v8064 = vpop.permute.xlu0 %8063
    %8065 = vrot.lane.b32.xlu0 %v8055, 127
    %v8066 = vpop.permute.xlu0 %8065
    %8067 = vrot.lane.b32.xlu0 %v8056, 127
    %v8068 = vpop.permute.xlu0 %8067
    %v8073 = vadd.f32 %v8047, %v8062
    %v8074 = vadd.f32 %v8048, %v8064
    %v8075 = vadd.f32 %v8049, %v8066
    %v8076 = vadd.f32 %v8050, %v8068
    %s8077 = sld [smem:[#allocation6 + $0x705]]
    %v8078 = vstv %s8077
    %v8079 = vmul.f32 %v57, %v8078
    %v8080 = vmul.f32 %v58, %v8078
    %v8081 = vmul.f32 %v59, %v8078
    %v8082 = vmul.f32 %v60, %v8078
    %8087 = vrot.lane.b32.xlu0 %v8079, 126
    %v8088 = vpop.permute.xlu0 %8087
    %8089 = vrot.lane.b32.xlu0 %v8080, 126
    %v8090 = vpop.permute.xlu0 %8089
    %8091 = vrot.lane.b32.xlu0 %v8081, 126
    %v8092 = vpop.permute.xlu0 %8091
    %8093 = vrot.lane.b32.xlu0 %v8082, 126
    %v8094 = vpop.permute.xlu0 %8093
    %v8099 = vadd.f32 %v8073, %v8088
    %v8100 = vadd.f32 %v8074, %v8090
    %v8101 = vadd.f32 %v8075, %v8092
    %v8102 = vadd.f32 %v8076, %v8094
    %s8103 = sld [smem:[#allocation6 + $0x706]]
    %v8104 = vstv %s8103
    %v8105 = vmul.f32 %v61, %v8104
    %v8106 = vmul.f32 %v62, %v8104
    %v8107 = vmul.f32 %v63, %v8104
    %v8108 = vmul.f32 %v64, %v8104
    %v8109 = vadd.f32 %v8099, %v8105
    %v8110 = vadd.f32 %v8100, %v8106
    %v8111 = vadd.f32 %v8101, %v8107
    %v8112 = vadd.f32 %v8102, %v8108
    %s8113 = sld [smem:[#allocation6 + $0x707]]
    %v8114 = vstv %s8113
    %v8115 = vmul.f32 %v61, %v8114
    %v8116 = vmul.f32 %v62, %v8114
    %v8117 = vmul.f32 %v63, %v8114
    %v8118 = vmul.f32 %v64, %v8114
    %8123 = vrot.lane.b32.xlu0 %v8115, 127
    %v8124 = vpop.permute.xlu0 %8123
    %8125 = vrot.lane.b32.xlu0 %v8116, 127
    %v8126 = vpop.permute.xlu0 %8125
    %8127 = vrot.lane.b32.xlu0 %v8117, 127
    %v8128 = vpop.permute.xlu0 %8127
    %8129 = vrot.lane.b32.xlu0 %v8118, 127
    %v8130 = vpop.permute.xlu0 %8129
    %v8135 = vadd.f32 %v8109, %v8124
    %v8136 = vadd.f32 %v8110, %v8126
    %v8137 = vadd.f32 %v8111, %v8128
    %v8138 = vadd.f32 %v8112, %v8130
    %s8139 = sld [smem:[#allocation6 + $0x708]]
    %v8140 = vstv %s8139
    %v8141 = vmul.f32 %v61, %v8140
    %v8142 = vmul.f32 %v62, %v8140
    %v8143 = vmul.f32 %v63, %v8140
    %v8144 = vmul.f32 %v64, %v8140
    %8149 = vrot.lane.b32.xlu0 %v8141, 126
    %v8150 = vpop.permute.xlu0 %8149
    %8151 = vrot.lane.b32.xlu0 %v8142, 126
    %v8152 = vpop.permute.xlu0 %8151
    %8153 = vrot.lane.b32.xlu0 %v8143, 126
    %v8154 = vpop.permute.xlu0 %8153
    %8155 = vrot.lane.b32.xlu0 %v8144, 126
    %v8156 = vpop.permute.xlu0 %8155
    %v8161 = vadd.f32 %v8135, %v8150
    %v8162 = vadd.f32 %v8136, %v8152
    %v8163 = vadd.f32 %v8137, %v8154
    %v8164 = vadd.f32 %v8138, %v8156
    %s8165 = sld [smem:[#allocation6 + $0x709]]
    %v8166 = vstv %s8165
    %v8167 = vmul.f32 %v66, %v8166
    %v8168 = vmul.f32 %v67, %v8166
    %v8169 = vmul.f32 %v68, %v8166
    %v8170 = vmul.f32 %v69, %v8166
    %v8171 = vadd.f32 %v8161, %v8167
    %v8172 = vadd.f32 %v8162, %v8168
    %v8173 = vadd.f32 %v8163, %v8169
    %v8174 = vadd.f32 %v8164, %v8170
    %s8175 = sld [smem:[#allocation6 + $0x70a]]
    %v8176 = vstv %s8175
    %v8177 = vmul.f32 %v66, %v8176
    %v8178 = vmul.f32 %v67, %v8176
    %v8179 = vmul.f32 %v68, %v8176
    %v8180 = vmul.f32 %v69, %v8176
    %8185 = vrot.lane.b32.xlu0 %v8177, 127
    %v8186 = vpop.permute.xlu0 %8185
    %8187 = vrot.lane.b32.xlu0 %v8178, 127
    %v8188 = vpop.permute.xlu0 %8187
    %8189 = vrot.lane.b32.xlu0 %v8179, 127
    %v8190 = vpop.permute.xlu0 %8189
    %8191 = vrot.lane.b32.xlu0 %v8180, 127
    %v8192 = vpop.permute.xlu0 %8191
    %v8197 = vadd.f32 %v8171, %v8186
    %v8198 = vadd.f32 %v8172, %v8188
    %v8199 = vadd.f32 %v8173, %v8190
    %v8200 = vadd.f32 %v8174, %v8192
    %s8201 = sld [smem:[#allocation6 + $0x70b]]
    %v8202 = vstv %s8201
    %v8203 = vmul.f32 %v66, %v8202
    %v8204 = vmul.f32 %v67, %v8202
    %v8205 = vmul.f32 %v68, %v8202
    %v8206 = vmul.f32 %v69, %v8202
    %8211 = vrot.lane.b32.xlu0 %v8203, 126
    %v8212 = vpop.permute.xlu0 %8211
    %8213 = vrot.lane.b32.xlu0 %v8204, 126
    %v8214 = vpop.permute.xlu0 %8213
    %8215 = vrot.lane.b32.xlu0 %v8205, 126
    %v8216 = vpop.permute.xlu0 %8215
    %8217 = vrot.lane.b32.xlu0 %v8206, 126
    %v8218 = vpop.permute.xlu0 %8217
    %v8223 = vadd.f32 %v8197, %v8212
    %v8224 = vadd.f32 %v8198, %v8214
    %v8225 = vadd.f32 %v8199, %v8216
    %v8226 = vadd.f32 %v8200, %v8218
    %s8227 = sld [smem:[#allocation6 + $0x70c]]
    %v8228 = vstv %s8227
    %v8229 = vmul.f32 %v70, %v8228
    %v8230 = vmul.f32 %v71, %v8228
    %v8231 = vmul.f32 %v72, %v8228
    %v8232 = vmul.f32 %v73, %v8228
    %v8233 = vadd.f32 %v8223, %v8229
    %v8234 = vadd.f32 %v8224, %v8230
    %v8235 = vadd.f32 %v8225, %v8231
    %v8236 = vadd.f32 %v8226, %v8232
    %s8237 = sld [smem:[#allocation6 + $0x70d]]
    %v8238 = vstv %s8237
    %v8239 = vmul.f32 %v70, %v8238
    %v8240 = vmul.f32 %v71, %v8238
    %v8241 = vmul.f32 %v72, %v8238
    %v8242 = vmul.f32 %v73, %v8238
    %8247 = vrot.lane.b32.xlu0 %v8239, 127
    %v8248 = vpop.permute.xlu0 %8247
    %8249 = vrot.lane.b32.xlu0 %v8240, 127
    %v8250 = vpop.permute.xlu0 %8249
    %8251 = vrot.lane.b32.xlu0 %v8241, 127
    %v8252 = vpop.permute.xlu0 %8251
    %8253 = vrot.lane.b32.xlu0 %v8242, 127
    %v8254 = vpop.permute.xlu0 %8253
    %v8259 = vadd.f32 %v8233, %v8248
    %v8260 = vadd.f32 %v8234, %v8250
    %v8261 = vadd.f32 %v8235, %v8252
    %v8262 = vadd.f32 %v8236, %v8254
    %s8263 = sld [smem:[#allocation6 + $0x70e]]
    %v8264 = vstv %s8263
    %v8265 = vmul.f32 %v70, %v8264
    %v8266 = vmul.f32 %v71, %v8264
    %v8267 = vmul.f32 %v72, %v8264
    %v8268 = vmul.f32 %v73, %v8264
    %8273 = vrot.lane.b32.xlu0 %v8265, 126
    %v8274 = vpop.permute.xlu0 %8273
    %8275 = vrot.lane.b32.xlu0 %v8266, 126
    %v8276 = vpop.permute.xlu0 %8275
    %8277 = vrot.lane.b32.xlu0 %v8267, 126
    %v8278 = vpop.permute.xlu0 %8277
    %8279 = vrot.lane.b32.xlu0 %v8268, 126
    %v8280 = vpop.permute.xlu0 %8279
    %v8285 = vadd.f32 %v8259, %v8274
    %v8286 = vadd.f32 %v8260, %v8276
    %v8287 = vadd.f32 %v8261, %v8278
    %v8288 = vadd.f32 %v8262, %v8280
    %s8289 = sld [smem:[#allocation6 + $0x70f]]
    %v8290 = vstv %s8289
    %v8291 = vmul.f32 %v74, %v8290
    %v8292 = vmul.f32 %v75, %v8290
    %v8293 = vmul.f32 %v76, %v8290
    %v8294 = vmul.f32 %v77, %v8290
    %v8295 = vadd.f32 %v8285, %v8291
    %v8296 = vadd.f32 %v8286, %v8292
    %v8297 = vadd.f32 %v8287, %v8293
    %v8298 = vadd.f32 %v8288, %v8294
    %s8299 = sld [smem:[#allocation6 + $0x710]]
    %v8300 = vstv %s8299
    %v8301 = vmul.f32 %v74, %v8300
    %v8302 = vmul.f32 %v75, %v8300
    %v8303 = vmul.f32 %v76, %v8300
    %v8304 = vmul.f32 %v77, %v8300
    %8309 = vrot.lane.b32.xlu0 %v8301, 127
    %v8310 = vpop.permute.xlu0 %8309
    %8311 = vrot.lane.b32.xlu0 %v8302, 127
    %v8312 = vpop.permute.xlu0 %8311
    %8313 = vrot.lane.b32.xlu0 %v8303, 127
    %v8314 = vpop.permute.xlu0 %8313
    %8315 = vrot.lane.b32.xlu0 %v8304, 127
    %v8316 = vpop.permute.xlu0 %8315
    %v8321 = vadd.f32 %v8295, %v8310
    %v8322 = vadd.f32 %v8296, %v8312
    %v8323 = vadd.f32 %v8297, %v8314
    %v8324 = vadd.f32 %v8298, %v8316
    %s8325 = sld [smem:[#allocation6 + $0x711]]
    %v8326 = vstv %s8325
    %v8327 = vmul.f32 %v74, %v8326
    %v8328 = vmul.f32 %v75, %v8326
    %v8329 = vmul.f32 %v76, %v8326
    %v8330 = vmul.f32 %v77, %v8326
    %8335 = vrot.lane.b32.xlu0 %v8327, 126
    %v8336 = vpop.permute.xlu0 %8335
    %8337 = vrot.lane.b32.xlu0 %v8328, 126
    %v8338 = vpop.permute.xlu0 %8337
    %8339 = vrot.lane.b32.xlu0 %v8329, 126
    %v8340 = vpop.permute.xlu0 %8339
    %8341 = vrot.lane.b32.xlu0 %v8330, 126
    %v8342 = vpop.permute.xlu0 %8341
    %v8347 = vadd.f32 %v8321, %v8336
    %v8348 = vadd.f32 %v8322, %v8338
    %v8349 = vadd.f32 %v8323, %v8340
    %v8350 = vadd.f32 %v8324, %v8342
    %s8351 = sld [smem:[#allocation6 + $0x712]]
    %v8352 = vstv %s8351
    %v8353 = vmul.f32 %v79, %v8352
    %v8354 = vmul.f32 %v80, %v8352
    %v8355 = vmul.f32 %v81, %v8352
    %v8356 = vmul.f32 %v82, %v8352
    %v8357 = vadd.f32 %v8347, %v8353
    %v8358 = vadd.f32 %v8348, %v8354
    %v8359 = vadd.f32 %v8349, %v8355
    %v8360 = vadd.f32 %v8350, %v8356
    %s8361 = sld [smem:[#allocation6 + $0x713]]
    %v8362 = vstv %s8361
    %v8363 = vmul.f32 %v79, %v8362
    %v8364 = vmul.f32 %v80, %v8362
    %v8365 = vmul.f32 %v81, %v8362
    %v8366 = vmul.f32 %v82, %v8362
    %8371 = vrot.lane.b32.xlu0 %v8363, 127
    %v8372 = vpop.permute.xlu0 %8371
    %8373 = vrot.lane.b32.xlu0 %v8364, 127
    %v8374 = vpop.permute.xlu0 %8373
    %8375 = vrot.lane.b32.xlu0 %v8365, 127
    %v8376 = vpop.permute.xlu0 %8375
    %8377 = vrot.lane.b32.xlu0 %v8366, 127
    %v8378 = vpop.permute.xlu0 %8377
    %v8383 = vadd.f32 %v8357, %v8372
    %v8384 = vadd.f32 %v8358, %v8374
    %v8385 = vadd.f32 %v8359, %v8376
    %v8386 = vadd.f32 %v8360, %v8378
    %s8387 = sld [smem:[#allocation6 + $0x714]]
    %v8388 = vstv %s8387
    %v8389 = vmul.f32 %v79, %v8388
    %v8390 = vmul.f32 %v80, %v8388
    %v8391 = vmul.f32 %v81, %v8388
    %v8392 = vmul.f32 %v82, %v8388
    %8397 = vrot.lane.b32.xlu0 %v8389, 126
    %v8398 = vpop.permute.xlu0 %8397
    %8399 = vrot.lane.b32.xlu0 %v8390, 126
    %v8400 = vpop.permute.xlu0 %8399
    %8401 = vrot.lane.b32.xlu0 %v8391, 126
    %v8402 = vpop.permute.xlu0 %8401
    %8403 = vrot.lane.b32.xlu0 %v8392, 126
    %v8404 = vpop.permute.xlu0 %8403
    %v8409 = vadd.f32 %v8383, %v8398
    %v8410 = vadd.f32 %v8384, %v8400
    %v8411 = vadd.f32 %v8385, %v8402
    %v8412 = vadd.f32 %v8386, %v8404
    %s8413 = sld [smem:[#allocation6 + $0x715]]
    %v8414 = vstv %s8413
    %v8415 = vmul.f32 %v83, %v8414
    %v8416 = vmul.f32 %v84, %v8414
    %v8417 = vmul.f32 %v85, %v8414
    %v8418 = vmul.f32 %v86, %v8414
    %v8419 = vadd.f32 %v8409, %v8415
    %v8420 = vadd.f32 %v8410, %v8416
    %v8421 = vadd.f32 %v8411, %v8417
    %v8422 = vadd.f32 %v8412, %v8418
    %s8423 = sld [smem:[#allocation6 + $0x716]]
    %v8424 = vstv %s8423
    %v8425 = vmul.f32 %v83, %v8424
    %v8426 = vmul.f32 %v84, %v8424
    %v8427 = vmul.f32 %v85, %v8424
    %v8428 = vmul.f32 %v86, %v8424
    %8433 = vrot.lane.b32.xlu0 %v8425, 127
    %v8434 = vpop.permute.xlu0 %8433
    %8435 = vrot.lane.b32.xlu0 %v8426, 127
    %v8436 = vpop.permute.xlu0 %8435
    %8437 = vrot.lane.b32.xlu0 %v8427, 127
    %v8438 = vpop.permute.xlu0 %8437
    %8439 = vrot.lane.b32.xlu0 %v8428, 127
    %v8440 = vpop.permute.xlu0 %8439
    %v8445 = vadd.f32 %v8419, %v8434
    %v8446 = vadd.f32 %v8420, %v8436
    %v8447 = vadd.f32 %v8421, %v8438
    %v8448 = vadd.f32 %v8422, %v8440
    %s8449 = sld [smem:[#allocation6 + $0x717]]
    %v8450 = vstv %s8449
    %v8451 = vmul.f32 %v83, %v8450
    %v8452 = vmul.f32 %v84, %v8450
    %v8453 = vmul.f32 %v85, %v8450
    %v8454 = vmul.f32 %v86, %v8450
    %8459 = vrot.lane.b32.xlu0 %v8451, 126
    %v8460 = vpop.permute.xlu0 %8459
    %8461 = vrot.lane.b32.xlu0 %v8452, 126
    %v8462 = vpop.permute.xlu0 %8461
    %8463 = vrot.lane.b32.xlu0 %v8453, 126
    %v8464 = vpop.permute.xlu0 %8463
    %8465 = vrot.lane.b32.xlu0 %v8454, 126
    %v8466 = vpop.permute.xlu0 %8465
    %v8471 = vadd.f32 %v8445, %v8460
    %v8472 = vadd.f32 %v8446, %v8462
    %v8473 = vadd.f32 %v8447, %v8464
    %v8474 = vadd.f32 %v8448, %v8466
    %s8475 = sld [smem:[#allocation6 + $0x718]]
    %v8476 = vstv %s8475
    %v8477 = vmul.f32 %v87, %v8476
    %v8478 = vmul.f32 %v88, %v8476
    %v8479 = vmul.f32 %v89, %v8476
    %v8480 = vmul.f32 %v90, %v8476
    %v8481 = vadd.f32 %v8471, %v8477
    %v8482 = vadd.f32 %v8472, %v8478
    %v8483 = vadd.f32 %v8473, %v8479
    %v8484 = vadd.f32 %v8474, %v8480
    %s8485 = sld [smem:[#allocation6 + $0x719]]
    %v8486 = vstv %s8485
    %v8487 = vmul.f32 %v87, %v8486
    %v8488 = vmul.f32 %v88, %v8486
    %v8489 = vmul.f32 %v89, %v8486
    %v8490 = vmul.f32 %v90, %v8486
    %8495 = vrot.lane.b32.xlu0 %v8487, 127
    %v8496 = vpop.permute.xlu0 %8495
    %8497 = vrot.lane.b32.xlu0 %v8488, 127
    %v8498 = vpop.permute.xlu0 %8497
    %8499 = vrot.lane.b32.xlu0 %v8489, 127
    %v8500 = vpop.permute.xlu0 %8499
    %8501 = vrot.lane.b32.xlu0 %v8490, 127
    %v8502 = vpop.permute.xlu0 %8501
    %v8507 = vadd.f32 %v8481, %v8496
    %v8508 = vadd.f32 %v8482, %v8498
    %v8509 = vadd.f32 %v8483, %v8500
    %v8510 = vadd.f32 %v8484, %v8502
    %s8511 = sld [smem:[#allocation6 + $0x71a]]
    %v8512 = vstv %s8511
    %v8513 = vmul.f32 %v87, %v8512
    %v8514 = vmul.f32 %v88, %v8512
    %v8515 = vmul.f32 %v89, %v8512
    %v8516 = vmul.f32 %v90, %v8512
    %8521 = vrot.lane.b32.xlu0 %v8513, 126
    %v8522 = vpop.permute.xlu0 %8521
    %8523 = vrot.lane.b32.xlu0 %v8514, 126
    %v8524 = vpop.permute.xlu0 %8523
    %8525 = vrot.lane.b32.xlu0 %v8515, 126
    %v8526 = vpop.permute.xlu0 %8525
    %8527 = vrot.lane.b32.xlu0 %v8516, 126
    %v8528 = vpop.permute.xlu0 %8527
    %v8533 = vadd.f32 %v8507, %v8522
    %v8534 = vadd.f32 %v8508, %v8524
    %v8535 = vadd.f32 %v8509, %v8526
    %v8536 = vadd.f32 %v8510, %v8528
    %s8537 = sld [smem:[#allocation7 + $0xe]]
    %v8538 = vstv %s8537
    %v8539 = vadd.f32 %v8533, %v8538
    %v8540 = vadd.f32 %v8534, %v8538
    %v8541 = vadd.f32 %v8535, %v8538
    %v8542 = vadd.f32 %v8536, %v8538
    %v8543 = vmin.f32 %v7979, %v8539
    %v8544 = vmin.f32 %v7980, %v8540
    %v8545 = vmin.f32 %v7981, %v8541
    %v8546 = vmin.f32 %v7982, %v8542
    %s8547 = sld [smem:[#allocation6 + $0x780]]
    %v8548 = vstv %s8547
    %v8549 = vmul.f32 %v53, %v8548
    %v8550 = vmul.f32 %v54, %v8548
    %v8551 = vmul.f32 %v55, %v8548
    %v8552 = vmul.f32 %v56, %v8548
    %s8553 = sld [smem:[#allocation6 + $0x781]]
    %v8554 = vstv %s8553
    %v8555 = vmul.f32 %v53, %v8554
    %v8556 = vmul.f32 %v54, %v8554
    %v8557 = vmul.f32 %v55, %v8554
    %v8558 = vmul.f32 %v56, %v8554
    %8563 = vrot.lane.b32.xlu0 %v8555, 127
    %v8564 = vpop.permute.xlu0 %8563
    %8565 = vrot.lane.b32.xlu0 %v8556, 127
    %v8566 = vpop.permute.xlu0 %8565
    %8567 = vrot.lane.b32.xlu0 %v8557, 127
    %v8568 = vpop.permute.xlu0 %8567
    %8569 = vrot.lane.b32.xlu0 %v8558, 127
    %v8570 = vpop.permute.xlu0 %8569
    %v8575 = vadd.f32 %v8549, %v8564
    %v8576 = vadd.f32 %v8550, %v8566
    %v8577 = vadd.f32 %v8551, %v8568
    %v8578 = vadd.f32 %v8552, %v8570
    %s8579 = sld [smem:[#allocation6 + $0x782]]
    %v8580 = vstv %s8579
    %v8581 = vmul.f32 %v53, %v8580
    %v8582 = vmul.f32 %v54, %v8580
    %v8583 = vmul.f32 %v55, %v8580
    %v8584 = vmul.f32 %v56, %v8580
    %8589 = vrot.lane.b32.xlu0 %v8581, 126
    %v8590 = vpop.permute.xlu0 %8589
    %8591 = vrot.lane.b32.xlu0 %v8582, 126
    %v8592 = vpop.permute.xlu0 %8591
    %8593 = vrot.lane.b32.xlu0 %v8583, 126
    %v8594 = vpop.permute.xlu0 %8593
    %8595 = vrot.lane.b32.xlu0 %v8584, 126
    %v8596 = vpop.permute.xlu0 %8595
    %v8601 = vadd.f32 %v8575, %v8590
    %v8602 = vadd.f32 %v8576, %v8592
    %v8603 = vadd.f32 %v8577, %v8594
    %v8604 = vadd.f32 %v8578, %v8596
    %s8605 = sld [smem:[#allocation6 + $0x783]]
    %v8606 = vstv %s8605
    %v8607 = vmul.f32 %v57, %v8606
    %v8608 = vmul.f32 %v58, %v8606
    %v8609 = vmul.f32 %v59, %v8606
    %v8610 = vmul.f32 %v60, %v8606
    %v8611 = vadd.f32 %v8601, %v8607
    %v8612 = vadd.f32 %v8602, %v8608
    %v8613 = vadd.f32 %v8603, %v8609
    %v8614 = vadd.f32 %v8604, %v8610
    %s8615 = sld [smem:[#allocation6 + $0x784]]
    %v8616 = vstv %s8615
    %v8617 = vmul.f32 %v57, %v8616
    %v8618 = vmul.f32 %v58, %v8616
    %v8619 = vmul.f32 %v59, %v8616
    %v8620 = vmul.f32 %v60, %v8616
    %8625 = vrot.lane.b32.xlu0 %v8617, 127
    %v8626 = vpop.permute.xlu0 %8625
    %8627 = vrot.lane.b32.xlu0 %v8618, 127
    %v8628 = vpop.permute.xlu0 %8627
    %8629 = vrot.lane.b32.xlu0 %v8619, 127
    %v8630 = vpop.permute.xlu0 %8629
    %8631 = vrot.lane.b32.xlu0 %v8620, 127
    %v8632 = vpop.permute.xlu0 %8631
    %v8637 = vadd.f32 %v8611, %v8626
    %v8638 = vadd.f32 %v8612, %v8628
    %v8639 = vadd.f32 %v8613, %v8630
    %v8640 = vadd.f32 %v8614, %v8632
    %s8641 = sld [smem:[#allocation6 + $0x785]]
    %v8642 = vstv %s8641
    %v8643 = vmul.f32 %v57, %v8642
    %v8644 = vmul.f32 %v58, %v8642
    %v8645 = vmul.f32 %v59, %v8642
    %v8646 = vmul.f32 %v60, %v8642
    %8651 = vrot.lane.b32.xlu0 %v8643, 126
    %v8652 = vpop.permute.xlu0 %8651
    %8653 = vrot.lane.b32.xlu0 %v8644, 126
    %v8654 = vpop.permute.xlu0 %8653
    %8655 = vrot.lane.b32.xlu0 %v8645, 126
    %v8656 = vpop.permute.xlu0 %8655
    %8657 = vrot.lane.b32.xlu0 %v8646, 126
    %v8658 = vpop.permute.xlu0 %8657
    %v8663 = vadd.f32 %v8637, %v8652
    %v8664 = vadd.f32 %v8638, %v8654
    %v8665 = vadd.f32 %v8639, %v8656
    %v8666 = vadd.f32 %v8640, %v8658
    %s8667 = sld [smem:[#allocation6 + $0x786]]
    %v8668 = vstv %s8667
    %v8669 = vmul.f32 %v61, %v8668
    %v8670 = vmul.f32 %v62, %v8668
    %v8671 = vmul.f32 %v63, %v8668
    %v8672 = vmul.f32 %v64, %v8668
    %v8673 = vadd.f32 %v8663, %v8669
    %v8674 = vadd.f32 %v8664, %v8670
    %v8675 = vadd.f32 %v8665, %v8671
    %v8676 = vadd.f32 %v8666, %v8672
    %s8677 = sld [smem:[#allocation6 + $0x787]]
    %v8678 = vstv %s8677
    %v8679 = vmul.f32 %v61, %v8678
    %v8680 = vmul.f32 %v62, %v8678
    %v8681 = vmul.f32 %v63, %v8678
    %v8682 = vmul.f32 %v64, %v8678
    %8687 = vrot.lane.b32.xlu0 %v8679, 127
    %v8688 = vpop.permute.xlu0 %8687
    %8689 = vrot.lane.b32.xlu0 %v8680, 127
    %v8690 = vpop.permute.xlu0 %8689
    %8691 = vrot.lane.b32.xlu0 %v8681, 127
    %v8692 = vpop.permute.xlu0 %8691
    %8693 = vrot.lane.b32.xlu0 %v8682, 127
    %v8694 = vpop.permute.xlu0 %8693
    %v8699 = vadd.f32 %v8673, %v8688
    %v8700 = vadd.f32 %v8674, %v8690
    %v8701 = vadd.f32 %v8675, %v8692
    %v8702 = vadd.f32 %v8676, %v8694
    %s8703 = sld [smem:[#allocation6 + $0x788]]
    %v8704 = vstv %s8703
    %v8705 = vmul.f32 %v61, %v8704
    %v8706 = vmul.f32 %v62, %v8704
    %v8707 = vmul.f32 %v63, %v8704
    %v8708 = vmul.f32 %v64, %v8704
    %8713 = vrot.lane.b32.xlu0 %v8705, 126
    %v8714 = vpop.permute.xlu0 %8713
    %8715 = vrot.lane.b32.xlu0 %v8706, 126
    %v8716 = vpop.permute.xlu0 %8715
    %8717 = vrot.lane.b32.xlu0 %v8707, 126
    %v8718 = vpop.permute.xlu0 %8717
    %8719 = vrot.lane.b32.xlu0 %v8708, 126
    %v8720 = vpop.permute.xlu0 %8719
    %v8725 = vadd.f32 %v8699, %v8714
    %v8726 = vadd.f32 %v8700, %v8716
    %v8727 = vadd.f32 %v8701, %v8718
    %v8728 = vadd.f32 %v8702, %v8720
    %s8729 = sld [smem:[#allocation6 + $0x789]]
    %v8730 = vstv %s8729
    %v8731 = vmul.f32 %v66, %v8730
    %v8732 = vmul.f32 %v67, %v8730
    %v8733 = vmul.f32 %v68, %v8730
    %v8734 = vmul.f32 %v69, %v8730
    %v8735 = vadd.f32 %v8725, %v8731
    %v8736 = vadd.f32 %v8726, %v8732
    %v8737 = vadd.f32 %v8727, %v8733
    %v8738 = vadd.f32 %v8728, %v8734
    %s8739 = sld [smem:[#allocation6 + $0x78a]]
    %v8740 = vstv %s8739
    %v8741 = vmul.f32 %v66, %v8740
    %v8742 = vmul.f32 %v67, %v8740
    %v8743 = vmul.f32 %v68, %v8740
    %v8744 = vmul.f32 %v69, %v8740
    %8749 = vrot.lane.b32.xlu0 %v8741, 127
    %v8750 = vpop.permute.xlu0 %8749
    %8751 = vrot.lane.b32.xlu0 %v8742, 127
    %v8752 = vpop.permute.xlu0 %8751
    %8753 = vrot.lane.b32.xlu0 %v8743, 127
    %v8754 = vpop.permute.xlu0 %8753
    %8755 = vrot.lane.b32.xlu0 %v8744, 127
    %v8756 = vpop.permute.xlu0 %8755
    %v8761 = vadd.f32 %v8735, %v8750
    %v8762 = vadd.f32 %v8736, %v8752
    %v8763 = vadd.f32 %v8737, %v8754
    %v8764 = vadd.f32 %v8738, %v8756
    %s8765 = sld [smem:[#allocation6 + $0x78b]]
    %v8766 = vstv %s8765
    %v8767 = vmul.f32 %v66, %v8766
    %v8768 = vmul.f32 %v67, %v8766
    %v8769 = vmul.f32 %v68, %v8766
    %v8770 = vmul.f32 %v69, %v8766
    %8775 = vrot.lane.b32.xlu0 %v8767, 126
    %v8776 = vpop.permute.xlu0 %8775
    %8777 = vrot.lane.b32.xlu0 %v8768, 126
    %v8778 = vpop.permute.xlu0 %8777
    %8779 = vrot.lane.b32.xlu0 %v8769, 126
    %v8780 = vpop.permute.xlu0 %8779
    %8781 = vrot.lane.b32.xlu0 %v8770, 126
    %v8782 = vpop.permute.xlu0 %8781
    %v8787 = vadd.f32 %v8761, %v8776
    %v8788 = vadd.f32 %v8762, %v8778
    %v8789 = vadd.f32 %v8763, %v8780
    %v8790 = vadd.f32 %v8764, %v8782
    %s8791 = sld [smem:[#allocation6 + $0x78c]]
    %v8792 = vstv %s8791
    %v8793 = vmul.f32 %v70, %v8792
    %v8794 = vmul.f32 %v71, %v8792
    %v8795 = vmul.f32 %v72, %v8792
    %v8796 = vmul.f32 %v73, %v8792
    %v8797 = vadd.f32 %v8787, %v8793
    %v8798 = vadd.f32 %v8788, %v8794
    %v8799 = vadd.f32 %v8789, %v8795
    %v8800 = vadd.f32 %v8790, %v8796
    %s8801 = sld [smem:[#allocation6 + $0x78d]]
    %v8802 = vstv %s8801
    %v8803 = vmul.f32 %v70, %v8802
    %v8804 = vmul.f32 %v71, %v8802
    %v8805 = vmul.f32 %v72, %v8802
    %v8806 = vmul.f32 %v73, %v8802
    %8811 = vrot.lane.b32.xlu0 %v8803, 127
    %v8812 = vpop.permute.xlu0 %8811
    %8813 = vrot.lane.b32.xlu0 %v8804, 127
    %v8814 = vpop.permute.xlu0 %8813
    %8815 = vrot.lane.b32.xlu0 %v8805, 127
    %v8816 = vpop.permute.xlu0 %8815
    %8817 = vrot.lane.b32.xlu0 %v8806, 127
    %v8818 = vpop.permute.xlu0 %8817
    %v8823 = vadd.f32 %v8797, %v8812
    %v8824 = vadd.f32 %v8798, %v8814
    %v8825 = vadd.f32 %v8799, %v8816
    %v8826 = vadd.f32 %v8800, %v8818
    %s8827 = sld [smem:[#allocation6 + $0x78e]]
    %v8828 = vstv %s8827
    %v8829 = vmul.f32 %v70, %v8828
    %v8830 = vmul.f32 %v71, %v8828
    %v8831 = vmul.f32 %v72, %v8828
    %v8832 = vmul.f32 %v73, %v8828
    %8837 = vrot.lane.b32.xlu0 %v8829, 126
    %v8838 = vpop.permute.xlu0 %8837
    %8839 = vrot.lane.b32.xlu0 %v8830, 126
    %v8840 = vpop.permute.xlu0 %8839
    %8841 = vrot.lane.b32.xlu0 %v8831, 126
    %v8842 = vpop.permute.xlu0 %8841
    %8843 = vrot.lane.b32.xlu0 %v8832, 126
    %v8844 = vpop.permute.xlu0 %8843
    %v8849 = vadd.f32 %v8823, %v8838
    %v8850 = vadd.f32 %v8824, %v8840
    %v8851 = vadd.f32 %v8825, %v8842
    %v8852 = vadd.f32 %v8826, %v8844
    %s8853 = sld [smem:[#allocation6 + $0x78f]]
    %v8854 = vstv %s8853
    %v8855 = vmul.f32 %v74, %v8854
    %v8856 = vmul.f32 %v75, %v8854
    %v8857 = vmul.f32 %v76, %v8854
    %v8858 = vmul.f32 %v77, %v8854
    %v8859 = vadd.f32 %v8849, %v8855
    %v8860 = vadd.f32 %v8850, %v8856
    %v8861 = vadd.f32 %v8851, %v8857
    %v8862 = vadd.f32 %v8852, %v8858
    %s8863 = sld [smem:[#allocation6 + $0x790]]
    %v8864 = vstv %s8863
    %v8865 = vmul.f32 %v74, %v8864
    %v8866 = vmul.f32 %v75, %v8864
    %v8867 = vmul.f32 %v76, %v8864
    %v8868 = vmul.f32 %v77, %v8864
    %8873 = vrot.lane.b32.xlu0 %v8865, 127
    %v8874 = vpop.permute.xlu0 %8873
    %8875 = vrot.lane.b32.xlu0 %v8866, 127
    %v8876 = vpop.permute.xlu0 %8875
    %8877 = vrot.lane.b32.xlu0 %v8867, 127
    %v8878 = vpop.permute.xlu0 %8877
    %8879 = vrot.lane.b32.xlu0 %v8868, 127
    %v8880 = vpop.permute.xlu0 %8879
    %v8885 = vadd.f32 %v8859, %v8874
    %v8886 = vadd.f32 %v8860, %v8876
    %v8887 = vadd.f32 %v8861, %v8878
    %v8888 = vadd.f32 %v8862, %v8880
    %s8889 = sld [smem:[#allocation6 + $0x791]]
    %v8890 = vstv %s8889
    %v8891 = vmul.f32 %v74, %v8890
    %v8892 = vmul.f32 %v75, %v8890
    %v8893 = vmul.f32 %v76, %v8890
    %v8894 = vmul.f32 %v77, %v8890
    %8899 = vrot.lane.b32.xlu0 %v8891, 126
    %v8900 = vpop.permute.xlu0 %8899
    %8901 = vrot.lane.b32.xlu0 %v8892, 126
    %v8902 = vpop.permute.xlu0 %8901
    %8903 = vrot.lane.b32.xlu0 %v8893, 126
    %v8904 = vpop.permute.xlu0 %8903
    %8905 = vrot.lane.b32.xlu0 %v8894, 126
    %v8906 = vpop.permute.xlu0 %8905
    %v8911 = vadd.f32 %v8885, %v8900
    %v8912 = vadd.f32 %v8886, %v8902
    %v8913 = vadd.f32 %v8887, %v8904
    %v8914 = vadd.f32 %v8888, %v8906
    %s8915 = sld [smem:[#allocation6 + $0x792]]
    %v8916 = vstv %s8915
    %v8917 = vmul.f32 %v79, %v8916
    %v8918 = vmul.f32 %v80, %v8916
    %v8919 = vmul.f32 %v81, %v8916
    %v8920 = vmul.f32 %v82, %v8916
    %v8921 = vadd.f32 %v8911, %v8917
    %v8922 = vadd.f32 %v8912, %v8918
    %v8923 = vadd.f32 %v8913, %v8919
    %v8924 = vadd.f32 %v8914, %v8920
    %s8925 = sld [smem:[#allocation6 + $0x793]]
    %v8926 = vstv %s8925
    %v8927 = vmul.f32 %v79, %v8926
    %v8928 = vmul.f32 %v80, %v8926
    %v8929 = vmul.f32 %v81, %v8926
    %v8930 = vmul.f32 %v82, %v8926
    %8935 = vrot.lane.b32.xlu0 %v8927, 127
    %v8936 = vpop.permute.xlu0 %8935
    %8937 = vrot.lane.b32.xlu0 %v8928, 127
    %v8938 = vpop.permute.xlu0 %8937
    %8939 = vrot.lane.b32.xlu0 %v8929, 127
    %v8940 = vpop.permute.xlu0 %8939
    %8941 = vrot.lane.b32.xlu0 %v8930, 127
    %v8942 = vpop.permute.xlu0 %8941
    %v8947 = vadd.f32 %v8921, %v8936
    %v8948 = vadd.f32 %v8922, %v8938
    %v8949 = vadd.f32 %v8923, %v8940
    %v8950 = vadd.f32 %v8924, %v8942
    %s8951 = sld [smem:[#allocation6 + $0x794]]
    %v8952 = vstv %s8951
    %v8953 = vmul.f32 %v79, %v8952
    %v8954 = vmul.f32 %v80, %v8952
    %v8955 = vmul.f32 %v81, %v8952
    %v8956 = vmul.f32 %v82, %v8952
    %8961 = vrot.lane.b32.xlu0 %v8953, 126
    %v8962 = vpop.permute.xlu0 %8961
    %8963 = vrot.lane.b32.xlu0 %v8954, 126
    %v8964 = vpop.permute.xlu0 %8963
    %8965 = vrot.lane.b32.xlu0 %v8955, 126
    %v8966 = vpop.permute.xlu0 %8965
    %8967 = vrot.lane.b32.xlu0 %v8956, 126
    %v8968 = vpop.permute.xlu0 %8967
    %v8973 = vadd.f32 %v8947, %v8962
    %v8974 = vadd.f32 %v8948, %v8964
    %v8975 = vadd.f32 %v8949, %v8966
    %v8976 = vadd.f32 %v8950, %v8968
    %s8977 = sld [smem:[#allocation6 + $0x795]]
    %v8978 = vstv %s8977
    %v8979 = vmul.f32 %v83, %v8978
    %v8980 = vmul.f32 %v84, %v8978
    %v8981 = vmul.f32 %v85, %v8978
    %v8982 = vmul.f32 %v86, %v8978
    %v8983 = vadd.f32 %v8973, %v8979
    %v8984 = vadd.f32 %v8974, %v8980
    %v8985 = vadd.f32 %v8975, %v8981
    %v8986 = vadd.f32 %v8976, %v8982
    %s8987 = sld [smem:[#allocation6 + $0x796]]
    %v8988 = vstv %s8987
    %v8989 = vmul.f32 %v83, %v8988
    %v8990 = vmul.f32 %v84, %v8988
    %v8991 = vmul.f32 %v85, %v8988
    %v8992 = vmul.f32 %v86, %v8988
    %8997 = vrot.lane.b32.xlu0 %v8989, 127
    %v8998 = vpop.permute.xlu0 %8997
    %8999 = vrot.lane.b32.xlu0 %v8990, 127
    %v9000 = vpop.permute.xlu0 %8999
    %9001 = vrot.lane.b32.xlu0 %v8991, 127
    %v9002 = vpop.permute.xlu0 %9001
    %9003 = vrot.lane.b32.xlu0 %v8992, 127
    %v9004 = vpop.permute.xlu0 %9003
    %v9009 = vadd.f32 %v8983, %v8998
    %v9010 = vadd.f32 %v8984, %v9000
    %v9011 = vadd.f32 %v8985, %v9002
    %v9012 = vadd.f32 %v8986, %v9004
    %s9013 = sld [smem:[#allocation6 + $0x797]]
    %v9014 = vstv %s9013
    %v9015 = vmul.f32 %v83, %v9014
    %v9016 = vmul.f32 %v84, %v9014
    %v9017 = vmul.f32 %v85, %v9014
    %v9018 = vmul.f32 %v86, %v9014
    %9023 = vrot.lane.b32.xlu0 %v9015, 126
    %v9024 = vpop.permute.xlu0 %9023
    %9025 = vrot.lane.b32.xlu0 %v9016, 126
    %v9026 = vpop.permute.xlu0 %9025
    %9027 = vrot.lane.b32.xlu0 %v9017, 126
    %v9028 = vpop.permute.xlu0 %9027
    %9029 = vrot.lane.b32.xlu0 %v9018, 126
    %v9030 = vpop.permute.xlu0 %9029
    %v9035 = vadd.f32 %v9009, %v9024
    %v9036 = vadd.f32 %v9010, %v9026
    %v9037 = vadd.f32 %v9011, %v9028
    %v9038 = vadd.f32 %v9012, %v9030
    %s9039 = sld [smem:[#allocation6 + $0x798]]
    %v9040 = vstv %s9039
    %v9041 = vmul.f32 %v87, %v9040
    %v9042 = vmul.f32 %v88, %v9040
    %v9043 = vmul.f32 %v89, %v9040
    %v9044 = vmul.f32 %v90, %v9040
    %v9045 = vadd.f32 %v9035, %v9041
    %v9046 = vadd.f32 %v9036, %v9042
    %v9047 = vadd.f32 %v9037, %v9043
    %v9048 = vadd.f32 %v9038, %v9044
    %s9049 = sld [smem:[#allocation6 + $0x799]]
    %v9050 = vstv %s9049
    %v9051 = vmul.f32 %v87, %v9050
    %v9052 = vmul.f32 %v88, %v9050
    %v9053 = vmul.f32 %v89, %v9050
    %v9054 = vmul.f32 %v90, %v9050
    %9059 = vrot.lane.b32.xlu0 %v9051, 127
    %v9060 = vpop.permute.xlu0 %9059
    %9061 = vrot.lane.b32.xlu0 %v9052, 127
    %v9062 = vpop.permute.xlu0 %9061
    %9063 = vrot.lane.b32.xlu0 %v9053, 127
    %v9064 = vpop.permute.xlu0 %9063
    %9065 = vrot.lane.b32.xlu0 %v9054, 127
    %v9066 = vpop.permute.xlu0 %9065
    %v9071 = vadd.f32 %v9045, %v9060
    %v9072 = vadd.f32 %v9046, %v9062
    %v9073 = vadd.f32 %v9047, %v9064
    %v9074 = vadd.f32 %v9048, %v9066
    %s9075 = sld [smem:[#allocation6 + $0x79a]]
    %v9076 = vstv %s9075
    %v9077 = vmul.f32 %v87, %v9076
    %v9078 = vmul.f32 %v88, %v9076
    %v9079 = vmul.f32 %v89, %v9076
    %v9080 = vmul.f32 %v90, %v9076
    %9085 = vrot.lane.b32.xlu0 %v9077, 126
    %v9086 = vpop.permute.xlu0 %9085
    %9087 = vrot.lane.b32.xlu0 %v9078, 126
    %v9088 = vpop.permute.xlu0 %9087
    %9089 = vrot.lane.b32.xlu0 %v9079, 126
    %v9090 = vpop.permute.xlu0 %9089
    %9091 = vrot.lane.b32.xlu0 %v9080, 126
    %v9092 = vpop.permute.xlu0 %9091
    %v9097 = vadd.f32 %v9071, %v9086
    %v9098 = vadd.f32 %v9072, %v9088
    %v9099 = vadd.f32 %v9073, %v9090
    %v9100 = vadd.f32 %v9074, %v9092
    %s9101 = sld [smem:[#allocation7 + $0xf]]
    %v9102 = vstv %s9101
    %v9103 = vadd.f32 %v9097, %v9102
    %v9104 = vadd.f32 %v9098, %v9102
    %v9105 = vadd.f32 %v9099, %v9102
    %v9106 = vadd.f32 %v9100, %v9102
    %v9107 = vmin.f32 %v8543, %v9103
    %v9108 = vmin.f32 %v8544, %v9104
    %v9109 = vmin.f32 %v8545, %v9105
    %v9110 = vmin.f32 %v8546, %v9106
    %v9111 = vtanh.pop %v9107
    %v9112 = vtanh.pop %v9108
    %v9113 = vtanh.pop %v9109
    %v9114 = vtanh.pop %v9110
    %v9115 = vtanh.pop %v9111
    %v9116 = vtanh.pop %v9112
    %v9117 = vtanh.pop %v9113
    %v9118 = vtanh.pop %v9114
    %vm9119 = vcmask 113664
    %9120 = vst.msk [vmem:[%s3] sm:$0xff] %vm9119, %v9115
    %vm9121 = vcmask 111616
    %9122 = vst.msk [vmem:[%s3 + $0x8] sm:$0x3f] %vm9121, %v9116
    %9123 = vst.msk [vmem:[%s3 + $0x10] sm:$0xff] %vm9119, %v9117
    %9124 = vst.msk [vmem:[%s3 + $0x18] sm:$0x3f] %vm9121, %v9118
    // Predicated region
    $region26: #{tpu_custom_call.1} parent=1 // pred_check
      _
    $region27: #{tpu_custom_call.1} parent=1 // pred_check_branch
      %9126 = sbr.rel (0) target = $region29
    $region28: #{tpu_custom_call.1} parent=1 // pred_region
      _
    $region29: #{tpu_custom_call.1} parent=1 // pred_fallthru
      _
    // Predicated region
    $region30: #{tpu_custom_call.1} parent=1 // pred_check
      _
    $region31: #{tpu_custom_call.1} parent=1 // pred_check_branch
      %9128 = sbr.rel (0) target = $region33
    $region32: #{tpu_custom_call.1} parent=1 // pred_region
      _
    $region33: #{tpu_custom_call.1} parent=1 // pred_fallthru
      _
    %9129 = vsyncpa [#allocation3], 1
    %9130 = vsyncpa [#allocation4], 1
    %9131 = vsyncpa [#allocation5], 1

</llo_original>
